<compile_context>
chip_gen: v7x
topology: tpu7x:2x2x1
jax: 0.10.0
libtpu: 0.0.40
codegen_flags: <defaults>
</compile_context>

<pallas_src>
import functools
import math

import jax
import jax.numpy as jnp
from jax.experimental import pallas as pl
from jax.experimental.pallas import tpu as pltpu


VMEM_LIMIT_BYTES = 32 * 1024 * 1024  # safe on v5e/v6e (128 MiB) and v7x (64 MiB)


# ------------------------------ small helpers ------------------------------

def _round_up(x, m):
    return ((x + m - 1) // m) * m


def _pad2(a, rows, cols):
    pr, pc = rows - a.shape[0], cols - a.shape[1]
    if pr == 0 and pc == 0:
        return a
    return jnp.pad(a, ((0, pr), (0, pc)))


def _erf_approx(x):
    # Abramowitz & Stegun 7.1.26 (max abs err ~1.5e-7); only mul/add/exp/select.
    a1, a2, a3, a4, a5 = (0.254829592, -0.284496736, 1.421413741,
                          -1.453152027, 1.061405429)
    p = 0.3275911
    ax = jnp.abs(x)
    t = 1.0 / (1.0 + p * ax)
    poly = ((((a5 * t + a4) * t + a3) * t + a2) * t + a1) * t
    e = 1.0 - poly * jnp.exp(-ax * ax)
    return jnp.where(x < 0.0, -e, e)


def _gelu_exact(x):
    # exact (erf) GELU, matching torch.nn.functional.gelu default.
    return 0.5 * x * (1.0 + _erf_approx(x * 0.7071067811865476))


def _apply_activation(y, activation):
    if activation == "gelu":
        return _gelu_exact(y)
    if activation == "relu":
        return jnp.maximum(y, 0.0)
    return y


# ----------------------------- Pallas kernels ------------------------------

def _matmul_kernel(*refs, activation, has_residual):
    """Tiled matmul with f32 accumulator; bias/activation/residual epilogue."""
    if has_residual:
        x_ref, w_ref, b_ref, res_ref, o_ref, acc_ref = refs
    else:
        x_ref, w_ref, b_ref, o_ref, acc_ref = refs
        res_ref = None

    k_id = pl.program_id(2)

    @pl.when(k_id == 0)
    def _():
        acc_ref[...] = jnp.zeros_like(acc_ref)

    acc_ref[...] += jnp.dot(x_ref[...].astype(w_ref.dtype), w_ref[...],
                            preferred_element_type=jnp.float32)

    @pl.when(k_id == pl.num_programs(2) - 1)
    def _():
        y = acc_ref[...] + b_ref[...].astype(jnp.float32)
        y = _apply_activation(y, activation)
        if has_residual:
            y = y + res_ref[...].astype(jnp.float32)
        o_ref[...] = y.astype(o_ref.dtype)


def linear(x, w, b, activation="none", residual=None, out_dtype=None):
    """y = act(x @ w + b) [+ residual].  w stored as (in, out) = torch w.T."""
    lead, K = x.shape[:-1], x.shape[-1]
    N = w.shape[-1]
    M = math.prod(lead) if lead else 1

    tm = min(128, _round_up(M, 8))
    tn = min(256, _round_up(N, 128))
    tk = min(512, _round_up(K, 128))
    Mp, Np, Kp = _round_up(M, tm), _round_up(N, tn), _round_up(K, tk)

    xp = _pad2(x.reshape(M, K), Mp, Kp)
    wp = _pad2(w, Kp, Np)
    bp = _pad2(b.reshape(1, N), 1, Np)

    args = [xp, wp, bp]
    in_specs = [pl.BlockSpec((tm, tk), lambda i, j, k: (i, k)),
                pl.BlockSpec((tk, tn), lambda i, j, k: (k, j)),
                pl.BlockSpec((1, tn), lambda i, j, k: (0, j))]
    if residual is not None:
        rp = _pad2(residual.reshape(M, N), Mp, Np)
        args.append(rp)
        in_specs.append(pl.BlockSpec((tm, tn), lambda i, j, k: (i, j)))

    out_dtype = out_dtype if out_dtype is not None else x.dtype
    out = pl.pallas_call(
        functools.partial(_matmul_kernel, activation=activation,
                          has_residual=residual is not None),
        out_shape=jax.ShapeDtypeStruct((Mp, Np), out_dtype),
        grid=(Mp // tm, Np // tn, Kp // tk),
        in_specs=in_specs,
        out_specs=pl.BlockSpec((tm, tn), lambda i, j, k: (i, j)),
        scratch_shapes=[pltpu.VMEM((tm, tn), jnp.float32)],
        compiler_params=pltpu.CompilerParams(
            dimension_semantics=("parallel", "parallel", "arbitrary"),
            vmem_limit_bytes=VMEM_LIMIT_BYTES),
    )(*args)
    return out[:M, :N].reshape(*lead, N)


def _ln_linear_kernel(x_ref, g_ref, beta_ref, w_ref, b_ref, o_ref, *,
                      eps, activation):
    x = x_ref[...].astype(jnp.float32)
    mu = jnp.mean(x, axis=-1, keepdims=True)
    var = jnp.mean(jnp.square(x - mu), axis=-1, keepdims=True)
    xn = (x - mu) * jax.lax.rsqrt(var + eps)
    xn = xn * g_ref[...].astype(jnp.float32) + beta_ref[...].astype(jnp.float32)
    y = jnp.dot(xn.astype(w_ref.dtype), w_ref[...],
                preferred_element_type=jnp.float32)
    y = y + b_ref[...].astype(jnp.float32)
    y = _apply_activation(y, activation)
    o_ref[...] = y.astype(o_ref.dtype)


def ln_linear(x, g, beta, w, b, activation="none", eps=1e-5, out_dtype=None):
    """Fused pre-LayerNorm + projection: act(LN(x) @ w + b).

    The x block keeps the full feature (K) axis so LN sees whole rows; the
    grid tiles rows (M) and output features (N) only.  For BLIP2-scale hidden
    sizes (<=1408) this stays well inside VMEM without K tiling.
    """
    lead, K = x.shape[:-1], x.shape[-1]
    N = w.shape[-1]
    M = math.prod(lead) if lead else 1

    tm = min(128, _round_up(M, 8))
    tn = min(256, _round_up(N, 128))
    Mp, Np = _round_up(M, tm), _round_up(N, tn)

    xp = _pad2(x.reshape(M, K), Mp, K)
    wp = _pad2(w, K, Np)
    bp = _pad2(b.reshape(1, N), 1, Np)

    out_dtype = out_dtype if out_dtype is not None else x.dtype
    out = pl.pallas_call(
        functools.partial(_ln_linear_kernel, eps=eps, activation=activation),
        out_shape=jax.ShapeDtypeStruct((Mp, Np), out_dtype),
        grid=(Mp // tm, Np // tn),
        in_specs=[pl.BlockSpec((tm, K), lambda i, j: (i, 0)),
                  pl.BlockSpec((1, K), lambda i, j: (0, 0)),
                  pl.BlockSpec((1, K), lambda i, j: (0, 0)),
                  pl.BlockSpec((K, tn), lambda i, j: (0, j)),
                  pl.BlockSpec((1, tn), lambda i, j: (0, j))],
        out_specs=pl.BlockSpec((tm, tn), lambda i, j: (i, j)),
        compiler_params=pltpu.CompilerParams(
            dimension_semantics=("parallel", "parallel"),
            vmem_limit_bytes=VMEM_LIMIT_BYTES),
    )(xp, g.reshape(1, K), beta.reshape(1, K), wp, bp)
    return out[:M, :N].reshape(*lead, N)


def _layernorm_kernel(x_ref, g_ref, b_ref, o_ref, *, eps):
    x = x_ref[...].astype(jnp.float32)
    mu = jnp.mean(x, axis=-1, keepdims=True)
    var = jnp.mean(jnp.square(x - mu), axis=-1, keepdims=True)
    y = (x - mu) * jax.lax.rsqrt(var + eps)
    o_ref[...] = (y * g_ref[...].astype(jnp.float32)
                  + b_ref[...].astype(jnp.float32)).astype(o_ref.dtype)


def layernorm(x, g, b, eps=1e-5):
    lead, d = x.shape[:-1], x.shape[-1]
    m = math.prod(lead) if lead else 1
    tm = min(512, _round_up(m, 8))
    mp = _round_up(m, tm)
    xp = _pad2(x.reshape(m, d), mp, d)
    out = pl.pallas_call(
        functools.partial(_layernorm_kernel, eps=eps),
        out_shape=jax.ShapeDtypeStruct((mp, d), x.dtype),
        grid=(mp // tm,),
        in_specs=[pl.BlockSpec((tm, d), lambda i: (i, 0)),
                  pl.BlockSpec((1, d), lambda i: (0, 0)),
                  pl.BlockSpec((1, d), lambda i: (0, 0))],
        out_specs=pl.BlockSpec((tm, d), lambda i: (i, 0)),
        compiler_params=pltpu.CompilerParams(
            dimension_semantics=("parallel",),
            vmem_limit_bytes=VMEM_LIMIT_BYTES),
    )(xp, g.reshape(1, d), b.reshape(1, d))
    return out[:m].reshape(*lead, d)


def _attn_kernel(q_ref, k_ref, v_ref, o_ref, *, scale):
    # q_ref: (1, G, Sq, Dh); k_ref/v_ref: (1, G, Sk, Dh); o_ref: (1, Sq, G*Dh)
    g_heads = q_ref.shape[1]
    outs = []
    for g in range(g_heads):              # static unroll over the head group
        q = q_ref[0, g]                   # (Sq, Dh) -- 2-D MXU dots
        k = k_ref[0, g]
        v = v_ref[0, g]
        s = jax.lax.dot_general(q, k, (((1,), (1,)), ((), ())),
                                preferred_element_type=jnp.float32) * scale
        s = s - jnp.max(s, axis=-1, keepdims=True)
        p = jnp.exp(s)
        inv = pl.reciprocal(jnp.sum(p, axis=-1, keepdims=True), approx=True)
        o = jnp.dot((p * inv).astype(v.dtype), v,
                    preferred_element_type=jnp.float32)
        outs.append(o.astype(o_ref.dtype))
    # single lane-dense store of the whole head group (merged-heads layout)
    o_ref[0] = jnp.concatenate(outs, axis=-1) if len(outs) > 1 else outs[0]


def _head_group(num_heads, head_dim):
    # largest divisor of H whose merged width is a multiple of 128 lanes;
    # fall back to all heads (full output width) otherwise.
    for g in range(num_heads, 0, -1):
        if num_heads % g == 0 and (g * head_dim) % 128 == 0:
            return g
    return num_heads


def attention(q, k, v):
    """q: (B, H, Sq, Dh); k, v: (B, H, Sk, Dh) -> (B, Sq, H*Dh) merged-heads.
    No mask needed: attention/cross-attention masks are all-ones ([[1.0]])."""
    B, H, Sq, Dh = q.shape
    Sk = k.shape[2]
    G = _head_group(H, Dh)
    scale = 1.0 / float(Dh) ** 0.5
    # TODO(synk): for ViT-scale Sq/Sk (577) add flash-style kv tiling so the
    # per-step logits stay small on v7x's 64 MiB VMEM.
    out = pl.pallas_call(
        functools.partial(_attn_kernel, scale=scale),
        out_shape=jax.ShapeDtypeStruct((B, Sq, H * Dh), q.dtype),
        grid=(B, H // G),
        in_specs=[pl.BlockSpec((1, G, Sq, Dh), lambda b, h: (b, h, 0, 0)),
                  pl.BlockSpec((1, G, Sk, Dh), lambda b, h: (b, h, 0, 0)),
                  pl.BlockSpec((1, G, Sk, Dh), lambda b, h: (b, h, 0, 0))],
        out_specs=pl.BlockSpec((1, Sq, G * Dh), lambda b, h: (b, 0, h)),
        compiler_params=pltpu.CompilerParams(
            dimension_semantics=("parallel", "parallel"),
            vmem_limit_bytes=VMEM_LIMIT_BYTES),
    )(q, k, v)
    return out


# ------------------------- model building blocks ---------------------------

def _split_heads(t, num_heads):
    # TODO(synk): fold the head split into the QKV projection kernel (write
    # head-major output blocks directly) to remove this XLA transpose.
    B, S, D = t.shape
    return t.reshape(B, S, num_heads, D // num_heads).transpose(0, 2, 1, 3)


def self_attention_block(x, ln_g, ln_b, p, num_heads):
    # pre-LN fused into the QKV projection; residual fused into the o-proj.
    qkv = ln_linear(x, ln_g, ln_b, p["w_qkv"], p["b_qkv"])
    q, k, v = jnp.split(qkv, 3, axis=-1)
    o = attention(_split_heads(q, num_heads), _split_heads(k, num_heads),
                  _split_heads(v, num_heads))                 # (B, S, D)
    return linear(o, p["w_o"], p["b_o"], residual=x)


def cross_attention_block(x, enc, ln_g, ln_b, p, num_heads):
    q = ln_linear(x, ln_g, ln_b, p["w_q"], p["b_q"])
    k = linear(enc, p["w_k"], p["b_k"])
    v = linear(enc, p["w_v"], p["b_v"])
    o = attention(_split_heads(q, num_heads), _split_heads(k, num_heads),
                  _split_heads(v, num_heads))
    return linear(o, p["w_o"], p["b_o"], residual=x)


def mlp_block(x, ln_g, ln_b, p):
    h = ln_linear(x, ln_g, ln_b, p["w_fc1"], p["b_fc1"], activation="gelu")
    return linear(h, p["w_fc2"], p["b_fc2"], residual=x)


def vit_layer(x, p, num_heads):
    h = self_attention_block(x, p["ln1_g"], p["ln1_b"], p["attn"], num_heads)
    h = mlp_block(h, p["ln2_g"], p["ln2_b"], p["mlp"])
    return h


def qformer_layer(x, enc, p, num_heads):
    h = self_attention_block(x, p["ln1_g"], p["ln1_b"], p["attn"], num_heads)
    h = cross_attention_block(h, enc, p["lnx_g"], p["lnx_b"], p["xattn"],
                              num_heads)
    h = mlp_block(h, p["ln2_g"], p["ln2_b"], p["mlp"])
    return h


def vit_forward(image, p, cfg):
    # EVAViT: patch-embedding conv, CLS token (input_ids == 0), pos embeddings,
    # transformer layers, final LayerNorm (LNFinalyMixin.final_forward).
    B, C, H, W = image.shape
    ps = cfg["patch"]
    hp, wp = H // ps, W // ps
    patches = (image.reshape(B, C, hp, ps, wp, ps)
               .transpose(0, 2, 4, 1, 3, 5)
               .reshape(B, hp * wp, C * ps * ps)).astype(jnp.bfloat16)
    x = linear(patches, p["patch_w"], p["patch_b"])           # conv-as-matmul
    cls = jnp.broadcast_to(p["cls_emb"][None], (B, 1, cfg["vit_hidden"]))
    x = jnp.concatenate([cls, x], axis=1)
    x = x + p["pos_emb"][None]
    for lp in p["layers"]:
        x = vit_layer(x, lp, cfg["vit_heads"])
    return layernorm(x, p["ln_vision_g"], p["ln_vision_b"])   # ln_vision


def qformer_forward(enc, p, cfg):
    # QFormer: input_ids = arange(32) query tokens, NO position embeddings,
    # self-attn + cross-attn to encoder outputs, gelu MLP; final_forward = id.
    B = enc.shape[0]
    x = jnp.broadcast_to(p["query_emb"][None], (B, cfg["n_query"], cfg["q_hidden"]))
    for lp in p["layers"]:
        x = qformer_layer(x, enc, lp, cfg["q_heads"])
    return x


def blip2_forward(image, params, cfg):
    enc = vit_forward(image, params["vit"], cfg)        # self.vit(image)[0]
    out = qformer_forward(enc, params["qformer"], cfg)  # self.qformer(enc)[0]
    # TODO(synk): cls_fusion branch (mlp_1..5 / clf_forward / FusionModel) not
    # implemented; constructor default cls_fusion=None -> fusion_model is None.
    return linear(out, params["glm_w"], params["glm_b"],
                  out_dtype=jnp.float32)                # self.glm_proj(out)


# ----------------------- deterministic param init --------------------------
# weights stored bf16 (MXU operands), biases / LN params f32, embeddings bf16.

def _init_linear(key, k_in, n_out, scale=0.02):
    kw, kb = jax.random.split(key)
    w = (scale * jax.random.normal(kw, (k_in, n_out), jnp.float32)).astype(jnp.bfloat16)
    b = scale * jax.random.normal(kb, (n_out,), jnp.float32)
    return w, b


def _init_ln(d):
    return jnp.ones((d,), jnp.float32), jnp.zeros((d,), jnp.float32)


def _init_self_attn(key, d):
    k1, k2 = jax.random.split(key)
    w_qkv, b_qkv = _init_linear(k1, d, 3 * d)
    w_o, b_o = _init_linear(k2, d, d)
    return dict(w_qkv=w_qkv, b_qkv=b_qkv, w_o=w_o, b_o=b_o)


def _init_cross_attn(key, d_q, d_kv):
    k1, k2, k3, k4 = jax.random.split(key, 4)
    w_q, b_q = _init_linear(k1, d_q, d_q)
    w_k, b_k = _init_linear(k2, d_kv, d_q)
    w_v, b_v = _init_linear(k3, d_kv, d_q)
    w_o, b_o = _init_linear(k4, d_q, d_q)
    return dict(w_q=w_q, b_q=b_q, w_k=w_k, b_k=b_k,
                w_v=w_v, b_v=b_v, w_o=w_o, b_o=b_o)


def _init_mlp(key, d, d_ff):
    k1, k2 = jax.random.split(key)
    w1, b1 = _init_linear(k1, d, d_ff)
    w2, b2 = _init_linear(k2, d_ff, d)
    return dict(w_fc1=w1, b_fc1=b1, w_fc2=w2, b_fc2=b2)


def init_params(key, cfg, in_chans, img_size):
    keys = jax.random.split(key, 8)
    ps = cfg["patch"]
    n_patch = (img_size // ps) ** 2
    D = cfg["vit_hidden"]
    # --- ViT ---
    patch_w, patch_b = _init_linear(keys[0], in_chans * ps * ps, D)
    cls_emb = (0.02 * jax.random.normal(keys[1], (1, D), jnp.float32)).astype(jnp.bfloat16)
    pos_emb = (0.02 * jax.random.normal(keys[2], (1 + n_patch, D), jnp.float32)).astype(jnp.bfloat16)
    vit_layers = []
    for lk in jax.random.split(keys[3], cfg["vit_layers"]):
        ka, km = jax.random.split(lk)
        g1, b1 = _init_ln(D)
        g2, b2 = _init_ln(D)
        vit_layers.append(dict(ln1_g=g1, ln1_b=b1, ln2_g=g2, ln2_b=b2,
                               attn=_init_self_attn(ka, D),
                               mlp=_init_mlp(km, D, cfg["vit_mlp"])))
    gln, bln = _init_ln(D)
    vit = dict(patch_w=patch_w, patch_b=patch_b, cls_emb=cls_emb, pos_emb=pos_emb,
               layers=vit_layers, ln_vision_g=gln, ln_vision_b=bln)
    # --- QFormer ---
    Dq = cfg["q_hidden"]
    query_emb = (0.02 * jax.random.normal(keys[4], (cfg["n_query"], Dq),
                                          jnp.float32)).astype(jnp.bfloat16)
    q_layers = []
    for lk in jax.random.split(keys[5], cfg["q_layers"]):
        ka, kx, km = jax.random.split(lk, 3)
        g1, b1 = _init_ln(Dq)
        gx, bx = _init_ln(Dq)
        g2, b2 = _init_ln(Dq)
        q_layers.append(dict(ln1_g=g1, ln1_b=b1, lnx_g=gx, lnx_b=bx,
                             ln2_g=g2, ln2_b=b2,
                             attn=_init_self_attn(ka, Dq),
                             xattn=_init_cross_attn(kx, Dq, D),
                             mlp=_init_mlp(km, Dq, cfg["q_mlp"])))
    qformer = dict(query_emb=query_emb, layers=q_layers)
    # --- glm_proj ---
    glm_w, glm_b = _init_linear(keys[6], Dq, cfg["glm_out"])
    return dict(vit=vit, qformer=qformer, glm_w=glm_w, glm_b=glm_b)


# --------------------------------- main -------------------------------------

if __name__ == "__main__":
    cfg = dict(
        patch=8,
        vit_hidden=64, vit_heads=4, vit_layers=2, vit_mlp=256,
        q_hidden=64, q_heads=4, q_layers=2, q_mlp=256,
        n_query=32,           # QFormer uses 32 query tokens (arange(32))
        glm_out=128,          # scaled-down stand-in for the 768->4096 glm_proj
    )
    key = jax.random.PRNGKey(0)
    k_img, k_par = jax.random.split(key)
    image = jax.random.normal(k_img, (2, 3, 16, 16), jnp.float32)  # NCHW
    params = init_params(k_par, cfg, in_chans=3, img_size=16)

    fwd = jax.jit(lambda img, prm: blip2_forward(img, prm, cfg))
    out = fwd(image, params)
    jax.block_until_ready(out)
    assert out.shape == (2, cfg["n_query"], cfg["glm_out"]), out.shape
    assert out.dtype == jnp.float32
    print("KERNEL_OK")
</pallas_src>

<mosaic_0001>
module attributes {stable_mosaic.version = 11 : i64} {
  func.func @_ln_linear_kernel(%arg0: i32, %arg1: i32, %arg2: memref<64x64xbf16, #tpu.memory_space<vmem>>, %arg3: memref<1x64xf32, #tpu.memory_space<vmem>>, %arg4: memref<1x64xf32, #tpu.memory_space<vmem>>, %arg5: memref<64x256xbf16, #tpu.memory_space<vmem>>, %arg6: memref<1x256xf32, #tpu.memory_space<vmem>>, %arg7: memref<64x256xbf16, #tpu.memory_space<vmem>>) attributes {dimension_semantics = [#tpu.dimension_semantics<parallel>, #tpu.dimension_semantics<parallel>], iteration_bounds = array<i64: 1, 1>, scalar_prefetch = 0 : i64, scratch_operands = 0 : i64, tpu.core_type = #tpu.core_type<tc>, window_params = [{transform_indices = @transform_0, window_bounds = array<i64: 64, 64>}, {pipeline_mode = #tpu.pipeline_mode<synchronous>, transform_indices = @transform_1, window_bounds = array<i64: 1, 64>}, {pipeline_mode = #tpu.pipeline_mode<synchronous>, transform_indices = @transform_2, window_bounds = array<i64: 1, 64>}, {transform_indices = @transform_3, window_bounds = array<i64: 64, 256>}, {transform_indices = @transform_4, window_bounds = array<i64: 1, 256>}, {transform_indices = @transform_5, window_bounds = array<i64: 64, 256>}]} {
    %c0 = arith.constant 0 : index
    %c0_0 = arith.constant 0 : index
    %0 = vector.load %arg2[%c0, %c0_0] : memref<64x64xbf16, #tpu.memory_space<vmem>>, vector<64x64xbf16>
    %1 = arith.extf %0 : vector<64x64xbf16> to vector<64x64xf32>
    %cst = arith.constant dense<0.000000e+00> : vector<64xf32>
    %2 = vector.multi_reduction <add>, %1, %cst [1] : vector<64x64xf32> to vector<64xf32>
    %3 = vector.shape_cast %2 : vector<64xf32> to vector<64x1xf32>
    %cst_1 = arith.constant 6.400000e+01 : f32
    %4 = vector.broadcast %cst_1 : f32 to vector<64x1xf32>
    %5 = arith.divf %3, %4 : vector<64x1xf32>
    %6 = vector.broadcast %5 : vector<64x1xf32> to vector<64x64xf32>
    %7 = arith.subf %1, %6 : vector<64x64xf32>
    %8 = arith.mulf %7, %7 : vector<64x64xf32>
    %cst_2 = arith.constant dense<0.000000e+00> : vector<64xf32>
    %9 = vector.multi_reduction <add>, %8, %cst_2 [1] : vector<64x64xf32> to vector<64xf32>
    %10 = vector.shape_cast %9 : vector<64xf32> to vector<64x1xf32>
    %cst_3 = arith.constant 6.400000e+01 : f32
    %11 = vector.broadcast %cst_3 : f32 to vector<64x1xf32>
    %12 = arith.divf %10, %11 : vector<64x1xf32>
    %13 = vector.broadcast %5 : vector<64x1xf32> to vector<64x64xf32>
    %14 = arith.subf %1, %13 : vector<64x64xf32>
    %cst_4 = arith.constant 9.99999974E-6 : f32
    %15 = vector.broadcast %cst_4 : f32 to vector<64x1xf32>
    %16 = arith.addf %12, %15 : vector<64x1xf32>
    %17 = math.rsqrt %16 : vector<64x1xf32>
    %18 = vector.broadcast %17 : vector<64x1xf32> to vector<64x64xf32>
    %19 = arith.mulf %14, %18 : vector<64x64xf32>
    %c0_5 = arith.constant 0 : index
    %c0_6 = arith.constant 0 : index
    %20 = vector.load %arg3[%c0_5, %c0_6] : memref<1x64xf32, #tpu.memory_space<vmem>>, vector<1x64xf32>
    %21 = vector.broadcast %20 : vector<1x64xf32> to vector<64x64xf32>
    %22 = arith.mulf %19, %21 : vector<64x64xf32>
    %c0_7 = arith.constant 0 : index
    %c0_8 = arith.constant 0 : index
    %23 = vector.load %arg4[%c0_7, %c0_8] : memref<1x64xf32, #tpu.memory_space<vmem>>, vector<1x64xf32>
    %24 = vector.broadcast %23 : vector<1x64xf32> to vector<64x64xf32>
    %25 = arith.addf %22, %24 : vector<64x64xf32>
    %26 = arith.truncf %25 : vector<64x64xf32> to vector<64x64xbf16>
    %c0_9 = arith.constant 0 : index
    %c0_10 = arith.constant 0 : index
    %27 = vector.load %arg5[%c0_9, %c0_10] : memref<64x256xbf16, #tpu.memory_space<vmem>>, vector<64x256xbf16>
    %cst_11 = arith.constant dense<0.000000e+00> : vector<64x256xf32>
    %28 = tpu.matmul %26, %27, %cst_11 {dimension_numbers = #tpu.dot_dimension_numbers<[1], [0], [0], [1], [0, 0, 1, 1], [], []>} : vector<64x64xbf16>, vector<64x256xbf16>, vector<64x256xf32> -> vector<64x256xf32>
    %c0_12 = arith.constant 0 : index
    %c0_13 = arith.constant 0 : index
    %29 = vector.load %arg6[%c0_12, %c0_13] : memref<1x256xf32, #tpu.memory_space<vmem>>, vector<1x256xf32>
    %30 = vector.broadcast %29 : vector<1x256xf32> to vector<64x256xf32>
    %31 = arith.addf %28, %30 : vector<64x256xf32>
    %32 = arith.truncf %31 : vector<64x256xf32> to vector<64x256xbf16>
    %c0_14 = arith.constant 0 : index
    %c0_15 = arith.constant 0 : index
    %33 = vector.load %arg7[%c0_14, %c0_15] : memref<64x256xbf16, #tpu.memory_space<vmem>>, vector<64x256xbf16>
    tpu.vector_store %arg7[%c0_14, %c0_15], %32 {strides = array<i32>} : memref<64x256xbf16, #tpu.memory_space<vmem>>, vector<64x256xbf16>,
    return
  }
  func.func @transform_0(%arg0: i32, %arg1: i32) -> (i32, i32) {
    %c0_i32 = arith.constant 0 : i32
    %c0_i32_0 = arith.constant 0 : i32
    return %arg0, %c0_i32 : i32, i32
  }
  func.func @transform_1(%arg0: i32, %arg1: i32) -> (i32, i32) {
    %c0_i32 = arith.constant 0 : i32
    %c0_i32_0 = arith.constant 0 : i32
    %c0_i32_1 = arith.constant 0 : i32
    return %c0_i32, %c0_i32_0 : i32, i32
  }
  func.func @transform_2(%arg0: i32, %arg1: i32) -> (i32, i32) {
    %c0_i32 = arith.constant 0 : i32
    %c0_i32_0 = arith.constant 0 : i32
    %c0_i32_1 = arith.constant 0 : i32
    return %c0_i32, %c0_i32_0 : i32, i32
  }
  func.func @transform_3(%arg0: i32, %arg1: i32) -> (i32, i32) {
    %c0_i32 = arith.constant 0 : i32
    %c0_i32_0 = arith.constant 0 : i32
    return %c0_i32, %arg1 : i32, i32
  }
  func.func @transform_4(%arg0: i32, %arg1: i32) -> (i32, i32) {
    %c0_i32 = arith.constant 0 : i32
    %c0_i32_0 = arith.constant 0 : i32
    return %c0_i32, %arg1 : i32, i32
  }
  func.func @transform_5(%arg0: i32, %arg1: i32) -> (i32, i32) {
    %c0_i32 = arith.constant 0 : i32
    return %arg0, %arg1 : i32, i32
  }
}

module attributes {stable_mosaic.version = 11 : i64} {
  func.func @_attn_kernel(%arg0: i32, %arg1: i32, %arg2: memref<1x4x32x16xbf16, #tpu.memory_space<vmem>>, %arg3: memref<1x4x32x16xbf16, #tpu.memory_space<vmem>>, %arg4: memref<1x4x32x16xbf16, #tpu.memory_space<vmem>>, %arg5: memref<1x32x64xbf16, #tpu.memory_space<vmem>>) attributes {dimension_semantics = [#tpu.dimension_semantics<parallel>, #tpu.dimension_semantics<parallel>], iteration_bounds = array<i64: 2, 1>, scalar_prefetch = 0 : i64, scratch_operands = 0 : i64, tpu.core_type = #tpu.core_type<tc>, window_params = [{transform_indices = @transform_0, window_bounds = array<i64: 1, 4, 32, 16>}, {transform_indices = @transform_1, window_bounds = array<i64: 1, 4, 32, 16>}, {transform_indices = @transform_2, window_bounds = array<i64: 1, 4, 32, 16>}, {transform_indices = @transform_3, window_bounds = array<i64: 1, 32, 64>}]} {
    %c0 = arith.constant 0 : index
    %c0_0 = arith.constant 0 : index
    %c0_1 = arith.constant 0 : index
    %c0_2 = arith.constant 0 : index
    %0 = vector.load %arg2[%c0, %c0_0, %c0_1, %c0_2] : memref<1x4x32x16xbf16, #tpu.memory_space<vmem>>, vector<1x1x32x16xbf16>
    %1 = vector.shape_cast %0 : vector<1x1x32x16xbf16> to vector<32x16xbf16>
    %c0_3 = arith.constant 0 : index
    %c0_4 = arith.constant 0 : index
    %c0_5 = arith.constant 0 : index
    %c0_6 = arith.constant 0 : index
    %2 = vector.load %arg3[%c0_3, %c0_4, %c0_5, %c0_6] : memref<1x4x32x16xbf16, #tpu.memory_space<vmem>>, vector<1x1x32x16xbf16>
    %3 = vector.shape_cast %2 : vector<1x1x32x16xbf16> to vector<32x16xbf16>
    %c0_7 = arith.constant 0 : index
    %c0_8 = arith.constant 0 : index
    %c0_9 = arith.constant 0 : index
    %c0_10 = arith.constant 0 : index
    %4 = vector.load %arg4[%c0_7, %c0_8, %c0_9, %c0_10] : memref<1x4x32x16xbf16, #tpu.memory_space<vmem>>, vector<1x1x32x16xbf16>
    %5 = vector.shape_cast %4 : vector<1x1x32x16xbf16> to vector<32x16xbf16>
    %cst = arith.constant dense<0.000000e+00> : vector<32x32xf32>
    %6 = tpu.matmul %1, %3, %cst {dimension_numbers = #tpu.dot_dimension_numbers<[1], [1], [0], [0], [0, 0, 1, 0], [], []>} : vector<32x16xbf16>, vector<32x16xbf16>, vector<32x32xf32> -> vector<32x32xf32>
    %cst_11 = arith.constant 2.500000e-01 : f32
    %7 = vector.broadcast %cst_11 : f32 to vector<32x32xf32>
    %8 = arith.mulf %6, %7 : vector<32x32xf32>
    %cst_12 = arith.constant dense<0xFF800000> : vector<32xf32>
    %9 = vector.multi_reduction <maximumf>, %8, %cst_12 [1] : vector<32x32xf32> to vector<32xf32>
    %10 = vector.shape_cast %9 : vector<32xf32> to vector<32x1xf32>
    %11 = vector.broadcast %10 : vector<32x1xf32> to vector<32x32xf32>
    %12 = arith.subf %8, %11 : vector<32x32xf32>
    %13 = math.exp %12 : vector<32x32xf32>
    %cst_13 = arith.constant dense<0.000000e+00> : vector<32xf32>
    %14 = vector.multi_reduction <add>, %13, %cst_13 [1] : vector<32x32xf32> to vector<32xf32>
    %15 = vector.shape_cast %14 : vector<32xf32> to vector<32x1xf32>
    %16 = tpu.reciprocal %15 {approx = true} : vector<32x1xf32> -> vector<32x1xf32>
    %17 = vector.broadcast %16 : vector<32x1xf32> to vector<32x32xf32>
    %18 = arith.mulf %13, %17 : vector<32x32xf32>
    %19 = arith.truncf %18 : vector<32x32xf32> to vector<32x32xbf16>
    %cst_14 = arith.constant dense<0.000000e+00> : vector<32x16xf32>
    %20 = tpu.matmul %19, %5, %cst_14 {dimension_numbers = #tpu.dot_dimension_numbers<[1], [0], [0], [1], [0, 0, 1, 1], [], []>} : vector<32x32xbf16>, vector<32x16xbf16>, vector<32x16xf32> -> vector<32x16xf32>
    %21 = arith.truncf %20 : vector<32x16xf32> to vector<32x16xbf16>
    %c0_15 = arith.constant 0 : index
    %c1 = arith.constant 1 : index
    %c0_16 = arith.constant 0 : index
    %c0_17 = arith.constant 0 : index
    %22 = vector.load %arg2[%c0_15, %c1, %c0_16, %c0_17] : memref<1x4x32x16xbf16, #tpu.memory_space<vmem>>, vector<1x1x32x16xbf16>
    %23 = vector.shape_cast %22 : vector<1x1x32x16xbf16> to vector<32x16xbf16>
    %c0_18 = arith.constant 0 : index
    %c1_19 = arith.constant 1 : index
    %c0_20 = arith.constant 0 : index
    %c0_21 = arith.constant 0 : index
    %24 = vector.load %arg3[%c0_18, %c1_19, %c0_20, %c0_21] : memref<1x4x32x16xbf16, #tpu.memory_space<vmem>>, vector<1x1x32x16xbf16>
    %25 = vector.shape_cast %24 : vector<1x1x32x16xbf16> to vector<32x16xbf16>
    %c0_22 = arith.constant 0 : index
    %c1_23 = arith.constant 1 : index
    %c0_24 = arith.constant 0 : index
    %c0_25 = arith.constant 0 : index
    %26 = vector.load %arg4[%c0_22, %c1_23, %c0_24, %c0_25] : memref<1x4x32x16xbf16, #tpu.memory_space<vmem>>, vector<1x1x32x16xbf16>
    %27 = vector.shape_cast %26 : vector<1x1x32x16xbf16> to vector<32x16xbf16>
    %cst_26 = arith.constant dense<0.000000e+00> : vector<32x32xf32>
    %28 = tpu.matmul %23, %25, %cst_26 {dimension_numbers = #tpu.dot_dimension_numbers<[1], [1], [0], [0], [0, 0, 1, 0], [], []>} : vector<32x16xbf16>, vector<32x16xbf16>, vector<32x32xf32> -> vector<32x32xf32>
    %cst_27 = arith.constant 2.500000e-01 : f32
    %29 = vector.broadcast %cst_27 : f32 to vector<32x32xf32>
    %30 = arith.mulf %28, %29 : vector<32x32xf32>
    %cst_28 = arith.constant dense<0xFF800000> : vector<32xf32>
    %31 = vector.multi_reduction <maximumf>, %30, %cst_28 [1] : vector<32x32xf32> to vector<32xf32>
    %32 = vector.shape_cast %31 : vector<32xf32> to vector<32x1xf32>
    %33 = vector.broadcast %32 : vector<32x1xf32> to vector<32x32xf32>
    %34 = arith.subf %30, %33 : vector<32x32xf32>
    %35 = math.exp %34 : vector<32x32xf32>
    %cst_29 = arith.constant dense<0.000000e+00> : vector<32xf32>
    %36 = vector.multi_reduction <add>, %35, %cst_29 [1] : vector<32x32xf32> to vector<32xf32>
    %37 = vector.shape_cast %36 : vector<32xf32> to vector<32x1xf32>
    %38 = tpu.reciprocal %37 {approx = true} : vector<32x1xf32> -> vector<32x1xf32>
    %39 = vector.broadcast %38 : vector<32x1xf32> to vector<32x32xf32>
    %40 = arith.mulf %35, %39 : vector<32x32xf32>
    %41 = arith.truncf %40 : vector<32x32xf32> to vector<32x32xbf16>
    %cst_30 = arith.constant dense<0.000000e+00> : vector<32x16xf32>
    %42 = tpu.matmul %41, %27, %cst_30 {dimension_numbers = #tpu.dot_dimension_numbers<[1], [0], [0], [1], [0, 0, 1, 1], [], []>} : vector<32x32xbf16>, vector<32x16xbf16>, vector<32x16xf32> -> vector<32x16xf32>
    %43 = arith.truncf %42 : vector<32x16xf32> to vector<32x16xbf16>
    %c0_31 = arith.constant 0 : index
    %c2 = arith.constant 2 : index
    %c0_32 = arith.constant 0 : index
    %c0_33 = arith.constant 0 : index
    %44 = vector.load %arg2[%c0_31, %c2, %c0_32, %c0_33] : memref<1x4x32x16xbf16, #tpu.memory_space<vmem>>, vector<1x1x32x16xbf16>
    %45 = vector.shape_cast %44 : vector<1x1x32x16xbf16> to vector<32x16xbf16>
    %c0_34 = arith.constant 0 : index
    %c2_35 = arith.constant 2 : index
    %c0_36 = arith.constant 0 : index
    %c0_37 = arith.constant 0 : index
    %46 = vector.load %arg3[%c0_34, %c2_35, %c0_36, %c0_37] : memref<1x4x32x16xbf16, #tpu.memory_space<vmem>>, vector<1x1x32x16xbf16>
    %47 = vector.shape_cast %46 : vector<1x1x32x16xbf16> to vector<32x16xbf16>
    %c0_38 = arith.constant 0 : index
    %c2_39 = arith.constant 2 : index
    %c0_40 = arith.constant 0 : index
    %c0_41 = arith.constant 0 : index
    %48 = vector.load %arg4[%c0_38, %c2_39, %c0_40, %c0_41] : memref<1x4x32x16xbf16, #tpu.memory_space<vmem>>, vector<1x1x32x16xbf16>
    %49 = vector.shape_cast %48 : vector<1x1x32x16xbf16> to vector<32x16xbf16>
    %cst_42 = arith.constant dense<0.000000e+00> : vector<32x32xf32>
    %50 = tpu.matmul %45, %47, %cst_42 {dimension_numbers = #tpu.dot_dimension_numbers<[1], [1], [0], [0], [0, 0, 1, 0], [], []>} : vector<32x16xbf16>, vector<32x16xbf16>, vector<32x32xf32> -> vector<32x32xf32>
    %cst_43 = arith.constant 2.500000e-01 : f32
    %51 = vector.broadcast %cst_43 : f32 to vector<32x32xf32>
    %52 = arith.mulf %50, %51 : vector<32x32xf32>
    %cst_44 = arith.constant dense<0xFF800000> : vector<32xf32>
    %53 = vector.multi_reduction <maximumf>, %52, %cst_44 [1] : vector<32x32xf32> to vector<32xf32>
    %54 = vector.shape_cast %53 : vector<32xf32> to vector<32x1xf32>
    %55 = vector.broadcast %54 : vector<32x1xf32> to vector<32x32xf32>
    %56 = arith.subf %52, %55 : vector<32x32xf32>
    %57 = math.exp %56 : vector<32x32xf32>
    %cst_45 = arith.constant dense<0.000000e+00> : vector<32xf32>
    %58 = vector.multi_reduction <add>, %57, %cst_45 [1] : vector<32x32xf32> to vector<32xf32>
    %59 = vector.shape_cast %58 : vector<32xf32> to vector<32x1xf32>
    %60 = tpu.reciprocal %59 {approx = true} : vector<32x1xf32> -> vector<32x1xf32>
    %61 = vector.broadcast %60 : vector<32x1xf32> to vector<32x32xf32>
    %62 = arith.mulf %57, %61 : vector<32x32xf32>
    %63 = arith.truncf %62 : vector<32x32xf32> to vector<32x32xbf16>
    %cst_46 = arith.constant dense<0.000000e+00> : vector<32x16xf32>
    %64 = tpu.matmul %63, %49, %cst_46 {dimension_numbers = #tpu.dot_dimension_numbers<[1], [0], [0], [1], [0, 0, 1, 1], [], []>} : vector<32x32xbf16>, vector<32x16xbf16>, vector<32x16xf32> -> vector<32x16xf32>
    %65 = arith.truncf %64 : vector<32x16xf32> to vector<32x16xbf16>
    %c0_47 = arith.constant 0 : index
    %c3 = arith.constant 3 : index
    %c0_48 = arith.constant 0 : index
    %c0_49 = arith.constant 0 : index
    %66 = vector.load %arg2[%c0_47, %c3, %c0_48, %c0_49] : memref<1x4x32x16xbf16, #tpu.memory_space<vmem>>, vector<1x1x32x16xbf16>
    %67 = vector.shape_cast %66 : vector<1x1x32x16xbf16> to vector<32x16xbf16>
    %c0_50 = arith.constant 0 : index
    %c3_51 = arith.constant 3 : index
    %c0_52 = arith.constant 0 : index
    %c0_53 = arith.constant 0 : index
    %68 = vector.load %arg3[%c0_50, %c3_51, %c0_52, %c0_53] : memref<1x4x32x16xbf16, #tpu.memory_space<vmem>>, vector<1x1x32x16xbf16>
    %69 = vector.shape_cast %68 : vector<1x1x32x16xbf16> to vector<32x16xbf16>
    %c0_54 = arith.constant 0 : index
    %c3_55 = arith.constant 3 : index
    %c0_56 = arith.constant 0 : index
    %c0_57 = arith.constant 0 : index
    %70 = vector.load %arg4[%c0_54, %c3_55, %c0_56, %c0_57] : memref<1x4x32x16xbf16, #tpu.memory_space<vmem>>, vector<1x1x32x16xbf16>
    %71 = vector.shape_cast %70 : vector<1x1x32x16xbf16> to vector<32x16xbf16>
    %cst_58 = arith.constant dense<0.000000e+00> : vector<32x32xf32>
    %72 = tpu.matmul %67, %69, %cst_58 {dimension_numbers = #tpu.dot_dimension_numbers<[1], [1], [0], [0], [0, 0, 1, 0], [], []>} : vector<32x16xbf16>, vector<32x16xbf16>, vector<32x32xf32> -> vector<32x32xf32>
    %cst_59 = arith.constant 2.500000e-01 : f32
    %73 = vector.broadcast %cst_59 : f32 to vector<32x32xf32>
    %74 = arith.mulf %72, %73 : vector<32x32xf32>
    %cst_60 = arith.constant dense<0xFF800000> : vector<32xf32>
    %75 = vector.multi_reduction <maximumf>, %74, %cst_60 [1] : vector<32x32xf32> to vector<32xf32>
    %76 = vector.shape_cast %75 : vector<32xf32> to vector<32x1xf32>
    %77 = vector.broadcast %76 : vector<32x1xf32> to vector<32x32xf32>
    %78 = arith.subf %74, %77 : vector<32x32xf32>
    %79 = math.exp %78 : vector<32x32xf32>
    %cst_61 = arith.constant dense<0.000000e+00> : vector<32xf32>
    %80 = vector.multi_reduction <add>, %79, %cst_61 [1] : vector<32x32xf32> to vector<32xf32>
    %81 = vector.shape_cast %80 : vector<32xf32> to vector<32x1xf32>
    %82 = tpu.reciprocal %81 {approx = true} : vector<32x1xf32> -> vector<32x1xf32>
    %83 = vector.broadcast %82 : vector<32x1xf32> to vector<32x32xf32>
    %84 = arith.mulf %79, %83 : vector<32x32xf32>
    %85 = arith.truncf %84 : vector<32x32xf32> to vector<32x32xbf16>
    %cst_62 = arith.constant dense<0.000000e+00> : vector<32x16xf32>
    %86 = tpu.matmul %85, %71, %cst_62 {dimension_numbers = #tpu.dot_dimension_numbers<[1], [0], [0], [1], [0, 0, 1, 1], [], []>} : vector<32x32xbf16>, vector<32x16xbf16>, vector<32x16xf32> -> vector<32x16xf32>
    %87 = arith.truncf %86 : vector<32x16xf32> to vector<32x16xbf16>
    %88 = tpu.concatenate %21, %43, %65, %87 in 1 : vector<32x16xbf16>, vector<32x16xbf16>, vector<32x16xbf16>, vector<32x16xbf16> -> vector<32x64xbf16>
    %c0_63 = arith.constant 0 : index
    %c0_64 = arith.constant 0 : index
    %c0_65 = arith.constant 0 : index
    %89 = vector.load %arg5[%c0_63, %c0_64, %c0_65] : memref<1x32x64xbf16, #tpu.memory_space<vmem>>, vector<1x32x64xbf16>
    %90 = vector.shape_cast %89 : vector<1x32x64xbf16> to vector<32x64xbf16>
    %91 = vector.shape_cast %88 : vector<32x64xbf16> to vector<1x32x64xbf16>
    tpu.vector_store %arg5[%c0_63, %c0_64, %c0_65], %91 {strides = array<i32>} : memref<1x32x64xbf16, #tpu.memory_space<vmem>>, vector<1x32x64xbf16>,
    return
  }
  func.func @transform_0(%arg0: i32, %arg1: i32) -> (i32, i32, i32, i32) {
    %c0_i32 = arith.constant 0 : i32
    %c0_i32_0 = arith.constant 0 : i32
    %c0_i32_1 = arith.constant 0 : i32
    return %arg0, %arg1, %c0_i32, %c0_i32_0 : i32, i32, i32, i32
  }
  func.func @transform_1(%arg0: i32, %arg1: i32) -> (i32, i32, i32, i32) {
    %c0_i32 = arith.constant 0 : i32
    %c0_i32_0 = arith.constant 0 : i32
    %c0_i32_1 = arith.constant 0 : i32
    return %arg0, %arg1, %c0_i32, %c0_i32_0 : i32, i32, i32, i32
  }
  func.func @transform_2(%arg0: i32, %arg1: i32) -> (i32, i32, i32, i32) {
    %c0_i32 = arith.constant 0 : i32
    %c0_i32_0 = arith.constant 0 : i32
    %c0_i32_1 = arith.constant 0 : i32
    return %arg0, %arg1, %c0_i32, %c0_i32_0 : i32, i32, i32, i32
  }
  func.func @transform_3(%arg0: i32, %arg1: i32) -> (i32, i32, i32) {
    %c0_i32 = arith.constant 0 : i32
    %c0_i32_0 = arith.constant 0 : i32
    return %arg0, %c0_i32, %arg1 : i32, i32, i32
  }
}

module attributes {stable_mosaic.version = 11 : i64} {
  func.func @_ln_linear_kernel(%arg0: i32, %arg1: i32, %arg2: memref<64x64xbf16, #tpu.memory_space<vmem>>, %arg3: memref<1x64xf32, #tpu.memory_space<vmem>>, %arg4: memref<1x64xf32, #tpu.memory_space<vmem>>, %arg5: memref<64x128xbf16, #tpu.memory_space<vmem>>, %arg6: memref<1x128xf32, #tpu.memory_space<vmem>>, %arg7: memref<64x128xbf16, #tpu.memory_space<vmem>>) attributes {dimension_semantics = [#tpu.dimension_semantics<parallel>, #tpu.dimension_semantics<parallel>], iteration_bounds = array<i64: 1, 1>, scalar_prefetch = 0 : i64, scratch_operands = 0 : i64, tpu.core_type = #tpu.core_type<tc>, window_params = [{transform_indices = @transform_0, window_bounds = array<i64: 64, 64>}, {pipeline_mode = #tpu.pipeline_mode<synchronous>, transform_indices = @transform_1, window_bounds = array<i64: 1, 64>}, {pipeline_mode = #tpu.pipeline_mode<synchronous>, transform_indices = @transform_2, window_bounds = array<i64: 1, 64>}, {transform_indices = @transform_3, window_bounds = array<i64: 64, 128>}, {transform_indices = @transform_4, window_bounds = array<i64: 1, 128>}, {transform_indices = @transform_5, window_bounds = array<i64: 64, 128>}]} {
    %c0 = arith.constant 0 : index
    %c0_0 = arith.constant 0 : index
    %0 = vector.load %arg2[%c0, %c0_0] : memref<64x64xbf16, #tpu.memory_space<vmem>>, vector<64x64xbf16>
    %1 = arith.extf %0 : vector<64x64xbf16> to vector<64x64xf32>
    %cst = arith.constant dense<0.000000e+00> : vector<64xf32>
    %2 = vector.multi_reduction <add>, %1, %cst [1] : vector<64x64xf32> to vector<64xf32>
    %3 = vector.shape_cast %2 : vector<64xf32> to vector<64x1xf32>
    %cst_1 = arith.constant 6.400000e+01 : f32
    %4 = vector.broadcast %cst_1 : f32 to vector<64x1xf32>
    %5 = arith.divf %3, %4 : vector<64x1xf32>
    %6 = vector.broadcast %5 : vector<64x1xf32> to vector<64x64xf32>
    %7 = arith.subf %1, %6 : vector<64x64xf32>
    %8 = arith.mulf %7, %7 : vector<64x64xf32>
    %cst_2 = arith.constant dense<0.000000e+00> : vector<64xf32>
    %9 = vector.multi_reduction <add>, %8, %cst_2 [1] : vector<64x64xf32> to vector<64xf32>
    %10 = vector.shape_cast %9 : vector<64xf32> to vector<64x1xf32>
    %cst_3 = arith.constant 6.400000e+01 : f32
    %11 = vector.broadcast %cst_3 : f32 to vector<64x1xf32>
    %12 = arith.divf %10, %11 : vector<64x1xf32>
    %13 = vector.broadcast %5 : vector<64x1xf32> to vector<64x64xf32>
    %14 = arith.subf %1, %13 : vector<64x64xf32>
    %cst_4 = arith.constant 9.99999974E-6 : f32
    %15 = vector.broadcast %cst_4 : f32 to vector<64x1xf32>
    %16 = arith.addf %12, %15 : vector<64x1xf32>
    %17 = math.rsqrt %16 : vector<64x1xf32>
    %18 = vector.broadcast %17 : vector<64x1xf32> to vector<64x64xf32>
    %19 = arith.mulf %14, %18 : vector<64x64xf32>
    %c0_5 = arith.constant 0 : index
    %c0_6 = arith.constant 0 : index
    %20 = vector.load %arg3[%c0_5, %c0_6] : memref<1x64xf32, #tpu.memory_space<vmem>>, vector<1x64xf32>
    %21 = vector.broadcast %20 : vector<1x64xf32> to vector<64x64xf32>
    %22 = arith.mulf %19, %21 : vector<64x64xf32>
    %c0_7 = arith.constant 0 : index
    %c0_8 = arith.constant 0 : index
    %23 = vector.load %arg4[%c0_7, %c0_8] : memref<1x64xf32, #tpu.memory_space<vmem>>, vector<1x64xf32>
    %24 = vector.broadcast %23 : vector<1x64xf32> to vector<64x64xf32>
    %25 = arith.addf %22, %24 : vector<64x64xf32>
    %26 = arith.truncf %25 : vector<64x64xf32> to vector<64x64xbf16>
    %c0_9 = arith.constant 0 : index
    %c0_10 = arith.constant 0 : index
    %27 = vector.load %arg5[%c0_9, %c0_10] : memref<64x128xbf16, #tpu.memory_space<vmem>>, vector<64x128xbf16>
    %cst_11 = arith.constant dense<0.000000e+00> : vector<64x128xf32>
    %28 = tpu.matmul %26, %27, %cst_11 {dimension_numbers = #tpu.dot_dimension_numbers<[1], [0], [0], [1], [0, 0, 1, 1], [], []>} : vector<64x64xbf16>, vector<64x128xbf16>, vector<64x128xf32> -> vector<64x128xf32>
    %c0_12 = arith.constant 0 : index
    %c0_13 = arith.constant 0 : index
    %29 = vector.load %arg6[%c0_12, %c0_13] : memref<1x128xf32, #tpu.memory_space<vmem>>, vector<1x128xf32>
    %30 = vector.broadcast %29 : vector<1x128xf32> to vector<64x128xf32>
    %31 = arith.addf %28, %30 : vector<64x128xf32>
    %32 = arith.truncf %31 : vector<64x128xf32> to vector<64x128xbf16>
    %c0_14 = arith.constant 0 : index
    %c0_15 = arith.constant 0 : index
    %33 = vector.load %arg7[%c0_14, %c0_15] : memref<64x128xbf16, #tpu.memory_space<vmem>>, vector<64x128xbf16>
    tpu.vector_store %arg7[%c0_14, %c0_15], %32 {strides = array<i32>} : memref<64x128xbf16, #tpu.memory_space<vmem>>, vector<64x128xbf16>,
    return
  }
  func.func @transform_0(%arg0: i32, %arg1: i32) -> (i32, i32) {
    %c0_i32 = arith.constant 0 : i32
    %c0_i32_0 = arith.constant 0 : i32
    return %arg0, %c0_i32 : i32, i32
  }
  func.func @transform_1(%arg0: i32, %arg1: i32) -> (i32, i32) {
    %c0_i32 = arith.constant 0 : i32
    %c0_i32_0 = arith.constant 0 : i32
    %c0_i32_1 = arith.constant 0 : i32
    return %c0_i32, %c0_i32_0 : i32, i32
  }
  func.func @transform_2(%arg0: i32, %arg1: i32) -> (i32, i32) {
    %c0_i32 = arith.constant 0 : i32
    %c0_i32_0 = arith.constant 0 : i32
    %c0_i32_1 = arith.constant 0 : i32
    return %c0_i32, %c0_i32_0 : i32, i32
  }
  func.func @transform_3(%arg0: i32, %arg1: i32) -> (i32, i32) {
    %c0_i32 = arith.constant 0 : i32
    %c0_i32_0 = arith.constant 0 : i32
    return %c0_i32, %arg1 : i32, i32
  }
  func.func @transform_4(%arg0: i32, %arg1: i32) -> (i32, i32) {
    %c0_i32 = arith.constant 0 : i32
    %c0_i32_0 = arith.constant 0 : i32
    return %c0_i32, %arg1 : i32, i32
  }
  func.func @transform_5(%arg0: i32, %arg1: i32) -> (i32, i32) {
    %c0_i32 = arith.constant 0 : i32
    return %arg0, %arg1 : i32, i32
  }
}

module attributes {stable_mosaic.version = 11 : i64} {
  func.func @_matmul_kernel(%arg0: i32, %arg1: i32, %arg2: i32, %arg3: memref<64x128xbf16, #tpu.memory_space<vmem>>, %arg4: memref<128x128xbf16, #tpu.memory_space<vmem>>, %arg5: memref<1x128xf32, #tpu.memory_space<vmem>>, %arg6: memref<64x128xbf16, #tpu.memory_space<vmem>>, %arg7: memref<64x128xbf16, #tpu.memory_space<vmem>>, %arg8: memref<64x128xf32, #tpu.memory_space<vmem>>) attributes {dimension_semantics = [#tpu.dimension_semantics<parallel>, #tpu.dimension_semantics<parallel>, #tpu.dimension_semantics<arbitrary>], iteration_bounds = array<i64: 1, 1, 1>, scalar_prefetch = 0 : i64, scratch_operands = 1 : i64, tpu.core_type = #tpu.core_type<tc>, window_params = [{transform_indices = @transform_0, window_bounds = array<i64: 64, 128>}, {transform_indices = @transform_1, window_bounds = array<i64: 128, 128>}, {transform_indices = @transform_2, window_bounds = array<i64: 1, 128>}, {transform_indices = @transform_3, window_bounds = array<i64: 64, 128>}, {transform_indices = @transform_4, window_bounds = array<i64: 64, 128>}]} {
    %c0_i32 = arith.constant 0 : i32
    %0 = arith.cmpi eq, %arg2, %c0_i32 : i32
    %1 = arith.extui %0 : i1 to i32
    %c0_i32_0 = arith.constant 0 : i32
    %2 = arith.cmpi ne, %1, %c0_i32_0 : i32
    scf.if %2 {
      %cst_10 = arith.constant 0.000000e+00 : f32
      %12 = vector.broadcast %cst_10 : f32 to vector<64x128xf32>
      %c0_11 = arith.constant 0 : index
      %c0_12 = arith.constant 0 : index
      %13 = vector.load %arg8[%c0_11, %c0_12] : memref<64x128xf32, #tpu.memory_space<vmem>>, vector<64x128xf32>
      tpu.vector_store %arg8[%c0_11, %c0_12], %12 {strides = array<i32>} : memref<64x128xf32, #tpu.memory_space<vmem>>, vector<64x128xf32>,
    } else {
    }
    %c0 = arith.constant 0 : index
    %c0_1 = arith.constant 0 : index
    %3 = vector.load %arg8[%c0, %c0_1] : memref<64x128xf32, #tpu.memory_space<vmem>>, vector<64x128xf32>
    %c0_2 = arith.constant 0 : index
    %c0_3 = arith.constant 0 : index
    %4 = vector.load %arg3[%c0_2, %c0_3] : memref<64x128xbf16, #tpu.memory_space<vmem>>, vector<64x128xbf16>
    %c0_4 = arith.constant 0 : index
    %c0_5 = arith.constant 0 : index
    %5 = vector.load %arg4[%c0_4, %c0_5] : memref<128x128xbf16, #tpu.memory_space<vmem>>, vector<128x128xbf16>
    %cst = arith.constant dense<0.000000e+00> : vector<64x128xf32>
    %6 = tpu.matmul %4, %5, %cst {dimension_numbers = #tpu.dot_dimension_numbers<[1], [0], [0], [1], [0, 0, 1, 1], [], []>} : vector<64x128xbf16>, vector<128x128xbf16>, vector<64x128xf32> -> vector<64x128xf32>
    %7 = arith.addf %3, %6 : vector<64x128xf32>
    %c0_6 = arith.constant 0 : index
    %c0_7 = arith.constant 0 : index
    %8 = vector.load %arg8[%c0_6, %c0_7] : memref<64x128xf32, #tpu.memory_space<vmem>>, vector<64x128xf32>
    tpu.vector_store %arg8[%c0_6, %c0_7], %7 {strides = array<i32>} : memref<64x128xf32, #tpu.memory_space<vmem>>, vector<64x128xf32>,
    %c0_i32_8 = arith.constant 0 : i32
    %9 = arith.cmpi eq, %arg2, %c0_i32_8 : i32
    %10 = arith.extui %9 : i1 to i32
    %c0_i32_9 = arith.constant 0 : i32
    %11 = arith.cmpi ne, %10, %c0_i32_9 : i32
    scf.if %11 {
      %c0_10 = arith.constant 0 : index
      %c0_11 = arith.constant 0 : index
      %12 = vector.load %arg8[%c0_10, %c0_11] : memref<64x128xf32, #tpu.memory_space<vmem>>, vector<64x128xf32>
      %c0_12 = arith.constant 0 : index
      %c0_13 = arith.constant 0 : index
      %13 = vector.load %arg5[%c0_12, %c0_13] : memref<1x128xf32, #tpu.memory_space<vmem>>, vector<1x128xf32>
      %14 = vector.broadcast %13 : vector<1x128xf32> to vector<64x128xf32>
      %15 = arith.addf %12, %14 : vector<64x128xf32>
      %c0_14 = arith.constant 0 : index
      %c0_15 = arith.constant 0 : index
      %16 = vector.load %arg6[%c0_14, %c0_15] : memref<64x128xbf16, #tpu.memory_space<vmem>>, vector<64x128xbf16>
      %17 = arith.extf %16 : vector<64x128xbf16> to vector<64x128xf32>
      %18 = arith.addf %15, %17 : vector<64x128xf32>
      %19 = arith.truncf %18 : vector<64x128xf32> to vector<64x128xbf16>
      %c0_16 = arith.constant 0 : index
      %c0_17 = arith.constant 0 : index
      %20 = vector.load %arg7[%c0_16, %c0_17] : memref<64x128xbf16, #tpu.memory_space<vmem>>, vector<64x128xbf16>
      tpu.vector_store %arg7[%c0_16, %c0_17], %19 {strides = array<i32>} : memref<64x128xbf16, #tpu.memory_space<vmem>>, vector<64x128xbf16>,
    } else {
    }
    return
  }
  func.func @transform_0(%arg0: i32, %arg1: i32, %arg2: i32) -> (i32, i32) {
    %c0_i32 = arith.constant 0 : i32
    return %arg0, %arg2 : i32, i32
  }
  func.func @transform_1(%arg0: i32, %arg1: i32, %arg2: i32) -> (i32, i32) {
    %c0_i32 = arith.constant 0 : i32
    return %arg2, %arg1 : i32, i32
  }
  func.func @transform_2(%arg0: i32, %arg1: i32, %arg2: i32) -> (i32, i32) {
    %c0_i32 = arith.constant 0 : i32
    %c0_i32_0 = arith.constant 0 : i32
    return %c0_i32, %arg1 : i32, i32
  }
  func.func @transform_3(%arg0: i32, %arg1: i32, %arg2: i32) -> (i32, i32) {
    %c0_i32 = arith.constant 0 : i32
    return %arg0, %arg1 : i32, i32
  }
  func.func @transform_4(%arg0: i32, %arg1: i32, %arg2: i32) -> (i32, i32) {
    %c0_i32 = arith.constant 0 : i32
    return %arg0, %arg1 : i32, i32
  }
}

module attributes {stable_mosaic.version = 11 : i64} {
  func.func @_matmul_kernel(%arg0: i32, %arg1: i32, %arg2: i32, %arg3: memref<8x256xbf16, #tpu.memory_space<vmem>>, %arg4: memref<256x128xbf16, #tpu.memory_space<vmem>>, %arg5: memref<1x128xf32, #tpu.memory_space<vmem>>, %arg6: memref<8x128xbf16, #tpu.memory_space<vmem>>, %arg7: memref<8x128xf32, #tpu.memory_space<vmem>>) attributes {dimension_semantics = [#tpu.dimension_semantics<parallel>, #tpu.dimension_semantics<parallel>, #tpu.dimension_semantics<arbitrary>], iteration_bounds = array<i64: 1, 1, 1>, scalar_prefetch = 0 : i64, scratch_operands = 1 : i64, tpu.core_type = #tpu.core_type<tc>, window_params = [{transform_indices = @transform_0, window_bounds = array<i64: 8, 256>}, {transform_indices = @transform_1, window_bounds = array<i64: 256, 128>}, {transform_indices = @transform_2, window_bounds = array<i64: 1, 128>}, {transform_indices = @transform_3, window_bounds = array<i64: 8, 128>}]} {
    %c0_i32 = arith.constant 0 : i32
    %0 = arith.cmpi eq, %arg2, %c0_i32 : i32
    %1 = arith.extui %0 : i1 to i32
    %c0_i32_0 = arith.constant 0 : i32
    %2 = arith.cmpi ne, %1, %c0_i32_0 : i32
    scf.if %2 {
      %cst_10 = arith.constant 0.000000e+00 : f32
      %12 = vector.broadcast %cst_10 : f32 to vector<8x128xf32>
      %c0_11 = arith.constant 0 : index
      %c0_12 = arith.constant 0 : index
      %13 = vector.load %arg7[%c0_11, %c0_12] : memref<8x128xf32, #tpu.memory_space<vmem>>, vector<8x128xf32>
      tpu.vector_store %arg7[%c0_11, %c0_12], %12 {strides = array<i32>} : memref<8x128xf32, #tpu.memory_space<vmem>>, vector<8x128xf32>,
    } else {
    }
    %c0 = arith.constant 0 : index
    %c0_1 = arith.constant 0 : index
    %3 = vector.load %arg7[%c0, %c0_1] : memref<8x128xf32, #tpu.memory_space<vmem>>, vector<8x128xf32>
    %c0_2 = arith.constant 0 : index
    %c0_3 = arith.constant 0 : index
    %4 = vector.load %arg3[%c0_2, %c0_3] : memref<8x256xbf16, #tpu.memory_space<vmem>>, vector<8x256xbf16>
    %c0_4 = arith.constant 0 : index
    %c0_5 = arith.constant 0 : index
    %5 = vector.load %arg4[%c0_4, %c0_5] : memref<256x128xbf16, #tpu.memory_space<vmem>>, vector<256x128xbf16>
    %cst = arith.constant dense<0.000000e+00> : vector<8x128xf32>
    %6 = tpu.matmul %4, %5, %cst {dimension_numbers = #tpu.dot_dimension_numbers<[1], [0], [0], [1], [0, 0, 1, 1], [], []>} : vector<8x256xbf16>, vector<256x128xbf16>, vector<8x128xf32> -> vector<8x128xf32>
    %7 = arith.addf %3, %6 : vector<8x128xf32>
    %c0_6 = arith.constant 0 : index
    %c0_7 = arith.constant 0 : index
    %8 = vector.load %arg7[%c0_6, %c0_7] : memref<8x128xf32, #tpu.memory_space<vmem>>, vector<8x128xf32>
    tpu.vector_store %arg7[%c0_6, %c0_7], %7 {strides = array<i32>} : memref<8x128xf32, #tpu.memory_space<vmem>>, vector<8x128xf32>,
    %c0_i32_8 = arith.constant 0 : i32
    %9 = arith.cmpi eq, %arg2, %c0_i32_8 : i32
    %10 = arith.extui %9 : i1 to i32
    %c0_i32_9 = arith.constant 0 : i32
    %11 = arith.cmpi ne, %10, %c0_i32_9 : i32
    scf.if %11 {
      %c0_10 = arith.constant 0 : index
      %c0_11 = arith.constant 0 : index
      %12 = vector.load %arg7[%c0_10, %c0_11] : memref<8x128xf32, #tpu.memory_space<vmem>>, vector<8x128xf32>
      %c0_12 = arith.constant 0 : index
      %c0_13 = arith.constant 0 : index
      %13 = vector.load %arg5[%c0_12, %c0_13] : memref<1x128xf32, #tpu.memory_space<vmem>>, vector<1x128xf32>
      %14 = vector.broadcast %13 : vector<1x128xf32> to vector<8x128xf32>
      %15 = arith.addf %12, %14 : vector<8x128xf32>
      %16 = arith.truncf %15 : vector<8x128xf32> to vector<8x128xbf16>
      %c0_14 = arith.constant 0 : index
      %c0_15 = arith.constant 0 : index
      %17 = vector.load %arg6[%c0_14, %c0_15] : memref<8x128xbf16, #tpu.memory_space<vmem>>, vector<8x128xbf16>
      tpu.vector_store %arg6[%c0_14, %c0_15], %16 {strides = array<i32>} : memref<8x128xbf16, #tpu.memory_space<vmem>>, vector<8x128xbf16>,
    } else {
    }
    return
  }
  func.func @transform_0(%arg0: i32, %arg1: i32, %arg2: i32) -> (i32, i32) {
    %c0_i32 = arith.constant 0 : i32
    return %arg0, %arg2 : i32, i32
  }
  func.func @transform_1(%arg0: i32, %arg1: i32, %arg2: i32) -> (i32, i32) {
    %c0_i32 = arith.constant 0 : i32
    return %arg2, %arg1 : i32, i32
  }
  func.func @transform_2(%arg0: i32, %arg1: i32, %arg2: i32) -> (i32, i32) {
    %c0_i32 = arith.constant 0 : i32
    %c0_i32_0 = arith.constant 0 : i32
    return %c0_i32, %arg1 : i32, i32
  }
  func.func @transform_3(%arg0: i32, %arg1: i32, %arg2: i32) -> (i32, i32) {
    %c0_i32 = arith.constant 0 : i32
    return %arg0, %arg1 : i32, i32
  }
}

module attributes {stable_mosaic.version = 11 : i64} {
  func.func @_ln_linear_kernel(%arg0: i32, %arg1: i32, %arg2: memref<16x64xbf16, #tpu.memory_space<vmem>>, %arg3: memref<1x64xf32, #tpu.memory_space<vmem>>, %arg4: memref<1x64xf32, #tpu.memory_space<vmem>>, %arg5: memref<64x256xbf16, #tpu.memory_space<vmem>>, %arg6: memref<1x256xf32, #tpu.memory_space<vmem>>, %arg7: memref<16x256xbf16, #tpu.memory_space<vmem>>) attributes {dimension_semantics = [#tpu.dimension_semantics<parallel>, #tpu.dimension_semantics<parallel>], iteration_bounds = array<i64: 1, 1>, scalar_prefetch = 0 : i64, scratch_operands = 0 : i64, tpu.core_type = #tpu.core_type<tc>, window_params = [{transform_indices = @transform_0, window_bounds = array<i64: 16, 64>}, {pipeline_mode = #tpu.pipeline_mode<synchronous>, transform_indices = @transform_1, window_bounds = array<i64: 1, 64>}, {pipeline_mode = #tpu.pipeline_mode<synchronous>, transform_indices = @transform_2, window_bounds = array<i64: 1, 64>}, {transform_indices = @transform_3, window_bounds = array<i64: 64, 256>}, {transform_indices = @transform_4, window_bounds = array<i64: 1, 256>}, {transform_indices = @transform_5, window_bounds = array<i64: 16, 256>}]} {
    %c0 = arith.constant 0 : index
    %c0_0 = arith.constant 0 : index
    %0 = vector.load %arg2[%c0, %c0_0] : memref<16x64xbf16, #tpu.memory_space<vmem>>, vector<16x64xbf16>
    %1 = arith.extf %0 : vector<16x64xbf16> to vector<16x64xf32>
    %cst = arith.constant dense<0.000000e+00> : vector<16xf32>
    %2 = vector.multi_reduction <add>, %1, %cst [1] : vector<16x64xf32> to vector<16xf32>
    %3 = vector.shape_cast %2 : vector<16xf32> to vector<16x1xf32>
    %cst_1 = arith.constant 6.400000e+01 : f32
    %4 = vector.broadcast %cst_1 : f32 to vector<16x1xf32>
    %5 = arith.divf %3, %4 : vector<16x1xf32>
    %6 = vector.broadcast %5 : vector<16x1xf32> to vector<16x64xf32>
    %7 = arith.subf %1, %6 : vector<16x64xf32>
    %8 = arith.mulf %7, %7 : vector<16x64xf32>
    %cst_2 = arith.constant dense<0.000000e+00> : vector<16xf32>
    %9 = vector.multi_reduction <add>, %8, %cst_2 [1] : vector<16x64xf32> to vector<16xf32>
    %10 = vector.shape_cast %9 : vector<16xf32> to vector<16x1xf32>
    %cst_3 = arith.constant 6.400000e+01 : f32
    %11 = vector.broadcast %cst_3 : f32 to vector<16x1xf32>
    %12 = arith.divf %10, %11 : vector<16x1xf32>
    %13 = vector.broadcast %5 : vector<16x1xf32> to vector<16x64xf32>
    %14 = arith.subf %1, %13 : vector<16x64xf32>
    %cst_4 = arith.constant 9.99999974E-6 : f32
    %15 = vector.broadcast %cst_4 : f32 to vector<16x1xf32>
    %16 = arith.addf %12, %15 : vector<16x1xf32>
    %17 = math.rsqrt %16 : vector<16x1xf32>
    %18 = vector.broadcast %17 : vector<16x1xf32> to vector<16x64xf32>
    %19 = arith.mulf %14, %18 : vector<16x64xf32>
    %c0_5 = arith.constant 0 : index
    %c0_6 = arith.constant 0 : index
    %20 = vector.load %arg3[%c0_5, %c0_6] : memref<1x64xf32, #tpu.memory_space<vmem>>, vector<1x64xf32>
    %21 = vector.broadcast %20 : vector<1x64xf32> to vector<16x64xf32>
    %22 = arith.mulf %19, %21 : vector<16x64xf32>
    %c0_7 = arith.constant 0 : index
    %c0_8 = arith.constant 0 : index
    %23 = vector.load %arg4[%c0_7, %c0_8] : memref<1x64xf32, #tpu.memory_space<vmem>>, vector<1x64xf32>
    %24 = vector.broadcast %23 : vector<1x64xf32> to vector<16x64xf32>
    %25 = arith.addf %22, %24 : vector<16x64xf32>
    %26 = arith.truncf %25 : vector<16x64xf32> to vector<16x64xbf16>
    %c0_9 = arith.constant 0 : index
    %c0_10 = arith.constant 0 : index
    %27 = vector.load %arg5[%c0_9, %c0_10] : memref<64x256xbf16, #tpu.memory_space<vmem>>, vector<64x256xbf16>
    %cst_11 = arith.constant dense<0.000000e+00> : vector<16x256xf32>
    %28 = tpu.matmul %26, %27, %cst_11 {dimension_numbers = #tpu.dot_dimension_numbers<[1], [0], [0], [1], [0, 0, 1, 1], [], []>} : vector<16x64xbf16>, vector<64x256xbf16>, vector<16x256xf32> -> vector<16x256xf32>
    %c0_12 = arith.constant 0 : index
    %c0_13 = arith.constant 0 : index
    %29 = vector.load %arg6[%c0_12, %c0_13] : memref<1x256xf32, #tpu.memory_space<vmem>>, vector<1x256xf32>
    %30 = vector.broadcast %29 : vector<1x256xf32> to vector<16x256xf32>
    %31 = arith.addf %28, %30 : vector<16x256xf32>
    %32 = arith.truncf %31 : vector<16x256xf32> to vector<16x256xbf16>
    %c0_14 = arith.constant 0 : index
    %c0_15 = arith.constant 0 : index
    %33 = vector.load %arg7[%c0_14, %c0_15] : memref<16x256xbf16, #tpu.memory_space<vmem>>, vector<16x256xbf16>
    tpu.vector_store %arg7[%c0_14, %c0_15], %32 {strides = array<i32>} : memref<16x256xbf16, #tpu.memory_space<vmem>>, vector<16x256xbf16>,
    return
  }
  func.func @transform_0(%arg0: i32, %arg1: i32) -> (i32, i32) {
    %c0_i32 = arith.constant 0 : i32
    %c0_i32_0 = arith.constant 0 : i32
    return %arg0, %c0_i32 : i32, i32
  }
  func.func @transform_1(%arg0: i32, %arg1: i32) -> (i32, i32) {
    %c0_i32 = arith.constant 0 : i32
    %c0_i32_0 = arith.constant 0 : i32
    %c0_i32_1 = arith.constant 0 : i32
    return %c0_i32, %c0_i32_0 : i32, i32
  }
  func.func @transform_2(%arg0: i32, %arg1: i32) -> (i32, i32) {
    %c0_i32 = arith.constant 0 : i32
    %c0_i32_0 = arith.constant 0 : i32
    %c0_i32_1 = arith.constant 0 : i32
    return %c0_i32, %c0_i32_0 : i32, i32
  }
  func.func @transform_3(%arg0: i32, %arg1: i32) -> (i32, i32) {
    %c0_i32 = arith.constant 0 : i32
    %c0_i32_0 = arith.constant 0 : i32
    return %c0_i32, %arg1 : i32, i32
  }
  func.func @transform_4(%arg0: i32, %arg1: i32) -> (i32, i32) {
    %c0_i32 = arith.constant 0 : i32
    %c0_i32_0 = arith.constant 0 : i32
    return %c0_i32, %arg1 : i32, i32
  }
  func.func @transform_5(%arg0: i32, %arg1: i32) -> (i32, i32) {
    %c0_i32 = arith.constant 0 : i32
    return %arg0, %arg1 : i32, i32
  }
}

module attributes {stable_mosaic.version = 11 : i64} {
  func.func @_matmul_kernel(%arg0: i32, %arg1: i32, %arg2: i32, %arg3: memref<16x128xbf16, #tpu.memory_space<vmem>>, %arg4: memref<128x128xbf16, #tpu.memory_space<vmem>>, %arg5: memref<1x128xf32, #tpu.memory_space<vmem>>, %arg6: memref<16x128xbf16, #tpu.memory_space<vmem>>, %arg7: memref<16x128xbf16, #tpu.memory_space<vmem>>, %arg8: memref<16x128xf32, #tpu.memory_space<vmem>>) attributes {dimension_semantics = [#tpu.dimension_semantics<parallel>, #tpu.dimension_semantics<parallel>, #tpu.dimension_semantics<arbitrary>], iteration_bounds = array<i64: 1, 1, 1>, scalar_prefetch = 0 : i64, scratch_operands = 1 : i64, tpu.core_type = #tpu.core_type<tc>, window_params = [{transform_indices = @transform_0, window_bounds = array<i64: 16, 128>}, {transform_indices = @transform_1, window_bounds = array<i64: 128, 128>}, {transform_indices = @transform_2, window_bounds = array<i64: 1, 128>}, {transform_indices = @transform_3, window_bounds = array<i64: 16, 128>}, {transform_indices = @transform_4, window_bounds = array<i64: 16, 128>}]} {
    %c0_i32 = arith.constant 0 : i32
    %0 = arith.cmpi eq, %arg2, %c0_i32 : i32
    %1 = arith.extui %0 : i1 to i32
    %c0_i32_0 = arith.constant 0 : i32
    %2 = arith.cmpi ne, %1, %c0_i32_0 : i32
    scf.if %2 {
      %cst_10 = arith.constant 0.000000e+00 : f32
      %12 = vector.broadcast %cst_10 : f32 to vector<16x128xf32>
      %c0_11 = arith.constant 0 : index
      %c0_12 = arith.constant 0 : index
      %13 = vector.load %arg8[%c0_11, %c0_12] : memref<16x128xf32, #tpu.memory_space<vmem>>, vector<16x128xf32>
      tpu.vector_store %arg8[%c0_11, %c0_12], %12 {strides = array<i32>} : memref<16x128xf32, #tpu.memory_space<vmem>>, vector<16x128xf32>,
    } else {
    }
    %c0 = arith.constant 0 : index
    %c0_1 = arith.constant 0 : index
    %3 = vector.load %arg8[%c0, %c0_1] : memref<16x128xf32, #tpu.memory_space<vmem>>, vector<16x128xf32>
    %c0_2 = arith.constant 0 : index
    %c0_3 = arith.constant 0 : index
    %4 = vector.load %arg3[%c0_2, %c0_3] : memref<16x128xbf16, #tpu.memory_space<vmem>>, vector<16x128xbf16>
    %c0_4 = arith.constant 0 : index
    %c0_5 = arith.constant 0 : index
    %5 = vector.load %arg4[%c0_4, %c0_5] : memref<128x128xbf16, #tpu.memory_space<vmem>>, vector<128x128xbf16>
    %cst = arith.constant dense<0.000000e+00> : vector<16x128xf32>
    %6 = tpu.matmul %4, %5, %cst {dimension_numbers = #tpu.dot_dimension_numbers<[1], [0], [0], [1], [0, 0, 1, 1], [], []>} : vector<16x128xbf16>, vector<128x128xbf16>, vector<16x128xf32> -> vector<16x128xf32>
    %7 = arith.addf %3, %6 : vector<16x128xf32>
    %c0_6 = arith.constant 0 : index
    %c0_7 = arith.constant 0 : index
    %8 = vector.load %arg8[%c0_6, %c0_7] : memref<16x128xf32, #tpu.memory_space<vmem>>, vector<16x128xf32>
    tpu.vector_store %arg8[%c0_6, %c0_7], %7 {strides = array<i32>} : memref<16x128xf32, #tpu.memory_space<vmem>>, vector<16x128xf32>,
    %c0_i32_8 = arith.constant 0 : i32
    %9 = arith.cmpi eq, %arg2, %c0_i32_8 : i32
    %10 = arith.extui %9 : i1 to i32
    %c0_i32_9 = arith.constant 0 : i32
    %11 = arith.cmpi ne, %10, %c0_i32_9 : i32
    scf.if %11 {
      %c0_10 = arith.constant 0 : index
      %c0_11 = arith.constant 0 : index
      %12 = vector.load %arg8[%c0_10, %c0_11] : memref<16x128xf32, #tpu.memory_space<vmem>>, vector<16x128xf32>
      %c0_12 = arith.constant 0 : index
      %c0_13 = arith.constant 0 : index
      %13 = vector.load %arg5[%c0_12, %c0_13] : memref<1x128xf32, #tpu.memory_space<vmem>>, vector<1x128xf32>
      %14 = vector.broadcast %13 : vector<1x128xf32> to vector<16x128xf32>
      %15 = arith.addf %12, %14 : vector<16x128xf32>
      %c0_14 = arith.constant 0 : index
      %c0_15 = arith.constant 0 : index
      %16 = vector.load %arg6[%c0_14, %c0_15] : memref<16x128xbf16, #tpu.memory_space<vmem>>, vector<16x128xbf16>
      %17 = arith.extf %16 : vector<16x128xbf16> to vector<16x128xf32>
      %18 = arith.addf %15, %17 : vector<16x128xf32>
      %19 = arith.truncf %18 : vector<16x128xf32> to vector<16x128xbf16>
      %c0_16 = arith.constant 0 : index
      %c0_17 = arith.constant 0 : index
      %20 = vector.load %arg7[%c0_16, %c0_17] : memref<16x128xbf16, #tpu.memory_space<vmem>>, vector<16x128xbf16>
      tpu.vector_store %arg7[%c0_16, %c0_17], %19 {strides = array<i32>} : memref<16x128xbf16, #tpu.memory_space<vmem>>, vector<16x128xbf16>,
    } else {
    }
    return
  }
  func.func @transform_0(%arg0: i32, %arg1: i32, %arg2: i32) -> (i32, i32) {
    %c0_i32 = arith.constant 0 : i32
    return %arg0, %arg2 : i32, i32
  }
  func.func @transform_1(%arg0: i32, %arg1: i32, %arg2: i32) -> (i32, i32) {
    %c0_i32 = arith.constant 0 : i32
    return %arg2, %arg1 : i32, i32
  }
  func.func @transform_2(%arg0: i32, %arg1: i32, %arg2: i32) -> (i32, i32) {
    %c0_i32 = arith.constant 0 : i32
    %c0_i32_0 = arith.constant 0 : i32
    return %c0_i32, %arg1 : i32, i32
  }
  func.func @transform_3(%arg0: i32, %arg1: i32, %arg2: i32) -> (i32, i32) {
    %c0_i32 = arith.constant 0 : i32
    return %arg0, %arg1 : i32, i32
  }
  func.func @transform_4(%arg0: i32, %arg1: i32, %arg2: i32) -> (i32, i32) {
    %c0_i32 = arith.constant 0 : i32
    return %arg0, %arg1 : i32, i32
  }
}

module attributes {stable_mosaic.version = 11 : i64} {
  func.func @_attn_kernel(%arg0: i32, %arg1: i32, %arg2: memref<1x4x5x16xbf16, #tpu.memory_space<vmem>>, %arg3: memref<1x4x5x16xbf16, #tpu.memory_space<vmem>>, %arg4: memref<1x4x5x16xbf16, #tpu.memory_space<vmem>>, %arg5: memref<1x5x64xbf16, #tpu.memory_space<vmem>>) attributes {dimension_semantics = [#tpu.dimension_semantics<parallel>, #tpu.dimension_semantics<parallel>], iteration_bounds = array<i64: 2, 1>, scalar_prefetch = 0 : i64, scratch_operands = 0 : i64, tpu.core_type = #tpu.core_type<tc>, window_params = [{transform_indices = @transform_0, window_bounds = array<i64: 1, 4, 5, 16>}, {transform_indices = @transform_1, window_bounds = array<i64: 1, 4, 5, 16>}, {transform_indices = @transform_2, window_bounds = array<i64: 1, 4, 5, 16>}, {transform_indices = @transform_3, window_bounds = array<i64: 1, 5, 64>}]} {
    %c0 = arith.constant 0 : index
    %c0_0 = arith.constant 0 : index
    %c0_1 = arith.constant 0 : index
    %c0_2 = arith.constant 0 : index
    %0 = vector.load %arg2[%c0, %c0_0, %c0_1, %c0_2] : memref<1x4x5x16xbf16, #tpu.memory_space<vmem>>, vector<1x1x5x16xbf16>
    %1 = vector.shape_cast %0 : vector<1x1x5x16xbf16> to vector<5x16xbf16>
    %c0_3 = arith.constant 0 : index
    %c0_4 = arith.constant 0 : index
    %c0_5 = arith.constant 0 : index
    %c0_6 = arith.constant 0 : index
    %2 = vector.load %arg3[%c0_3, %c0_4, %c0_5, %c0_6] : memref<1x4x5x16xbf16, #tpu.memory_space<vmem>>, vector<1x1x5x16xbf16>
    %3 = vector.shape_cast %2 : vector<1x1x5x16xbf16> to vector<5x16xbf16>
    %c0_7 = arith.constant 0 : index
    %c0_8 = arith.constant 0 : index
    %c0_9 = arith.constant 0 : index
    %c0_10 = arith.constant 0 : index
    %4 = vector.load %arg4[%c0_7, %c0_8, %c0_9, %c0_10] : memref<1x4x5x16xbf16, #tpu.memory_space<vmem>>, vector<1x1x5x16xbf16>
    %5 = vector.shape_cast %4 : vector<1x1x5x16xbf16> to vector<5x16xbf16>
    %cst = arith.constant dense<0.000000e+00> : vector<5x5xf32>
    %6 = tpu.matmul %1, %3, %cst {dimension_numbers = #tpu.dot_dimension_numbers<[1], [1], [0], [0], [0, 0, 1, 0], [], []>} : vector<5x16xbf16>, vector<5x16xbf16>, vector<5x5xf32> -> vector<5x5xf32>
    %cst_11 = arith.constant 2.500000e-01 : f32
    %7 = vector.broadcast %cst_11 : f32 to vector<5x5xf32>
    %8 = arith.mulf %6, %7 : vector<5x5xf32>
    %cst_12 = arith.constant dense<0xFF800000> : vector<5xf32>
    %9 = vector.multi_reduction <maximumf>, %8, %cst_12 [1] : vector<5x5xf32> to vector<5xf32>
    %10 = vector.shape_cast %9 : vector<5xf32> to vector<5x1xf32>
    %11 = vector.broadcast %10 : vector<5x1xf32> to vector<5x5xf32>
    %12 = arith.subf %8, %11 : vector<5x5xf32>
    %13 = math.exp %12 : vector<5x5xf32>
    %cst_13 = arith.constant dense<0.000000e+00> : vector<5xf32>
    %14 = vector.multi_reduction <add>, %13, %cst_13 [1] : vector<5x5xf32> to vector<5xf32>
    %15 = vector.shape_cast %14 : vector<5xf32> to vector<5x1xf32>
    %16 = tpu.reciprocal %15 {approx = true} : vector<5x1xf32> -> vector<5x1xf32>
    %17 = vector.broadcast %16 : vector<5x1xf32> to vector<5x5xf32>
    %18 = arith.mulf %13, %17 : vector<5x5xf32>
    %19 = arith.truncf %18 : vector<5x5xf32> to vector<5x5xbf16>
    %cst_14 = arith.constant dense<0.000000e+00> : vector<5x16xf32>
    %20 = tpu.matmul %19, %5, %cst_14 {dimension_numbers = #tpu.dot_dimension_numbers<[1], [0], [0], [1], [0, 0, 1, 1], [], []>} : vector<5x5xbf16>, vector<5x16xbf16>, vector<5x16xf32> -> vector<5x16xf32>
    %21 = arith.truncf %20 : vector<5x16xf32> to vector<5x16xbf16>
    %c0_15 = arith.constant 0 : index
    %c1 = arith.constant 1 : index
    %c0_16 = arith.constant 0 : index
    %c0_17 = arith.constant 0 : index
    %22 = vector.load %arg2[%c0_15, %c1, %c0_16, %c0_17] : memref<1x4x5x16xbf16, #tpu.memory_space<vmem>>, vector<1x1x5x16xbf16>
    %23 = vector.shape_cast %22 : vector<1x1x5x16xbf16> to vector<5x16xbf16>
    %c0_18 = arith.constant 0 : index
    %c1_19 = arith.constant 1 : index
    %c0_20 = arith.constant 0 : index
    %c0_21 = arith.constant 0 : index
    %24 = vector.load %arg3[%c0_18, %c1_19, %c0_20, %c0_21] : memref<1x4x5x16xbf16, #tpu.memory_space<vmem>>, vector<1x1x5x16xbf16>
    %25 = vector.shape_cast %24 : vector<1x1x5x16xbf16> to vector<5x16xbf16>
    %c0_22 = arith.constant 0 : index
    %c1_23 = arith.constant 1 : index
    %c0_24 = arith.constant 0 : index
    %c0_25 = arith.constant 0 : index
    %26 = vector.load %arg4[%c0_22, %c1_23, %c0_24, %c0_25] : memref<1x4x5x16xbf16, #tpu.memory_space<vmem>>, vector<1x1x5x16xbf16>
    %27 = vector.shape_cast %26 : vector<1x1x5x16xbf16> to vector<5x16xbf16>
    %cst_26 = arith.constant dense<0.000000e+00> : vector<5x5xf32>
    %28 = tpu.matmul %23, %25, %cst_26 {dimension_numbers = #tpu.dot_dimension_numbers<[1], [1], [0], [0], [0, 0, 1, 0], [], []>} : vector<5x16xbf16>, vector<5x16xbf16>, vector<5x5xf32> -> vector<5x5xf32>
    %cst_27 = arith.constant 2.500000e-01 : f32
    %29 = vector.broadcast %cst_27 : f32 to vector<5x5xf32>
    %30 = arith.mulf %28, %29 : vector<5x5xf32>
    %cst_28 = arith.constant dense<0xFF800000> : vector<5xf32>
    %31 = vector.multi_reduction <maximumf>, %30, %cst_28 [1] : vector<5x5xf32> to vector<5xf32>
    %32 = vector.shape_cast %31 : vector<5xf32> to vector<5x1xf32>
    %33 = vector.broadcast %32 : vector<5x1xf32> to vector<5x5xf32>
    %34 = arith.subf %30, %33 : vector<5x5xf32>
    %35 = math.exp %34 : vector<5x5xf32>
    %cst_29 = arith.constant dense<0.000000e+00> : vector<5xf32>
    %36 = vector.multi_reduction <add>, %35, %cst_29 [1] : vector<5x5xf32> to vector<5xf32>
    %37 = vector.shape_cast %36 : vector<5xf32> to vector<5x1xf32>
    %38 = tpu.reciprocal %37 {approx = true} : vector<5x1xf32> -> vector<5x1xf32>
    %39 = vector.broadcast %38 : vector<5x1xf32> to vector<5x5xf32>
    %40 = arith.mulf %35, %39 : vector<5x5xf32>
    %41 = arith.truncf %40 : vector<5x5xf32> to vector<5x5xbf16>
    %cst_30 = arith.constant dense<0.000000e+00> : vector<5x16xf32>
    %42 = tpu.matmul %41, %27, %cst_30 {dimension_numbers = #tpu.dot_dimension_numbers<[1], [0], [0], [1], [0, 0, 1, 1], [], []>} : vector<5x5xbf16>, vector<5x16xbf16>, vector<5x16xf32> -> vector<5x16xf32>
    %43 = arith.truncf %42 : vector<5x16xf32> to vector<5x16xbf16>
    %c0_31 = arith.constant 0 : index
    %c2 = arith.constant 2 : index
    %c0_32 = arith.constant 0 : index
    %c0_33 = arith.constant 0 : index
    %44 = vector.load %arg2[%c0_31, %c2, %c0_32, %c0_33] : memref<1x4x5x16xbf16, #tpu.memory_space<vmem>>, vector<1x1x5x16xbf16>
    %45 = vector.shape_cast %44 : vector<1x1x5x16xbf16> to vector<5x16xbf16>
    %c0_34 = arith.constant 0 : index
    %c2_35 = arith.constant 2 : index
    %c0_36 = arith.constant 0 : index
    %c0_37 = arith.constant 0 : index
    %46 = vector.load %arg3[%c0_34, %c2_35, %c0_36, %c0_37] : memref<1x4x5x16xbf16, #tpu.memory_space<vmem>>, vector<1x1x5x16xbf16>
    %47 = vector.shape_cast %46 : vector<1x1x5x16xbf16> to vector<5x16xbf16>
    %c0_38 = arith.constant 0 : index
    %c2_39 = arith.constant 2 : index
    %c0_40 = arith.constant 0 : index
    %c0_41 = arith.constant 0 : index
    %48 = vector.load %arg4[%c0_38, %c2_39, %c0_40, %c0_41] : memref<1x4x5x16xbf16, #tpu.memory_space<vmem>>, vector<1x1x5x16xbf16>
    %49 = vector.shape_cast %48 : vector<1x1x5x16xbf16> to vector<5x16xbf16>
    %cst_42 = arith.constant dense<0.000000e+00> : vector<5x5xf32>
    %50 = tpu.matmul %45, %47, %cst_42 {dimension_numbers = #tpu.dot_dimension_numbers<[1], [1], [0], [0], [0, 0, 1, 0], [], []>} : vector<5x16xbf16>, vector<5x16xbf16>, vector<5x5xf32> -> vector<5x5xf32>
    %cst_43 = arith.constant 2.500000e-01 : f32
    %51 = vector.broadcast %cst_43 : f32 to vector<5x5xf32>
    %52 = arith.mulf %50, %51 : vector<5x5xf32>
    %cst_44 = arith.constant dense<0xFF800000> : vector<5xf32>
    %53 = vector.multi_reduction <maximumf>, %52, %cst_44 [1] : vector<5x5xf32> to vector<5xf32>
    %54 = vector.shape_cast %53 : vector<5xf32> to vector<5x1xf32>
    %55 = vector.broadcast %54 : vector<5x1xf32> to vector<5x5xf32>
    %56 = arith.subf %52, %55 : vector<5x5xf32>
    %57 = math.exp %56 : vector<5x5xf32>
    %cst_45 = arith.constant dense<0.000000e+00> : vector<5xf32>
    %58 = vector.multi_reduction <add>, %57, %cst_45 [1] : vector<5x5xf32> to vector<5xf32>
    %59 = vector.shape_cast %58 : vector<5xf32> to vector<5x1xf32>
    %60 = tpu.reciprocal %59 {approx = true} : vector<5x1xf32> -> vector<5x1xf32>
    %61 = vector.broadcast %60 : vector<5x1xf32> to vector<5x5xf32>
    %62 = arith.mulf %57, %61 : vector<5x5xf32>
    %63 = arith.truncf %62 : vector<5x5xf32> to vector<5x5xbf16>
    %cst_46 = arith.constant dense<0.000000e+00> : vector<5x16xf32>
    %64 = tpu.matmul %63, %49, %cst_46 {dimension_numbers = #tpu.dot_dimension_numbers<[1], [0], [0], [1], [0, 0, 1, 1], [], []>} : vector<5x5xbf16>, vector<5x16xbf16>, vector<5x16xf32> -> vector<5x16xf32>
    %65 = arith.truncf %64 : vector<5x16xf32> to vector<5x16xbf16>
    %c0_47 = arith.constant 0 : index
    %c3 = arith.constant 3 : index
    %c0_48 = arith.constant 0 : index
    %c0_49 = arith.constant 0 : index
    %66 = vector.load %arg2[%c0_47, %c3, %c0_48, %c0_49] : memref<1x4x5x16xbf16, #tpu.memory_space<vmem>>, vector<1x1x5x16xbf16>
    %67 = vector.shape_cast %66 : vector<1x1x5x16xbf16> to vector<5x16xbf16>
    %c0_50 = arith.constant 0 : index
    %c3_51 = arith.constant 3 : index
    %c0_52 = arith.constant 0 : index
    %c0_53 = arith.constant 0 : index
    %68 = vector.load %arg3[%c0_50, %c3_51, %c0_52, %c0_53] : memref<1x4x5x16xbf16, #tpu.memory_space<vmem>>, vector<1x1x5x16xbf16>
    %69 = vector.shape_cast %68 : vector<1x1x5x16xbf16> to vector<5x16xbf16>
    %c0_54 = arith.constant 0 : index
    %c3_55 = arith.constant 3 : index
    %c0_56 = arith.constant 0 : index
    %c0_57 = arith.constant 0 : index
    %70 = vector.load %arg4[%c0_54, %c3_55, %c0_56, %c0_57] : memref<1x4x5x16xbf16, #tpu.memory_space<vmem>>, vector<1x1x5x16xbf16>
    %71 = vector.shape_cast %70 : vector<1x1x5x16xbf16> to vector<5x16xbf16>
    %cst_58 = arith.constant dense<0.000000e+00> : vector<5x5xf32>
    %72 = tpu.matmul %67, %69, %cst_58 {dimension_numbers = #tpu.dot_dimension_numbers<[1], [1], [0], [0], [0, 0, 1, 0], [], []>} : vector<5x16xbf16>, vector<5x16xbf16>, vector<5x5xf32> -> vector<5x5xf32>
    %cst_59 = arith.constant 2.500000e-01 : f32
    %73 = vector.broadcast %cst_59 : f32 to vector<5x5xf32>
    %74 = arith.mulf %72, %73 : vector<5x5xf32>
    %cst_60 = arith.constant dense<0xFF800000> : vector<5xf32>
    %75 = vector.multi_reduction <maximumf>, %74, %cst_60 [1] : vector<5x5xf32> to vector<5xf32>
    %76 = vector.shape_cast %75 : vector<5xf32> to vector<5x1xf32>
    %77 = vector.broadcast %76 : vector<5x1xf32> to vector<5x5xf32>
    %78 = arith.subf %74, %77 : vector<5x5xf32>
    %79 = math.exp %78 : vector<5x5xf32>
    %cst_61 = arith.constant dense<0.000000e+00> : vector<5xf32>
    %80 = vector.multi_reduction <add>, %79, %cst_61 [1] : vector<5x5xf32> to vector<5xf32>
    %81 = vector.shape_cast %80 : vector<5xf32> to vector<5x1xf32>
    %82 = tpu.reciprocal %81 {approx = true} : vector<5x1xf32> -> vector<5x1xf32>
    %83 = vector.broadcast %82 : vector<5x1xf32> to vector<5x5xf32>
    %84 = arith.mulf %79, %83 : vector<5x5xf32>
    %85 = arith.truncf %84 : vector<5x5xf32> to vector<5x5xbf16>
    %cst_62 = arith.constant dense<0.000000e+00> : vector<5x16xf32>
    %86 = tpu.matmul %85, %71, %cst_62 {dimension_numbers = #tpu.dot_dimension_numbers<[1], [0], [0], [1], [0, 0, 1, 1], [], []>} : vector<5x5xbf16>, vector<5x16xbf16>, vector<5x16xf32> -> vector<5x16xf32>
    %87 = arith.truncf %86 : vector<5x16xf32> to vector<5x16xbf16>
    %88 = tpu.concatenate %21, %43, %65, %87 in 1 : vector<5x16xbf16>, vector<5x16xbf16>, vector<5x16xbf16>, vector<5x16xbf16> -> vector<5x64xbf16>
    %c0_63 = arith.constant 0 : index
    %c0_64 = arith.constant 0 : index
    %c0_65 = arith.constant 0 : index
    %89 = vector.load %arg5[%c0_63, %c0_64, %c0_65] : memref<1x5x64xbf16, #tpu.memory_space<vmem>>, vector<1x5x64xbf16>
    %90 = vector.shape_cast %89 : vector<1x5x64xbf16> to vector<5x64xbf16>
    %91 = vector.shape_cast %88 : vector<5x64xbf16> to vector<1x5x64xbf16>
    tpu.vector_store %arg5[%c0_63, %c0_64, %c0_65], %91 {strides = array<i32>} : memref<1x5x64xbf16, #tpu.memory_space<vmem>>, vector<1x5x64xbf16>,
    return
  }
  func.func @transform_0(%arg0: i32, %arg1: i32) -> (i32, i32, i32, i32) {
    %c0_i32 = arith.constant 0 : i32
    %c0_i32_0 = arith.constant 0 : i32
    %c0_i32_1 = arith.constant 0 : i32
    return %arg0, %arg1, %c0_i32, %c0_i32_0 : i32, i32, i32, i32
  }
  func.func @transform_1(%arg0: i32, %arg1: i32) -> (i32, i32, i32, i32) {
    %c0_i32 = arith.constant 0 : i32
    %c0_i32_0 = arith.constant 0 : i32
    %c0_i32_1 = arith.constant 0 : i32
    return %arg0, %arg1, %c0_i32, %c0_i32_0 : i32, i32, i32, i32
  }
  func.func @transform_2(%arg0: i32, %arg1: i32) -> (i32, i32, i32, i32) {
    %c0_i32 = arith.constant 0 : i32
    %c0_i32_0 = arith.constant 0 : i32
    %c0_i32_1 = arith.constant 0 : i32
    return %arg0, %arg1, %c0_i32, %c0_i32_0 : i32, i32, i32, i32
  }
  func.func @transform_3(%arg0: i32, %arg1: i32) -> (i32, i32, i32) {
    %c0_i32 = arith.constant 0 : i32
    %c0_i32_0 = arith.constant 0 : i32
    return %arg0, %c0_i32, %arg1 : i32, i32, i32
  }
}

module attributes {stable_mosaic.version = 11 : i64} {
  func.func @_ln_linear_kernel(%arg0: i32, %arg1: i32, %arg2: memref<16x64xbf16, #tpu.memory_space<vmem>>, %arg3: memref<1x64xf32, #tpu.memory_space<vmem>>, %arg4: memref<1x64xf32, #tpu.memory_space<vmem>>, %arg5: memref<64x256xbf16, #tpu.memory_space<vmem>>, %arg6: memref<1x256xf32, #tpu.memory_space<vmem>>, %arg7: memref<16x256xbf16, #tpu.memory_space<vmem>>) attributes {dimension_semantics = [#tpu.dimension_semantics<parallel>, #tpu.dimension_semantics<parallel>], iteration_bounds = array<i64: 1, 1>, scalar_prefetch = 0 : i64, scratch_operands = 0 : i64, tpu.core_type = #tpu.core_type<tc>, window_params = [{transform_indices = @transform_0, window_bounds = array<i64: 16, 64>}, {pipeline_mode = #tpu.pipeline_mode<synchronous>, transform_indices = @transform_1, window_bounds = array<i64: 1, 64>}, {pipeline_mode = #tpu.pipeline_mode<synchronous>, transform_indices = @transform_2, window_bounds = array<i64: 1, 64>}, {transform_indices = @transform_3, window_bounds = array<i64: 64, 256>}, {transform_indices = @transform_4, window_bounds = array<i64: 1, 256>}, {transform_indices = @transform_5, window_bounds = array<i64: 16, 256>}]} {
    %c0 = arith.constant 0 : index
    %c0_0 = arith.constant 0 : index
    %0 = vector.load %arg2[%c0, %c0_0] : memref<16x64xbf16, #tpu.memory_space<vmem>>, vector<16x64xbf16>
    %1 = arith.extf %0 : vector<16x64xbf16> to vector<16x64xf32>
    %cst = arith.constant dense<0.000000e+00> : vector<16xf32>
    %2 = vector.multi_reduction <add>, %1, %cst [1] : vector<16x64xf32> to vector<16xf32>
    %3 = vector.shape_cast %2 : vector<16xf32> to vector<16x1xf32>
    %cst_1 = arith.constant 6.400000e+01 : f32
    %4 = vector.broadcast %cst_1 : f32 to vector<16x1xf32>
    %5 = arith.divf %3, %4 : vector<16x1xf32>
    %6 = vector.broadcast %5 : vector<16x1xf32> to vector<16x64xf32>
    %7 = arith.subf %1, %6 : vector<16x64xf32>
    %8 = arith.mulf %7, %7 : vector<16x64xf32>
    %cst_2 = arith.constant dense<0.000000e+00> : vector<16xf32>
    %9 = vector.multi_reduction <add>, %8, %cst_2 [1] : vector<16x64xf32> to vector<16xf32>
    %10 = vector.shape_cast %9 : vector<16xf32> to vector<16x1xf32>
    %cst_3 = arith.constant 6.400000e+01 : f32
    %11 = vector.broadcast %cst_3 : f32 to vector<16x1xf32>
    %12 = arith.divf %10, %11 : vector<16x1xf32>
    %13 = vector.broadcast %5 : vector<16x1xf32> to vector<16x64xf32>
    %14 = arith.subf %1, %13 : vector<16x64xf32>
    %cst_4 = arith.constant 9.99999974E-6 : f32
    %15 = vector.broadcast %cst_4 : f32 to vector<16x1xf32>
    %16 = arith.addf %12, %15 : vector<16x1xf32>
    %17 = math.rsqrt %16 : vector<16x1xf32>
    %18 = vector.broadcast %17 : vector<16x1xf32> to vector<16x64xf32>
    %19 = arith.mulf %14, %18 : vector<16x64xf32>
    %c0_5 = arith.constant 0 : index
    %c0_6 = arith.constant 0 : index
    %20 = vector.load %arg3[%c0_5, %c0_6] : memref<1x64xf32, #tpu.memory_space<vmem>>, vector<1x64xf32>
    %21 = vector.broadcast %20 : vector<1x64xf32> to vector<16x64xf32>
    %22 = arith.mulf %19, %21 : vector<16x64xf32>
    %c0_7 = arith.constant 0 : index
    %c0_8 = arith.constant 0 : index
    %23 = vector.load %arg4[%c0_7, %c0_8] : memref<1x64xf32, #tpu.memory_space<vmem>>, vector<1x64xf32>
    %24 = vector.broadcast %23 : vector<1x64xf32> to vector<16x64xf32>
    %25 = arith.addf %22, %24 : vector<16x64xf32>
    %26 = arith.truncf %25 : vector<16x64xf32> to vector<16x64xbf16>
    %c0_9 = arith.constant 0 : index
    %c0_10 = arith.constant 0 : index
    %27 = vector.load %arg5[%c0_9, %c0_10] : memref<64x256xbf16, #tpu.memory_space<vmem>>, vector<64x256xbf16>
    %cst_11 = arith.constant dense<0.000000e+00> : vector<16x256xf32>
    %28 = tpu.matmul %26, %27, %cst_11 {dimension_numbers = #tpu.dot_dimension_numbers<[1], [0], [0], [1], [0, 0, 1, 1], [], []>} : vector<16x64xbf16>, vector<64x256xbf16>, vector<16x256xf32> -> vector<16x256xf32>
    %c0_12 = arith.constant 0 : index
    %c0_13 = arith.constant 0 : index
    %29 = vector.load %arg6[%c0_12, %c0_13] : memref<1x256xf32, #tpu.memory_space<vmem>>, vector<1x256xf32>
    %30 = vector.broadcast %29 : vector<1x256xf32> to vector<16x256xf32>
    %31 = arith.addf %28, %30 : vector<16x256xf32>
    %cst_14 = arith.constant 5.000000e-01 : f32
    %32 = vector.broadcast %cst_14 : f32 to vector<16x256xf32>
    %33 = arith.mulf %32, %31 : vector<16x256xf32>
    %cst_15 = arith.constant 0.707106769 : f32
    %34 = vector.broadcast %cst_15 : f32 to vector<16x256xf32>
    %35 = arith.mulf %31, %34 : vector<16x256xf32>
    %36 = math.absf %35 : vector<16x256xf32>
    %cst_16 = arith.constant 0.327591091 : f32
    %37 = vector.broadcast %cst_16 : f32 to vector<16x256xf32>
    %38 = arith.mulf %37, %36 : vector<16x256xf32>
    %cst_17 = arith.constant 1.000000e+00 : f32
    %39 = vector.broadcast %cst_17 : f32 to vector<16x256xf32>
    %40 = arith.addf %39, %38 : vector<16x256xf32>
    %cst_18 = arith.constant 1.000000e+00 : f32
    %41 = vector.broadcast %cst_18 : f32 to vector<16x256xf32>
    %42 = arith.divf %41, %40 : vector<16x256xf32>
    %cst_19 = arith.constant 1.06140542 : f32
    %43 = vector.broadcast %cst_19 : f32 to vector<16x256xf32>
    %44 = arith.mulf %43, %42 : vector<16x256xf32>
    %cst_20 = arith.constant -1.45315206 : f32
    %45 = vector.broadcast %cst_20 : f32 to vector<16x256xf32>
    %46 = arith.addf %44, %45 : vector<16x256xf32>
    %47 = arith.mulf %46, %42 : vector<16x256xf32>
    %cst_21 = arith.constant 1.42141378 : f32
    %48 = vector.broadcast %cst_21 : f32 to vector<16x256xf32>
    %49 = arith.addf %47, %48 : vector<16x256xf32>
    %50 = arith.mulf %49, %42 : vector<16x256xf32>
    %cst_22 = arith.constant -0.284496725 : f32
    %51 = vector.broadcast %cst_22 : f32 to vector<16x256xf32>
    %52 = arith.addf %50, %51 : vector<16x256xf32>
    %53 = arith.mulf %52, %42 : vector<16x256xf32>
    %cst_23 = arith.constant 0.254829586 : f32
    %54 = vector.broadcast %cst_23 : f32 to vector<16x256xf32>
    %55 = arith.addf %53, %54 : vector<16x256xf32>
    %56 = arith.mulf %55, %42 : vector<16x256xf32>
    %cst_24 = arith.constant 0.000000e+00 : f32
    %57 = vector.broadcast %cst_24 : f32 to vector<16x256xf32>
    %58 = arith.subf %57, %36 : vector<16x256xf32>
    %59 = arith.mulf %58, %36 : vector<16x256xf32>
    %60 = math.exp %59 : vector<16x256xf32>
    %61 = arith.mulf %56, %60 : vector<16x256xf32>
    %cst_25 = arith.constant 1.000000e+00 : f32
    %62 = vector.broadcast %cst_25 : f32 to vector<16x256xf32>
    %63 = arith.subf %62, %61 : vector<16x256xf32>
    %cst_26 = arith.constant 0.000000e+00 : f32
    %64 = vector.broadcast %cst_26 : f32 to vector<16x256xf32>
    %65 = arith.cmpf olt, %35, %64 : vector<16x256xf32>
    %cst_27 = arith.constant 0.000000e+00 : f32
    %66 = vector.broadcast %cst_27 : f32 to vector<16x256xf32>
    %67 = arith.subf %66, %63 : vector<16x256xf32>
    %68 = arith.select %65, %67, %63 : vector<16x256xi1>, vector<16x256xf32>
    %cst_28 = arith.constant 1.000000e+00 : f32
    %69 = vector.broadcast %cst_28 : f32 to vector<16x256xf32>
    %70 = arith.addf %69, %68 : vector<16x256xf32>
    %71 = arith.mulf %33, %70 : vector<16x256xf32>
    %72 = arith.truncf %71 : vector<16x256xf32> to vector<16x256xbf16>
    %c0_29 = arith.constant 0 : index
    %c0_30 = arith.constant 0 : index
    %73 = vector.load %arg7[%c0_29, %c0_30] : memref<16x256xbf16, #tpu.memory_space<vmem>>, vector<16x256xbf16>
    tpu.vector_store %arg7[%c0_29, %c0_30], %72 {strides = array<i32>} : memref<16x256xbf16, #tpu.memory_space<vmem>>, vector<16x256xbf16>,
    return
  }
  func.func @transform_0(%arg0: i32, %arg1: i32) -> (i32, i32) {
    %c0_i32 = arith.constant 0 : i32
    %c0_i32_0 = arith.constant 0 : i32
    return %arg0, %c0_i32 : i32, i32
  }
  func.func @transform_1(%arg0: i32, %arg1: i32) -> (i32, i32) {
    %c0_i32 = arith.constant 0 : i32
    %c0_i32_0 = arith.constant 0 : i32
    %c0_i32_1 = arith.constant 0 : i32
    return %c0_i32, %c0_i32_0 : i32, i32
  }
  func.func @transform_2(%arg0: i32, %arg1: i32) -> (i32, i32) {
    %c0_i32 = arith.constant 0 : i32
    %c0_i32_0 = arith.constant 0 : i32
    %c0_i32_1 = arith.constant 0 : i32
    return %c0_i32, %c0_i32_0 : i32, i32
  }
  func.func @transform_3(%arg0: i32, %arg1: i32) -> (i32, i32) {
    %c0_i32 = arith.constant 0 : i32
    %c0_i32_0 = arith.constant 0 : i32
    return %c0_i32, %arg1 : i32, i32
  }
  func.func @transform_4(%arg0: i32, %arg1: i32) -> (i32, i32) {
    %c0_i32 = arith.constant 0 : i32
    %c0_i32_0 = arith.constant 0 : i32
    return %c0_i32, %arg1 : i32, i32
  }
  func.func @transform_5(%arg0: i32, %arg1: i32) -> (i32, i32) {
    %c0_i32 = arith.constant 0 : i32
    return %arg0, %arg1 : i32, i32
  }
}

module attributes {stable_mosaic.version = 11 : i64} {
  func.func @_matmul_kernel(%arg0: i32, %arg1: i32, %arg2: i32, %arg3: memref<16x256xbf16, #tpu.memory_space<vmem>>, %arg4: memref<256x128xbf16, #tpu.memory_space<vmem>>, %arg5: memref<1x128xf32, #tpu.memory_space<vmem>>, %arg6: memref<16x128xbf16, #tpu.memory_space<vmem>>, %arg7: memref<16x128xbf16, #tpu.memory_space<vmem>>, %arg8: memref<16x128xf32, #tpu.memory_space<vmem>>) attributes {dimension_semantics = [#tpu.dimension_semantics<parallel>, #tpu.dimension_semantics<parallel>, #tpu.dimension_semantics<arbitrary>], iteration_bounds = array<i64: 1, 1, 1>, scalar_prefetch = 0 : i64, scratch_operands = 1 : i64, tpu.core_type = #tpu.core_type<tc>, window_params = [{transform_indices = @transform_0, window_bounds = array<i64: 16, 256>}, {transform_indices = @transform_1, window_bounds = array<i64: 256, 128>}, {transform_indices = @transform_2, window_bounds = array<i64: 1, 128>}, {transform_indices = @transform_3, window_bounds = array<i64: 16, 128>}, {transform_indices = @transform_4, window_bounds = array<i64: 16, 128>}]} {
    %c0_i32 = arith.constant 0 : i32
    %0 = arith.cmpi eq, %arg2, %c0_i32 : i32
    %1 = arith.extui %0 : i1 to i32
    %c0_i32_0 = arith.constant 0 : i32
    %2 = arith.cmpi ne, %1, %c0_i32_0 : i32
    scf.if %2 {
      %cst_10 = arith.constant 0.000000e+00 : f32
      %12 = vector.broadcast %cst_10 : f32 to vector<16x128xf32>
      %c0_11 = arith.constant 0 : index
      %c0_12 = arith.constant 0 : index
      %13 = vector.load %arg8[%c0_11, %c0_12] : memref<16x128xf32, #tpu.memory_space<vmem>>, vector<16x128xf32>
      tpu.vector_store %arg8[%c0_11, %c0_12], %12 {strides = array<i32>} : memref<16x128xf32, #tpu.memory_space<vmem>>, vector<16x128xf32>,
    } else {
    }
    %c0 = arith.constant 0 : index
    %c0_1 = arith.constant 0 : index
    %3 = vector.load %arg8[%c0, %c0_1] : memref<16x128xf32, #tpu.memory_space<vmem>>, vector<16x128xf32>
    %c0_2 = arith.constant 0 : index
    %c0_3 = arith.constant 0 : index
    %4 = vector.load %arg3[%c0_2, %c0_3] : memref<16x256xbf16, #tpu.memory_space<vmem>>, vector<16x256xbf16>
    %c0_4 = arith.constant 0 : index
    %c0_5 = arith.constant 0 : index
    %5 = vector.load %arg4[%c0_4, %c0_5] : memref<256x128xbf16, #tpu.memory_space<vmem>>, vector<256x128xbf16>
    %cst = arith.constant dense<0.000000e+00> : vector<16x128xf32>
    %6 = tpu.matmul %4, %5, %cst {dimension_numbers = #tpu.dot_dimension_numbers<[1], [0], [0], [1], [0, 0, 1, 1], [], []>} : vector<16x256xbf16>, vector<256x128xbf16>, vector<16x128xf32> -> vector<16x128xf32>
    %7 = arith.addf %3, %6 : vector<16x128xf32>
    %c0_6 = arith.constant 0 : index
    %c0_7 = arith.constant 0 : index
    %8 = vector.load %arg8[%c0_6, %c0_7] : memref<16x128xf32, #tpu.memory_space<vmem>>, vector<16x128xf32>
    tpu.vector_store %arg8[%c0_6, %c0_7], %7 {strides = array<i32>} : memref<16x128xf32, #tpu.memory_space<vmem>>, vector<16x128xf32>,
    %c0_i32_8 = arith.constant 0 : i32
    %9 = arith.cmpi eq, %arg2, %c0_i32_8 : i32
    %10 = arith.extui %9 : i1 to i32
    %c0_i32_9 = arith.constant 0 : i32
    %11 = arith.cmpi ne, %10, %c0_i32_9 : i32
    scf.if %11 {
      %c0_10 = arith.constant 0 : index
      %c0_11 = arith.constant 0 : index
      %12 = vector.load %arg8[%c0_10, %c0_11] : memref<16x128xf32, #tpu.memory_space<vmem>>, vector<16x128xf32>
      %c0_12 = arith.constant 0 : index
      %c0_13 = arith.constant 0 : index
      %13 = vector.load %arg5[%c0_12, %c0_13] : memref<1x128xf32, #tpu.memory_space<vmem>>, vector<1x128xf32>
      %14 = vector.broadcast %13 : vector<1x128xf32> to vector<16x128xf32>
      %15 = arith.addf %12, %14 : vector<16x128xf32>
      %c0_14 = arith.constant 0 : index
      %c0_15 = arith.constant 0 : index
      %16 = vector.load %arg6[%c0_14, %c0_15] : memref<16x128xbf16, #tpu.memory_space<vmem>>, vector<16x128xbf16>
      %17 = arith.extf %16 : vector<16x128xbf16> to vector<16x128xf32>
      %18 = arith.addf %15, %17 : vector<16x128xf32>
      %19 = arith.truncf %18 : vector<16x128xf32> to vector<16x128xbf16>
      %c0_16 = arith.constant 0 : index
      %c0_17 = arith.constant 0 : index
      %20 = vector.load %arg7[%c0_16, %c0_17] : memref<16x128xbf16, #tpu.memory_space<vmem>>, vector<16x128xbf16>
      tpu.vector_store %arg7[%c0_16, %c0_17], %19 {strides = array<i32>} : memref<16x128xbf16, #tpu.memory_space<vmem>>, vector<16x128xbf16>,
    } else {
    }
    return
  }
  func.func @transform_0(%arg0: i32, %arg1: i32, %arg2: i32) -> (i32, i32) {
    %c0_i32 = arith.constant 0 : i32
    return %arg0, %arg2 : i32, i32
  }
  func.func @transform_1(%arg0: i32, %arg1: i32, %arg2: i32) -> (i32, i32) {
    %c0_i32 = arith.constant 0 : i32
    return %arg2, %arg1 : i32, i32
  }
  func.func @transform_2(%arg0: i32, %arg1: i32, %arg2: i32) -> (i32, i32) {
    %c0_i32 = arith.constant 0 : i32
    %c0_i32_0 = arith.constant 0 : i32
    return %c0_i32, %arg1 : i32, i32
  }
  func.func @transform_3(%arg0: i32, %arg1: i32, %arg2: i32) -> (i32, i32) {
    %c0_i32 = arith.constant 0 : i32
    return %arg0, %arg1 : i32, i32
  }
  func.func @transform_4(%arg0: i32, %arg1: i32, %arg2: i32) -> (i32, i32) {
    %c0_i32 = arith.constant 0 : i32
    return %arg0, %arg1 : i32, i32
  }
}

module attributes {stable_mosaic.version = 11 : i64} {
  func.func @_layernorm_kernel(%arg0: i32, %arg1: memref<16x64xbf16, #tpu.memory_space<vmem>>, %arg2: memref<1x64xf32, #tpu.memory_space<vmem>>, %arg3: memref<1x64xf32, #tpu.memory_space<vmem>>, %arg4: memref<16x64xbf16, #tpu.memory_space<vmem>>) attributes {dimension_semantics = [#tpu.dimension_semantics<parallel>], iteration_bounds = array<i64: 1>, scalar_prefetch = 0 : i64, scratch_operands = 0 : i64, tpu.core_type = #tpu.core_type<tc>, window_params = [{transform_indices = @transform_0, window_bounds = array<i64: 16, 64>}, {pipeline_mode = #tpu.pipeline_mode<synchronous>, transform_indices = @transform_1, window_bounds = array<i64: 1, 64>}, {pipeline_mode = #tpu.pipeline_mode<synchronous>, transform_indices = @transform_2, window_bounds = array<i64: 1, 64>}, {transform_indices = @transform_3, window_bounds = array<i64: 16, 64>}]} {
    %c0 = arith.constant 0 : index
    %c0_0 = arith.constant 0 : index
    %0 = vector.load %arg1[%c0, %c0_0] : memref<16x64xbf16, #tpu.memory_space<vmem>>, vector<16x64xbf16>
    %1 = arith.extf %0 : vector<16x64xbf16> to vector<16x64xf32>
    %cst = arith.constant dense<0.000000e+00> : vector<16xf32>
    %2 = vector.multi_reduction <add>, %1, %cst [1] : vector<16x64xf32> to vector<16xf32>
    %3 = vector.shape_cast %2 : vector<16xf32> to vector<16x1xf32>
    %cst_1 = arith.constant 6.400000e+01 : f32
    %4 = vector.broadcast %cst_1 : f32 to vector<16x1xf32>
    %5 = arith.divf %3, %4 : vector<16x1xf32>
    %6 = vector.broadcast %5 : vector<16x1xf32> to vector<16x64xf32>
    %7 = arith.subf %1, %6 : vector<16x64xf32>
    %8 = arith.mulf %7, %7 : vector<16x64xf32>
    %cst_2 = arith.constant dense<0.000000e+00> : vector<16xf32>
    %9 = vector.multi_reduction <add>, %8, %cst_2 [1] : vector<16x64xf32> to vector<16xf32>
    %10 = vector.shape_cast %9 : vector<16xf32> to vector<16x1xf32>
    %cst_3 = arith.constant 6.400000e+01 : f32
    %11 = vector.broadcast %cst_3 : f32 to vector<16x1xf32>
    %12 = arith.divf %10, %11 : vector<16x1xf32>
    %13 = vector.broadcast %5 : vector<16x1xf32> to vector<16x64xf32>
    %14 = arith.subf %1, %13 : vector<16x64xf32>
    %cst_4 = arith.constant 9.99999974E-6 : f32
    %15 = vector.broadcast %cst_4 : f32 to vector<16x1xf32>
    %16 = arith.addf %12, %15 : vector<16x1xf32>
    %17 = math.rsqrt %16 : vector<16x1xf32>
    %18 = vector.broadcast %17 : vector<16x1xf32> to vector<16x64xf32>
    %19 = arith.mulf %14, %18 : vector<16x64xf32>
    %c0_5 = arith.constant 0 : index
    %c0_6 = arith.constant 0 : index
    %20 = vector.load %arg2[%c0_5, %c0_6] : memref<1x64xf32, #tpu.memory_space<vmem>>, vector<1x64xf32>
    %21 = vector.broadcast %20 : vector<1x64xf32> to vector<16x64xf32>
    %22 = arith.mulf %19, %21 : vector<16x64xf32>
    %c0_7 = arith.constant 0 : index
    %c0_8 = arith.constant 0 : index
    %23 = vector.load %arg3[%c0_7, %c0_8] : memref<1x64xf32, #tpu.memory_space<vmem>>, vector<1x64xf32>
    %24 = vector.broadcast %23 : vector<1x64xf32> to vector<16x64xf32>
    %25 = arith.addf %22, %24 : vector<16x64xf32>
    %26 = arith.truncf %25 : vector<16x64xf32> to vector<16x64xbf16>
    %c0_9 = arith.constant 0 : index
    %c0_10 = arith.constant 0 : index
    %27 = vector.load %arg4[%c0_9, %c0_10] : memref<16x64xbf16, #tpu.memory_space<vmem>>, vector<16x64xbf16>
    tpu.vector_store %arg4[%c0_9, %c0_10], %26 {strides = array<i32>} : memref<16x64xbf16, #tpu.memory_space<vmem>>, vector<16x64xbf16>,
    return
  }
  func.func @transform_0(%arg0: i32) -> (i32, i32) {
    %c0_i32 = arith.constant 0 : i32
    %c0_i32_0 = arith.constant 0 : i32
    return %arg0, %c0_i32 : i32, i32
  }
  func.func @transform_1(%arg0: i32) -> (i32, i32) {
    %c0_i32 = arith.constant 0 : i32
    %c0_i32_0 = arith.constant 0 : i32
    %c0_i32_1 = arith.constant 0 : i32
    return %c0_i32, %c0_i32_0 : i32, i32
  }
  func.func @transform_2(%arg0: i32) -> (i32, i32) {
    %c0_i32 = arith.constant 0 : i32
    %c0_i32_0 = arith.constant 0 : i32
    %c0_i32_1 = arith.constant 0 : i32
    return %c0_i32, %c0_i32_0 : i32, i32
  }
  func.func @transform_3(%arg0: i32) -> (i32, i32) {
    %c0_i32 = arith.constant 0 : i32
    %c0_i32_0 = arith.constant 0 : i32
    return %arg0, %c0_i32 : i32, i32
  }
}

module attributes {stable_mosaic.version = 11 : i64} {
  func.func @_matmul_kernel(%arg0: i32, %arg1: i32, %arg2: i32, %arg3: memref<16x128xbf16, #tpu.memory_space<vmem>>, %arg4: memref<128x128xbf16, #tpu.memory_space<vmem>>, %arg5: memref<1x128xf32, #tpu.memory_space<vmem>>, %arg6: memref<16x128xbf16, #tpu.memory_space<vmem>>, %arg7: memref<16x128xf32, #tpu.memory_space<vmem>>) attributes {dimension_semantics = [#tpu.dimension_semantics<parallel>, #tpu.dimension_semantics<parallel>, #tpu.dimension_semantics<arbitrary>], iteration_bounds = array<i64: 1, 1, 1>, scalar_prefetch = 0 : i64, scratch_operands = 1 : i64, tpu.core_type = #tpu.core_type<tc>, window_params = [{transform_indices = @transform_0, window_bounds = array<i64: 16, 128>}, {transform_indices = @transform_1, window_bounds = array<i64: 128, 128>}, {transform_indices = @transform_2, window_bounds = array<i64: 1, 128>}, {transform_indices = @transform_3, window_bounds = array<i64: 16, 128>}]} {
    %c0_i32 = arith.constant 0 : i32
    %0 = arith.cmpi eq, %arg2, %c0_i32 : i32
    %1 = arith.extui %0 : i1 to i32
    %c0_i32_0 = arith.constant 0 : i32
    %2 = arith.cmpi ne, %1, %c0_i32_0 : i32
    scf.if %2 {
      %cst_10 = arith.constant 0.000000e+00 : f32
      %12 = vector.broadcast %cst_10 : f32 to vector<16x128xf32>
      %c0_11 = arith.constant 0 : index
      %c0_12 = arith.constant 0 : index
      %13 = vector.load %arg7[%c0_11, %c0_12] : memref<16x128xf32, #tpu.memory_space<vmem>>, vector<16x128xf32>
      tpu.vector_store %arg7[%c0_11, %c0_12], %12 {strides = array<i32>} : memref<16x128xf32, #tpu.memory_space<vmem>>, vector<16x128xf32>,
    } else {
    }
    %c0 = arith.constant 0 : index
    %c0_1 = arith.constant 0 : index
    %3 = vector.load %arg7[%c0, %c0_1] : memref<16x128xf32, #tpu.memory_space<vmem>>, vector<16x128xf32>
    %c0_2 = arith.constant 0 : index
    %c0_3 = arith.constant 0 : index
    %4 = vector.load %arg3[%c0_2, %c0_3] : memref<16x128xbf16, #tpu.memory_space<vmem>>, vector<16x128xbf16>
    %c0_4 = arith.constant 0 : index
    %c0_5 = arith.constant 0 : index
    %5 = vector.load %arg4[%c0_4, %c0_5] : memref<128x128xbf16, #tpu.memory_space<vmem>>, vector<128x128xbf16>
    %cst = arith.constant dense<0.000000e+00> : vector<16x128xf32>
    %6 = tpu.matmul %4, %5, %cst {dimension_numbers = #tpu.dot_dimension_numbers<[1], [0], [0], [1], [0, 0, 1, 1], [], []>} : vector<16x128xbf16>, vector<128x128xbf16>, vector<16x128xf32> -> vector<16x128xf32>
    %7 = arith.addf %3, %6 : vector<16x128xf32>
    %c0_6 = arith.constant 0 : index
    %c0_7 = arith.constant 0 : index
    %8 = vector.load %arg7[%c0_6, %c0_7] : memref<16x128xf32, #tpu.memory_space<vmem>>, vector<16x128xf32>
    tpu.vector_store %arg7[%c0_6, %c0_7], %7 {strides = array<i32>} : memref<16x128xf32, #tpu.memory_space<vmem>>, vector<16x128xf32>,
    %c0_i32_8 = arith.constant 0 : i32
    %9 = arith.cmpi eq, %arg2, %c0_i32_8 : i32
    %10 = arith.extui %9 : i1 to i32
    %c0_i32_9 = arith.constant 0 : i32
    %11 = arith.cmpi ne, %10, %c0_i32_9 : i32
    scf.if %11 {
      %c0_10 = arith.constant 0 : index
      %c0_11 = arith.constant 0 : index
      %12 = vector.load %arg7[%c0_10, %c0_11] : memref<16x128xf32, #tpu.memory_space<vmem>>, vector<16x128xf32>
      %c0_12 = arith.constant 0 : index
      %c0_13 = arith.constant 0 : index
      %13 = vector.load %arg5[%c0_12, %c0_13] : memref<1x128xf32, #tpu.memory_space<vmem>>, vector<1x128xf32>
      %14 = vector.broadcast %13 : vector<1x128xf32> to vector<16x128xf32>
      %15 = arith.addf %12, %14 : vector<16x128xf32>
      %16 = arith.truncf %15 : vector<16x128xf32> to vector<16x128xbf16>
      %c0_14 = arith.constant 0 : index
      %c0_15 = arith.constant 0 : index
      %17 = vector.load %arg6[%c0_14, %c0_15] : memref<16x128xbf16, #tpu.memory_space<vmem>>, vector<16x128xbf16>
      tpu.vector_store %arg6[%c0_14, %c0_15], %16 {strides = array<i32>} : memref<16x128xbf16, #tpu.memory_space<vmem>>, vector<16x128xbf16>,
    } else {
    }
    return
  }
  func.func @transform_0(%arg0: i32, %arg1: i32, %arg2: i32) -> (i32, i32) {
    %c0_i32 = arith.constant 0 : i32
    return %arg0, %arg2 : i32, i32
  }
  func.func @transform_1(%arg0: i32, %arg1: i32, %arg2: i32) -> (i32, i32) {
    %c0_i32 = arith.constant 0 : i32
    return %arg2, %arg1 : i32, i32
  }
  func.func @transform_2(%arg0: i32, %arg1: i32, %arg2: i32) -> (i32, i32) {
    %c0_i32 = arith.constant 0 : i32
    %c0_i32_0 = arith.constant 0 : i32
    return %c0_i32, %arg1 : i32, i32
  }
  func.func @transform_3(%arg0: i32, %arg1: i32, %arg2: i32) -> (i32, i32) {
    %c0_i32 = arith.constant 0 : i32
    return %arg0, %arg1 : i32, i32
  }
}

module attributes {stable_mosaic.version = 11 : i64} {
  func.func @_attn_kernel(%arg0: i32, %arg1: i32, %arg2: memref<1x4x32x16xbf16, #tpu.memory_space<vmem>>, %arg3: memref<1x4x5x16xbf16, #tpu.memory_space<vmem>>, %arg4: memref<1x4x5x16xbf16, #tpu.memory_space<vmem>>, %arg5: memref<1x32x64xbf16, #tpu.memory_space<vmem>>) attributes {dimension_semantics = [#tpu.dimension_semantics<parallel>, #tpu.dimension_semantics<parallel>], iteration_bounds = array<i64: 2, 1>, scalar_prefetch = 0 : i64, scratch_operands = 0 : i64, tpu.core_type = #tpu.core_type<tc>, window_params = [{transform_indices = @transform_0, window_bounds = array<i64: 1, 4, 32, 16>}, {transform_indices = @transform_1, window_bounds = array<i64: 1, 4, 5, 16>}, {transform_indices = @transform_2, window_bounds = array<i64: 1, 4, 5, 16>}, {transform_indices = @transform_3, window_bounds = array<i64: 1, 32, 64>}]} {
    %c0 = arith.constant 0 : index
    %c0_0 = arith.constant 0 : index
    %c0_1 = arith.constant 0 : index
    %c0_2 = arith.constant 0 : index
    %0 = vector.load %arg2[%c0, %c0_0, %c0_1, %c0_2] : memref<1x4x32x16xbf16, #tpu.memory_space<vmem>>, vector<1x1x32x16xbf16>
    %1 = vector.shape_cast %0 : vector<1x1x32x16xbf16> to vector<32x16xbf16>
    %c0_3 = arith.constant 0 : index
    %c0_4 = arith.constant 0 : index
    %c0_5 = arith.constant 0 : index
    %c0_6 = arith.constant 0 : index
    %2 = vector.load %arg3[%c0_3, %c0_4, %c0_5, %c0_6] : memref<1x4x5x16xbf16, #tpu.memory_space<vmem>>, vector<1x1x5x16xbf16>
    %3 = vector.shape_cast %2 : vector<1x1x5x16xbf16> to vector<5x16xbf16>
    %c0_7 = arith.constant 0 : index
    %c0_8 = arith.constant 0 : index
    %c0_9 = arith.constant 0 : index
    %c0_10 = arith.constant 0 : index
    %4 = vector.load %arg4[%c0_7, %c0_8, %c0_9, %c0_10] : memref<1x4x5x16xbf16, #tpu.memory_space<vmem>>, vector<1x1x5x16xbf16>
    %5 = vector.shape_cast %4 : vector<1x1x5x16xbf16> to vector<5x16xbf16>
    %cst = arith.constant dense<0.000000e+00> : vector<32x5xf32>
    %6 = tpu.matmul %1, %3, %cst {dimension_numbers = #tpu.dot_dimension_numbers<[1], [1], [0], [0], [0, 0, 1, 0], [], []>} : vector<32x16xbf16>, vector<5x16xbf16>, vector<32x5xf32> -> vector<32x5xf32>
    %cst_11 = arith.constant 2.500000e-01 : f32
    %7 = vector.broadcast %cst_11 : f32 to vector<32x5xf32>
    %8 = arith.mulf %6, %7 : vector<32x5xf32>
    %cst_12 = arith.constant dense<0xFF800000> : vector<32xf32>
    %9 = vector.multi_reduction <maximumf>, %8, %cst_12 [1] : vector<32x5xf32> to vector<32xf32>
    %10 = vector.shape_cast %9 : vector<32xf32> to vector<32x1xf32>
    %11 = vector.broadcast %10 : vector<32x1xf32> to vector<32x5xf32>
    %12 = arith.subf %8, %11 : vector<32x5xf32>
    %13 = math.exp %12 : vector<32x5xf32>
    %cst_13 = arith.constant dense<0.000000e+00> : vector<32xf32>
    %14 = vector.multi_reduction <add>, %13, %cst_13 [1] : vector<32x5xf32> to vector<32xf32>
    %15 = vector.shape_cast %14 : vector<32xf32> to vector<32x1xf32>
    %16 = tpu.reciprocal %15 {approx = true} : vector<32x1xf32> -> vector<32x1xf32>
    %17 = vector.broadcast %16 : vector<32x1xf32> to vector<32x5xf32>
    %18 = arith.mulf %13, %17 : vector<32x5xf32>
    %19 = arith.truncf %18 : vector<32x5xf32> to vector<32x5xbf16>
    %cst_14 = arith.constant dense<0.000000e+00> : vector<32x16xf32>
    %20 = tpu.matmul %19, %5, %cst_14 {dimension_numbers = #tpu.dot_dimension_numbers<[1], [0], [0], [1], [0, 0, 1, 1], [], []>} : vector<32x5xbf16>, vector<5x16xbf16>, vector<32x16xf32> -> vector<32x16xf32>
    %21 = arith.truncf %20 : vector<32x16xf32> to vector<32x16xbf16>
    %c0_15 = arith.constant 0 : index
    %c1 = arith.constant 1 : index
    %c0_16 = arith.constant 0 : index
    %c0_17 = arith.constant 0 : index
    %22 = vector.load %arg2[%c0_15, %c1, %c0_16, %c0_17] : memref<1x4x32x16xbf16, #tpu.memory_space<vmem>>, vector<1x1x32x16xbf16>
    %23 = vector.shape_cast %22 : vector<1x1x32x16xbf16> to vector<32x16xbf16>
    %c0_18 = arith.constant 0 : index
    %c1_19 = arith.constant 1 : index
    %c0_20 = arith.constant 0 : index
    %c0_21 = arith.constant 0 : index
    %24 = vector.load %arg3[%c0_18, %c1_19, %c0_20, %c0_21] : memref<1x4x5x16xbf16, #tpu.memory_space<vmem>>, vector<1x1x5x16xbf16>
    %25 = vector.shape_cast %24 : vector<1x1x5x16xbf16> to vector<5x16xbf16>
    %c0_22 = arith.constant 0 : index
    %c1_23 = arith.constant 1 : index
    %c0_24 = arith.constant 0 : index
    %c0_25 = arith.constant 0 : index
    %26 = vector.load %arg4[%c0_22, %c1_23, %c0_24, %c0_25] : memref<1x4x5x16xbf16, #tpu.memory_space<vmem>>, vector<1x1x5x16xbf16>
    %27 = vector.shape_cast %26 : vector<1x1x5x16xbf16> to vector<5x16xbf16>
    %cst_26 = arith.constant dense<0.000000e+00> : vector<32x5xf32>
    %28 = tpu.matmul %23, %25, %cst_26 {dimension_numbers = #tpu.dot_dimension_numbers<[1], [1], [0], [0], [0, 0, 1, 0], [], []>} : vector<32x16xbf16>, vector<5x16xbf16>, vector<32x5xf32> -> vector<32x5xf32>
    %cst_27 = arith.constant 2.500000e-01 : f32
    %29 = vector.broadcast %cst_27 : f32 to vector<32x5xf32>
    %30 = arith.mulf %28, %29 : vector<32x5xf32>
    %cst_28 = arith.constant dense<0xFF800000> : vector<32xf32>
    %31 = vector.multi_reduction <maximumf>, %30, %cst_28 [1] : vector<32x5xf32> to vector<32xf32>
    %32 = vector.shape_cast %31 : vector<32xf32> to vector<32x1xf32>
    %33 = vector.broadcast %32 : vector<32x1xf32> to vector<32x5xf32>
    %34 = arith.subf %30, %33 : vector<32x5xf32>
    %35 = math.exp %34 : vector<32x5xf32>
    %cst_29 = arith.constant dense<0.000000e+00> : vector<32xf32>
    %36 = vector.multi_reduction <add>, %35, %cst_29 [1] : vector<32x5xf32> to vector<32xf32>
    %37 = vector.shape_cast %36 : vector<32xf32> to vector<32x1xf32>
    %38 = tpu.reciprocal %37 {approx = true} : vector<32x1xf32> -> vector<32x1xf32>
    %39 = vector.broadcast %38 : vector<32x1xf32> to vector<32x5xf32>
    %40 = arith.mulf %35, %39 : vector<32x5xf32>
    %41 = arith.truncf %40 : vector<32x5xf32> to vector<32x5xbf16>
    %cst_30 = arith.constant dense<0.000000e+00> : vector<32x16xf32>
    %42 = tpu.matmul %41, %27, %cst_30 {dimension_numbers = #tpu.dot_dimension_numbers<[1], [0], [0], [1], [0, 0, 1, 1], [], []>} : vector<32x5xbf16>, vector<5x16xbf16>, vector<32x16xf32> -> vector<32x16xf32>
    %43 = arith.truncf %42 : vector<32x16xf32> to vector<32x16xbf16>
    %c0_31 = arith.constant 0 : index
    %c2 = arith.constant 2 : index
    %c0_32 = arith.constant 0 : index
    %c0_33 = arith.constant 0 : index
    %44 = vector.load %arg2[%c0_31, %c2, %c0_32, %c0_33] : memref<1x4x32x16xbf16, #tpu.memory_space<vmem>>, vector<1x1x32x16xbf16>
    %45 = vector.shape_cast %44 : vector<1x1x32x16xbf16> to vector<32x16xbf16>
    %c0_34 = arith.constant 0 : index
    %c2_35 = arith.constant 2 : index
    %c0_36 = arith.constant 0 : index
    %c0_37 = arith.constant 0 : index
    %46 = vector.load %arg3[%c0_34, %c2_35, %c0_36, %c0_37] : memref<1x4x5x16xbf16, #tpu.memory_space<vmem>>, vector<1x1x5x16xbf16>
    %47 = vector.shape_cast %46 : vector<1x1x5x16xbf16> to vector<5x16xbf16>
    %c0_38 = arith.constant 0 : index
    %c2_39 = arith.constant 2 : index
    %c0_40 = arith.constant 0 : index
    %c0_41 = arith.constant 0 : index
    %48 = vector.load %arg4[%c0_38, %c2_39, %c0_40, %c0_41] : memref<1x4x5x16xbf16, #tpu.memory_space<vmem>>, vector<1x1x5x16xbf16>
    %49 = vector.shape_cast %48 : vector<1x1x5x16xbf16> to vector<5x16xbf16>
    %cst_42 = arith.constant dense<0.000000e+00> : vector<32x5xf32>
    %50 = tpu.matmul %45, %47, %cst_42 {dimension_numbers = #tpu.dot_dimension_numbers<[1], [1], [0], [0], [0, 0, 1, 0], [], []>} : vector<32x16xbf16>, vector<5x16xbf16>, vector<32x5xf32> -> vector<32x5xf32>
    %cst_43 = arith.constant 2.500000e-01 : f32
    %51 = vector.broadcast %cst_43 : f32 to vector<32x5xf32>
    %52 = arith.mulf %50, %51 : vector<32x5xf32>
    %cst_44 = arith.constant dense<0xFF800000> : vector<32xf32>
    %53 = vector.multi_reduction <maximumf>, %52, %cst_44 [1] : vector<32x5xf32> to vector<32xf32>
    %54 = vector.shape_cast %53 : vector<32xf32> to vector<32x1xf32>
    %55 = vector.broadcast %54 : vector<32x1xf32> to vector<32x5xf32>
    %56 = arith.subf %52, %55 : vector<32x5xf32>
    %57 = math.exp %56 : vector<32x5xf32>
    %cst_45 = arith.constant dense<0.000000e+00> : vector<32xf32>
    %58 = vector.multi_reduction <add>, %57, %cst_45 [1] : vector<32x5xf32> to vector<32xf32>
    %59 = vector.shape_cast %58 : vector<32xf32> to vector<32x1xf32>
    %60 = tpu.reciprocal %59 {approx = true} : vector<32x1xf32> -> vector<32x1xf32>
    %61 = vector.broadcast %60 : vector<32x1xf32> to vector<32x5xf32>
    %62 = arith.mulf %57, %61 : vector<32x5xf32>
    %63 = arith.truncf %62 : vector<32x5xf32> to vector<32x5xbf16>
    %cst_46 = arith.constant dense<0.000000e+00> : vector<32x16xf32>
    %64 = tpu.matmul %63, %49, %cst_46 {dimension_numbers = #tpu.dot_dimension_numbers<[1], [0], [0], [1], [0, 0, 1, 1], [], []>} : vector<32x5xbf16>, vector<5x16xbf16>, vector<32x16xf32> -> vector<32x16xf32>
    %65 = arith.truncf %64 : vector<32x16xf32> to vector<32x16xbf16>
    %c0_47 = arith.constant 0 : index
    %c3 = arith.constant 3 : index
    %c0_48 = arith.constant 0 : index
    %c0_49 = arith.constant 0 : index
    %66 = vector.load %arg2[%c0_47, %c3, %c0_48, %c0_49] : memref<1x4x32x16xbf16, #tpu.memory_space<vmem>>, vector<1x1x32x16xbf16>
    %67 = vector.shape_cast %66 : vector<1x1x32x16xbf16> to vector<32x16xbf16>
    %c0_50 = arith.constant 0 : index
    %c3_51 = arith.constant 3 : index
    %c0_52 = arith.constant 0 : index
    %c0_53 = arith.constant 0 : index
    %68 = vector.load %arg3[%c0_50, %c3_51, %c0_52, %c0_53] : memref<1x4x5x16xbf16, #tpu.memory_space<vmem>>, vector<1x1x5x16xbf16>
    %69 = vector.shape_cast %68 : vector<1x1x5x16xbf16> to vector<5x16xbf16>
    %c0_54 = arith.constant 0 : index
    %c3_55 = arith.constant 3 : index
    %c0_56 = arith.constant 0 : index
    %c0_57 = arith.constant 0 : index
    %70 = vector.load %arg4[%c0_54, %c3_55, %c0_56, %c0_57] : memref<1x4x5x16xbf16, #tpu.memory_space<vmem>>, vector<1x1x5x16xbf16>
    %71 = vector.shape_cast %70 : vector<1x1x5x16xbf16> to vector<5x16xbf16>
    %cst_58 = arith.constant dense<0.000000e+00> : vector<32x5xf32>
    %72 = tpu.matmul %67, %69, %cst_58 {dimension_numbers = #tpu.dot_dimension_numbers<[1], [1], [0], [0], [0, 0, 1, 0], [], []>} : vector<32x16xbf16>, vector<5x16xbf16>, vector<32x5xf32> -> vector<32x5xf32>
    %cst_59 = arith.constant 2.500000e-01 : f32
    %73 = vector.broadcast %cst_59 : f32 to vector<32x5xf32>
    %74 = arith.mulf %72, %73 : vector<32x5xf32>
    %cst_60 = arith.constant dense<0xFF800000> : vector<32xf32>
    %75 = vector.multi_reduction <maximumf>, %74, %cst_60 [1] : vector<32x5xf32> to vector<32xf32>
    %76 = vector.shape_cast %75 : vector<32xf32> to vector<32x1xf32>
    %77 = vector.broadcast %76 : vector<32x1xf32> to vector<32x5xf32>
    %78 = arith.subf %74, %77 : vector<32x5xf32>
    %79 = math.exp %78 : vector<32x5xf32>
    %cst_61 = arith.constant dense<0.000000e+00> : vector<32xf32>
    %80 = vector.multi_reduction <add>, %79, %cst_61 [1] : vector<32x5xf32> to vector<32xf32>
    %81 = vector.shape_cast %80 : vector<32xf32> to vector<32x1xf32>
    %82 = tpu.reciprocal %81 {approx = true} : vector<32x1xf32> -> vector<32x1xf32>
    %83 = vector.broadcast %82 : vector<32x1xf32> to vector<32x5xf32>
    %84 = arith.mulf %79, %83 : vector<32x5xf32>
    %85 = arith.truncf %84 : vector<32x5xf32> to vector<32x5xbf16>
    %cst_62 = arith.constant dense<0.000000e+00> : vector<32x16xf32>
    %86 = tpu.matmul %85, %71, %cst_62 {dimension_numbers = #tpu.dot_dimension_numbers<[1], [0], [0], [1], [0, 0, 1, 1], [], []>} : vector<32x5xbf16>, vector<5x16xbf16>, vector<32x16xf32> -> vector<32x16xf32>
    %87 = arith.truncf %86 : vector<32x16xf32> to vector<32x16xbf16>
    %88 = tpu.concatenate %21, %43, %65, %87 in 1 : vector<32x16xbf16>, vector<32x16xbf16>, vector<32x16xbf16>, vector<32x16xbf16> -> vector<32x64xbf16>
    %c0_63 = arith.constant 0 : index
    %c0_64 = arith.constant 0 : index
    %c0_65 = arith.constant 0 : index
    %89 = vector.load %arg5[%c0_63, %c0_64, %c0_65] : memref<1x32x64xbf16, #tpu.memory_space<vmem>>, vector<1x32x64xbf16>
    %90 = vector.shape_cast %89 : vector<1x32x64xbf16> to vector<32x64xbf16>
    %91 = vector.shape_cast %88 : vector<32x64xbf16> to vector<1x32x64xbf16>
    tpu.vector_store %arg5[%c0_63, %c0_64, %c0_65], %91 {strides = array<i32>} : memref<1x32x64xbf16, #tpu.memory_space<vmem>>, vector<1x32x64xbf16>,
    return
  }
  func.func @transform_0(%arg0: i32, %arg1: i32) -> (i32, i32, i32, i32) {
    %c0_i32 = arith.constant 0 : i32
    %c0_i32_0 = arith.constant 0 : i32
    %c0_i32_1 = arith.constant 0 : i32
    return %arg0, %arg1, %c0_i32, %c0_i32_0 : i32, i32, i32, i32
  }
  func.func @transform_1(%arg0: i32, %arg1: i32) -> (i32, i32, i32, i32) {
    %c0_i32 = arith.constant 0 : i32
    %c0_i32_0 = arith.constant 0 : i32
    %c0_i32_1 = arith.constant 0 : i32
    return %arg0, %arg1, %c0_i32, %c0_i32_0 : i32, i32, i32, i32
  }
  func.func @transform_2(%arg0: i32, %arg1: i32) -> (i32, i32, i32, i32) {
    %c0_i32 = arith.constant 0 : i32
    %c0_i32_0 = arith.constant 0 : i32
    %c0_i32_1 = arith.constant 0 : i32
    return %arg0, %arg1, %c0_i32, %c0_i32_0 : i32, i32, i32, i32
  }
  func.func @transform_3(%arg0: i32, %arg1: i32) -> (i32, i32, i32) {
    %c0_i32 = arith.constant 0 : i32
    %c0_i32_0 = arith.constant 0 : i32
    return %arg0, %c0_i32, %arg1 : i32, i32, i32
  }
}

module attributes {stable_mosaic.version = 11 : i64} {
  func.func @_ln_linear_kernel(%arg0: i32, %arg1: i32, %arg2: memref<64x64xbf16, #tpu.memory_space<vmem>>, %arg3: memref<1x64xf32, #tpu.memory_space<vmem>>, %arg4: memref<1x64xf32, #tpu.memory_space<vmem>>, %arg5: memref<64x256xbf16, #tpu.memory_space<vmem>>, %arg6: memref<1x256xf32, #tpu.memory_space<vmem>>, %arg7: memref<64x256xbf16, #tpu.memory_space<vmem>>) attributes {dimension_semantics = [#tpu.dimension_semantics<parallel>, #tpu.dimension_semantics<parallel>], iteration_bounds = array<i64: 1, 1>, scalar_prefetch = 0 : i64, scratch_operands = 0 : i64, tpu.core_type = #tpu.core_type<tc>, window_params = [{transform_indices = @transform_0, window_bounds = array<i64: 64, 64>}, {pipeline_mode = #tpu.pipeline_mode<synchronous>, transform_indices = @transform_1, window_bounds = array<i64: 1, 64>}, {pipeline_mode = #tpu.pipeline_mode<synchronous>, transform_indices = @transform_2, window_bounds = array<i64: 1, 64>}, {transform_indices = @transform_3, window_bounds = array<i64: 64, 256>}, {transform_indices = @transform_4, window_bounds = array<i64: 1, 256>}, {transform_indices = @transform_5, window_bounds = array<i64: 64, 256>}]} {
    %c0 = arith.constant 0 : index
    %c0_0 = arith.constant 0 : index
    %0 = vector.load %arg2[%c0, %c0_0] : memref<64x64xbf16, #tpu.memory_space<vmem>>, vector<64x64xbf16>
    %1 = arith.extf %0 : vector<64x64xbf16> to vector<64x64xf32>
    %cst = arith.constant dense<0.000000e+00> : vector<64xf32>
    %2 = vector.multi_reduction <add>, %1, %cst [1] : vector<64x64xf32> to vector<64xf32>
    %3 = vector.shape_cast %2 : vector<64xf32> to vector<64x1xf32>
    %cst_1 = arith.constant 6.400000e+01 : f32
    %4 = vector.broadcast %cst_1 : f32 to vector<64x1xf32>
    %5 = arith.divf %3, %4 : vector<64x1xf32>
    %6 = vector.broadcast %5 : vector<64x1xf32> to vector<64x64xf32>
    %7 = arith.subf %1, %6 : vector<64x64xf32>
    %8 = arith.mulf %7, %7 : vector<64x64xf32>
    %cst_2 = arith.constant dense<0.000000e+00> : vector<64xf32>
    %9 = vector.multi_reduction <add>, %8, %cst_2 [1] : vector<64x64xf32> to vector<64xf32>
    %10 = vector.shape_cast %9 : vector<64xf32> to vector<64x1xf32>
    %cst_3 = arith.constant 6.400000e+01 : f32
    %11 = vector.broadcast %cst_3 : f32 to vector<64x1xf32>
    %12 = arith.divf %10, %11 : vector<64x1xf32>
    %13 = vector.broadcast %5 : vector<64x1xf32> to vector<64x64xf32>
    %14 = arith.subf %1, %13 : vector<64x64xf32>
    %cst_4 = arith.constant 9.99999974E-6 : f32
    %15 = vector.broadcast %cst_4 : f32 to vector<64x1xf32>
    %16 = arith.addf %12, %15 : vector<64x1xf32>
    %17 = math.rsqrt %16 : vector<64x1xf32>
    %18 = vector.broadcast %17 : vector<64x1xf32> to vector<64x64xf32>
    %19 = arith.mulf %14, %18 : vector<64x64xf32>
    %c0_5 = arith.constant 0 : index
    %c0_6 = arith.constant 0 : index
    %20 = vector.load %arg3[%c0_5, %c0_6] : memref<1x64xf32, #tpu.memory_space<vmem>>, vector<1x64xf32>
    %21 = vector.broadcast %20 : vector<1x64xf32> to vector<64x64xf32>
    %22 = arith.mulf %19, %21 : vector<64x64xf32>
    %c0_7 = arith.constant 0 : index
    %c0_8 = arith.constant 0 : index
    %23 = vector.load %arg4[%c0_7, %c0_8] : memref<1x64xf32, #tpu.memory_space<vmem>>, vector<1x64xf32>
    %24 = vector.broadcast %23 : vector<1x64xf32> to vector<64x64xf32>
    %25 = arith.addf %22, %24 : vector<64x64xf32>
    %26 = arith.truncf %25 : vector<64x64xf32> to vector<64x64xbf16>
    %c0_9 = arith.constant 0 : index
    %c0_10 = arith.constant 0 : index
    %27 = vector.load %arg5[%c0_9, %c0_10] : memref<64x256xbf16, #tpu.memory_space<vmem>>, vector<64x256xbf16>
    %cst_11 = arith.constant dense<0.000000e+00> : vector<64x256xf32>
    %28 = tpu.matmul %26, %27, %cst_11 {dimension_numbers = #tpu.dot_dimension_numbers<[1], [0], [0], [1], [0, 0, 1, 1], [], []>} : vector<64x64xbf16>, vector<64x256xbf16>, vector<64x256xf32> -> vector<64x256xf32>
    %c0_12 = arith.constant 0 : index
    %c0_13 = arith.constant 0 : index
    %29 = vector.load %arg6[%c0_12, %c0_13] : memref<1x256xf32, #tpu.memory_space<vmem>>, vector<1x256xf32>
    %30 = vector.broadcast %29 : vector<1x256xf32> to vector<64x256xf32>
    %31 = arith.addf %28, %30 : vector<64x256xf32>
    %cst_14 = arith.constant 5.000000e-01 : f32
    %32 = vector.broadcast %cst_14 : f32 to vector<64x256xf32>
    %33 = arith.mulf %32, %31 : vector<64x256xf32>
    %cst_15 = arith.constant 0.707106769 : f32
    %34 = vector.broadcast %cst_15 : f32 to vector<64x256xf32>
    %35 = arith.mulf %31, %34 : vector<64x256xf32>
    %36 = math.absf %35 : vector<64x256xf32>
    %cst_16 = arith.constant 0.327591091 : f32
    %37 = vector.broadcast %cst_16 : f32 to vector<64x256xf32>
    %38 = arith.mulf %37, %36 : vector<64x256xf32>
    %cst_17 = arith.constant 1.000000e+00 : f32
    %39 = vector.broadcast %cst_17 : f32 to vector<64x256xf32>
    %40 = arith.addf %39, %38 : vector<64x256xf32>
    %cst_18 = arith.constant 1.000000e+00 : f32
    %41 = vector.broadcast %cst_18 : f32 to vector<64x256xf32>
    %42 = arith.divf %41, %40 : vector<64x256xf32>
    %cst_19 = arith.constant 1.06140542 : f32
    %43 = vector.broadcast %cst_19 : f32 to vector<64x256xf32>
    %44 = arith.mulf %43, %42 : vector<64x256xf32>
    %cst_20 = arith.constant -1.45315206 : f32
    %45 = vector.broadcast %cst_20 : f32 to vector<64x256xf32>
    %46 = arith.addf %44, %45 : vector<64x256xf32>
    %47 = arith.mulf %46, %42 : vector<64x256xf32>
    %cst_21 = arith.constant 1.42141378 : f32
    %48 = vector.broadcast %cst_21 : f32 to vector<64x256xf32>
    %49 = arith.addf %47, %48 : vector<64x256xf32>
    %50 = arith.mulf %49, %42 : vector<64x256xf32>
    %cst_22 = arith.constant -0.284496725 : f32
    %51 = vector.broadcast %cst_22 : f32 to vector<64x256xf32>
    %52 = arith.addf %50, %51 : vector<64x256xf32>
    %53 = arith.mulf %52, %42 : vector<64x256xf32>
    %cst_23 = arith.constant 0.254829586 : f32
    %54 = vector.broadcast %cst_23 : f32 to vector<64x256xf32>
    %55 = arith.addf %53, %54 : vector<64x256xf32>
    %56 = arith.mulf %55, %42 : vector<64x256xf32>
    %cst_24 = arith.constant 0.000000e+00 : f32
    %57 = vector.broadcast %cst_24 : f32 to vector<64x256xf32>
    %58 = arith.subf %57, %36 : vector<64x256xf32>
    %59 = arith.mulf %58, %36 : vector<64x256xf32>
    %60 = math.exp %59 : vector<64x256xf32>
    %61 = arith.mulf %56, %60 : vector<64x256xf32>
    %cst_25 = arith.constant 1.000000e+00 : f32
    %62 = vector.broadcast %cst_25 : f32 to vector<64x256xf32>
    %63 = arith.subf %62, %61 : vector<64x256xf32>
    %cst_26 = arith.constant 0.000000e+00 : f32
    %64 = vector.broadcast %cst_26 : f32 to vector<64x256xf32>
    %65 = arith.cmpf olt, %35, %64 : vector<64x256xf32>
    %cst_27 = arith.constant 0.000000e+00 : f32
    %66 = vector.broadcast %cst_27 : f32 to vector<64x256xf32>
    %67 = arith.subf %66, %63 : vector<64x256xf32>
    %68 = arith.select %65, %67, %63 : vector<64x256xi1>, vector<64x256xf32>
    %cst_28 = arith.constant 1.000000e+00 : f32
    %69 = vector.broadcast %cst_28 : f32 to vector<64x256xf32>
    %70 = arith.addf %69, %68 : vector<64x256xf32>
    %71 = arith.mulf %33, %70 : vector<64x256xf32>
    %72 = arith.truncf %71 : vector<64x256xf32> to vector<64x256xbf16>
    %c0_29 = arith.constant 0 : index
    %c0_30 = arith.constant 0 : index
    %73 = vector.load %arg7[%c0_29, %c0_30] : memref<64x256xbf16, #tpu.memory_space<vmem>>, vector<64x256xbf16>
    tpu.vector_store %arg7[%c0_29, %c0_30], %72 {strides = array<i32>} : memref<64x256xbf16, #tpu.memory_space<vmem>>, vector<64x256xbf16>,
    return
  }
  func.func @transform_0(%arg0: i32, %arg1: i32) -> (i32, i32) {
    %c0_i32 = arith.constant 0 : i32
    %c0_i32_0 = arith.constant 0 : i32
    return %arg0, %c0_i32 : i32, i32
  }
  func.func @transform_1(%arg0: i32, %arg1: i32) -> (i32, i32) {
    %c0_i32 = arith.constant 0 : i32
    %c0_i32_0 = arith.constant 0 : i32
    %c0_i32_1 = arith.constant 0 : i32
    return %c0_i32, %c0_i32_0 : i32, i32
  }
  func.func @transform_2(%arg0: i32, %arg1: i32) -> (i32, i32) {
    %c0_i32 = arith.constant 0 : i32
    %c0_i32_0 = arith.constant 0 : i32
    %c0_i32_1 = arith.constant 0 : i32
    return %c0_i32, %c0_i32_0 : i32, i32
  }
  func.func @transform_3(%arg0: i32, %arg1: i32) -> (i32, i32) {
    %c0_i32 = arith.constant 0 : i32
    %c0_i32_0 = arith.constant 0 : i32
    return %c0_i32, %arg1 : i32, i32
  }
  func.func @transform_4(%arg0: i32, %arg1: i32) -> (i32, i32) {
    %c0_i32 = arith.constant 0 : i32
    %c0_i32_0 = arith.constant 0 : i32
    return %c0_i32, %arg1 : i32, i32
  }
  func.func @transform_5(%arg0: i32, %arg1: i32) -> (i32, i32) {
    %c0_i32 = arith.constant 0 : i32
    return %arg0, %arg1 : i32, i32
  }
}

module attributes {stable_mosaic.version = 11 : i64} {
  func.func @_matmul_kernel(%arg0: i32, %arg1: i32, %arg2: i32, %arg3: memref<64x256xbf16, #tpu.memory_space<vmem>>, %arg4: memref<256x128xbf16, #tpu.memory_space<vmem>>, %arg5: memref<1x128xf32, #tpu.memory_space<vmem>>, %arg6: memref<64x128xbf16, #tpu.memory_space<vmem>>, %arg7: memref<64x128xbf16, #tpu.memory_space<vmem>>, %arg8: memref<64x128xf32, #tpu.memory_space<vmem>>) attributes {dimension_semantics = [#tpu.dimension_semantics<parallel>, #tpu.dimension_semantics<parallel>, #tpu.dimension_semantics<arbitrary>], iteration_bounds = array<i64: 1, 1, 1>, scalar_prefetch = 0 : i64, scratch_operands = 1 : i64, tpu.core_type = #tpu.core_type<tc>, window_params = [{transform_indices = @transform_0, window_bounds = array<i64: 64, 256>}, {transform_indices = @transform_1, window_bounds = array<i64: 256, 128>}, {transform_indices = @transform_2, window_bounds = array<i64: 1, 128>}, {transform_indices = @transform_3, window_bounds = array<i64: 64, 128>}, {transform_indices = @transform_4, window_bounds = array<i64: 64, 128>}]} {
    %c0_i32 = arith.constant 0 : i32
    %0 = arith.cmpi eq, %arg2, %c0_i32 : i32
    %1 = arith.extui %0 : i1 to i32
    %c0_i32_0 = arith.constant 0 : i32
    %2 = arith.cmpi ne, %1, %c0_i32_0 : i32
    scf.if %2 {
      %cst_10 = arith.constant 0.000000e+00 : f32
      %12 = vector.broadcast %cst_10 : f32 to vector<64x128xf32>
      %c0_11 = arith.constant 0 : index
      %c0_12 = arith.constant 0 : index
      %13 = vector.load %arg8[%c0_11, %c0_12] : memref<64x128xf32, #tpu.memory_space<vmem>>, vector<64x128xf32>
      tpu.vector_store %arg8[%c0_11, %c0_12], %12 {strides = array<i32>} : memref<64x128xf32, #tpu.memory_space<vmem>>, vector<64x128xf32>,
    } else {
    }
    %c0 = arith.constant 0 : index
    %c0_1 = arith.constant 0 : index
    %3 = vector.load %arg8[%c0, %c0_1] : memref<64x128xf32, #tpu.memory_space<vmem>>, vector<64x128xf32>
    %c0_2 = arith.constant 0 : index
    %c0_3 = arith.constant 0 : index
    %4 = vector.load %arg3[%c0_2, %c0_3] : memref<64x256xbf16, #tpu.memory_space<vmem>>, vector<64x256xbf16>
    %c0_4 = arith.constant 0 : index
    %c0_5 = arith.constant 0 : index
    %5 = vector.load %arg4[%c0_4, %c0_5] : memref<256x128xbf16, #tpu.memory_space<vmem>>, vector<256x128xbf16>
    %cst = arith.constant dense<0.000000e+00> : vector<64x128xf32>
    %6 = tpu.matmul %4, %5, %cst {dimension_numbers = #tpu.dot_dimension_numbers<[1], [0], [0], [1], [0, 0, 1, 1], [], []>} : vector<64x256xbf16>, vector<256x128xbf16>, vector<64x128xf32> -> vector<64x128xf32>
    %7 = arith.addf %3, %6 : vector<64x128xf32>
    %c0_6 = arith.constant 0 : index
    %c0_7 = arith.constant 0 : index
    %8 = vector.load %arg8[%c0_6, %c0_7] : memref<64x128xf32, #tpu.memory_space<vmem>>, vector<64x128xf32>
    tpu.vector_store %arg8[%c0_6, %c0_7], %7 {strides = array<i32>} : memref<64x128xf32, #tpu.memory_space<vmem>>, vector<64x128xf32>,
    %c0_i32_8 = arith.constant 0 : i32
    %9 = arith.cmpi eq, %arg2, %c0_i32_8 : i32
    %10 = arith.extui %9 : i1 to i32
    %c0_i32_9 = arith.constant 0 : i32
    %11 = arith.cmpi ne, %10, %c0_i32_9 : i32
    scf.if %11 {
      %c0_10 = arith.constant 0 : index
      %c0_11 = arith.constant 0 : index
      %12 = vector.load %arg8[%c0_10, %c0_11] : memref<64x128xf32, #tpu.memory_space<vmem>>, vector<64x128xf32>
      %c0_12 = arith.constant 0 : index
      %c0_13 = arith.constant 0 : index
      %13 = vector.load %arg5[%c0_12, %c0_13] : memref<1x128xf32, #tpu.memory_space<vmem>>, vector<1x128xf32>
      %14 = vector.broadcast %13 : vector<1x128xf32> to vector<64x128xf32>
      %15 = arith.addf %12, %14 : vector<64x128xf32>
      %c0_14 = arith.constant 0 : index
      %c0_15 = arith.constant 0 : index
      %16 = vector.load %arg6[%c0_14, %c0_15] : memref<64x128xbf16, #tpu.memory_space<vmem>>, vector<64x128xbf16>
      %17 = arith.extf %16 : vector<64x128xbf16> to vector<64x128xf32>
      %18 = arith.addf %15, %17 : vector<64x128xf32>
      %19 = arith.truncf %18 : vector<64x128xf32> to vector<64x128xbf16>
      %c0_16 = arith.constant 0 : index
      %c0_17 = arith.constant 0 : index
      %20 = vector.load %arg7[%c0_16, %c0_17] : memref<64x128xbf16, #tpu.memory_space<vmem>>, vector<64x128xbf16>
      tpu.vector_store %arg7[%c0_16, %c0_17], %19 {strides = array<i32>} : memref<64x128xbf16, #tpu.memory_space<vmem>>, vector<64x128xbf16>,
    } else {
    }
    return
  }
  func.func @transform_0(%arg0: i32, %arg1: i32, %arg2: i32) -> (i32, i32) {
    %c0_i32 = arith.constant 0 : i32
    return %arg0, %arg2 : i32, i32
  }
  func.func @transform_1(%arg0: i32, %arg1: i32, %arg2: i32) -> (i32, i32) {
    %c0_i32 = arith.constant 0 : i32
    return %arg2, %arg1 : i32, i32
  }
  func.func @transform_2(%arg0: i32, %arg1: i32, %arg2: i32) -> (i32, i32) {
    %c0_i32 = arith.constant 0 : i32
    %c0_i32_0 = arith.constant 0 : i32
    return %c0_i32, %arg1 : i32, i32
  }
  func.func @transform_3(%arg0: i32, %arg1: i32, %arg2: i32) -> (i32, i32) {
    %c0_i32 = arith.constant 0 : i32
    return %arg0, %arg1 : i32, i32
  }
  func.func @transform_4(%arg0: i32, %arg1: i32, %arg2: i32) -> (i32, i32) {
    %c0_i32 = arith.constant 0 : i32
    return %arg0, %arg1 : i32, i32
  }
}

module attributes {stable_mosaic.version = 11 : i64} {
  func.func @_matmul_kernel(%arg0: i32, %arg1: i32, %arg2: i32, %arg3: memref<64x128xbf16, #tpu.memory_space<vmem>>, %arg4: memref<128x128xbf16, #tpu.memory_space<vmem>>, %arg5: memref<1x128xf32, #tpu.memory_space<vmem>>, %arg6: memref<64x128xf32, #tpu.memory_space<vmem>>, %arg7: memref<64x128xf32, #tpu.memory_space<vmem>>) attributes {dimension_semantics = [#tpu.dimension_semantics<parallel>, #tpu.dimension_semantics<parallel>, #tpu.dimension_semantics<arbitrary>], iteration_bounds = array<i64: 1, 1, 1>, scalar_prefetch = 0 : i64, scratch_operands = 1 : i64, tpu.core_type = #tpu.core_type<tc>, window_params = [{transform_indices = @transform_0, window_bounds = array<i64: 64, 128>}, {transform_indices = @transform_1, window_bounds = array<i64: 128, 128>}, {transform_indices = @transform_2, window_bounds = array<i64: 1, 128>}, {transform_indices = @transform_3, window_bounds = array<i64: 64, 128>}]} {
    %c0_i32 = arith.constant 0 : i32
    %0 = arith.cmpi eq, %arg2, %c0_i32 : i32
    %1 = arith.extui %0 : i1 to i32
    %c0_i32_0 = arith.constant 0 : i32
    %2 = arith.cmpi ne, %1, %c0_i32_0 : i32
    scf.if %2 {
      %cst_10 = arith.constant 0.000000e+00 : f32
      %12 = vector.broadcast %cst_10 : f32 to vector<64x128xf32>
      %c0_11 = arith.constant 0 : index
      %c0_12 = arith.constant 0 : index
      %13 = vector.load %arg7[%c0_11, %c0_12] : memref<64x128xf32, #tpu.memory_space<vmem>>, vector<64x128xf32>
      tpu.vector_store %arg7[%c0_11, %c0_12], %12 {strides = array<i32>} : memref<64x128xf32, #tpu.memory_space<vmem>>, vector<64x128xf32>,
    } else {
    }
    %c0 = arith.constant 0 : index
    %c0_1 = arith.constant 0 : index
    %3 = vector.load %arg7[%c0, %c0_1] : memref<64x128xf32, #tpu.memory_space<vmem>>, vector<64x128xf32>
    %c0_2 = arith.constant 0 : index
    %c0_3 = arith.constant 0 : index
    %4 = vector.load %arg3[%c0_2, %c0_3] : memref<64x128xbf16, #tpu.memory_space<vmem>>, vector<64x128xbf16>
    %c0_4 = arith.constant 0 : index
    %c0_5 = arith.constant 0 : index
    %5 = vector.load %arg4[%c0_4, %c0_5] : memref<128x128xbf16, #tpu.memory_space<vmem>>, vector<128x128xbf16>
    %cst = arith.constant dense<0.000000e+00> : vector<64x128xf32>
    %6 = tpu.matmul %4, %5, %cst {dimension_numbers = #tpu.dot_dimension_numbers<[1], [0], [0], [1], [0, 0, 1, 1], [], []>} : vector<64x128xbf16>, vector<128x128xbf16>, vector<64x128xf32> -> vector<64x128xf32>
    %7 = arith.addf %3, %6 : vector<64x128xf32>
    %c0_6 = arith.constant 0 : index
    %c0_7 = arith.constant 0 : index
    %8 = vector.load %arg7[%c0_6, %c0_7] : memref<64x128xf32, #tpu.memory_space<vmem>>, vector<64x128xf32>
    tpu.vector_store %arg7[%c0_6, %c0_7], %7 {strides = array<i32>} : memref<64x128xf32, #tpu.memory_space<vmem>>, vector<64x128xf32>,
    %c0_i32_8 = arith.constant 0 : i32
    %9 = arith.cmpi eq, %arg2, %c0_i32_8 : i32
    %10 = arith.extui %9 : i1 to i32
    %c0_i32_9 = arith.constant 0 : i32
    %11 = arith.cmpi ne, %10, %c0_i32_9 : i32
    scf.if %11 {
      %c0_10 = arith.constant 0 : index
      %c0_11 = arith.constant 0 : index
      %12 = vector.load %arg7[%c0_10, %c0_11] : memref<64x128xf32, #tpu.memory_space<vmem>>, vector<64x128xf32>
      %c0_12 = arith.constant 0 : index
      %c0_13 = arith.constant 0 : index
      %13 = vector.load %arg5[%c0_12, %c0_13] : memref<1x128xf32, #tpu.memory_space<vmem>>, vector<1x128xf32>
      %14 = vector.broadcast %13 : vector<1x128xf32> to vector<64x128xf32>
      %15 = arith.addf %12, %14 : vector<64x128xf32>
      %c0_14 = arith.constant 0 : index
      %c0_15 = arith.constant 0 : index
      %16 = vector.load %arg6[%c0_14, %c0_15] : memref<64x128xf32, #tpu.memory_space<vmem>>, vector<64x128xf32>
      tpu.vector_store %arg6[%c0_14, %c0_15], %15 {strides = array<i32>} : memref<64x128xf32, #tpu.memory_space<vmem>>, vector<64x128xf32>,
    } else {
    }
    return
  }
  func.func @transform_0(%arg0: i32, %arg1: i32, %arg2: i32) -> (i32, i32) {
    %c0_i32 = arith.constant 0 : i32
    return %arg0, %arg2 : i32, i32
  }
  func.func @transform_1(%arg0: i32, %arg1: i32, %arg2: i32) -> (i32, i32) {
    %c0_i32 = arith.constant 0 : i32
    return %arg2, %arg1 : i32, i32
  }
  func.func @transform_2(%arg0: i32, %arg1: i32, %arg2: i32) -> (i32, i32) {
    %c0_i32 = arith.constant 0 : i32
    %c0_i32_0 = arith.constant 0 : i32
    return %c0_i32, %arg1 : i32, i32
  }
  func.func @transform_3(%arg0: i32, %arg1: i32, %arg2: i32) -> (i32, i32) {
    %c0_i32 = arith.constant 0 : i32
    return %arg0, %arg1 : i32, i32
  }
}

</mosaic_0001>

<llo_original>
// kernel: _lambda_.45
$region0: #{_lambda_.45}
  #allocation0 [shape = 'u32[]', space=smem, size = 0x4, offset = 0x4, fixed_abs, tag = 'smem constant byte address 0x4 - core index']
  #allocation1 [shape = 'u32[144,128]{1,0:T(1,128)}', space=vmem, size = 0x12000, scoped, tag = 'internal scratch']
  %s0 = inlined_call_operand.vmem [shape: bf16[64,64], index: 0, kind: input, shape index: {}]
  %s1 = inlined_call_operand.vmem [shape: f32[1,64], index: 1, kind: input, shape index: {}]
  %s2 = inlined_call_operand.vmem [shape: f32[1,64], index: 2, kind: input, shape index: {}]
  %s3 = inlined_call_operand.vmem [shape: bf16[64,256], index: 3, kind: input, shape index: {}]
  %s4 = inlined_call_operand.vmem [shape: f32[1,256], index: 4, kind: input, shape index: {}]
  %s5 = inlined_call_operand.vmem [shape: bf16[64,256], index: 5, kind: output, shape index: {}]
  %s6 = sld [smem:[#allocation0]]
  $region30: #{_lambda_.45} parent=0
    _
  %s8 = ssub.s32 1, %s6
  %s9 = scalar_select 0, %s8, %s6
  // Predicated region
  $region2: #{_lambda_.45} parent=0 // pred_check
    _
  $region3: #{_lambda_.45} parent=0 // pred_check_branch
    %11 = sbr.rel (0) target = $region5
  $region4: #{_lambda_.45} parent=0 // pred_region
    _
  $region5: #{_lambda_.45} parent=0 // pred_fallthru
    _
  // Predicated region
  $region6: #{_lambda_.45} parent=0 // pred_check
    _
  $region7: #{_lambda_.45} parent=0 // pred_check_branch
    %13 = sbr.rel (0) target = $region9
  $region8: #{_lambda_.45} parent=0 // pred_region
    _
  $region9: #{_lambda_.45} parent=0 // pred_fallthru
    _
  // Predicated region
  $region10: #{_lambda_.45} parent=0 // pred_check
    _
  $region11: #{_lambda_.45} parent=0 // pred_check_branch
    %15 = sbr.rel (0) target = $region13
  $region12: #{_lambda_.45} parent=0 // pred_region
    _
  $region13: #{_lambda_.45} parent=0 // pred_fallthru
    _
  // Predicated region
  $region14: #{_lambda_.45} parent=0 // pred_check
    _
  $region15: #{_lambda_.45} parent=0 // pred_check_branch
    %17 = sbr.rel (0) target = $region17
  $region16: #{_lambda_.45} parent=0 // pred_region
    _
  $region17: #{_lambda_.45} parent=0 // pred_fallthru
    _
  // Predicated region
  $region18: #{_lambda_.45} parent=0 // pred_check
    _
  $region19: #{_lambda_.45} parent=0 // pred_check_branch
    %19 = sbr.rel (0) target = $region21
  $region20: #{_lambda_.45} parent=0 // pred_region
    _
  $region21: #{_lambda_.45} parent=0 // pred_fallthru
    _
  %v21 = vld [vmem:[%s0] sm:$0xf]
  %v22 = vld [vmem:[%s0 + $0x4] sm:$0xf]
  %v23 = vld [vmem:[%s0 + $0x8] sm:$0xf]
  %v24 = vld [vmem:[%s0 + $0xc] sm:$0xf]
  %v25 = vld [vmem:[%s0 + $0x10] sm:$0xf]
  %v26 = vld [vmem:[%s0 + $0x14] sm:$0xf]
  %v27 = vld [vmem:[%s0 + $0x18] sm:$0xf]
  %v28 = vld [vmem:[%s0 + $0x1c] sm:$0xf]
  %v29 = vunpack.c.l.bf16 %v21
  %v30 = vunpack.c.l.bf16 %v22
  %v31 = vunpack.c.l.bf16 %v23
  %v32 = vunpack.c.l.bf16 %v24
  %v33 = vunpack.c.l.bf16 %v25
  %v34 = vunpack.c.l.bf16 %v26
  %v35 = vunpack.c.l.bf16 %v27
  %v36 = vunpack.c.l.bf16 %v28
  %vm37 = vcmask 523264
  %v38 = vsel %vm37, %v29, 0.0
  %39 = vadd.xlane.f32.xlu0 %v38
  %v40 = vpop.xlane.xlu0 %39
  %v41 = vsel %vm37, %v30, 0.0
  %42 = vadd.xlane.f32.xlu0 %v41
  %v43 = vpop.xlane.xlu0 %42
  %v44 = vsel %vm37, %v31, 0.0
  %45 = vadd.xlane.f32.xlu0 %v44
  %v46 = vpop.xlane.xlu0 %45
  %v47 = vsel %vm37, %v32, 0.0
  %48 = vadd.xlane.f32.xlu0 %v47
  %v49 = vpop.xlane.xlu0 %48
  %v50 = vsel %vm37, %v33, 0.0
  %51 = vadd.xlane.f32.xlu0 %v50
  %v52 = vpop.xlane.xlu0 %51
  %v53 = vsel %vm37, %v34, 0.0
  %54 = vadd.xlane.f32.xlu0 %v53
  %v55 = vpop.xlane.xlu0 %54
  %v56 = vsel %vm37, %v35, 0.0
  %57 = vadd.xlane.f32.xlu0 %v56
  %v58 = vpop.xlane.xlu0 %57
  %v59 = vsel %vm37, %v36, 0.0
  %60 = vadd.xlane.f32.xlu0 %v59
  %v61 = vpop.xlane.xlu0 %60
  %v62 = vrcp.pop 64.0
  %v63 = vmul.f32 %v40, %v62
  %v64 = vmul.f32 %v43, %v62
  %v65 = vmul.f32 %v46, %v62
  %v66 = vmul.f32 %v49, %v62
  %v67 = vmul.f32 %v52, %v62
  %v68 = vmul.f32 %v55, %v62
  %v69 = vmul.f32 %v58, %v62
  %v70 = vmul.f32 %v61, %v62
  %v71 = vsub.f32 %v29, %v63
  %v72 = vsub.f32 %v30, %v64
  %v73 = vsub.f32 %v31, %v65
  %v74 = vsub.f32 %v32, %v66
  %v75 = vsub.f32 %v33, %v67
  %v76 = vsub.f32 %v34, %v68
  %v77 = vsub.f32 %v35, %v69
  %v78 = vsub.f32 %v36, %v70
  %v79 = vmul.f32 %v71, %v71
  %v80 = vmul.f32 %v72, %v72
  %v81 = vmul.f32 %v73, %v73
  %v82 = vmul.f32 %v74, %v74
  %v83 = vmul.f32 %v75, %v75
  %v84 = vmul.f32 %v76, %v76
  %v85 = vmul.f32 %v77, %v77
  %v86 = vmul.f32 %v78, %v78
  %v87 = vsel %vm37, %v79, 0.0
  %88 = vadd.xlane.f32.xlu0 %v87
  %v89 = vpop.xlane.xlu0 %88
  %v90 = vsel %vm37, %v80, 0.0
  %91 = vadd.xlane.f32.xlu0 %v90
  %v92 = vpop.xlane.xlu0 %91
  %v93 = vsel %vm37, %v81, 0.0
  %94 = vadd.xlane.f32.xlu0 %v93
  %v95 = vpop.xlane.xlu0 %94
  %v96 = vsel %vm37, %v82, 0.0
  %97 = vadd.xlane.f32.xlu0 %v96
  %v98 = vpop.xlane.xlu0 %97
  %v99 = vsel %vm37, %v83, 0.0
  %100 = vadd.xlane.f32.xlu0 %v99
  %v101 = vpop.xlane.xlu0 %100
  %v102 = vsel %vm37, %v84, 0.0
  %103 = vadd.xlane.f32.xlu0 %v102
  %v104 = vpop.xlane.xlu0 %103
  %v105 = vsel %vm37, %v85, 0.0
  %106 = vadd.xlane.f32.xlu0 %v105
  %v107 = vpop.xlane.xlu0 %106
  %v108 = vsel %vm37, %v86, 0.0
  %109 = vadd.xlane.f32.xlu0 %v108
  %v110 = vpop.xlane.xlu0 %109
  %v111 = vmul.f32 %v89, %v62
  %v112 = vmul.f32 %v92, %v62
  %v113 = vmul.f32 %v95, %v62
  %v114 = vmul.f32 %v98, %v62
  %v115 = vmul.f32 %v101, %v62
  %v116 = vmul.f32 %v104, %v62
  %v117 = vmul.f32 %v107, %v62
  %v118 = vmul.f32 %v110, %v62
  %v119 = vadd.f32 %v111, 1e-05
  %v120 = vadd.f32 %v112, 1e-05
  %v121 = vadd.f32 %v113, 1e-05
  %v122 = vadd.f32 %v114, 1e-05
  %v123 = vadd.f32 %v115, 1e-05
  %v124 = vadd.f32 %v116, 1e-05
  %v125 = vadd.f32 %v117, 1e-05
  %v126 = vadd.f32 %v118, 1e-05
  %v127 = vrsqrt.pop %v119
  %v128 = vrsqrt.pop %v120
  %v129 = vrsqrt.pop %v121
  %v130 = vrsqrt.pop %v122
  %v131 = vrsqrt.pop %v123
  %v132 = vrsqrt.pop %v124
  %v133 = vrsqrt.pop %v125
  %v134 = vrsqrt.pop %v126
  %v135 = vmul.f32 %v71, %v127
  %v136 = vmul.f32 %v72, %v128
  %v137 = vmul.f32 %v73, %v129
  %v138 = vmul.f32 %v74, %v130
  %v139 = vmul.f32 %v75, %v131
  %v140 = vmul.f32 %v76, %v132
  %v141 = vmul.f32 %v77, %v133
  %v142 = vmul.f32 %v78, %v134
  %v143 = vld [vmem:[%s1] sm:$0x1]
  %v145 = vlaneseq
  %v146 = vshrl.u32 %v145, 7
  %v147 = vsub.s32 0, %v146
  %v148 = vrot.slane %v143, %v147
  %v150 = vmul.f32 %v135, %v148
  %v151 = vmul.f32 %v136, %v148
  %v152 = vmul.f32 %v137, %v148
  %v153 = vmul.f32 %v138, %v148
  %v154 = vmul.f32 %v139, %v148
  %v155 = vmul.f32 %v140, %v148
  %v156 = vmul.f32 %v141, %v148
  %v157 = vmul.f32 %v142, %v148
  %v158 = vld [vmem:[%s2] sm:$0x1]
  %v160 = vlaneseq
  %v161 = vshrl.u32 %v160, 7
  %v162 = vsub.s32 0, %v161
  %v163 = vrot.slane %v158, %v162
  %v165 = vadd.f32 %v150, %v163
  %v166 = vadd.f32 %v151, %v163
  %v167 = vadd.f32 %v152, %v163
  %v168 = vadd.f32 %v153, %v163
  %v169 = vadd.f32 %v154, %v163
  %v170 = vadd.f32 %v155, %v163
  %v171 = vadd.f32 %v156, %v163
  %v172 = vadd.f32 %v157, %v163
  %v173 = vpack.c.bf16 %v166, %v165
  %v174 = vpack.c.bf16 %v168, %v167
  %v175 = vpack.c.bf16 %v170, %v169
  %v176 = vpack.c.bf16 %v172, %v171
  %v177 = vld [vmem:[%s3] sm:$0xff]
  %v178 = vld [vmem:[%s3 + $0x8] sm:$0xff]
  %v179 = vld [vmem:[%s3 + $0x10] sm:$0xff]
  %v180 = vld [vmem:[%s3 + $0x18] sm:$0xff]
  %v181 = vld [vmem:[%s3 + $0x20] sm:$0xff]
  %v182 = vld [vmem:[%s3 + $0x28] sm:$0xff]
  %v183 = vld [vmem:[%s3 + $0x30] sm:$0xff]
  %v184 = vld [vmem:[%s3 + $0x38] sm:$0xff]
  %v185 = vld [vmem:[%s4] sm:$0x3]
  %v187 = vlaneseq
  %v188 = vshrl.u32 %v187, 7
  %v189 = vsub.s32 0, %v188
  %v190 = vrot.slane %v185, %v189
  %v191 = vlaneseq
  %v192 = vshrl.u32 %v191, 7
  %v193 = vsub.s32 1, %v192
  %v194 = vrot.slane %v185, %v193
  %v205 = vunpack.c.l.b16 %v177
  %v206 = vunpack.c.h.b16 %v177
  %v207 = vunpack.c.l.b16 %v178
  %v208 = vunpack.c.h.b16 %v178
  %v209 = vunpack.c.l.b16 %v179
  %v210 = vunpack.c.h.b16 %v179
  %v211 = vunpack.c.l.b16 %v180
  %v212 = vunpack.c.h.b16 %v180
  %v213 = vunpack.c.l.b16 %v181
  %v214 = vunpack.c.h.b16 %v181
  %v215 = vunpack.c.l.b16 %v182
  %v216 = vunpack.c.h.b16 %v182
  %v217 = vunpack.c.l.b16 %v183
  %v218 = vunpack.c.h.b16 %v183
  %v219 = vunpack.c.l.b16 %v184
  %v220 = vunpack.c.h.b16 %v184
  %v221 = vpack.c.b16 %v207, %v205
  %v222 = vpack.c.b16 %v208, %v206
  %v223 = vpack.c.b16 %v211, %v209
  %v224 = vpack.c.b16 %v212, %v210
  %v225 = vpack.c.b16 %v215, %v213
  %v226 = vpack.c.b16 %v216, %v214
  %v227 = vpack.c.b16 %v219, %v217
  %v228 = vpack.c.b16 %v220, %v218
  %v238 = vsel %vm37, %v173, 0
  %v241 = vsel %vm37, %v174, 0
  %v244 = vsel %vm37, %v175, 0
  %v247 = vsel %vm37, %v176, 0
  %249 = vmatprep.subr.bf16.mxu0 %v222
  %250 = vmatpush1.bf16.msra.mxu0 %v221
  %251 = vmatprep.subr.bf16.mxu0 %v224
  %252 = vmatpush1.bf16.msra.mxu0 %v223
  %253 = vmatprep.subr.bf16.mxu0 %v226
  %254 = vmatpush1.bf16.msra.mxu0 %v225
  %255 = vmatprep.subr.bf16.mxu0 %v228
  %256 = vmatpush1.bf16.msra.mxu0 %v227
  %257 = vmatprep.subr.bf16.mxu0 0
  %258 = vmatpush1.bf16.msra.mxu0 0
  %259 = vmatprep.subr.bf16.mxu0 0
  %260 = vmatpush1.bf16.msra.mxu0 0
  %261 = vmatprep.subr.bf16.mxu0 0
  %262 = vmatpush1.bf16.msra.mxu0 0
  %263 = vmatprep.subr.bf16.mxu0 0
  %264 = vmatpush1.bf16.msra.mxu0 0
  %265 = vmatprep.subr.bf16.mxu0 0
  %266 = vmatpush1.bf16.msra.mxu0 0
  %267 = vmatprep.subr.bf16.mxu0 0
  %268 = vmatpush1.bf16.msra.mxu0 0
  %269 = vmatprep.subr.bf16.mxu0 0
  %270 = vmatpush1.bf16.msra.mxu0 0
  %271 = vmatprep.subr.bf16.mxu0 0
  %272 = vmatpush1.bf16.msra.mxu0 0
  %273 = vmatprep.subr.bf16.mxu0 0
  %274 = vmatpush1.bf16.msra.mxu0 0
  %275 = vmatprep.subr.bf16.mxu0 0
  %276 = vmatpush1.bf16.msra.mxu0 0
  %277 = vmatprep.subr.bf16.mxu0 0
  %278 = vmatpush1.bf16.msra.mxu0 0
  %279 = vmatprep.subr.bf16.mxu0 0
  %280 = vmatpush1.bf16.msra.mxu0 0
  %281 = vmatprep.mubr.bf16.mxu0 0
  %282 = vmatmul.mubr.bf16.gmra.mrb[0].mxu0 %v238
  %v283 = vpop.f32.mrb[0].mxu0
  %v284 = vadd.f32 %v190, %v283
  %v285 = vpop.f32.mrb[0].mxu0
  %v286 = vadd.f32 %v194, %v285
  %v287 = vpop.f32.mrb[0].mxu0
  %v288 = vadd.f32 %v190, %v287
  %v289 = vpop.f32.mrb[0].mxu0
  %v290 = vadd.f32 %v194, %v289
  %291 = vmatprep.mubr.bf16.mxu0 0
  %292 = vmatmul.mubr.bf16.gmra.mrb[0].mxu0 %v241
  %v293 = vpop.f32.mrb[0].mxu0
  %v294 = vadd.f32 %v190, %v293
  %v295 = vpop.f32.mrb[0].mxu0
  %v296 = vadd.f32 %v194, %v295
  %v297 = vpop.f32.mrb[0].mxu0
  %v298 = vadd.f32 %v190, %v297
  %v299 = vpop.f32.mrb[0].mxu0
  %v300 = vadd.f32 %v194, %v299
  %301 = vmatprep.mubr.bf16.mxu0 0
  %302 = vmatmul.mubr.bf16.gmra.mrb[0].mxu0 %v244
  %v303 = vpop.f32.mrb[0].mxu0
  %v304 = vadd.f32 %v190, %v303
  %v305 = vpop.f32.mrb[0].mxu0
  %v306 = vadd.f32 %v194, %v305
  %v307 = vpop.f32.mrb[0].mxu0
  %v308 = vadd.f32 %v190, %v307
  %v309 = vpop.f32.mrb[0].mxu0
  %v310 = vadd.f32 %v194, %v309
  %311 = vmatprep.mubr.bf16.mxu0 0
  %312 = vmatmul.mubr.bf16.gmra.mrb[0].mxu0 %v247
  %v313 = vpop.f32.mrb[0].mxu0
  %v314 = vadd.f32 %v190, %v313
  %v315 = vpop.f32.mrb[0].mxu0
  %v316 = vadd.f32 %v194, %v315
  %v317 = vpop.f32.mrb[0].mxu0
  %v318 = vadd.f32 %v190, %v317
  %v319 = vpop.f32.mrb[0].mxu0
  %v320 = vadd.f32 %v194, %v319
  %321 = vdwg.mxu0
  %v322 = vpack.c.bf16 %v288, %v284
  %v323 = vpack.c.bf16 %v290, %v286
  %v324 = vpack.c.bf16 %v298, %v294
  %v325 = vpack.c.bf16 %v300, %v296
  %v326 = vpack.c.bf16 %v308, %v304
  %v327 = vpack.c.bf16 %v310, %v306
  %v328 = vpack.c.bf16 %v318, %v314
  %v329 = vpack.c.bf16 %v320, %v316
  %v338 = vunpack.c.l.b16 %v322
  %v339 = vunpack.c.l.b16 %v323
  %v340 = vunpack.c.h.b16 %v322
  %v341 = vunpack.c.h.b16 %v323
  %v342 = vunpack.c.l.b16 %v324
  %v343 = vunpack.c.l.b16 %v325
  %v344 = vunpack.c.h.b16 %v324
  %v345 = vunpack.c.h.b16 %v325
  %v346 = vunpack.c.l.b16 %v326
  %v347 = vunpack.c.l.b16 %v327
  %v348 = vunpack.c.h.b16 %v326
  %v349 = vunpack.c.h.b16 %v327
  %v350 = vunpack.c.l.b16 %v328
  %v351 = vunpack.c.l.b16 %v329
  %v352 = vunpack.c.h.b16 %v328
  %v353 = vunpack.c.h.b16 %v329
  %v354 = vpack.c.b16 %v339, %v338
  %v355 = vpack.c.b16 %v341, %v340
  %v356 = vpack.c.b16 %v343, %v342
  %v357 = vpack.c.b16 %v345, %v344
  %v358 = vpack.c.b16 %v347, %v346
  %v359 = vpack.c.b16 %v349, %v348
  %v360 = vpack.c.b16 %v351, %v350
  %v361 = vpack.c.b16 %v353, %v352
  %370 = vst [vmem:[%s5] sm:$0xff] %v354
  %371 = vst [vmem:[%s5 + $0x8] sm:$0xff] %v355
  %372 = vst [vmem:[%s5 + $0x10] sm:$0xff] %v356
  %373 = vst [vmem:[%s5 + $0x18] sm:$0xff] %v357
  %374 = vst [vmem:[%s5 + $0x20] sm:$0xff] %v358
  %375 = vst [vmem:[%s5 + $0x28] sm:$0xff] %v359
  %376 = vst [vmem:[%s5 + $0x30] sm:$0xff] %v360
  %377 = vst [vmem:[%s5 + $0x38] sm:$0xff] %v361
  // Predicated region
  $region22: #{_lambda_.45} parent=0 // pred_check
    _
  $region23: #{_lambda_.45} parent=0 // pred_check_branch
    %379 = sbr.rel (0) target = $region25
  $region24: #{_lambda_.45} parent=0 // pred_region
    _
  $region25: #{_lambda_.45} parent=0 // pred_fallthru
    _
  // Predicated region
  $region26: #{_lambda_.45} parent=0 // pred_check
    _
  $region27: #{_lambda_.45} parent=0 // pred_check_branch
    %381 = sbr.rel (0) target = $region29
  $region28: #{_lambda_.45} parent=0 // pred_region
    _
  $region29: #{_lambda_.45} parent=0 // pred_fallthru
    _

// kernel: _lambda_.48
$region0: #{_lambda_.48}
  #allocation0 [shape = 'u32[]', space=smem, size = 0x4, offset = 0x4, fixed_abs, tag = 'smem constant byte address 0x4 - core index']
  #allocation1 [shape = 'u32[144,128]{1,0:T(1,128)}', space=vmem, size = 0x12000, scoped, tag = 'internal scratch']
  %s0 = inlined_call_operand.vmem [shape: bf16[64,64], index: 0, kind: input, shape index: {}]
  %s1 = inlined_call_operand.vmem [shape: f32[1,64], index: 1, kind: input, shape index: {}]
  %s2 = inlined_call_operand.vmem [shape: f32[1,64], index: 2, kind: input, shape index: {}]
  %s3 = inlined_call_operand.vmem [shape: bf16[64,128], index: 3, kind: input, shape index: {}]
  %s4 = inlined_call_operand.vmem [shape: f32[1,128], index: 4, kind: input, shape index: {}]
  %s5 = inlined_call_operand.vmem [shape: bf16[64,128], index: 5, kind: output, shape index: {}]
  %s6 = sld [smem:[#allocation0]]
  $region30: #{_lambda_.48} parent=0
    _
  %s8 = ssub.s32 1, %s6
  %s9 = scalar_select 0, %s8, %s6
  // Predicated region
  $region2: #{_lambda_.48} parent=0 // pred_check
    _
  $region3: #{_lambda_.48} parent=0 // pred_check_branch
    %11 = sbr.rel (0) target = $region5
  $region4: #{_lambda_.48} parent=0 // pred_region
    _
  $region5: #{_lambda_.48} parent=0 // pred_fallthru
    _
  // Predicated region
  $region6: #{_lambda_.48} parent=0 // pred_check
    _
  $region7: #{_lambda_.48} parent=0 // pred_check_branch
    %13 = sbr.rel (0) target = $region9
  $region8: #{_lambda_.48} parent=0 // pred_region
    _
  $region9: #{_lambda_.48} parent=0 // pred_fallthru
    _
  // Predicated region
  $region10: #{_lambda_.48} parent=0 // pred_check
    _
  $region11: #{_lambda_.48} parent=0 // pred_check_branch
    %15 = sbr.rel (0) target = $region13
  $region12: #{_lambda_.48} parent=0 // pred_region
    _
  $region13: #{_lambda_.48} parent=0 // pred_fallthru
    _
  // Predicated region
  $region14: #{_lambda_.48} parent=0 // pred_check
    _
  $region15: #{_lambda_.48} parent=0 // pred_check_branch
    %17 = sbr.rel (0) target = $region17
  $region16: #{_lambda_.48} parent=0 // pred_region
    _
  $region17: #{_lambda_.48} parent=0 // pred_fallthru
    _
  // Predicated region
  $region18: #{_lambda_.48} parent=0 // pred_check
    _
  $region19: #{_lambda_.48} parent=0 // pred_check_branch
    %19 = sbr.rel (0) target = $region21
  $region20: #{_lambda_.48} parent=0 // pred_region
    _
  $region21: #{_lambda_.48} parent=0 // pred_fallthru
    _
  %v21 = vld [vmem:[%s0] sm:$0xf]
  %v22 = vld [vmem:[%s0 + $0x4] sm:$0xf]
  %v23 = vld [vmem:[%s0 + $0x8] sm:$0xf]
  %v24 = vld [vmem:[%s0 + $0xc] sm:$0xf]
  %v25 = vld [vmem:[%s0 + $0x10] sm:$0xf]
  %v26 = vld [vmem:[%s0 + $0x14] sm:$0xf]
  %v27 = vld [vmem:[%s0 + $0x18] sm:$0xf]
  %v28 = vld [vmem:[%s0 + $0x1c] sm:$0xf]
  %v29 = vunpack.c.l.bf16 %v21
  %v30 = vunpack.c.l.bf16 %v22
  %v31 = vunpack.c.l.bf16 %v23
  %v32 = vunpack.c.l.bf16 %v24
  %v33 = vunpack.c.l.bf16 %v25
  %v34 = vunpack.c.l.bf16 %v26
  %v35 = vunpack.c.l.bf16 %v27
  %v36 = vunpack.c.l.bf16 %v28
  %vm37 = vcmask 523264
  %v38 = vsel %vm37, %v29, 0.0
  %39 = vadd.xlane.f32.xlu0 %v38
  %v40 = vpop.xlane.xlu0 %39
  %v41 = vsel %vm37, %v30, 0.0
  %42 = vadd.xlane.f32.xlu0 %v41
  %v43 = vpop.xlane.xlu0 %42
  %v44 = vsel %vm37, %v31, 0.0
  %45 = vadd.xlane.f32.xlu0 %v44
  %v46 = vpop.xlane.xlu0 %45
  %v47 = vsel %vm37, %v32, 0.0
  %48 = vadd.xlane.f32.xlu0 %v47
  %v49 = vpop.xlane.xlu0 %48
  %v50 = vsel %vm37, %v33, 0.0
  %51 = vadd.xlane.f32.xlu0 %v50
  %v52 = vpop.xlane.xlu0 %51
  %v53 = vsel %vm37, %v34, 0.0
  %54 = vadd.xlane.f32.xlu0 %v53
  %v55 = vpop.xlane.xlu0 %54
  %v56 = vsel %vm37, %v35, 0.0
  %57 = vadd.xlane.f32.xlu0 %v56
  %v58 = vpop.xlane.xlu0 %57
  %v59 = vsel %vm37, %v36, 0.0
  %60 = vadd.xlane.f32.xlu0 %v59
  %v61 = vpop.xlane.xlu0 %60
  %v62 = vrcp.pop 64.0
  %v63 = vmul.f32 %v40, %v62
  %v64 = vmul.f32 %v43, %v62
  %v65 = vmul.f32 %v46, %v62
  %v66 = vmul.f32 %v49, %v62
  %v67 = vmul.f32 %v52, %v62
  %v68 = vmul.f32 %v55, %v62
  %v69 = vmul.f32 %v58, %v62
  %v70 = vmul.f32 %v61, %v62
  %v71 = vsub.f32 %v29, %v63
  %v72 = vsub.f32 %v30, %v64
  %v73 = vsub.f32 %v31, %v65
  %v74 = vsub.f32 %v32, %v66
  %v75 = vsub.f32 %v33, %v67
  %v76 = vsub.f32 %v34, %v68
  %v77 = vsub.f32 %v35, %v69
  %v78 = vsub.f32 %v36, %v70
  %v79 = vmul.f32 %v71, %v71
  %v80 = vmul.f32 %v72, %v72
  %v81 = vmul.f32 %v73, %v73
  %v82 = vmul.f32 %v74, %v74
  %v83 = vmul.f32 %v75, %v75
  %v84 = vmul.f32 %v76, %v76
  %v85 = vmul.f32 %v77, %v77
  %v86 = vmul.f32 %v78, %v78
  %v87 = vsel %vm37, %v79, 0.0
  %88 = vadd.xlane.f32.xlu0 %v87
  %v89 = vpop.xlane.xlu0 %88
  %v90 = vsel %vm37, %v80, 0.0
  %91 = vadd.xlane.f32.xlu0 %v90
  %v92 = vpop.xlane.xlu0 %91
  %v93 = vsel %vm37, %v81, 0.0
  %94 = vadd.xlane.f32.xlu0 %v93
  %v95 = vpop.xlane.xlu0 %94
  %v96 = vsel %vm37, %v82, 0.0
  %97 = vadd.xlane.f32.xlu0 %v96
  %v98 = vpop.xlane.xlu0 %97
  %v99 = vsel %vm37, %v83, 0.0
  %100 = vadd.xlane.f32.xlu0 %v99
  %v101 = vpop.xlane.xlu0 %100
  %v102 = vsel %vm37, %v84, 0.0
  %103 = vadd.xlane.f32.xlu0 %v102
  %v104 = vpop.xlane.xlu0 %103
  %v105 = vsel %vm37, %v85, 0.0
  %106 = vadd.xlane.f32.xlu0 %v105
  %v107 = vpop.xlane.xlu0 %106
  %v108 = vsel %vm37, %v86, 0.0
  %109 = vadd.xlane.f32.xlu0 %v108
  %v110 = vpop.xlane.xlu0 %109
  %v111 = vmul.f32 %v89, %v62
  %v112 = vmul.f32 %v92, %v62
  %v113 = vmul.f32 %v95, %v62
  %v114 = vmul.f32 %v98, %v62
  %v115 = vmul.f32 %v101, %v62
  %v116 = vmul.f32 %v104, %v62
  %v117 = vmul.f32 %v107, %v62
  %v118 = vmul.f32 %v110, %v62
  %v119 = vadd.f32 %v111, 1e-05
  %v120 = vadd.f32 %v112, 1e-05
  %v121 = vadd.f32 %v113, 1e-05
  %v122 = vadd.f32 %v114, 1e-05
  %v123 = vadd.f32 %v115, 1e-05
  %v124 = vadd.f32 %v116, 1e-05
  %v125 = vadd.f32 %v117, 1e-05
  %v126 = vadd.f32 %v118, 1e-05
  %v127 = vrsqrt.pop %v119
  %v128 = vrsqrt.pop %v120
  %v129 = vrsqrt.pop %v121
  %v130 = vrsqrt.pop %v122
  %v131 = vrsqrt.pop %v123
  %v132 = vrsqrt.pop %v124
  %v133 = vrsqrt.pop %v125
  %v134 = vrsqrt.pop %v126
  %v135 = vmul.f32 %v71, %v127
  %v136 = vmul.f32 %v72, %v128
  %v137 = vmul.f32 %v73, %v129
  %v138 = vmul.f32 %v74, %v130
  %v139 = vmul.f32 %v75, %v131
  %v140 = vmul.f32 %v76, %v132
  %v141 = vmul.f32 %v77, %v133
  %v142 = vmul.f32 %v78, %v134
  %v143 = vld [vmem:[%s1] sm:$0x1]
  %v145 = vlaneseq
  %v146 = vshrl.u32 %v145, 7
  %v147 = vsub.s32 0, %v146
  %v148 = vrot.slane %v143, %v147
  %v150 = vmul.f32 %v135, %v148
  %v151 = vmul.f32 %v136, %v148
  %v152 = vmul.f32 %v137, %v148
  %v153 = vmul.f32 %v138, %v148
  %v154 = vmul.f32 %v139, %v148
  %v155 = vmul.f32 %v140, %v148
  %v156 = vmul.f32 %v141, %v148
  %v157 = vmul.f32 %v142, %v148
  %v158 = vld [vmem:[%s2] sm:$0x1]
  %v160 = vlaneseq
  %v161 = vshrl.u32 %v160, 7
  %v162 = vsub.s32 0, %v161
  %v163 = vrot.slane %v158, %v162
  %v165 = vadd.f32 %v150, %v163
  %v166 = vadd.f32 %v151, %v163
  %v167 = vadd.f32 %v152, %v163
  %v168 = vadd.f32 %v153, %v163
  %v169 = vadd.f32 %v154, %v163
  %v170 = vadd.f32 %v155, %v163
  %v171 = vadd.f32 %v156, %v163
  %v172 = vadd.f32 %v157, %v163
  %v173 = vpack.c.bf16 %v166, %v165
  %v174 = vpack.c.bf16 %v168, %v167
  %v175 = vpack.c.bf16 %v170, %v169
  %v176 = vpack.c.bf16 %v172, %v171
  %v177 = vld [vmem:[%s3] sm:$0xf]
  %v178 = vld [vmem:[%s3 + $0x4] sm:$0xf]
  %v179 = vld [vmem:[%s3 + $0x8] sm:$0xf]
  %v180 = vld [vmem:[%s3 + $0xc] sm:$0xf]
  %v181 = vld [vmem:[%s3 + $0x10] sm:$0xf]
  %v182 = vld [vmem:[%s3 + $0x14] sm:$0xf]
  %v183 = vld [vmem:[%s3 + $0x18] sm:$0xf]
  %v184 = vld [vmem:[%s3 + $0x1c] sm:$0xf]
  %v185 = vld [vmem:[%s4] sm:$0x1]
  %v187 = vlaneseq
  %v188 = vshrl.u32 %v187, 7
  %v189 = vsub.s32 0, %v188
  %v190 = vrot.slane %v185, %v189
  %v200 = vunpack.c.l.b16 %v177
  %v201 = vunpack.c.l.b16 %v178
  %v202 = vunpack.c.l.b16 %v179
  %v203 = vunpack.c.l.b16 %v180
  %v204 = vunpack.c.l.b16 %v181
  %v205 = vunpack.c.l.b16 %v182
  %v206 = vunpack.c.l.b16 %v183
  %v207 = vunpack.c.l.b16 %v184
  %v208 = vpack.c.b16 %v201, %v200
  %v209 = vpack.c.b16 %v203, %v202
  %v210 = vpack.c.b16 %v205, %v204
  %v211 = vpack.c.b16 %v207, %v206
  %v217 = vsel %vm37, %v173, 0
  %v220 = vsel %vm37, %v174, 0
  %v223 = vsel %vm37, %v175, 0
  %v226 = vsel %vm37, %v176, 0
  %228 = vmatprep.subr.bf16.mxu0 0
  %229 = vmatpush1.bf16.msra.mxu0 %v208
  %230 = vmatprep.subr.bf16.mxu0 0
  %231 = vmatpush1.bf16.msra.mxu0 %v209
  %232 = vmatprep.subr.bf16.mxu0 0
  %233 = vmatpush1.bf16.msra.mxu0 %v210
  %234 = vmatprep.subr.bf16.mxu0 0
  %235 = vmatpush1.bf16.msra.mxu0 %v211
  %236 = vmatprep.subr.bf16.mxu0 0
  %237 = vmatpush1.bf16.msra.mxu0 0
  %238 = vmatprep.subr.bf16.mxu0 0
  %239 = vmatpush1.bf16.msra.mxu0 0
  %240 = vmatprep.subr.bf16.mxu0 0
  %241 = vmatpush1.bf16.msra.mxu0 0
  %242 = vmatprep.subr.bf16.mxu0 0
  %243 = vmatpush1.bf16.msra.mxu0 0
  %244 = vmatprep.subr.bf16.mxu0 0
  %245 = vmatpush1.bf16.msra.mxu0 0
  %246 = vmatprep.subr.bf16.mxu0 0
  %247 = vmatpush1.bf16.msra.mxu0 0
  %248 = vmatprep.subr.bf16.mxu0 0
  %249 = vmatpush1.bf16.msra.mxu0 0
  %250 = vmatprep.subr.bf16.mxu0 0
  %251 = vmatpush1.bf16.msra.mxu0 0
  %252 = vmatprep.subr.bf16.mxu0 0
  %253 = vmatpush1.bf16.msra.mxu0 0
  %254 = vmatprep.subr.bf16.mxu0 0
  %255 = vmatpush1.bf16.msra.mxu0 0
  %256 = vmatprep.subr.bf16.mxu0 0
  %257 = vmatpush1.bf16.msra.mxu0 0
  %258 = vmatprep.subr.bf16.mxu0 0
  %259 = vmatpush1.bf16.msra.mxu0 0
  %260 = vmatprep.mubr.bf16.mxu0 0
  %261 = vmatmul.mubr.bf16.gmra.mrb[0].mxu0 %v217
  %v262 = vpop.f32.mrb[0].mxu0
  %v263 = vadd.f32 %v190, %v262
  %v264 = vpop.f32.mrb[0].mxu0
  %v265 = vpop.f32.mrb[0].mxu0
  %v266 = vadd.f32 %v190, %v265
  %v267 = vpop.f32.mrb[0].mxu0
  %268 = vmatprep.mubr.bf16.mxu0 0
  %269 = vmatmul.mubr.bf16.gmra.mrb[0].mxu0 %v220
  %v270 = vpop.f32.mrb[0].mxu0
  %v271 = vadd.f32 %v190, %v270
  %v272 = vpop.f32.mrb[0].mxu0
  %v273 = vpop.f32.mrb[0].mxu0
  %v274 = vadd.f32 %v190, %v273
  %v275 = vpop.f32.mrb[0].mxu0
  %276 = vmatprep.mubr.bf16.mxu0 0
  %277 = vmatmul.mubr.bf16.gmra.mrb[0].mxu0 %v223
  %v278 = vpop.f32.mrb[0].mxu0
  %v279 = vadd.f32 %v190, %v278
  %v280 = vpop.f32.mrb[0].mxu0
  %v281 = vpop.f32.mrb[0].mxu0
  %v282 = vadd.f32 %v190, %v281
  %v283 = vpop.f32.mrb[0].mxu0
  %284 = vmatprep.mubr.bf16.mxu0 0
  %285 = vmatmul.mubr.bf16.gmra.mrb[0].mxu0 %v226
  %v286 = vpop.f32.mrb[0].mxu0
  %v287 = vadd.f32 %v190, %v286
  %v288 = vpop.f32.mrb[0].mxu0
  %v289 = vpop.f32.mrb[0].mxu0
  %v290 = vadd.f32 %v190, %v289
  %v291 = vpop.f32.mrb[0].mxu0
  %292 = vdwg.mxu0
  %v293 = vpack.c.bf16 %v266, %v263
  %v294 = vpack.c.bf16 %v274, %v271
  %v295 = vpack.c.bf16 %v282, %v279
  %v296 = vpack.c.bf16 %v290, %v287
  %v301 = vunpack.c.l.b16 %v293
  %v302 = vunpack.c.h.b16 %v293
  %v303 = vunpack.c.l.b16 %v294
  %v304 = vunpack.c.h.b16 %v294
  %v305 = vunpack.c.l.b16 %v295
  %v306 = vunpack.c.h.b16 %v295
  %v307 = vunpack.c.l.b16 %v296
  %v308 = vunpack.c.h.b16 %v296
  %v309 = vpack.c.b16 %v301, %v301
  %v310 = vpack.c.b16 %v302, %v302
  %v311 = vpack.c.b16 %v303, %v303
  %v312 = vpack.c.b16 %v304, %v304
  %v313 = vpack.c.b16 %v305, %v305
  %v314 = vpack.c.b16 %v306, %v306
  %v315 = vpack.c.b16 %v307, %v307
  %v316 = vpack.c.b16 %v308, %v308
  %325 = vst [vmem:[%s5] sm:$0xf] %v309
  %326 = vst [vmem:[%s5 + $0x4] sm:$0xf] %v310
  %327 = vst [vmem:[%s5 + $0x8] sm:$0xf] %v311
  %328 = vst [vmem:[%s5 + $0xc] sm:$0xf] %v312
  %329 = vst [vmem:[%s5 + $0x10] sm:$0xf] %v313
  %330 = vst [vmem:[%s5 + $0x14] sm:$0xf] %v314
  %331 = vst [vmem:[%s5 + $0x18] sm:$0xf] %v315
  %332 = vst [vmem:[%s5 + $0x1c] sm:$0xf] %v316
  // Predicated region
  $region22: #{_lambda_.48} parent=0 // pred_check
    _
  $region23: #{_lambda_.48} parent=0 // pred_check_branch
    %334 = sbr.rel (0) target = $region25
  $region24: #{_lambda_.48} parent=0 // pred_region
    _
  $region25: #{_lambda_.48} parent=0 // pred_fallthru
    _
  // Predicated region
  $region26: #{_lambda_.48} parent=0 // pred_check
    _
  $region27: #{_lambda_.48} parent=0 // pred_check_branch
    %336 = sbr.rel (0) target = $region29
  $region28: #{_lambda_.48} parent=0 // pred_region
    _
  $region29: #{_lambda_.48} parent=0 // pred_fallthru
    _

// kernel: _lambda_.47
$region0: #{_lambda_.47}
  #allocation0 [shape = 'u32[]', space=smem, size = 0x4, offset = 0x4, fixed_abs, tag = 'smem constant byte address 0x4 - core index']
  #allocation1 [shape = 'u32[144,128]{1,0:T(1,128)}', space=vmem, size = 0x12000, scoped, tag = 'internal scratch']
  #allocation2 [shape = 'f32[64,128]{1,0:T(8,128)}', space=vmem, size = 0x8000, scoped, tag = 'scratch operand']
  %s0 = inlined_call_operand.vmem [shape: bf16[64,128], index: 0, kind: input, shape index: {}]
  %s1 = inlined_call_operand.vmem [shape: bf16[128,128], index: 1, kind: input, shape index: {}]
  %s2 = inlined_call_operand.vmem [shape: f32[1,128], index: 2, kind: input, shape index: {}]
  %s3 = inlined_call_operand.vmem [shape: bf16[64,128], index: 3, kind: input, shape index: {}]
  %s4 = inlined_call_operand.vmem [shape: bf16[64,128], index: 4, kind: output, shape index: {}]
  %s5 = sld [smem:[#allocation0]]
  $region34: #{_lambda_.47} parent=0
    _
  %s7 = ssub.s32 1, %s5
  %s8 = scalar_select 0, %s7, %s5
  // Predicated region
  $region2: #{_lambda_.47} parent=0 // pred_check
    _
  $region3: #{_lambda_.47} parent=0 // pred_check_branch
    %10 = sbr.rel (0) target = $region5
  $region4: #{_lambda_.47} parent=0 // pred_region
    _
  $region5: #{_lambda_.47} parent=0 // pred_fallthru
    _
  // Predicated region
  $region6: #{_lambda_.47} parent=0 // pred_check
    _
  $region7: #{_lambda_.47} parent=0 // pred_check_branch
    %12 = sbr.rel (0) target = $region9
  $region8: #{_lambda_.47} parent=0 // pred_region
    _
  $region9: #{_lambda_.47} parent=0 // pred_fallthru
    _
  // Predicated region
  $region10: #{_lambda_.47} parent=0 // pred_check
    _
  $region11: #{_lambda_.47} parent=0 // pred_check_branch
    %14 = sbr.rel (0) target = $region13
  $region12: #{_lambda_.47} parent=0 // pred_region
    _
  $region13: #{_lambda_.47} parent=0 // pred_fallthru
    _
  // Predicated region
  $region14: #{_lambda_.47} parent=0 // pred_check
    _
  $region15: #{_lambda_.47} parent=0 // pred_check_branch
    %16 = sbr.rel (0) target = $region17
  $region16: #{_lambda_.47} parent=0 // pred_region
    _
  $region17: #{_lambda_.47} parent=0 // pred_fallthru
    _
  %p18 = scmp.eq.s32.totalorder 0, 0
  // Predicated region
  $region18: #{_lambda_.47} parent=0 // pred_check
    %p19 = pneg %p18
  $region19: #{_lambda_.47} parent=0 // pred_check_branch
    %21 = sbr.rel (%p19) target = $region21
  $region20: #{_lambda_.47} parent=0 // pred_region
    %22 = vst [vmem:[#allocation2] sm:$0xff] 0.0
    %23 = vst [vmem:[#allocation2 + $0x8] sm:$0xff] 0.0
    %24 = vst [vmem:[#allocation2 + $0x10] sm:$0xff] 0.0
    %25 = vst [vmem:[#allocation2 + $0x18] sm:$0xff] 0.0
    %26 = vst [vmem:[#allocation2 + $0x20] sm:$0xff] 0.0
    %27 = vst [vmem:[#allocation2 + $0x28] sm:$0xff] 0.0
    %28 = vst [vmem:[#allocation2 + $0x30] sm:$0xff] 0.0
    %29 = vst [vmem:[#allocation2 + $0x38] sm:$0xff] 0.0
  $region21: #{_lambda_.47} parent=0 // pred_fallthru
    _
  %v30 = vld [vmem:[#allocation2] sm:$0xff]
  %v31 = vld [vmem:[#allocation2 + $0x8] sm:$0xff]
  %v32 = vld [vmem:[#allocation2 + $0x10] sm:$0xff]
  %v33 = vld [vmem:[#allocation2 + $0x18] sm:$0xff]
  %v34 = vld [vmem:[#allocation2 + $0x20] sm:$0xff]
  %v35 = vld [vmem:[#allocation2 + $0x28] sm:$0xff]
  %v36 = vld [vmem:[#allocation2 + $0x30] sm:$0xff]
  %v37 = vld [vmem:[#allocation2 + $0x38] sm:$0xff]
  %v38 = vld [vmem:[%s0] sm:$0xf]
  %v39 = vld [vmem:[%s0 + $0x4] sm:$0xf]
  %v40 = vld [vmem:[%s0 + $0x8] sm:$0xf]
  %v41 = vld [vmem:[%s0 + $0xc] sm:$0xf]
  %v42 = vld [vmem:[%s0 + $0x10] sm:$0xf]
  %v43 = vld [vmem:[%s0 + $0x14] sm:$0xf]
  %v44 = vld [vmem:[%s0 + $0x18] sm:$0xf]
  %v45 = vld [vmem:[%s0 + $0x1c] sm:$0xf]
  %v46 = vld [vmem:[%s1] sm:$0xf]
  %v47 = vld [vmem:[%s1 + $0x4] sm:$0xf]
  %v48 = vld [vmem:[%s1 + $0x8] sm:$0xf]
  %v49 = vld [vmem:[%s1 + $0xc] sm:$0xf]
  %v50 = vld [vmem:[%s1 + $0x10] sm:$0xf]
  %v51 = vld [vmem:[%s1 + $0x14] sm:$0xf]
  %v52 = vld [vmem:[%s1 + $0x18] sm:$0xf]
  %v53 = vld [vmem:[%s1 + $0x1c] sm:$0xf]
  %v54 = vld [vmem:[%s1 + $0x20] sm:$0xf]
  %v55 = vld [vmem:[%s1 + $0x24] sm:$0xf]
  %v56 = vld [vmem:[%s1 + $0x28] sm:$0xf]
  %v57 = vld [vmem:[%s1 + $0x2c] sm:$0xf]
  %v58 = vld [vmem:[%s1 + $0x30] sm:$0xf]
  %v59 = vld [vmem:[%s1 + $0x34] sm:$0xf]
  %v60 = vld [vmem:[%s1 + $0x38] sm:$0xf]
  %v61 = vld [vmem:[%s1 + $0x3c] sm:$0xf]
  %v70 = vunpack.c.l.b16 %v38
  %v71 = vunpack.c.l.b16 %v39
  %v72 = vunpack.c.l.b16 %v40
  %v73 = vunpack.c.l.b16 %v41
  %v74 = vunpack.c.l.b16 %v42
  %v75 = vunpack.c.l.b16 %v43
  %v76 = vunpack.c.l.b16 %v44
  %v77 = vunpack.c.l.b16 %v45
  %v78 = vpack.c.b16 %v71, %v70
  %v79 = vpack.c.b16 %v73, %v72
  %v80 = vpack.c.b16 %v75, %v74
  %v81 = vpack.c.b16 %v77, %v76
  %v102 = vunpack.c.l.b16 %v46
  %v103 = vunpack.c.l.b16 %v47
  %v104 = vunpack.c.l.b16 %v48
  %v105 = vunpack.c.l.b16 %v49
  %v106 = vunpack.c.l.b16 %v50
  %v107 = vunpack.c.l.b16 %v51
  %v108 = vunpack.c.l.b16 %v52
  %v109 = vunpack.c.l.b16 %v53
  %v110 = vunpack.c.l.b16 %v54
  %v111 = vunpack.c.l.b16 %v55
  %v112 = vunpack.c.l.b16 %v56
  %v113 = vunpack.c.l.b16 %v57
  %v114 = vunpack.c.l.b16 %v58
  %v115 = vunpack.c.l.b16 %v59
  %v116 = vunpack.c.l.b16 %v60
  %v117 = vunpack.c.l.b16 %v61
  %v118 = vpack.c.b16 %v103, %v102
  %v119 = vpack.c.b16 %v105, %v104
  %v120 = vpack.c.b16 %v107, %v106
  %v121 = vpack.c.b16 %v109, %v108
  %v122 = vpack.c.b16 %v111, %v110
  %v123 = vpack.c.b16 %v113, %v112
  %v124 = vpack.c.b16 %v115, %v114
  %v125 = vpack.c.b16 %v117, %v116
  %134 = vmatprep.subr.bf16.mxu0 0
  %135 = vmatpush1.bf16.msra.mxu0 %v118
  %136 = vmatprep.subr.bf16.mxu0 0
  %137 = vmatpush1.bf16.msra.mxu0 %v119
  %138 = vmatprep.subr.bf16.mxu0 0
  %139 = vmatpush1.bf16.msra.mxu0 %v120
  %140 = vmatprep.subr.bf16.mxu0 0
  %141 = vmatpush1.bf16.msra.mxu0 %v121
  %142 = vmatprep.subr.bf16.mxu0 0
  %143 = vmatpush1.bf16.msra.mxu0 %v122
  %144 = vmatprep.subr.bf16.mxu0 0
  %145 = vmatpush1.bf16.msra.mxu0 %v123
  %146 = vmatprep.subr.bf16.mxu0 0
  %147 = vmatpush1.bf16.msra.mxu0 %v124
  %148 = vmatprep.subr.bf16.mxu0 0
  %149 = vmatpush1.bf16.msra.mxu0 %v125
  %150 = vmatprep.subr.bf16.mxu0 0
  %151 = vmatpush1.bf16.msra.mxu0 0
  %152 = vmatprep.subr.bf16.mxu0 0
  %153 = vmatpush1.bf16.msra.mxu0 0
  %154 = vmatprep.subr.bf16.mxu0 0
  %155 = vmatpush1.bf16.msra.mxu0 0
  %156 = vmatprep.subr.bf16.mxu0 0
  %157 = vmatpush1.bf16.msra.mxu0 0
  %158 = vmatprep.subr.bf16.mxu0 0
  %159 = vmatpush1.bf16.msra.mxu0 0
  %160 = vmatprep.subr.bf16.mxu0 0
  %161 = vmatpush1.bf16.msra.mxu0 0
  %162 = vmatprep.subr.bf16.mxu0 0
  %163 = vmatpush1.bf16.msra.mxu0 0
  %164 = vmatprep.subr.bf16.mxu0 0
  %165 = vmatpush1.bf16.msra.mxu0 0
  %166 = vmatprep.mubr.bf16.mxu0 0
  %167 = vmatmul.mubr.bf16.gmra.mrb[0].mxu0 %v78
  %v168 = vpop.f32.mrb[0].mxu0
  %v169 = vadd.f32 0.0, %v168
  %v170 = vpop.f32.mrb[0].mxu0
  %v171 = vpop.f32.mrb[0].mxu0
  %v172 = vadd.f32 0.0, %v171
  %v173 = vpop.f32.mrb[0].mxu0
  %174 = vmatprep.mubr.bf16.mxu0 0
  %175 = vmatmul.mubr.bf16.gmra.mrb[0].mxu0 %v79
  %v176 = vpop.f32.mrb[0].mxu0
  %v177 = vadd.f32 0.0, %v176
  %v178 = vpop.f32.mrb[0].mxu0
  %v179 = vpop.f32.mrb[0].mxu0
  %v180 = vadd.f32 0.0, %v179
  %v181 = vpop.f32.mrb[0].mxu0
  %182 = vmatprep.mubr.bf16.mxu0 0
  %183 = vmatmul.mubr.bf16.gmra.mrb[0].mxu0 %v80
  %v184 = vpop.f32.mrb[0].mxu0
  %v185 = vadd.f32 0.0, %v184
  %v186 = vpop.f32.mrb[0].mxu0
  %v187 = vpop.f32.mrb[0].mxu0
  %v188 = vadd.f32 0.0, %v187
  %v189 = vpop.f32.mrb[0].mxu0
  %190 = vmatprep.mubr.bf16.mxu0 0
  %191 = vmatmul.mubr.bf16.gmra.mrb[0].mxu0 %v81
  %v192 = vpop.f32.mrb[0].mxu0
  %v193 = vadd.f32 0.0, %v192
  %v194 = vpop.f32.mrb[0].mxu0
  %v195 = vpop.f32.mrb[0].mxu0
  %v196 = vadd.f32 0.0, %v195
  %v197 = vpop.f32.mrb[0].mxu0
  %198 = vdwg.mxu0
  %v199 = vadd.f32 %v30, %v169
  %v200 = vadd.f32 %v31, %v172
  %v201 = vadd.f32 %v32, %v177
  %v202 = vadd.f32 %v33, %v180
  %v203 = vadd.f32 %v34, %v185
  %v204 = vadd.f32 %v35, %v188
  %v205 = vadd.f32 %v36, %v193
  %v206 = vadd.f32 %v37, %v196
  %207 = vst [vmem:[#allocation2] sm:$0xff] %v199
  %208 = vst [vmem:[#allocation2 + $0x8] sm:$0xff] %v200
  %209 = vst [vmem:[#allocation2 + $0x10] sm:$0xff] %v201
  %210 = vst [vmem:[#allocation2 + $0x18] sm:$0xff] %v202
  %211 = vst [vmem:[#allocation2 + $0x20] sm:$0xff] %v203
  %212 = vst [vmem:[#allocation2 + $0x28] sm:$0xff] %v204
  %213 = vst [vmem:[#allocation2 + $0x30] sm:$0xff] %v205
  %214 = vst [vmem:[#allocation2 + $0x38] sm:$0xff] %v206
  // Predicated region
  $region22: #{_lambda_.47} parent=0 // pred_check
    %p215 = pneg %p18
  $region23: #{_lambda_.47} parent=0 // pred_check_branch
    %217 = sbr.rel (%p215) target = $region25
  $region24: #{_lambda_.47} parent=0 // pred_region
    %v218 = vld [vmem:[#allocation2] sm:$0xff]
    %v219 = vld [vmem:[#allocation2 + $0x8] sm:$0xff]
    %v220 = vld [vmem:[#allocation2 + $0x10] sm:$0xff]
    %v221 = vld [vmem:[#allocation2 + $0x18] sm:$0xff]
    %v222 = vld [vmem:[#allocation2 + $0x20] sm:$0xff]
    %v223 = vld [vmem:[#allocation2 + $0x28] sm:$0xff]
    %v224 = vld [vmem:[#allocation2 + $0x30] sm:$0xff]
    %v225 = vld [vmem:[#allocation2 + $0x38] sm:$0xff]
    %v226 = vld [vmem:[%s2] sm:$0x1]
    %v228 = vlaneseq
    %v229 = vshrl.u32 %v228, 7
    %v230 = vsub.s32 0, %v229
    %v231 = vrot.slane %v226, %v230
    %v233 = vadd.f32 %v218, %v231
    %v234 = vadd.f32 %v219, %v231
    %v235 = vadd.f32 %v220, %v231
    %v236 = vadd.f32 %v221, %v231
    %v237 = vadd.f32 %v222, %v231
    %v238 = vadd.f32 %v223, %v231
    %v239 = vadd.f32 %v224, %v231
    %v240 = vadd.f32 %v225, %v231
    %v241 = vld [vmem:[%s3] sm:$0xf]
    %v242 = vld [vmem:[%s3 + $0x4] sm:$0xf]
    %v243 = vld [vmem:[%s3 + $0x8] sm:$0xf]
    %v244 = vld [vmem:[%s3 + $0xc] sm:$0xf]
    %v245 = vld [vmem:[%s3 + $0x10] sm:$0xf]
    %v246 = vld [vmem:[%s3 + $0x14] sm:$0xf]
    %v247 = vld [vmem:[%s3 + $0x18] sm:$0xf]
    %v248 = vld [vmem:[%s3 + $0x1c] sm:$0xf]
    %v249 = vunpack.c.l.bf16 %v241
    %v250 = vunpack.c.l.bf16 %v242
    %v251 = vunpack.c.l.bf16 %v243
    %v252 = vunpack.c.l.bf16 %v244
    %v253 = vunpack.c.l.bf16 %v245
    %v254 = vunpack.c.l.bf16 %v246
    %v255 = vunpack.c.l.bf16 %v247
    %v256 = vunpack.c.l.bf16 %v248
    %v257 = vadd.f32 %v233, %v249
    %v258 = vadd.f32 %v234, %v250
    %v259 = vadd.f32 %v235, %v251
    %v260 = vadd.f32 %v236, %v252
    %v261 = vadd.f32 %v237, %v253
    %v262 = vadd.f32 %v238, %v254
    %v263 = vadd.f32 %v239, %v255
    %v264 = vadd.f32 %v240, %v256
    %v265 = vpack.c.bf16 %v258, %v257
    %v266 = vpack.c.bf16 %v260, %v259
    %v267 = vpack.c.bf16 %v262, %v261
    %v268 = vpack.c.bf16 %v264, %v263
    %v273 = vunpack.c.l.b16 %v265
    %v274 = vunpack.c.h.b16 %v265
    %v275 = vunpack.c.l.b16 %v266
    %v276 = vunpack.c.h.b16 %v266
    %v277 = vunpack.c.l.b16 %v267
    %v278 = vunpack.c.h.b16 %v267
    %v279 = vunpack.c.l.b16 %v268
    %v280 = vunpack.c.h.b16 %v268
    %v281 = vpack.c.b16 %v273, %v273
    %v282 = vpack.c.b16 %v274, %v274
    %v283 = vpack.c.b16 %v275, %v275
    %v284 = vpack.c.b16 %v276, %v276
    %v285 = vpack.c.b16 %v277, %v277
    %v286 = vpack.c.b16 %v278, %v278
    %v287 = vpack.c.b16 %v279, %v279
    %v288 = vpack.c.b16 %v280, %v280
    %297 = vst [vmem:[%s4] sm:$0xf] %v281
    %298 = vst [vmem:[%s4 + $0x4] sm:$0xf] %v282
    %299 = vst [vmem:[%s4 + $0x8] sm:$0xf] %v283
    %300 = vst [vmem:[%s4 + $0xc] sm:$0xf] %v284
    %301 = vst [vmem:[%s4 + $0x10] sm:$0xf] %v285
    %302 = vst [vmem:[%s4 + $0x14] sm:$0xf] %v286
    %303 = vst [vmem:[%s4 + $0x18] sm:$0xf] %v287
    %304 = vst [vmem:[%s4 + $0x1c] sm:$0xf] %v288
  $region25: #{_lambda_.47} parent=0 // pred_fallthru
    _
  // Predicated region
  $region26: #{_lambda_.47} parent=0 // pred_check
    _
  $region27: #{_lambda_.47} parent=0 // pred_check_branch
    %306 = sbr.rel (0) target = $region29
  $region28: #{_lambda_.47} parent=0 // pred_region
    _
  $region29: #{_lambda_.47} parent=0 // pred_fallthru
    _
  // Predicated region
  $region30: #{_lambda_.47} parent=0 // pred_check
    _
  $region31: #{_lambda_.47} parent=0 // pred_check_branch
    %308 = sbr.rel (0) target = $region33
  $region32: #{_lambda_.47} parent=0 // pred_region
    _
  $region33: #{_lambda_.47} parent=0 // pred_fallthru
    _

// kernel: _lambda_.46
$region0: #{_lambda_.46}
  #allocation0 [shape = 'u32[]', space=smem, size = 0x4, offset = 0x4, fixed_abs, tag = 'smem constant byte address 0x4 - core index']
  #allocation1 [shape = 'u32[144,128]{1,0:T(1,128)}', space=vmem, size = 0x12000, scoped, tag = 'internal scratch']
  %s0 = inlined_call_operand.vmem [shape: bf16[2,4,32,16], index: 0, kind: input, shape index: {}]
  %s1 = inlined_call_operand.vmem [shape: bf16[2,4,32,16], index: 1, kind: input, shape index: {}]
  %s2 = inlined_call_operand.vmem [shape: bf16[2,4,32,16], index: 2, kind: input, shape index: {}]
  %s3 = inlined_call_operand.vmem [shape: bf16[2,32,64], index: 3, kind: output, shape index: {}]
  %s4 = sld [smem:[#allocation0]]
  $region45: #{_lambda_.46} parent=0
    _
  %s6 = ssub.s32 1, %s4
  %s7 = scalar_select 0, %s6, %s4
  loop: start=0, step=1, limit=4
  $region2: #{_lambda_.46} parent=0 // loop_pre_header
    _
  $region3: #{_lambda_.46} parent=0 // loop_header
    %s9 = sphi 0, %s13
    %p10 = scmp.ge.s32.totalorder %s9, 4
    %s16 = sphi 0, %s28
    %s17 = sphi 0, %s24
    %s18 = sphi 0, %s16
    %s19 = sphi 0, %s17
    %s20 = sphi 0, %s18
    %s21 = sphi 0, %s19
    %s33 = sphi 0, %s35
    %s36 = sphi 0, %s33
    %s37 = sphi 0, %s36
    %s53 = sphi 0, %s37
    %s61 = sphi 0, %s63
    %s64 = sphi 0, %s61
    %s65 = sphi 0, %s64
    %s81 = sphi 0, %s65
    %s89 = sphi 0, %s91
    %s92 = sphi 0, %s89
    %s93 = sphi 0, %s92
    %s109 = sphi 0, %s93
    %s117 = sphi 0, %s119
    %s120 = sphi 0, %s117
    %s121 = sphi 0, %s120
    %s137 = sphi 0, %s121
  $region4: #{_lambda_.46} parent=0 // loop_header_branch
    %12 = sbr.rel (%p10) target = $region8
  $region5: #{_lambda_.46} parent=0 // loop_body
    %s14 = ssub.s32 %s9, 1
    %s15 = ssub.s32 %s9, 2
    %s22 = sadd.s32 1, %s17
    %p23 = scmp.ge.s32.totalorder %s22, 1
    %s24 = scalar_select %p23, 0, %s22
    %s25 = sadd.s32 1, %s16
    %s26 = scalar_select %p23, %s25, %s16
    %p27 = scmp.ge.s32.totalorder %s26, 2
    %s28 = scalar_select %p27, 0, %s26
    %s29 = ssub.s32 %s16, %s28
    %s30 = ssub.s32 %s17, %s24
    %s31 = sor.u32 %s29, %s30
    %p32 = scmp.eq.s32.totalorder %s31, 0
    %s34 = sadd.s32 %s33, 1
    %s35 = scalar_select %p32, %s33, %s34
    %p38 = pneg %p32
    %p39 = scmp.eq.s32.totalorder %s9, 1
    %p40 = por %p38, %p39
    %p41 = scmp.ne.s32.totalorder %s33, %s36
    %p42 = scmp.eq.s32.totalorder %s9, 0
    %p43 = por %p41, %p42
    %p44 = scmp.ne.s32.totalorder %s33, %s36
    %p45 = scmp.eq.s32.totalorder %s14, 1
    %p46 = por %p44, %p45
    %p47 = scmp.ne.s32.totalorder %s36, %s37
    %p48 = scmp.eq.s32.totalorder %s14, 0
    %p49 = por %p47, %p48
    %p50 = scmp.ne.s32.totalorder %s36, %s37
    %p51 = scmp.eq.s32.totalorder %s15, 1
    %p52 = por %p50, %p51
    %p54 = scmp.ne.s32.totalorder %s37, %s53
    %p55 = scmp.eq.s32.totalorder %s15, 0
    %p56 = por %p54, %p55
    %s57 = ssub.s32 %s16, %s28
    %s58 = ssub.s32 %s17, %s24
    %s59 = sor.u32 %s57, %s58
    %p60 = scmp.eq.s32.totalorder %s59, 0
    %s62 = sadd.s32 %s61, 1
    %s63 = scalar_select %p60, %s61, %s62
    %p66 = pneg %p60
    %p67 = scmp.eq.s32.totalorder %s9, 1
    %p68 = por %p66, %p67
    %p69 = scmp.ne.s32.totalorder %s61, %s64
    %p70 = scmp.eq.s32.totalorder %s9, 0
    %p71 = por %p69, %p70
    %p72 = scmp.ne.s32.totalorder %s61, %s64
    %p73 = scmp.eq.s32.totalorder %s14, 1
    %p74 = por %p72, %p73
    %p75 = scmp.ne.s32.totalorder %s64, %s65
    %p76 = scmp.eq.s32.totalorder %s14, 0
    %p77 = por %p75, %p76
    %p78 = scmp.ne.s32.totalorder %s64, %s65
    %p79 = scmp.eq.s32.totalorder %s15, 1
    %p80 = por %p78, %p79
    %p82 = scmp.ne.s32.totalorder %s65, %s81
    %p83 = scmp.eq.s32.totalorder %s15, 0
    %p84 = por %p82, %p83
    %s85 = ssub.s32 %s16, %s28
    %s86 = ssub.s32 %s17, %s24
    %s87 = sor.u32 %s85, %s86
    %p88 = scmp.eq.s32.totalorder %s87, 0
    %s90 = sadd.s32 %s89, 1
    %s91 = scalar_select %p88, %s89, %s90
    %p94 = pneg %p88
    %p95 = scmp.eq.s32.totalorder %s9, 1
    %p96 = por %p94, %p95
    %p97 = scmp.ne.s32.totalorder %s89, %s92
    %p98 = scmp.eq.s32.totalorder %s9, 0
    %p99 = por %p97, %p98
    %p100 = scmp.ne.s32.totalorder %s89, %s92
    %p101 = scmp.eq.s32.totalorder %s14, 1
    %p102 = por %p100, %p101
    %p103 = scmp.ne.s32.totalorder %s92, %s93
    %p104 = scmp.eq.s32.totalorder %s14, 0
    %p105 = por %p103, %p104
    %p106 = scmp.ne.s32.totalorder %s92, %s93
    %p107 = scmp.eq.s32.totalorder %s15, 1
    %p108 = por %p106, %p107
    %p110 = scmp.ne.s32.totalorder %s93, %s109
    %p111 = scmp.eq.s32.totalorder %s15, 0
    %p112 = por %p110, %p111
    %s113 = ssub.s32 %s16, %s28
    %s114 = ssub.s32 %s17, %s24
    %s115 = sor.u32 %s113, %s114
    %p116 = scmp.eq.s32.totalorder %s115, 0
    %s118 = sadd.s32 %s117, 1
    %s119 = scalar_select %p116, %s117, %s118
    %p122 = pneg %p116
    %p123 = scmp.eq.s32.totalorder %s9, 1
    %p124 = por %p122, %p123
    %p125 = scmp.ne.s32.totalorder %s117, %s120
    %p126 = scmp.eq.s32.totalorder %s9, 0
    %p127 = por %p125, %p126
    %p128 = scmp.ne.s32.totalorder %s117, %s120
    %p129 = scmp.eq.s32.totalorder %s14, 1
    %p130 = por %p128, %p129
    %p131 = scmp.ne.s32.totalorder %s120, %s121
    %p132 = scmp.eq.s32.totalorder %s14, 0
    %p133 = por %p131, %p132
    %p134 = scmp.ne.s32.totalorder %s120, %s121
    %p135 = scmp.eq.s32.totalorder %s15, 1
    %p136 = por %p134, %p135
    %p138 = scmp.ne.s32.totalorder %s121, %s137
    %p139 = scmp.eq.s32.totalorder %s15, 0
    %p140 = por %p138, %p139
    %p141 = scmp.le.s32.totalorder 1, %s9
    %p142 = scmp.lt.s32.totalorder %s9, 3
    %p143 = pnand %p141, %p142
    %p144 = pneg %p143
    // Predicated region
    $region9: #{_lambda_.46} parent=5 // pred_check
      _
    $region10: #{_lambda_.46} parent=5 // pred_check_branch
      %146 = sbr.rel (%p143) target = $region12
    $region11: #{_lambda_.46} parent=5 // pred_region
      %s147 = ssub.s32 %s9, 1
    $region12: #{_lambda_.46} parent=5 // pred_fallthru
      _
    %p148 = scmp.lt.s32.totalorder %s9, 2
    // Predicated region
    $region13: #{_lambda_.46} parent=5 // pred_check
      %p149 = pneg %p148
    $region14: #{_lambda_.46} parent=5 // pred_check_branch
      %151 = sbr.rel (%p149) target = $region16
    $region15: #{_lambda_.46} parent=5 // pred_region
      // Predicated region
      $region17: #{_lambda_.46} parent=15 // pred_check
        %p152 = pneg %p43
      $region18: #{_lambda_.46} parent=15 // pred_check_branch
        %154 = sbr.rel (%p152) target = $region20
      $region19: #{_lambda_.46} parent=15 // pred_region
        %s155 = smul.u32 4, %s17
        %p156 = scmp.lt.s32.totalorder %s16, 1
        %s157 = scalar_select %p156, %s16, 1
        %p158 = scmp.lt.s32.totalorder %s155, 3
        %s159 = scalar_select %p158, %s155, 3
        %s160 = smul.addr %s159, 4
        %s161 = smul.addr %s157, 16
        %s162 = sadd.s32 %s160, %s161
        %s163 = smul.addr %s162, 4
        %s164 = scalar_lea.vmem %s0, %s163
        %s165 = smul.u32 4, %s17
      $region20: #{_lambda_.46} parent=15 // pred_fallthru
        _
      // Predicated region
      $region21: #{_lambda_.46} parent=15 // pred_check
        %p166 = pneg %p71
      $region22: #{_lambda_.46} parent=15 // pred_check_branch
        %168 = sbr.rel (%p166) target = $region24
      $region23: #{_lambda_.46} parent=15 // pred_region
        %s169 = smul.u32 4, %s17
        %p170 = scmp.lt.s32.totalorder %s16, 1
        %s171 = scalar_select %p170, %s16, 1
        %p172 = scmp.lt.s32.totalorder %s169, 3
        %s173 = scalar_select %p172, %s169, 3
        %s174 = smul.addr %s173, 4
        %s175 = smul.addr %s171, 16
        %s176 = sadd.s32 %s174, %s175
        %s177 = smul.addr %s176, 4
        %s178 = scalar_lea.vmem %s1, %s177
        %s179 = smul.u32 4, %s17
      $region24: #{_lambda_.46} parent=15 // pred_fallthru
        _
      // Predicated region
      $region25: #{_lambda_.46} parent=15 // pred_check
        %p180 = pneg %p99
      $region26: #{_lambda_.46} parent=15 // pred_check_branch
        %182 = sbr.rel (%p180) target = $region28
      $region27: #{_lambda_.46} parent=15 // pred_region
        %s183 = smul.u32 4, %s17
        %p184 = scmp.lt.s32.totalorder %s16, 1
        %s185 = scalar_select %p184, %s16, 1
        %p186 = scmp.lt.s32.totalorder %s183, 3
        %s187 = scalar_select %p186, %s183, 3
        %s188 = smul.addr %s187, 4
        %s189 = smul.addr %s185, 16
        %s190 = sadd.s32 %s188, %s189
        %s191 = smul.addr %s190, 4
        %s192 = scalar_lea.vmem %s2, %s191
        %s193 = smul.u32 4, %s17
      $region28: #{_lambda_.46} parent=15 // pred_fallthru
        _
    $region16: #{_lambda_.46} parent=5 // pred_fallthru
      _
    %p194 = scmp.le.s32.totalorder 1, %s9
    %p195 = scmp.lt.s32.totalorder %s9, 3
    %p196 = pnand %p194, %p195
    %p197 = pneg %p196
    // Predicated region
    $region29: #{_lambda_.46} parent=5 // pred_check
      _
    $region30: #{_lambda_.46} parent=5 // pred_check_branch
      %199 = sbr.rel (%p196) target = $region32
    $region31: #{_lambda_.46} parent=5 // pred_region
      %s200 = ssub.s32 %s9, 1
      %s201 = smul.u32 4, %s19
      %p202 = scmp.lt.s32.totalorder %s18, 1
      %s203 = scalar_select %p202, %s18, 1
      %p204 = scmp.lt.s32.totalorder %s201, 3
      %s205 = scalar_select %p204, %s201, 3
      %s206 = smul.addr %s205, 4
      %s207 = smul.addr %s203, 16
      %s208 = sadd.s32 %s206, %s207
      %s209 = smul.addr %s208, 4
      %s210 = scalar_lea.vmem %s0, %s209
      %p211 = pneg %p49
      %p212 = pneg %p46
      %s213 = smul.u32 4, %s19
      %p214 = scmp.lt.s32.totalorder %s18, 1
      %s215 = scalar_select %p214, %s18, 1
      %p216 = scmp.lt.s32.totalorder %s213, 3
      %s217 = scalar_select %p216, %s213, 3
      %s218 = smul.addr %s217, 4
      %s219 = smul.addr %s215, 16
      %s220 = sadd.s32 %s218, %s219
      %s221 = smul.addr %s220, 4
      %s222 = scalar_lea.vmem %s1, %s221
      %p223 = pneg %p77
      %p224 = pneg %p74
      %s225 = smul.u32 4, %s19
      %p226 = scmp.lt.s32.totalorder %s18, 1
      %s227 = scalar_select %p226, %s18, 1
      %p228 = scmp.lt.s32.totalorder %s225, 3
      %s229 = scalar_select %p228, %s225, 3
      %s230 = smul.addr %s229, 4
      %s231 = smul.addr %s227, 16
      %s232 = sadd.s32 %s230, %s231
      %s233 = smul.addr %s232, 4
      %s234 = scalar_lea.vmem %s2, %s233
      %p235 = pneg %p105
      %p236 = pneg %p102
      %p237 = pneg %p133
      %p238 = pneg %p130
      %p239 = scmp.lt.s32.totalorder %s18, 1
      %s240 = scalar_select %p239, %s18, 1
      %p241 = scmp.lt.s32.totalorder %s19, 0
      %s242 = scalar_select %p241, %s19, 0
      %s243 = smul.addr %s240, 4
      %s244 = sadd.s32 %s242, %s243
      %s245 = smul.addr %s244, 4
      %s246 = scalar_lea.vmem %s3, %s245
      %s247 = smul.u32 4, %s19
      %p248 = scmp.lt.s32.totalorder %s18, 1
      %s249 = scalar_select %p248, %s18, 1
      %p250 = scmp.lt.s32.totalorder %s247, 3
      %s251 = scalar_select %p250, %s247, 3
      %s252 = smul.addr %s251, 4
      %s253 = smul.addr %s249, 16
      %s254 = sadd.s32 %s252, %s253
      %s255 = smul.addr %s254, 4
      %s256 = scalar_lea.vmem %s0, %s255
      %s257 = smul.u32 4, %s19
      %s258 = smul.u32 4, %s19
      %p259 = scmp.lt.s32.totalorder %s18, 1
      %s260 = scalar_select %p259, %s18, 1
      %p261 = scmp.lt.s32.totalorder %s258, 3
      %s262 = scalar_select %p261, %s258, 3
      %s263 = smul.addr %s262, 4
      %s264 = smul.addr %s260, 16
      %s265 = sadd.s32 %s263, %s264
      %s266 = smul.addr %s265, 4
      %s267 = scalar_lea.vmem %s1, %s266
      %s268 = smul.u32 4, %s19
      %s269 = smul.u32 4, %s19
      %p270 = scmp.lt.s32.totalorder %s18, 1
      %s271 = scalar_select %p270, %s18, 1
      %p272 = scmp.lt.s32.totalorder %s269, 3
      %s273 = scalar_select %p272, %s269, 3
      %s274 = smul.addr %s273, 4
      %s275 = smul.addr %s271, 16
      %s276 = sadd.s32 %s274, %s275
      %s277 = smul.addr %s276, 4
      %s278 = scalar_lea.vmem %s2, %s277
      %s279 = smul.u32 4, %s19
      %p280 = scmp.lt.s32.totalorder %s18, 1
      %s281 = scalar_select %p280, %s18, 1
      %p282 = scmp.lt.s32.totalorder %s19, 0
      %s283 = scalar_select %p282, %s19, 0
      %s284 = smul.addr %s281, 4
      %s285 = sadd.s32 %s283, %s284
      %s286 = smul.addr %s285, 4
      %s287 = scalar_lea.vmem %s3, %s286
      %v289 = vld [vmem:[%s256] sm:$0xf]
      %v290 = vld [vmem:[%s256 + $0x4] sm:$0xf]
      %v291 = vld [vmem:[%s256 + $0x8] sm:$0xf]
      %v292 = vld [vmem:[%s256 + $0xc] sm:$0xf]
      %v293 = vld [vmem:[%s267] sm:$0xf]
      %v294 = vld [vmem:[%s267 + $0x4] sm:$0xf]
      %v295 = vld [vmem:[%s267 + $0x8] sm:$0xf]
      %v296 = vld [vmem:[%s267 + $0xc] sm:$0xf]
      %v297 = vld [vmem:[%s278] sm:$0xf]
      %v298 = vld [vmem:[%s278 + $0x4] sm:$0xf]
      %v299 = vld [vmem:[%s278 + $0x8] sm:$0xf]
      %v300 = vld [vmem:[%s278 + $0xc] sm:$0xf]
      %v305 = vunpack.c.l.b16 %v289
      %v306 = vunpack.c.l.b16 %v290
      %v307 = vunpack.c.l.b16 %v291
      %v308 = vunpack.c.l.b16 %v292
      %v309 = vpack.c.b16 %v306, %v305
      %v310 = vpack.c.b16 %v308, %v307
      %v315 = vunpack.c.l.b16 %v293
      %v316 = vunpack.c.l.b16 %v294
      %v317 = vunpack.c.l.b16 %v295
      %v318 = vunpack.c.l.b16 %v296
      %v319 = vpack.c.b16 %v316, %v315
      %v320 = vpack.c.b16 %v318, %v317
      %vm321 = vcmask 130048
      %v323 = vsel %vm321, %v309, 0
      %v326 = vsel %vm321, %v310, 0
      %v329 = vsel %vm321, %v319, 0
      %v332 = vsel %vm321, %v320, 0
      %334 = vmatprep.subr.bf16.mxu0 0
      %335 = vmatpush1.bf16.xpose.msra.mxu0 %v329
      %336 = vmatprep.subr.bf16.mxu0 0
      %337 = vmatpush1.bf16.xpose.msra.mxu0 %v332
      %338 = vmatprep.subr.bf16.mxu0 0
      %339 = vmatpush1.bf16.xpose.msra.mxu0 0
      %340 = vmatprep.subr.bf16.mxu0 0
      %341 = vmatpush1.bf16.xpose.msra.mxu0 0
      %342 = vmatprep.subr.bf16.mxu0 0
      %343 = vmatpush1.bf16.xpose.msra.mxu0 0
      %344 = vmatprep.subr.bf16.mxu0 0
      %345 = vmatpush1.bf16.xpose.msra.mxu0 0
      %346 = vmatprep.subr.bf16.mxu0 0
      %347 = vmatpush1.bf16.xpose.msra.mxu0 0
      %348 = vmatprep.subr.bf16.mxu0 0
      %349 = vmatpush1.bf16.xpose.msra.mxu0 0
      %350 = vmatprep.subr.bf16.mxu0 0
      %351 = vmatpush1.bf16.xpose.msra.mxu0 0
      %352 = vmatprep.subr.bf16.mxu0 0
      %353 = vmatpush1.bf16.xpose.msra.mxu0 0
      %354 = vmatprep.subr.bf16.mxu0 0
      %355 = vmatpush1.bf16.xpose.msra.mxu0 0
      %356 = vmatprep.subr.bf16.mxu0 0
      %357 = vmatpush1.bf16.xpose.msra.mxu0 0
      %358 = vmatprep.subr.bf16.mxu0 0
      %359 = vmatpush1.bf16.xpose.msra.mxu0 0
      %360 = vmatprep.subr.bf16.mxu0 0
      %361 = vmatpush1.bf16.xpose.msra.mxu0 0
      %362 = vmatprep.subr.bf16.mxu0 0
      %363 = vmatpush1.bf16.xpose.msra.mxu0 0
      %364 = vmatprep.subr.bf16.mxu0 0
      %365 = vmatpush1.bf16.xpose.msra.mxu0 0
      %366 = vmatprep.mubr.bf16.mxu0 0
      %367 = vmatmul.mubr.bf16.gmra.mrb[0].mxu0 %v323
      %v368 = vpop.f32.mrb[0].mxu0
      %v369 = vadd.f32 0.0, %v368
      %v370 = vpop.f32.mrb[0].mxu0
      %v371 = vpop.f32.mrb[0].mxu0
      %v372 = vadd.f32 0.0, %v371
      %v373 = vpop.f32.mrb[0].mxu0
      %374 = vmatprep.mubr.bf16.mxu0 0
      %375 = vmatmul.mubr.bf16.gmra.mrb[0].mxu0 %v326
      %v376 = vpop.f32.mrb[0].mxu0
      %v377 = vadd.f32 0.0, %v376
      %v378 = vpop.f32.mrb[0].mxu0
      %v379 = vpop.f32.mrb[0].mxu0
      %v380 = vadd.f32 0.0, %v379
      %v381 = vpop.f32.mrb[0].mxu0
      %382 = vdwg.mxu0
      %v383 = vmul.f32 %v369, 0.25
      %v384 = vmul.f32 %v372, 0.25
      %v385 = vmul.f32 %v377, 0.25
      %v386 = vmul.f32 %v380, 0.25
      %vm387 = vcmask 261120
      %v388 = vsel %vm387, %v383, -inf
      %389 = vmax.xlane.f32.xlu0 %v388
      %v390 = vpop.xlane.xlu0 %389
      %v391 = vsel %vm387, %v384, -inf
      %392 = vmax.xlane.f32.xlu0 %v391
      %v393 = vpop.xlane.xlu0 %392
      %v394 = vsel %vm387, %v385, -inf
      %395 = vmax.xlane.f32.xlu0 %v394
      %v396 = vpop.xlane.xlu0 %395
      %v397 = vsel %vm387, %v386, -inf
      %398 = vmax.xlane.f32.xlu0 %v397
      %v399 = vpop.xlane.xlu0 %398
      %v400 = vsub.f32 %v383, %v390
      %v401 = vsub.f32 %v384, %v393
      %v402 = vsub.f32 %v385, %v396
      %v403 = vsub.f32 %v386, %v399
      %v404 = vmul.f32 %v400, 1.442695
      %v405 = vpow.pop %v404
      %v406 = vmul.f32 %v401, 1.442695
      %v407 = vpow.pop %v406
      %v408 = vmul.f32 %v402, 1.442695
      %v409 = vpow.pop %v408
      %v410 = vmul.f32 %v403, 1.442695
      %v411 = vpow.pop %v410
      %v412 = vsel %vm387, %v405, 0.0
      %413 = vadd.xlane.f32.xlu0 %v412
      %v414 = vpop.xlane.xlu0 %413
      %v415 = vsel %vm387, %v407, 0.0
      %416 = vadd.xlane.f32.xlu0 %v415
      %v417 = vpop.xlane.xlu0 %416
      %v418 = vsel %vm387, %v409, 0.0
      %419 = vadd.xlane.f32.xlu0 %v418
      %v420 = vpop.xlane.xlu0 %419
      %v421 = vsel %vm387, %v411, 0.0
      %422 = vadd.xlane.f32.xlu0 %v421
      %v423 = vpop.xlane.xlu0 %422
      %v424 = vrcp.pop %v414
      %v425 = vrcp.pop %v417
      %v426 = vrcp.pop %v420
      %v427 = vrcp.pop %v423
      %v428 = vmul.f32 %v405, %v424
      %v429 = vmul.f32 %v407, %v425
      %v430 = vmul.f32 %v409, %v426
      %v431 = vmul.f32 %v411, %v427
      %v432 = vpack.c.bf16 %v429, %v428
      %v433 = vpack.c.bf16 %v431, %v430
      %v438 = vunpack.c.l.b16 %v297
      %v439 = vunpack.c.l.b16 %v298
      %v440 = vunpack.c.l.b16 %v299
      %v441 = vunpack.c.l.b16 %v300
      %v442 = vpack.c.b16 %v439, %v438
      %v443 = vpack.c.b16 %v441, %v440
      %v447 = vsel %vm387, %v432, 0
      %v450 = vsel %vm387, %v433, 0
      %452 = vmatprep.subr.bf16.mxu0 0
      %453 = vmatpush1.bf16.msra.mxu0 %v442
      %454 = vmatprep.subr.bf16.mxu0 0
      %455 = vmatpush1.bf16.msra.mxu0 %v443
      %456 = vmatprep.subr.bf16.mxu0 0
      %457 = vmatpush1.bf16.msra.mxu0 0
      %458 = vmatprep.subr.bf16.mxu0 0
      %459 = vmatpush1.bf16.msra.mxu0 0
      %460 = vmatprep.subr.bf16.mxu0 0
      %461 = vmatpush1.bf16.msra.mxu0 0
      %462 = vmatprep.subr.bf16.mxu0 0
      %463 = vmatpush1.bf16.msra.mxu0 0
      %464 = vmatprep.subr.bf16.mxu0 0
      %465 = vmatpush1.bf16.msra.mxu0 0
      %466 = vmatprep.subr.bf16.mxu0 0
      %467 = vmatpush1.bf16.msra.mxu0 0
      %468 = vmatprep.subr.bf16.mxu0 0
      %469 = vmatpush1.bf16.msra.mxu0 0
      %470 = vmatprep.subr.bf16.mxu0 0
      %471 = vmatpush1.bf16.msra.mxu0 0
      %472 = vmatprep.subr.bf16.mxu0 0
      %473 = vmatpush1.bf16.msra.mxu0 0
      %474 = vmatprep.subr.bf16.mxu0 0
      %475 = vmatpush1.bf16.msra.mxu0 0
      %476 = vmatprep.subr.bf16.mxu0 0
      %477 = vmatpush1.bf16.msra.mxu0 0
      %478 = vmatprep.subr.bf16.mxu0 0
      %479 = vmatpush1.bf16.msra.mxu0 0
      %480 = vmatprep.subr.bf16.mxu0 0
      %481 = vmatpush1.bf16.msra.mxu0 0
      %482 = vmatprep.subr.bf16.mxu0 0
      %483 = vmatpush1.bf16.msra.mxu0 0
      %484 = vmatprep.mubr.bf16.mxu0 0
      %485 = vmatmul.mubr.bf16.gmra.mrb[0].mxu0 %v447
      %v486 = vpop.f32.mrb[0].mxu0
      %v487 = vadd.f32 0.0, %v486
      %v488 = vpop.f32.mrb[0].mxu0
      %v489 = vpop.f32.mrb[0].mxu0
      %v490 = vadd.f32 0.0, %v489
      %v491 = vpop.f32.mrb[0].mxu0
      %492 = vmatprep.mubr.bf16.mxu0 0
      %493 = vmatmul.mubr.bf16.gmra.mrb[0].mxu0 %v450
      %v494 = vpop.f32.mrb[0].mxu0
      %v495 = vadd.f32 0.0, %v494
      %v496 = vpop.f32.mrb[0].mxu0
      %v497 = vpop.f32.mrb[0].mxu0
      %v498 = vadd.f32 0.0, %v497
      %v499 = vpop.f32.mrb[0].mxu0
      %500 = vdwg.mxu0
      %v501 = vpack.c.bf16 %v490, %v487
      %v502 = vpack.c.bf16 %v498, %v495
      %s503 = scalar_lea.vmem %s256, 16
      %v504 = vld [vmem:[%s503] sm:$0xf]
      %v505 = vld [vmem:[%s503 + $0x4] sm:$0xf]
      %v506 = vld [vmem:[%s503 + $0x8] sm:$0xf]
      %v507 = vld [vmem:[%s503 + $0xc] sm:$0xf]
      %s508 = scalar_lea.vmem %s267, 16
      %v509 = vld [vmem:[%s508] sm:$0xf]
      %v510 = vld [vmem:[%s508 + $0x4] sm:$0xf]
      %v511 = vld [vmem:[%s508 + $0x8] sm:$0xf]
      %v512 = vld [vmem:[%s508 + $0xc] sm:$0xf]
      %s513 = scalar_lea.vmem %s278, 16
      %v514 = vld [vmem:[%s513] sm:$0xf]
      %v515 = vld [vmem:[%s513 + $0x4] sm:$0xf]
      %v516 = vld [vmem:[%s513 + $0x8] sm:$0xf]
      %v517 = vld [vmem:[%s513 + $0xc] sm:$0xf]
      %v522 = vunpack.c.l.b16 %v504
      %v523 = vunpack.c.l.b16 %v505
      %v524 = vunpack.c.l.b16 %v506
      %v525 = vunpack.c.l.b16 %v507
      %v526 = vpack.c.b16 %v523, %v522
      %v527 = vpack.c.b16 %v525, %v524
      %v532 = vunpack.c.l.b16 %v509
      %v533 = vunpack.c.l.b16 %v510
      %v534 = vunpack.c.l.b16 %v511
      %v535 = vunpack.c.l.b16 %v512
      %v536 = vpack.c.b16 %v533, %v532
      %v537 = vpack.c.b16 %v535, %v534
      %v539 = vsel %vm321, %v526, 0
      %v542 = vsel %vm321, %v527, 0
      %v545 = vsel %vm321, %v536, 0
      %v548 = vsel %vm321, %v537, 0
      %550 = vmatprep.subr.bf16.mxu0 0
      %551 = vmatpush1.bf16.xpose.msra.mxu0 %v545
      %552 = vmatprep.subr.bf16.mxu0 0
      %553 = vmatpush1.bf16.xpose.msra.mxu0 %v548
      %554 = vmatprep.subr.bf16.mxu0 0
      %555 = vmatpush1.bf16.xpose.msra.mxu0 0
      %556 = vmatprep.subr.bf16.mxu0 0
      %557 = vmatpush1.bf16.xpose.msra.mxu0 0
      %558 = vmatprep.subr.bf16.mxu0 0
      %559 = vmatpush1.bf16.xpose.msra.mxu0 0
      %560 = vmatprep.subr.bf16.mxu0 0
      %561 = vmatpush1.bf16.xpose.msra.mxu0 0
      %562 = vmatprep.subr.bf16.mxu0 0
      %563 = vmatpush1.bf16.xpose.msra.mxu0 0
      %564 = vmatprep.subr.bf16.mxu0 0
      %565 = vmatpush1.bf16.xpose.msra.mxu0 0
      %566 = vmatprep.subr.bf16.mxu0 0
      %567 = vmatpush1.bf16.xpose.msra.mxu0 0
      %568 = vmatprep.subr.bf16.mxu0 0
      %569 = vmatpush1.bf16.xpose.msra.mxu0 0
      %570 = vmatprep.subr.bf16.mxu0 0
      %571 = vmatpush1.bf16.xpose.msra.mxu0 0
      %572 = vmatprep.subr.bf16.mxu0 0
      %573 = vmatpush1.bf16.xpose.msra.mxu0 0
      %574 = vmatprep.subr.bf16.mxu0 0
      %575 = vmatpush1.bf16.xpose.msra.mxu0 0
      %576 = vmatprep.subr.bf16.mxu0 0
      %577 = vmatpush1.bf16.xpose.msra.mxu0 0
      %578 = vmatprep.subr.bf16.mxu0 0
      %579 = vmatpush1.bf16.xpose.msra.mxu0 0
      %580 = vmatprep.subr.bf16.mxu0 0
      %581 = vmatpush1.bf16.xpose.msra.mxu0 0
      %582 = vmatprep.mubr.bf16.mxu0 0
      %583 = vmatmul.mubr.bf16.gmra.mrb[0].mxu0 %v539
      %v584 = vpop.f32.mrb[0].mxu0
      %v585 = vadd.f32 0.0, %v584
      %v586 = vpop.f32.mrb[0].mxu0
      %v587 = vpop.f32.mrb[0].mxu0
      %v588 = vadd.f32 0.0, %v587
      %v589 = vpop.f32.mrb[0].mxu0
      %590 = vmatprep.mubr.bf16.mxu0 0
      %591 = vmatmul.mubr.bf16.gmra.mrb[0].mxu0 %v542
      %v592 = vpop.f32.mrb[0].mxu0
      %v593 = vadd.f32 0.0, %v592
      %v594 = vpop.f32.mrb[0].mxu0
      %v595 = vpop.f32.mrb[0].mxu0
      %v596 = vadd.f32 0.0, %v595
      %v597 = vpop.f32.mrb[0].mxu0
      %598 = vdwg.mxu0
      %v599 = vmul.f32 %v585, 0.25
      %v600 = vmul.f32 %v588, 0.25
      %v601 = vmul.f32 %v593, 0.25
      %v602 = vmul.f32 %v596, 0.25
      %v603 = vsel %vm387, %v599, -inf
      %604 = vmax.xlane.f32.xlu0 %v603
      %v605 = vpop.xlane.xlu0 %604
      %v606 = vsel %vm387, %v600, -inf
      %607 = vmax.xlane.f32.xlu0 %v606
      %v608 = vpop.xlane.xlu0 %607
      %v609 = vsel %vm387, %v601, -inf
      %610 = vmax.xlane.f32.xlu0 %v609
      %v611 = vpop.xlane.xlu0 %610
      %v612 = vsel %vm387, %v602, -inf
      %613 = vmax.xlane.f32.xlu0 %v612
      %v614 = vpop.xlane.xlu0 %613
      %v615 = vsub.f32 %v599, %v605
      %v616 = vsub.f32 %v600, %v608
      %v617 = vsub.f32 %v601, %v611
      %v618 = vsub.f32 %v602, %v614
      %v619 = vmul.f32 %v615, 1.442695
      %v620 = vpow.pop %v619
      %v621 = vmul.f32 %v616, 1.442695
      %v622 = vpow.pop %v621
      %v623 = vmul.f32 %v617, 1.442695
      %v624 = vpow.pop %v623
      %v625 = vmul.f32 %v618, 1.442695
      %v626 = vpow.pop %v625
      %v627 = vsel %vm387, %v620, 0.0
      %628 = vadd.xlane.f32.xlu0 %v627
      %v629 = vpop.xlane.xlu0 %628
      %v630 = vsel %vm387, %v622, 0.0
      %631 = vadd.xlane.f32.xlu0 %v630
      %v632 = vpop.xlane.xlu0 %631
      %v633 = vsel %vm387, %v624, 0.0
      %634 = vadd.xlane.f32.xlu0 %v633
      %v635 = vpop.xlane.xlu0 %634
      %v636 = vsel %vm387, %v626, 0.0
      %637 = vadd.xlane.f32.xlu0 %v636
      %v638 = vpop.xlane.xlu0 %637
      %v639 = vrcp.pop %v629
      %v640 = vrcp.pop %v632
      %v641 = vrcp.pop %v635
      %v642 = vrcp.pop %v638
      %v643 = vmul.f32 %v620, %v639
      %v644 = vmul.f32 %v622, %v640
      %v645 = vmul.f32 %v624, %v641
      %v646 = vmul.f32 %v626, %v642
      %v647 = vpack.c.bf16 %v644, %v643
      %v648 = vpack.c.bf16 %v646, %v645
      %v653 = vunpack.c.l.b16 %v514
      %v654 = vunpack.c.l.b16 %v515
      %v655 = vunpack.c.l.b16 %v516
      %v656 = vunpack.c.l.b16 %v517
      %v657 = vpack.c.b16 %v654, %v653
      %v658 = vpack.c.b16 %v656, %v655
      %v662 = vsel %vm387, %v647, 0
      %v665 = vsel %vm387, %v648, 0
      %667 = vmatprep.subr.bf16.mxu0 0
      %668 = vmatpush1.bf16.msra.mxu0 %v657
      %669 = vmatprep.subr.bf16.mxu0 0
      %670 = vmatpush1.bf16.msra.mxu0 %v658
      %671 = vmatprep.subr.bf16.mxu0 0
      %672 = vmatpush1.bf16.msra.mxu0 0
      %673 = vmatprep.subr.bf16.mxu0 0
      %674 = vmatpush1.bf16.msra.mxu0 0
      %675 = vmatprep.subr.bf16.mxu0 0
      %676 = vmatpush1.bf16.msra.mxu0 0
      %677 = vmatprep.subr.bf16.mxu0 0
      %678 = vmatpush1.bf16.msra.mxu0 0
      %679 = vmatprep.subr.bf16.mxu0 0
      %680 = vmatpush1.bf16.msra.mxu0 0
      %681 = vmatprep.subr.bf16.mxu0 0
      %682 = vmatpush1.bf16.msra.mxu0 0
      %683 = vmatprep.subr.bf16.mxu0 0
      %684 = vmatpush1.bf16.msra.mxu0 0
      %685 = vmatprep.subr.bf16.mxu0 0
      %686 = vmatpush1.bf16.msra.mxu0 0
      %687 = vmatprep.subr.bf16.mxu0 0
      %688 = vmatpush1.bf16.msra.mxu0 0
      %689 = vmatprep.subr.bf16.mxu0 0
      %690 = vmatpush1.bf16.msra.mxu0 0
      %691 = vmatprep.subr.bf16.mxu0 0
      %692 = vmatpush1.bf16.msra.mxu0 0
      %693 = vmatprep.subr.bf16.mxu0 0
      %694 = vmatpush1.bf16.msra.mxu0 0
      %695 = vmatprep.subr.bf16.mxu0 0
      %696 = vmatpush1.bf16.msra.mxu0 0
      %697 = vmatprep.subr.bf16.mxu0 0
      %698 = vmatpush1.bf16.msra.mxu0 0
      %699 = vmatprep.mubr.bf16.mxu0 0
      %700 = vmatmul.mubr.bf16.gmra.mrb[0].mxu0 %v662
      %v701 = vpop.f32.mrb[0].mxu0
      %v702 = vadd.f32 0.0, %v701
      %v703 = vpop.f32.mrb[0].mxu0
      %v704 = vpop.f32.mrb[0].mxu0
      %v705 = vadd.f32 0.0, %v704
      %v706 = vpop.f32.mrb[0].mxu0
      %707 = vmatprep.mubr.bf16.mxu0 0
      %708 = vmatmul.mubr.bf16.gmra.mrb[0].mxu0 %v665
      %v709 = vpop.f32.mrb[0].mxu0
      %v710 = vadd.f32 0.0, %v709
      %v711 = vpop.f32.mrb[0].mxu0
      %v712 = vpop.f32.mrb[0].mxu0
      %v713 = vadd.f32 0.0, %v712
      %v714 = vpop.f32.mrb[0].mxu0
      %715 = vdwg.mxu0
      %v716 = vpack.c.bf16 %v705, %v702
      %v717 = vpack.c.bf16 %v713, %v710
      %s718 = scalar_lea.vmem %s256, 32
      %v719 = vld [vmem:[%s718] sm:$0xf]
      %v720 = vld [vmem:[%s718 + $0x4] sm:$0xf]
      %v721 = vld [vmem:[%s718 + $0x8] sm:$0xf]
      %v722 = vld [vmem:[%s718 + $0xc] sm:$0xf]
      %s723 = scalar_lea.vmem %s267, 32
      %v724 = vld [vmem:[%s723] sm:$0xf]
      %v725 = vld [vmem:[%s723 + $0x4] sm:$0xf]
      %v726 = vld [vmem:[%s723 + $0x8] sm:$0xf]
      %v727 = vld [vmem:[%s723 + $0xc] sm:$0xf]
      %s728 = scalar_lea.vmem %s278, 32
      %v729 = vld [vmem:[%s728] sm:$0xf]
      %v730 = vld [vmem:[%s728 + $0x4] sm:$0xf]
      %v731 = vld [vmem:[%s728 + $0x8] sm:$0xf]
      %v732 = vld [vmem:[%s728 + $0xc] sm:$0xf]
      %v737 = vunpack.c.l.b16 %v719
      %v738 = vunpack.c.l.b16 %v720
      %v739 = vunpack.c.l.b16 %v721
      %v740 = vunpack.c.l.b16 %v722
      %v741 = vpack.c.b16 %v738, %v737
      %v742 = vpack.c.b16 %v740, %v739
      %v747 = vunpack.c.l.b16 %v724
      %v748 = vunpack.c.l.b16 %v725
      %v749 = vunpack.c.l.b16 %v726
      %v750 = vunpack.c.l.b16 %v727
      %v751 = vpack.c.b16 %v748, %v747
      %v752 = vpack.c.b16 %v750, %v749
      %v754 = vsel %vm321, %v741, 0
      %v757 = vsel %vm321, %v742, 0
      %v760 = vsel %vm321, %v751, 0
      %v763 = vsel %vm321, %v752, 0
      %765 = vmatprep.subr.bf16.mxu0 0
      %766 = vmatpush1.bf16.xpose.msra.mxu0 %v760
      %767 = vmatprep.subr.bf16.mxu0 0
      %768 = vmatpush1.bf16.xpose.msra.mxu0 %v763
      %769 = vmatprep.subr.bf16.mxu0 0
      %770 = vmatpush1.bf16.xpose.msra.mxu0 0
      %771 = vmatprep.subr.bf16.mxu0 0
      %772 = vmatpush1.bf16.xpose.msra.mxu0 0
      %773 = vmatprep.subr.bf16.mxu0 0
      %774 = vmatpush1.bf16.xpose.msra.mxu0 0
      %775 = vmatprep.subr.bf16.mxu0 0
      %776 = vmatpush1.bf16.xpose.msra.mxu0 0
      %777 = vmatprep.subr.bf16.mxu0 0
      %778 = vmatpush1.bf16.xpose.msra.mxu0 0
      %779 = vmatprep.subr.bf16.mxu0 0
      %780 = vmatpush1.bf16.xpose.msra.mxu0 0
      %781 = vmatprep.subr.bf16.mxu0 0
      %782 = vmatpush1.bf16.xpose.msra.mxu0 0
      %783 = vmatprep.subr.bf16.mxu0 0
      %784 = vmatpush1.bf16.xpose.msra.mxu0 0
      %785 = vmatprep.subr.bf16.mxu0 0
      %786 = vmatpush1.bf16.xpose.msra.mxu0 0
      %787 = vmatprep.subr.bf16.mxu0 0
      %788 = vmatpush1.bf16.xpose.msra.mxu0 0
      %789 = vmatprep.subr.bf16.mxu0 0
      %790 = vmatpush1.bf16.xpose.msra.mxu0 0
      %791 = vmatprep.subr.bf16.mxu0 0
      %792 = vmatpush1.bf16.xpose.msra.mxu0 0
      %793 = vmatprep.subr.bf16.mxu0 0
      %794 = vmatpush1.bf16.xpose.msra.mxu0 0
      %795 = vmatprep.subr.bf16.mxu0 0
      %796 = vmatpush1.bf16.xpose.msra.mxu0 0
      %797 = vmatprep.mubr.bf16.mxu0 0
      %798 = vmatmul.mubr.bf16.gmra.mrb[0].mxu0 %v754
      %v799 = vpop.f32.mrb[0].mxu0
      %v800 = vadd.f32 0.0, %v799
      %v801 = vpop.f32.mrb[0].mxu0
      %v802 = vpop.f32.mrb[0].mxu0
      %v803 = vadd.f32 0.0, %v802
      %v804 = vpop.f32.mrb[0].mxu0
      %805 = vmatprep.mubr.bf16.mxu0 0
      %806 = vmatmul.mubr.bf16.gmra.mrb[0].mxu0 %v757
      %v807 = vpop.f32.mrb[0].mxu0
      %v808 = vadd.f32 0.0, %v807
      %v809 = vpop.f32.mrb[0].mxu0
      %v810 = vpop.f32.mrb[0].mxu0
      %v811 = vadd.f32 0.0, %v810
      %v812 = vpop.f32.mrb[0].mxu0
      %813 = vdwg.mxu0
      %v814 = vmul.f32 %v800, 0.25
      %v815 = vmul.f32 %v803, 0.25
      %v816 = vmul.f32 %v808, 0.25
      %v817 = vmul.f32 %v811, 0.25
      %v818 = vsel %vm387, %v814, -inf
      %819 = vmax.xlane.f32.xlu0 %v818
      %v820 = vpop.xlane.xlu0 %819
      %v821 = vsel %vm387, %v815, -inf
      %822 = vmax.xlane.f32.xlu0 %v821
      %v823 = vpop.xlane.xlu0 %822
      %v824 = vsel %vm387, %v816, -inf
      %825 = vmax.xlane.f32.xlu0 %v824
      %v826 = vpop.xlane.xlu0 %825
      %v827 = vsel %vm387, %v817, -inf
      %828 = vmax.xlane.f32.xlu0 %v827
      %v829 = vpop.xlane.xlu0 %828
      %v830 = vsub.f32 %v814, %v820
      %v831 = vsub.f32 %v815, %v823
      %v832 = vsub.f32 %v816, %v826
      %v833 = vsub.f32 %v817, %v829
      %v834 = vmul.f32 %v830, 1.442695
      %v835 = vpow.pop %v834
      %v836 = vmul.f32 %v831, 1.442695
      %v837 = vpow.pop %v836
      %v838 = vmul.f32 %v832, 1.442695
      %v839 = vpow.pop %v838
      %v840 = vmul.f32 %v833, 1.442695
      %v841 = vpow.pop %v840
      %v842 = vsel %vm387, %v835, 0.0
      %843 = vadd.xlane.f32.xlu0 %v842
      %v844 = vpop.xlane.xlu0 %843
      %v845 = vsel %vm387, %v837, 0.0
      %846 = vadd.xlane.f32.xlu0 %v845
      %v847 = vpop.xlane.xlu0 %846
      %v848 = vsel %vm387, %v839, 0.0
      %849 = vadd.xlane.f32.xlu0 %v848
      %v850 = vpop.xlane.xlu0 %849
      %v851 = vsel %vm387, %v841, 0.0
      %852 = vadd.xlane.f32.xlu0 %v851
      %v853 = vpop.xlane.xlu0 %852
      %v854 = vrcp.pop %v844
      %v855 = vrcp.pop %v847
      %v856 = vrcp.pop %v850
      %v857 = vrcp.pop %v853
      %v858 = vmul.f32 %v835, %v854
      %v859 = vmul.f32 %v837, %v855
      %v860 = vmul.f32 %v839, %v856
      %v861 = vmul.f32 %v841, %v857
      %v862 = vpack.c.bf16 %v859, %v858
      %v863 = vpack.c.bf16 %v861, %v860
      %v868 = vunpack.c.l.b16 %v729
      %v869 = vunpack.c.l.b16 %v730
      %v870 = vunpack.c.l.b16 %v731
      %v871 = vunpack.c.l.b16 %v732
      %v872 = vpack.c.b16 %v869, %v868
      %v873 = vpack.c.b16 %v871, %v870
      %v877 = vsel %vm387, %v862, 0
      %v880 = vsel %vm387, %v863, 0
      %882 = vmatprep.subr.bf16.mxu0 0
      %883 = vmatpush1.bf16.msra.mxu0 %v872
      %884 = vmatprep.subr.bf16.mxu0 0
      %885 = vmatpush1.bf16.msra.mxu0 %v873
      %886 = vmatprep.subr.bf16.mxu0 0
      %887 = vmatpush1.bf16.msra.mxu0 0
      %888 = vmatprep.subr.bf16.mxu0 0
      %889 = vmatpush1.bf16.msra.mxu0 0
      %890 = vmatprep.subr.bf16.mxu0 0
      %891 = vmatpush1.bf16.msra.mxu0 0
      %892 = vmatprep.subr.bf16.mxu0 0
      %893 = vmatpush1.bf16.msra.mxu0 0
      %894 = vmatprep.subr.bf16.mxu0 0
      %895 = vmatpush1.bf16.msra.mxu0 0
      %896 = vmatprep.subr.bf16.mxu0 0
      %897 = vmatpush1.bf16.msra.mxu0 0
      %898 = vmatprep.subr.bf16.mxu0 0
      %899 = vmatpush1.bf16.msra.mxu0 0
      %900 = vmatprep.subr.bf16.mxu0 0
      %901 = vmatpush1.bf16.msra.mxu0 0
      %902 = vmatprep.subr.bf16.mxu0 0
      %903 = vmatpush1.bf16.msra.mxu0 0
      %904 = vmatprep.subr.bf16.mxu0 0
      %905 = vmatpush1.bf16.msra.mxu0 0
      %906 = vmatprep.subr.bf16.mxu0 0
      %907 = vmatpush1.bf16.msra.mxu0 0
      %908 = vmatprep.subr.bf16.mxu0 0
      %909 = vmatpush1.bf16.msra.mxu0 0
      %910 = vmatprep.subr.bf16.mxu0 0
      %911 = vmatpush1.bf16.msra.mxu0 0
      %912 = vmatprep.subr.bf16.mxu0 0
      %913 = vmatpush1.bf16.msra.mxu0 0
      %914 = vmatprep.mubr.bf16.mxu0 0
      %915 = vmatmul.mubr.bf16.gmra.mrb[0].mxu0 %v877
      %v916 = vpop.f32.mrb[0].mxu0
      %v917 = vadd.f32 0.0, %v916
      %v918 = vpop.f32.mrb[0].mxu0
      %v919 = vpop.f32.mrb[0].mxu0
      %v920 = vadd.f32 0.0, %v919
      %v921 = vpop.f32.mrb[0].mxu0
      %922 = vmatprep.mubr.bf16.mxu0 0
      %923 = vmatmul.mubr.bf16.gmra.mrb[0].mxu0 %v880
      %v924 = vpop.f32.mrb[0].mxu0
      %v925 = vadd.f32 0.0, %v924
      %v926 = vpop.f32.mrb[0].mxu0
      %v927 = vpop.f32.mrb[0].mxu0
      %v928 = vadd.f32 0.0, %v927
      %v929 = vpop.f32.mrb[0].mxu0
      %930 = vdwg.mxu0
      %v931 = vpack.c.bf16 %v920, %v917
      %v932 = vpack.c.bf16 %v928, %v925
      %s933 = scalar_lea.vmem %s256, 48
      %v934 = vld [vmem:[%s933] sm:$0xf]
      %v935 = vld [vmem:[%s933 + $0x4] sm:$0xf]
      %v936 = vld [vmem:[%s933 + $0x8] sm:$0xf]
      %v937 = vld [vmem:[%s933 + $0xc] sm:$0xf]
      %s938 = scalar_lea.vmem %s267, 48
      %v939 = vld [vmem:[%s938] sm:$0xf]
      %v940 = vld [vmem:[%s938 + $0x4] sm:$0xf]
      %v941 = vld [vmem:[%s938 + $0x8] sm:$0xf]
      %v942 = vld [vmem:[%s938 + $0xc] sm:$0xf]
      %s943 = scalar_lea.vmem %s278, 48
      %v944 = vld [vmem:[%s943] sm:$0xf]
      %v945 = vld [vmem:[%s943 + $0x4] sm:$0xf]
      %v946 = vld [vmem:[%s943 + $0x8] sm:$0xf]
      %v947 = vld [vmem:[%s943 + $0xc] sm:$0xf]
      %v952 = vunpack.c.l.b16 %v934
      %v953 = vunpack.c.l.b16 %v935
      %v954 = vunpack.c.l.b16 %v936
      %v955 = vunpack.c.l.b16 %v937
      %v956 = vpack.c.b16 %v953, %v952
      %v957 = vpack.c.b16 %v955, %v954
      %v962 = vunpack.c.l.b16 %v939
      %v963 = vunpack.c.l.b16 %v940
      %v964 = vunpack.c.l.b16 %v941
      %v965 = vunpack.c.l.b16 %v942
      %v966 = vpack.c.b16 %v963, %v962
      %v967 = vpack.c.b16 %v965, %v964
      %v969 = vsel %vm321, %v956, 0
      %v972 = vsel %vm321, %v957, 0
      %v975 = vsel %vm321, %v966, 0
      %v978 = vsel %vm321, %v967, 0
      %980 = vmatprep.subr.bf16.mxu0 0
      %981 = vmatpush1.bf16.xpose.msra.mxu0 %v975
      %982 = vmatprep.subr.bf16.mxu0 0
      %983 = vmatpush1.bf16.xpose.msra.mxu0 %v978
      %984 = vmatprep.subr.bf16.mxu0 0
      %985 = vmatpush1.bf16.xpose.msra.mxu0 0
      %986 = vmatprep.subr.bf16.mxu0 0
      %987 = vmatpush1.bf16.xpose.msra.mxu0 0
      %988 = vmatprep.subr.bf16.mxu0 0
      %989 = vmatpush1.bf16.xpose.msra.mxu0 0
      %990 = vmatprep.subr.bf16.mxu0 0
      %991 = vmatpush1.bf16.xpose.msra.mxu0 0
      %992 = vmatprep.subr.bf16.mxu0 0
      %993 = vmatpush1.bf16.xpose.msra.mxu0 0
      %994 = vmatprep.subr.bf16.mxu0 0
      %995 = vmatpush1.bf16.xpose.msra.mxu0 0
      %996 = vmatprep.subr.bf16.mxu0 0
      %997 = vmatpush1.bf16.xpose.msra.mxu0 0
      %998 = vmatprep.subr.bf16.mxu0 0
      %999 = vmatpush1.bf16.xpose.msra.mxu0 0
      %1000 = vmatprep.subr.bf16.mxu0 0
      %1001 = vmatpush1.bf16.xpose.msra.mxu0 0
      %1002 = vmatprep.subr.bf16.mxu0 0
      %1003 = vmatpush1.bf16.xpose.msra.mxu0 0
      %1004 = vmatprep.subr.bf16.mxu0 0
      %1005 = vmatpush1.bf16.xpose.msra.mxu0 0
      %1006 = vmatprep.subr.bf16.mxu0 0
      %1007 = vmatpush1.bf16.xpose.msra.mxu0 0
      %1008 = vmatprep.subr.bf16.mxu0 0
      %1009 = vmatpush1.bf16.xpose.msra.mxu0 0
      %1010 = vmatprep.subr.bf16.mxu0 0
      %1011 = vmatpush1.bf16.xpose.msra.mxu0 0
      %1012 = vmatprep.mubr.bf16.mxu0 0
      %1013 = vmatmul.mubr.bf16.gmra.mrb[0].mxu0 %v969
      %v1014 = vpop.f32.mrb[0].mxu0
      %v1015 = vadd.f32 0.0, %v1014
      %v1016 = vpop.f32.mrb[0].mxu0
      %v1017 = vpop.f32.mrb[0].mxu0
      %v1018 = vadd.f32 0.0, %v1017
      %v1019 = vpop.f32.mrb[0].mxu0
      %1020 = vmatprep.mubr.bf16.mxu0 0
      %1021 = vmatmul.mubr.bf16.gmra.mrb[0].mxu0 %v972
      %v1022 = vpop.f32.mrb[0].mxu0
      %v1023 = vadd.f32 0.0, %v1022
      %v1024 = vpop.f32.mrb[0].mxu0
      %v1025 = vpop.f32.mrb[0].mxu0
      %v1026 = vadd.f32 0.0, %v1025
      %v1027 = vpop.f32.mrb[0].mxu0
      %1028 = vdwg.mxu0
      %v1029 = vmul.f32 %v1015, 0.25
      %v1030 = vmul.f32 %v1018, 0.25
      %v1031 = vmul.f32 %v1023, 0.25
      %v1032 = vmul.f32 %v1026, 0.25
      %v1033 = vsel %vm387, %v1029, -inf
      %1034 = vmax.xlane.f32.xlu0 %v1033
      %v1035 = vpop.xlane.xlu0 %1034
      %v1036 = vsel %vm387, %v1030, -inf
      %1037 = vmax.xlane.f32.xlu0 %v1036
      %v1038 = vpop.xlane.xlu0 %1037
      %v1039 = vsel %vm387, %v1031, -inf
      %1040 = vmax.xlane.f32.xlu0 %v1039
      %v1041 = vpop.xlane.xlu0 %1040
      %v1042 = vsel %vm387, %v1032, -inf
      %1043 = vmax.xlane.f32.xlu0 %v1042
      %v1044 = vpop.xlane.xlu0 %1043
      %v1045 = vsub.f32 %v1029, %v1035
      %v1046 = vsub.f32 %v1030, %v1038
      %v1047 = vsub.f32 %v1031, %v1041
      %v1048 = vsub.f32 %v1032, %v1044
      %v1049 = vmul.f32 %v1045, 1.442695
      %v1050 = vpow.pop %v1049
      %v1051 = vmul.f32 %v1046, 1.442695
      %v1052 = vpow.pop %v1051
      %v1053 = vmul.f32 %v1047, 1.442695
      %v1054 = vpow.pop %v1053
      %v1055 = vmul.f32 %v1048, 1.442695
      %v1056 = vpow.pop %v1055
      %v1057 = vsel %vm387, %v1050, 0.0
      %1058 = vadd.xlane.f32.xlu0 %v1057
      %v1059 = vpop.xlane.xlu0 %1058
      %v1060 = vsel %vm387, %v1052, 0.0
      %1061 = vadd.xlane.f32.xlu0 %v1060
      %v1062 = vpop.xlane.xlu0 %1061
      %v1063 = vsel %vm387, %v1054, 0.0
      %1064 = vadd.xlane.f32.xlu0 %v1063
      %v1065 = vpop.xlane.xlu0 %1064
      %v1066 = vsel %vm387, %v1056, 0.0
      %1067 = vadd.xlane.f32.xlu0 %v1066
      %v1068 = vpop.xlane.xlu0 %1067
      %v1069 = vrcp.pop %v1059
      %v1070 = vrcp.pop %v1062
      %v1071 = vrcp.pop %v1065
      %v1072 = vrcp.pop %v1068
      %v1073 = vmul.f32 %v1050, %v1069
      %v1074 = vmul.f32 %v1052, %v1070
      %v1075 = vmul.f32 %v1054, %v1071
      %v1076 = vmul.f32 %v1056, %v1072
      %v1077 = vpack.c.bf16 %v1074, %v1073
      %v1078 = vpack.c.bf16 %v1076, %v1075
      %v1083 = vunpack.c.l.b16 %v944
      %v1084 = vunpack.c.l.b16 %v945
      %v1085 = vunpack.c.l.b16 %v946
      %v1086 = vunpack.c.l.b16 %v947
      %v1087 = vpack.c.b16 %v1084, %v1083
      %v1088 = vpack.c.b16 %v1086, %v1085
      %v1092 = vsel %vm387, %v1077, 0
      %v1095 = vsel %vm387, %v1078, 0
      %1097 = vmatprep.subr.bf16.mxu0 0
      %1098 = vmatpush1.bf16.msra.mxu0 %v1087
      %1099 = vmatprep.subr.bf16.mxu0 0
      %1100 = vmatpush1.bf16.msra.mxu0 %v1088
      %1101 = vmatprep.subr.bf16.mxu0 0
      %1102 = vmatpush1.bf16.msra.mxu0 0
      %1103 = vmatprep.subr.bf16.mxu0 0
      %1104 = vmatpush1.bf16.msra.mxu0 0
      %1105 = vmatprep.subr.bf16.mxu0 0
      %1106 = vmatpush1.bf16.msra.mxu0 0
      %1107 = vmatprep.subr.bf16.mxu0 0
      %1108 = vmatpush1.bf16.msra.mxu0 0
      %1109 = vmatprep.subr.bf16.mxu0 0
      %1110 = vmatpush1.bf16.msra.mxu0 0
      %1111 = vmatprep.subr.bf16.mxu0 0
      %1112 = vmatpush1.bf16.msra.mxu0 0
      %1113 = vmatprep.subr.bf16.mxu0 0
      %1114 = vmatpush1.bf16.msra.mxu0 0
      %1115 = vmatprep.subr.bf16.mxu0 0
      %1116 = vmatpush1.bf16.msra.mxu0 0
      %1117 = vmatprep.subr.bf16.mxu0 0
      %1118 = vmatpush1.bf16.msra.mxu0 0
      %1119 = vmatprep.subr.bf16.mxu0 0
      %1120 = vmatpush1.bf16.msra.mxu0 0
      %1121 = vmatprep.subr.bf16.mxu0 0
      %1122 = vmatpush1.bf16.msra.mxu0 0
      %1123 = vmatprep.subr.bf16.mxu0 0
      %1124 = vmatpush1.bf16.msra.mxu0 0
      %1125 = vmatprep.subr.bf16.mxu0 0
      %1126 = vmatpush1.bf16.msra.mxu0 0
      %1127 = vmatprep.subr.bf16.mxu0 0
      %1128 = vmatpush1.bf16.msra.mxu0 0
      %1129 = vmatprep.mubr.bf16.mxu0 0
      %1130 = vmatmul.mubr.bf16.gmra.mrb[0].mxu0 %v1092
      %v1131 = vpop.f32.mrb[0].mxu0
      %v1132 = vadd.f32 0.0, %v1131
      %v1133 = vpop.f32.mrb[0].mxu0
      %v1134 = vpop.f32.mrb[0].mxu0
      %v1135 = vadd.f32 0.0, %v1134
      %v1136 = vpop.f32.mrb[0].mxu0
      %1137 = vmatprep.mubr.bf16.mxu0 0
      %1138 = vmatmul.mubr.bf16.gmra.mrb[0].mxu0 %v1095
      %v1139 = vpop.f32.mrb[0].mxu0
      %v1140 = vadd.f32 0.0, %v1139
      %v1141 = vpop.f32.mrb[0].mxu0
      %v1142 = vpop.f32.mrb[0].mxu0
      %v1143 = vadd.f32 0.0, %v1142
      %v1144 = vpop.f32.mrb[0].mxu0
      %1145 = vdwg.mxu0
      %v1146 = vpack.c.bf16 %v1135, %v1132
      %v1147 = vpack.c.bf16 %v1143, %v1140
      %1150 = vrot.lane.b32.xlu0 %v716, 16
      %v1151 = vpop.permute.xlu0 %1150
      %1152 = vrot.lane.b32.xlu0 %v717, 16
      %v1153 = vpop.permute.xlu0 %1152
      %1156 = vrot.lane.b32.xlu0 %v931, 32
      %v1157 = vpop.permute.xlu0 %1156
      %1158 = vrot.lane.b32.xlu0 %v932, 32
      %v1159 = vpop.permute.xlu0 %1158
      %1162 = vrot.lane.b32.xlu0 %v1146, 48
      %v1163 = vpop.permute.xlu0 %1162
      %1164 = vrot.lane.b32.xlu0 %v1147, 48
      %v1165 = vpop.permute.xlu0 %1164
      %v1168 = vsel %vm321, %v501, %v1151
      %v1171 = vsel %vm321, %v502, %v1153
      %v1173 = vsel %vm387, %v1168, %v1157
      %v1175 = vsel %vm387, %v1171, %v1159
      %vm1176 = vcmask 392192
      %v1178 = vsel %vm1176, %v1173, %v1163
      %v1180 = vsel %vm1176, %v1175, %v1165
      %v1183 = vunpack.c.l.b16 %v1178
      %v1184 = vunpack.c.h.b16 %v1178
      %v1185 = vunpack.c.l.b16 %v1180
      %v1186 = vunpack.c.h.b16 %v1180
      %v1187 = vpack.c.b16 %v1183, %v1183
      %v1188 = vpack.c.b16 %v1184, %v1184
      %v1189 = vpack.c.b16 %v1185, %v1185
      %v1190 = vpack.c.b16 %v1186, %v1186
      %vm1195 = vcmask 519168
      %1196 = vst.msk [vmem:[%s287] sm:$0xf] %vm1195, %v1187
      %1197 = vst.msk [vmem:[%s287 + $0x4] sm:$0xf] %vm1195, %v1188
      %1198 = vst.msk [vmem:[%s287 + $0x8] sm:$0xf] %vm1195, %v1189
      %1199 = vst.msk [vmem:[%s287 + $0xc] sm:$0xf] %vm1195, %v1190
      %p1200 = scmp.lt.s32.totalorder %s18, 1
      %s1201 = scalar_select %p1200, %s18, 1
      %p1202 = scmp.lt.s32.totalorder %s19, 0
      %s1203 = scalar_select %p1202, %s19, 0
      %s1204 = smul.addr %s1201, 4
      %s1205 = sadd.s32 %s1203, %s1204
      %s1206 = smul.addr %s1205, 4
      %s1207 = scalar_lea.vmem %s3, %s1206
      // Predicated region
      $region33: #{_lambda_.46} parent=31 // pred_check
        %p1208 = pneg %p130
      $region34: #{_lambda_.46} parent=31 // pred_check_branch
        %1210 = sbr.rel (%p1208) target = $region36
      $region35: #{_lambda_.46} parent=31 // pred_region
        _
      $region36: #{_lambda_.46} parent=31 // pred_fallthru
        _
    $region32: #{_lambda_.46} parent=5 // pred_fallthru
      _
    %p1211 = scmp.le.s32.totalorder 2, %s9
    // Predicated region
    $region37: #{_lambda_.46} parent=5 // pred_check
      %p1212 = pneg %p1211
    $region38: #{_lambda_.46} parent=5 // pred_check_branch
      %1214 = sbr.rel (%p1212) target = $region40
    $region39: #{_lambda_.46} parent=5 // pred_region
      %s1215 = ssub.s32 %s9, 2
      // Predicated region
      $region41: #{_lambda_.46} parent=39 // pred_check
        %p1216 = pneg %p136
      $region42: #{_lambda_.46} parent=39 // pred_check_branch
        %1218 = sbr.rel (%p1216) target = $region44
      $region43: #{_lambda_.46} parent=39 // pred_region
        %p1219 = scmp.lt.s32.totalorder %s20, 1
        %s1220 = scalar_select %p1219, %s20, 1
        %p1221 = scmp.lt.s32.totalorder %s21, 0
        %s1222 = scalar_select %p1221, %s21, 0
        %s1223 = smul.addr %s1220, 4
        %s1224 = sadd.s32 %s1222, %s1223
        %s1225 = smul.addr %s1224, 4
        %s1226 = scalar_lea.vmem %s3, %s1225
      $region44: #{_lambda_.46} parent=39 // pred_fallthru
        _
    $region40: #{_lambda_.46} parent=5 // pred_fallthru
      _
  $region6: #{_lambda_.46} parent=0 // loop_footer
    %s13 = sadd.s32 1, %s9
  $region7: #{_lambda_.46} parent=0 // loop_footer_branch
    %8 = sbr.rel target = $region3
  $region8: #{_lambda_.46} parent=0 // loop_exit
    _

// kernel: _lambda_.33
$region0: #{_lambda_.33}
  #allocation0 [shape = 'u32[]', space=smem, size = 0x4, offset = 0x4, fixed_abs, tag = 'smem constant byte address 0x4 - core index']
  #allocation1 [shape = 'u32[144,128]{1,0:T(1,128)}', space=vmem, size = 0x12000, scoped, tag = 'internal scratch']
  #allocation2 [shape = 'f32[8,128]{1,0:T(8,128)}', space=vmem, size = 0x1000, scoped, tag = 'scratch operand']
  %s0 = inlined_call_operand.vmem [shape: bf16[8,256], index: 0, kind: input, shape index: {}]
  %s1 = inlined_call_operand.vmem [shape: bf16[256,128], index: 1, kind: input, shape index: {}]
  %s2 = inlined_call_operand.vmem [shape: f32[1,128], index: 2, kind: input, shape index: {}]
  %s3 = inlined_call_operand.vmem [shape: bf16[8,128], index: 3, kind: output, shape index: {}]
  %s4 = sld [smem:[#allocation0]]
  $region30: #{_lambda_.33} parent=0
    _
  %s6 = ssub.s32 1, %s4
  %s7 = scalar_select 0, %s6, %s4
  // Predicated region
  $region2: #{_lambda_.33} parent=0 // pred_check
    _
  $region3: #{_lambda_.33} parent=0 // pred_check_branch
    %9 = sbr.rel (0) target = $region5
  $region4: #{_lambda_.33} parent=0 // pred_region
    _
  $region5: #{_lambda_.33} parent=0 // pred_fallthru
    _
  // Predicated region
  $region6: #{_lambda_.33} parent=0 // pred_check
    _
  $region7: #{_lambda_.33} parent=0 // pred_check_branch
    %11 = sbr.rel (0) target = $region9
  $region8: #{_lambda_.33} parent=0 // pred_region
    _
  $region9: #{_lambda_.33} parent=0 // pred_fallthru
    _
  // Predicated region
  $region10: #{_lambda_.33} parent=0 // pred_check
    _
  $region11: #{_lambda_.33} parent=0 // pred_check_branch
    %13 = sbr.rel (0) target = $region13
  $region12: #{_lambda_.33} parent=0 // pred_region
    _
  $region13: #{_lambda_.33} parent=0 // pred_fallthru
    _
  %p15 = scmp.eq.s32.totalorder 0, 0
  // Predicated region
  $region14: #{_lambda_.33} parent=0 // pred_check
    %p16 = pneg %p15
  $region15: #{_lambda_.33} parent=0 // pred_check_branch
    %18 = sbr.rel (%p16) target = $region17
  $region16: #{_lambda_.33} parent=0 // pred_region
    %19 = vst [vmem:[#allocation2] sm:$0xff] 0.0
  $region17: #{_lambda_.33} parent=0 // pred_fallthru
    _
  %v20 = vld [vmem:[#allocation2] sm:$0xff]
  %v21 = vld [vmem:[%s0] sm:$0xff]
  %v22 = vld [vmem:[%s1] sm:$0xf]
  %v23 = vld [vmem:[%s1 + $0x4] sm:$0xf]
  %v24 = vld [vmem:[%s1 + $0x8] sm:$0xf]
  %v25 = vld [vmem:[%s1 + $0xc] sm:$0xf]
  %v26 = vld [vmem:[%s1 + $0x10] sm:$0xf]
  %v27 = vld [vmem:[%s1 + $0x14] sm:$0xf]
  %v28 = vld [vmem:[%s1 + $0x18] sm:$0xf]
  %v29 = vld [vmem:[%s1 + $0x1c] sm:$0xf]
  %v30 = vld [vmem:[%s1 + $0x20] sm:$0xf]
  %v31 = vld [vmem:[%s1 + $0x24] sm:$0xf]
  %v32 = vld [vmem:[%s1 + $0x28] sm:$0xf]
  %v33 = vld [vmem:[%s1 + $0x2c] sm:$0xf]
  %v34 = vld [vmem:[%s1 + $0x30] sm:$0xf]
  %v35 = vld [vmem:[%s1 + $0x34] sm:$0xf]
  %v36 = vld [vmem:[%s1 + $0x38] sm:$0xf]
  %v37 = vld [vmem:[%s1 + $0x3c] sm:$0xf]
  %v38 = vld [vmem:[%s1 + $0x40] sm:$0xf]
  %v39 = vld [vmem:[%s1 + $0x44] sm:$0xf]
  %v40 = vld [vmem:[%s1 + $0x48] sm:$0xf]
  %v41 = vld [vmem:[%s1 + $0x4c] sm:$0xf]
  %v42 = vld [vmem:[%s1 + $0x50] sm:$0xf]
  %v43 = vld [vmem:[%s1 + $0x54] sm:$0xf]
  %v44 = vld [vmem:[%s1 + $0x58] sm:$0xf]
  %v45 = vld [vmem:[%s1 + $0x5c] sm:$0xf]
  %v46 = vld [vmem:[%s1 + $0x60] sm:$0xf]
  %v47 = vld [vmem:[%s1 + $0x64] sm:$0xf]
  %v48 = vld [vmem:[%s1 + $0x68] sm:$0xf]
  %v49 = vld [vmem:[%s1 + $0x6c] sm:$0xf]
  %v50 = vld [vmem:[%s1 + $0x70] sm:$0xf]
  %v51 = vld [vmem:[%s1 + $0x74] sm:$0xf]
  %v52 = vld [vmem:[%s1 + $0x78] sm:$0xf]
  %v53 = vld [vmem:[%s1 + $0x7c] sm:$0xf]
  %v55 = vunpack.c.l.b16 %v21
  %v56 = vunpack.c.h.b16 %v21
  %v57 = vpack.c.b16 %v55, %v55
  %v58 = vpack.c.b16 %v56, %v56
  %v93 = vunpack.c.l.b16 %v22
  %v94 = vunpack.c.l.b16 %v23
  %v95 = vunpack.c.l.b16 %v24
  %v96 = vunpack.c.l.b16 %v25
  %v97 = vunpack.c.l.b16 %v26
  %v98 = vunpack.c.l.b16 %v27
  %v99 = vunpack.c.l.b16 %v28
  %v100 = vunpack.c.l.b16 %v29
  %v101 = vunpack.c.l.b16 %v30
  %v102 = vunpack.c.l.b16 %v31
  %v103 = vunpack.c.l.b16 %v32
  %v104 = vunpack.c.l.b16 %v33
  %v105 = vunpack.c.l.b16 %v34
  %v106 = vunpack.c.l.b16 %v35
  %v107 = vunpack.c.l.b16 %v36
  %v108 = vunpack.c.l.b16 %v37
  %v109 = vunpack.c.l.b16 %v38
  %v110 = vunpack.c.l.b16 %v39
  %v111 = vunpack.c.l.b16 %v40
  %v112 = vunpack.c.l.b16 %v41
  %v113 = vunpack.c.l.b16 %v42
  %v114 = vunpack.c.l.b16 %v43
  %v115 = vunpack.c.l.b16 %v44
  %v116 = vunpack.c.l.b16 %v45
  %v117 = vunpack.c.l.b16 %v46
  %v118 = vunpack.c.l.b16 %v47
  %v119 = vunpack.c.l.b16 %v48
  %v120 = vunpack.c.l.b16 %v49
  %v121 = vunpack.c.l.b16 %v50
  %v122 = vunpack.c.l.b16 %v51
  %v123 = vunpack.c.l.b16 %v52
  %v124 = vunpack.c.l.b16 %v53
  %v125 = vpack.c.b16 %v94, %v93
  %v126 = vpack.c.b16 %v96, %v95
  %v127 = vpack.c.b16 %v98, %v97
  %v128 = vpack.c.b16 %v100, %v99
  %v129 = vpack.c.b16 %v102, %v101
  %v130 = vpack.c.b16 %v104, %v103
  %v131 = vpack.c.b16 %v106, %v105
  %v132 = vpack.c.b16 %v108, %v107
  %v133 = vpack.c.b16 %v110, %v109
  %v134 = vpack.c.b16 %v112, %v111
  %v135 = vpack.c.b16 %v114, %v113
  %v136 = vpack.c.b16 %v116, %v115
  %v137 = vpack.c.b16 %v118, %v117
  %v138 = vpack.c.b16 %v120, %v119
  %v139 = vpack.c.b16 %v122, %v121
  %v140 = vpack.c.b16 %v124, %v123
  %157 = vmatprep.subr.bf16.mxu0 0
  %158 = vmatpush1.bf16.msra.mxu0 %v125
  %159 = vmatprep.subr.bf16.mxu0 0
  %160 = vmatpush1.bf16.msra.mxu0 %v126
  %161 = vmatprep.subr.bf16.mxu0 0
  %162 = vmatpush1.bf16.msra.mxu0 %v127
  %163 = vmatprep.subr.bf16.mxu0 0
  %164 = vmatpush1.bf16.msra.mxu0 %v128
  %165 = vmatprep.subr.bf16.mxu0 0
  %166 = vmatpush1.bf16.msra.mxu0 %v129
  %167 = vmatprep.subr.bf16.mxu0 0
  %168 = vmatpush1.bf16.msra.mxu0 %v130
  %169 = vmatprep.subr.bf16.mxu0 0
  %170 = vmatpush1.bf16.msra.mxu0 %v131
  %171 = vmatprep.subr.bf16.mxu0 0
  %172 = vmatpush1.bf16.msra.mxu0 %v132
  %173 = vmatprep.subr.bf16.mxu0 0
  %174 = vmatpush1.bf16.msra.mxu0 %v133
  %175 = vmatprep.subr.bf16.mxu0 0
  %176 = vmatpush1.bf16.msra.mxu0 %v134
  %177 = vmatprep.subr.bf16.mxu0 0
  %178 = vmatpush1.bf16.msra.mxu0 %v135
  %179 = vmatprep.subr.bf16.mxu0 0
  %180 = vmatpush1.bf16.msra.mxu0 %v136
  %181 = vmatprep.subr.bf16.mxu0 0
  %182 = vmatpush1.bf16.msra.mxu0 %v137
  %183 = vmatprep.subr.bf16.mxu0 0
  %184 = vmatpush1.bf16.msra.mxu0 %v138
  %185 = vmatprep.subr.bf16.mxu0 0
  %186 = vmatpush1.bf16.msra.mxu0 %v139
  %187 = vmatprep.subr.bf16.mxu0 0
  %188 = vmatpush1.bf16.msra.mxu0 %v140
  %189 = vmatprep.mubr.bf16.mxu0 %v58
  %190 = vmatmul.mubr.bf16.gmra.mrb[0].mxu0 %v57
  %v191 = vpop.f32.mrb[0].mxu0
  %v192 = vadd.f32 0.0, %v191
  %v193 = vpop.f32.mrb[0].mxu0
  %v194 = vpop.f32.mrb[0].mxu0
  %v195 = vpop.f32.mrb[0].mxu0
  %196 = vdwg.mxu0
  %v197 = vadd.f32 %v20, %v192
  %198 = vst [vmem:[#allocation2] sm:$0xff] %v197
  // Predicated region
  $region18: #{_lambda_.33} parent=0 // pred_check
    %p199 = pneg %p15
  $region19: #{_lambda_.33} parent=0 // pred_check_branch
    %201 = sbr.rel (%p199) target = $region21
  $region20: #{_lambda_.33} parent=0 // pred_region
    %v202 = vld [vmem:[#allocation2] sm:$0xff]
    %v203 = vld [vmem:[%s2] sm:$0x1]
    %v205 = vlaneseq
    %v206 = vshrl.u32 %v205, 7
    %v207 = vsub.s32 0, %v206
    %v208 = vrot.slane %v203, %v207
    %v210 = vadd.f32 %v202, %v208
    %v211 = vpack.c.bf16 %v210, %v210
    %212 = vst [vmem:[%s3] sm:$0xf] %v211
  $region21: #{_lambda_.33} parent=0 // pred_fallthru
    _
  // Predicated region
  $region22: #{_lambda_.33} parent=0 // pred_check
    _
  $region23: #{_lambda_.33} parent=0 // pred_check_branch
    %214 = sbr.rel (0) target = $region25
  $region24: #{_lambda_.33} parent=0 // pred_region
    _
  $region25: #{_lambda_.33} parent=0 // pred_fallthru
    _
  // Predicated region
  $region26: #{_lambda_.33} parent=0 // pred_check
    _
  $region27: #{_lambda_.33} parent=0 // pred_check_branch
    %216 = sbr.rel (0) target = $region29
  $region28: #{_lambda_.33} parent=0 // pred_region
    _
  $region29: #{_lambda_.33} parent=0 // pred_fallthru
    _

// kernel: _lambda_.34
$region0: #{_lambda_.34}
  #allocation0 [shape = 'u32[]', space=smem, size = 0x4, offset = 0x4, fixed_abs, tag = 'smem constant byte address 0x4 - core index']
  #allocation1 [shape = 'u32[144,128]{1,0:T(1,128)}', space=vmem, size = 0x12000, scoped, tag = 'internal scratch']
  %s0 = inlined_call_operand.vmem [shape: bf16[16,64], index: 0, kind: input, shape index: {}]
  %s1 = inlined_call_operand.vmem [shape: f32[1,64], index: 1, kind: input, shape index: {}]
  %s2 = inlined_call_operand.vmem [shape: f32[1,64], index: 2, kind: input, shape index: {}]
  %s3 = inlined_call_operand.vmem [shape: bf16[64,256], index: 3, kind: input, shape index: {}]
  %s4 = inlined_call_operand.vmem [shape: f32[1,256], index: 4, kind: input, shape index: {}]
  %s5 = inlined_call_operand.vmem [shape: bf16[16,256], index: 5, kind: output, shape index: {}]
  %s6 = sld [smem:[#allocation0]]
  $region30: #{_lambda_.34} parent=0
    _
  %s8 = ssub.s32 1, %s6
  %s9 = scalar_select 0, %s8, %s6
  // Predicated region
  $region2: #{_lambda_.34} parent=0 // pred_check
    _
  $region3: #{_lambda_.34} parent=0 // pred_check_branch
    %11 = sbr.rel (0) target = $region5
  $region4: #{_lambda_.34} parent=0 // pred_region
    _
  $region5: #{_lambda_.34} parent=0 // pred_fallthru
    _
  // Predicated region
  $region6: #{_lambda_.34} parent=0 // pred_check
    _
  $region7: #{_lambda_.34} parent=0 // pred_check_branch
    %13 = sbr.rel (0) target = $region9
  $region8: #{_lambda_.34} parent=0 // pred_region
    _
  $region9: #{_lambda_.34} parent=0 // pred_fallthru
    _
  // Predicated region
  $region10: #{_lambda_.34} parent=0 // pred_check
    _
  $region11: #{_lambda_.34} parent=0 // pred_check_branch
    %15 = sbr.rel (0) target = $region13
  $region12: #{_lambda_.34} parent=0 // pred_region
    _
  $region13: #{_lambda_.34} parent=0 // pred_fallthru
    _
  // Predicated region
  $region14: #{_lambda_.34} parent=0 // pred_check
    _
  $region15: #{_lambda_.34} parent=0 // pred_check_branch
    %17 = sbr.rel (0) target = $region17
  $region16: #{_lambda_.34} parent=0 // pred_region
    _
  $region17: #{_lambda_.34} parent=0 // pred_fallthru
    _
  // Predicated region
  $region18: #{_lambda_.34} parent=0 // pred_check
    _
  $region19: #{_lambda_.34} parent=0 // pred_check_branch
    %19 = sbr.rel (0) target = $region21
  $region20: #{_lambda_.34} parent=0 // pred_region
    _
  $region21: #{_lambda_.34} parent=0 // pred_fallthru
    _
  %v21 = vld [vmem:[%s0] sm:$0xf]
  %v22 = vld [vmem:[%s0 + $0x4] sm:$0xf]
  %v23 = vunpack.c.l.bf16 %v21
  %v24 = vunpack.c.l.bf16 %v22
  %vm25 = vcmask 523264
  %v26 = vsel %vm25, %v23, 0.0
  %27 = vadd.xlane.f32.xlu0 %v26
  %v28 = vpop.xlane.xlu0 %27
  %v29 = vsel %vm25, %v24, 0.0
  %30 = vadd.xlane.f32.xlu0 %v29
  %v31 = vpop.xlane.xlu0 %30
  %v32 = vrcp.pop 64.0
  %v33 = vmul.f32 %v28, %v32
  %v34 = vmul.f32 %v31, %v32
  %v35 = vsub.f32 %v23, %v33
  %v36 = vsub.f32 %v24, %v34
  %v37 = vmul.f32 %v35, %v35
  %v38 = vmul.f32 %v36, %v36
  %v39 = vsel %vm25, %v37, 0.0
  %40 = vadd.xlane.f32.xlu0 %v39
  %v41 = vpop.xlane.xlu0 %40
  %v42 = vsel %vm25, %v38, 0.0
  %43 = vadd.xlane.f32.xlu0 %v42
  %v44 = vpop.xlane.xlu0 %43
  %v45 = vmul.f32 %v41, %v32
  %v46 = vmul.f32 %v44, %v32
  %v47 = vadd.f32 %v45, 1e-05
  %v48 = vadd.f32 %v46, 1e-05
  %v49 = vrsqrt.pop %v47
  %v50 = vrsqrt.pop %v48
  %v51 = vmul.f32 %v35, %v49
  %v52 = vmul.f32 %v36, %v50
  %v53 = vld [vmem:[%s1] sm:$0x1]
  %v55 = vlaneseq
  %v56 = vshrl.u32 %v55, 7
  %v57 = vsub.s32 0, %v56
  %v58 = vrot.slane %v53, %v57
  %v60 = vmul.f32 %v51, %v58
  %v61 = vmul.f32 %v52, %v58
  %v62 = vld [vmem:[%s2] sm:$0x1]
  %v64 = vlaneseq
  %v65 = vshrl.u32 %v64, 7
  %v66 = vsub.s32 0, %v65
  %v67 = vrot.slane %v62, %v66
  %v69 = vadd.f32 %v60, %v67
  %v70 = vadd.f32 %v61, %v67
  %v71 = vpack.c.bf16 %v70, %v69
  %v72 = vld [vmem:[%s3] sm:$0xff]
  %v73 = vld [vmem:[%s3 + $0x8] sm:$0xff]
  %v74 = vld [vmem:[%s3 + $0x10] sm:$0xff]
  %v75 = vld [vmem:[%s3 + $0x18] sm:$0xff]
  %v76 = vld [vmem:[%s3 + $0x20] sm:$0xff]
  %v77 = vld [vmem:[%s3 + $0x28] sm:$0xff]
  %v78 = vld [vmem:[%s3 + $0x30] sm:$0xff]
  %v79 = vld [vmem:[%s3 + $0x38] sm:$0xff]
  %v80 = vld [vmem:[%s4] sm:$0x3]
  %v82 = vlaneseq
  %v83 = vshrl.u32 %v82, 7
  %v84 = vsub.s32 0, %v83
  %v85 = vrot.slane %v80, %v84
  %v86 = vlaneseq
  %v87 = vshrl.u32 %v86, 7
  %v88 = vsub.s32 1, %v87
  %v89 = vrot.slane %v80, %v88
  %v100 = vunpack.c.l.b16 %v72
  %v101 = vunpack.c.h.b16 %v72
  %v102 = vunpack.c.l.b16 %v73
  %v103 = vunpack.c.h.b16 %v73
  %v104 = vunpack.c.l.b16 %v74
  %v105 = vunpack.c.h.b16 %v74
  %v106 = vunpack.c.l.b16 %v75
  %v107 = vunpack.c.h.b16 %v75
  %v108 = vunpack.c.l.b16 %v76
  %v109 = vunpack.c.h.b16 %v76
  %v110 = vunpack.c.l.b16 %v77
  %v111 = vunpack.c.h.b16 %v77
  %v112 = vunpack.c.l.b16 %v78
  %v113 = vunpack.c.h.b16 %v78
  %v114 = vunpack.c.l.b16 %v79
  %v115 = vunpack.c.h.b16 %v79
  %v116 = vpack.c.b16 %v102, %v100
  %v117 = vpack.c.b16 %v103, %v101
  %v118 = vpack.c.b16 %v106, %v104
  %v119 = vpack.c.b16 %v107, %v105
  %v120 = vpack.c.b16 %v110, %v108
  %v121 = vpack.c.b16 %v111, %v109
  %v122 = vpack.c.b16 %v114, %v112
  %v123 = vpack.c.b16 %v115, %v113
  %v133 = vsel %vm25, %v71, 0
  %135 = vmatprep.subr.bf16.mxu0 %v117
  %136 = vmatpush1.bf16.msra.mxu0 %v116
  %137 = vmatprep.subr.bf16.mxu0 %v119
  %138 = vmatpush1.bf16.msra.mxu0 %v118
  %139 = vmatprep.subr.bf16.mxu0 %v121
  %140 = vmatpush1.bf16.msra.mxu0 %v120
  %141 = vmatprep.subr.bf16.mxu0 %v123
  %142 = vmatpush1.bf16.msra.mxu0 %v122
  %143 = vmatprep.subr.bf16.mxu0 0
  %144 = vmatpush1.bf16.msra.mxu0 0
  %145 = vmatprep.subr.bf16.mxu0 0
  %146 = vmatpush1.bf16.msra.mxu0 0
  %147 = vmatprep.subr.bf16.mxu0 0
  %148 = vmatpush1.bf16.msra.mxu0 0
  %149 = vmatprep.subr.bf16.mxu0 0
  %150 = vmatpush1.bf16.msra.mxu0 0
  %151 = vmatprep.subr.bf16.mxu0 0
  %152 = vmatpush1.bf16.msra.mxu0 0
  %153 = vmatprep.subr.bf16.mxu0 0
  %154 = vmatpush1.bf16.msra.mxu0 0
  %155 = vmatprep.subr.bf16.mxu0 0
  %156 = vmatpush1.bf16.msra.mxu0 0
  %157 = vmatprep.subr.bf16.mxu0 0
  %158 = vmatpush1.bf16.msra.mxu0 0
  %159 = vmatprep.subr.bf16.mxu0 0
  %160 = vmatpush1.bf16.msra.mxu0 0
  %161 = vmatprep.subr.bf16.mxu0 0
  %162 = vmatpush1.bf16.msra.mxu0 0
  %163 = vmatprep.subr.bf16.mxu0 0
  %164 = vmatpush1.bf16.msra.mxu0 0
  %165 = vmatprep.subr.bf16.mxu0 0
  %166 = vmatpush1.bf16.msra.mxu0 0
  %167 = vmatprep.mubr.bf16.mxu0 0
  %168 = vmatmul.mubr.bf16.gmra.mrb[0].mxu0 %v133
  %v169 = vpop.f32.mrb[0].mxu0
  %v170 = vadd.f32 %v85, %v169
  %v171 = vpop.f32.mrb[0].mxu0
  %v172 = vadd.f32 %v89, %v171
  %v173 = vpop.f32.mrb[0].mxu0
  %v174 = vadd.f32 %v85, %v173
  %v175 = vpop.f32.mrb[0].mxu0
  %v176 = vadd.f32 %v89, %v175
  %177 = vdwg.mxu0
  %v178 = vpack.c.bf16 %v174, %v170
  %v179 = vpack.c.bf16 %v176, %v172
  %v182 = vunpack.c.l.b16 %v178
  %v183 = vunpack.c.l.b16 %v179
  %v184 = vunpack.c.h.b16 %v178
  %v185 = vunpack.c.h.b16 %v179
  %v186 = vpack.c.b16 %v183, %v182
  %v187 = vpack.c.b16 %v185, %v184
  %190 = vst [vmem:[%s5] sm:$0xff] %v186
  %191 = vst [vmem:[%s5 + $0x8] sm:$0xff] %v187
  // Predicated region
  $region22: #{_lambda_.34} parent=0 // pred_check
    _
  $region23: #{_lambda_.34} parent=0 // pred_check_branch
    %193 = sbr.rel (0) target = $region25
  $region24: #{_lambda_.34} parent=0 // pred_region
    _
  $region25: #{_lambda_.34} parent=0 // pred_fallthru
    _
  // Predicated region
  $region26: #{_lambda_.34} parent=0 // pred_check
    _
  $region27: #{_lambda_.34} parent=0 // pred_check_branch
    %195 = sbr.rel (0) target = $region29
  $region28: #{_lambda_.34} parent=0 // pred_region
    _
  $region29: #{_lambda_.34} parent=0 // pred_fallthru
    _

// kernel: _lambda_.36
$region0: #{_lambda_.36}
  #allocation0 [shape = 'u32[]', space=smem, size = 0x4, offset = 0x4, fixed_abs, tag = 'smem constant byte address 0x4 - core index']
  #allocation1 [shape = 'u32[144,128]{1,0:T(1,128)}', space=vmem, size = 0x12000, scoped, tag = 'internal scratch']
  #allocation2 [shape = 'f32[16,128]{1,0:T(8,128)}', space=vmem, size = 0x2000, scoped, tag = 'scratch operand']
  %s0 = inlined_call_operand.vmem [shape: bf16[16,128], index: 0, kind: input, shape index: {}]
  %s1 = inlined_call_operand.vmem [shape: bf16[128,128], index: 1, kind: input, shape index: {}]
  %s2 = inlined_call_operand.vmem [shape: f32[1,128], index: 2, kind: input, shape index: {}]
  %s3 = inlined_call_operand.vmem [shape: bf16[16,128], index: 3, kind: input, shape index: {}]
  %s4 = inlined_call_operand.vmem [shape: bf16[16,128], index: 4, kind: output, shape index: {}]
  %s5 = sld [smem:[#allocation0]]
  $region34: #{_lambda_.36} parent=0
    _
  %s7 = ssub.s32 1, %s5
  %s8 = scalar_select 0, %s7, %s5
  // Predicated region
  $region2: #{_lambda_.36} parent=0 // pred_check
    _
  $region3: #{_lambda_.36} parent=0 // pred_check_branch
    %10 = sbr.rel (0) target = $region5
  $region4: #{_lambda_.36} parent=0 // pred_region
    _
  $region5: #{_lambda_.36} parent=0 // pred_fallthru
    _
  // Predicated region
  $region6: #{_lambda_.36} parent=0 // pred_check
    _
  $region7: #{_lambda_.36} parent=0 // pred_check_branch
    %12 = sbr.rel (0) target = $region9
  $region8: #{_lambda_.36} parent=0 // pred_region
    _
  $region9: #{_lambda_.36} parent=0 // pred_fallthru
    _
  // Predicated region
  $region10: #{_lambda_.36} parent=0 // pred_check
    _
  $region11: #{_lambda_.36} parent=0 // pred_check_branch
    %14 = sbr.rel (0) target = $region13
  $region12: #{_lambda_.36} parent=0 // pred_region
    _
  $region13: #{_lambda_.36} parent=0 // pred_fallthru
    _
  // Predicated region
  $region14: #{_lambda_.36} parent=0 // pred_check
    _
  $region15: #{_lambda_.36} parent=0 // pred_check_branch
    %16 = sbr.rel (0) target = $region17
  $region16: #{_lambda_.36} parent=0 // pred_region
    _
  $region17: #{_lambda_.36} parent=0 // pred_fallthru
    _
  %p18 = scmp.eq.s32.totalorder 0, 0
  // Predicated region
  $region18: #{_lambda_.36} parent=0 // pred_check
    %p19 = pneg %p18
  $region19: #{_lambda_.36} parent=0 // pred_check_branch
    %21 = sbr.rel (%p19) target = $region21
  $region20: #{_lambda_.36} parent=0 // pred_region
    %22 = vst [vmem:[#allocation2] sm:$0xff] 0.0
    %23 = vst [vmem:[#allocation2 + $0x8] sm:$0xff] 0.0
  $region21: #{_lambda_.36} parent=0 // pred_fallthru
    _
  %v24 = vld [vmem:[#allocation2] sm:$0xff]
  %v25 = vld [vmem:[#allocation2 + $0x8] sm:$0xff]
  %v26 = vld [vmem:[%s0] sm:$0xf]
  %v27 = vld [vmem:[%s0 + $0x4] sm:$0xf]
  %v28 = vld [vmem:[%s1] sm:$0xf]
  %v29 = vld [vmem:[%s1 + $0x4] sm:$0xf]
  %v30 = vld [vmem:[%s1 + $0x8] sm:$0xf]
  %v31 = vld [vmem:[%s1 + $0xc] sm:$0xf]
  %v32 = vld [vmem:[%s1 + $0x10] sm:$0xf]
  %v33 = vld [vmem:[%s1 + $0x14] sm:$0xf]
  %v34 = vld [vmem:[%s1 + $0x18] sm:$0xf]
  %v35 = vld [vmem:[%s1 + $0x1c] sm:$0xf]
  %v36 = vld [vmem:[%s1 + $0x20] sm:$0xf]
  %v37 = vld [vmem:[%s1 + $0x24] sm:$0xf]
  %v38 = vld [vmem:[%s1 + $0x28] sm:$0xf]
  %v39 = vld [vmem:[%s1 + $0x2c] sm:$0xf]
  %v40 = vld [vmem:[%s1 + $0x30] sm:$0xf]
  %v41 = vld [vmem:[%s1 + $0x34] sm:$0xf]
  %v42 = vld [vmem:[%s1 + $0x38] sm:$0xf]
  %v43 = vld [vmem:[%s1 + $0x3c] sm:$0xf]
  %v46 = vunpack.c.l.b16 %v26
  %v47 = vunpack.c.l.b16 %v27
  %v48 = vpack.c.b16 %v47, %v46
  %v66 = vunpack.c.l.b16 %v28
  %v67 = vunpack.c.l.b16 %v29
  %v68 = vunpack.c.l.b16 %v30
  %v69 = vunpack.c.l.b16 %v31
  %v70 = vunpack.c.l.b16 %v32
  %v71 = vunpack.c.l.b16 %v33
  %v72 = vunpack.c.l.b16 %v34
  %v73 = vunpack.c.l.b16 %v35
  %v74 = vunpack.c.l.b16 %v36
  %v75 = vunpack.c.l.b16 %v37
  %v76 = vunpack.c.l.b16 %v38
  %v77 = vunpack.c.l.b16 %v39
  %v78 = vunpack.c.l.b16 %v40
  %v79 = vunpack.c.l.b16 %v41
  %v80 = vunpack.c.l.b16 %v42
  %v81 = vunpack.c.l.b16 %v43
  %v82 = vpack.c.b16 %v67, %v66
  %v83 = vpack.c.b16 %v69, %v68
  %v84 = vpack.c.b16 %v71, %v70
  %v85 = vpack.c.b16 %v73, %v72
  %v86 = vpack.c.b16 %v75, %v74
  %v87 = vpack.c.b16 %v77, %v76
  %v88 = vpack.c.b16 %v79, %v78
  %v89 = vpack.c.b16 %v81, %v80
  %98 = vmatprep.subr.bf16.mxu0 0
  %99 = vmatpush1.bf16.msra.mxu0 %v82
  %100 = vmatprep.subr.bf16.mxu0 0
  %101 = vmatpush1.bf16.msra.mxu0 %v83
  %102 = vmatprep.subr.bf16.mxu0 0
  %103 = vmatpush1.bf16.msra.mxu0 %v84
  %104 = vmatprep.subr.bf16.mxu0 0
  %105 = vmatpush1.bf16.msra.mxu0 %v85
  %106 = vmatprep.subr.bf16.mxu0 0
  %107 = vmatpush1.bf16.msra.mxu0 %v86
  %108 = vmatprep.subr.bf16.mxu0 0
  %109 = vmatpush1.bf16.msra.mxu0 %v87
  %110 = vmatprep.subr.bf16.mxu0 0
  %111 = vmatpush1.bf16.msra.mxu0 %v88
  %112 = vmatprep.subr.bf16.mxu0 0
  %113 = vmatpush1.bf16.msra.mxu0 %v89
  %114 = vmatprep.subr.bf16.mxu0 0
  %115 = vmatpush1.bf16.msra.mxu0 0
  %116 = vmatprep.subr.bf16.mxu0 0
  %117 = vmatpush1.bf16.msra.mxu0 0
  %118 = vmatprep.subr.bf16.mxu0 0
  %119 = vmatpush1.bf16.msra.mxu0 0
  %120 = vmatprep.subr.bf16.mxu0 0
  %121 = vmatpush1.bf16.msra.mxu0 0
  %122 = vmatprep.subr.bf16.mxu0 0
  %123 = vmatpush1.bf16.msra.mxu0 0
  %124 = vmatprep.subr.bf16.mxu0 0
  %125 = vmatpush1.bf16.msra.mxu0 0
  %126 = vmatprep.subr.bf16.mxu0 0
  %127 = vmatpush1.bf16.msra.mxu0 0
  %128 = vmatprep.subr.bf16.mxu0 0
  %129 = vmatpush1.bf16.msra.mxu0 0
  %130 = vmatprep.mubr.bf16.mxu0 0
  %131 = vmatmul.mubr.bf16.gmra.mrb[0].mxu0 %v48
  %v132 = vpop.f32.mrb[0].mxu0
  %v133 = vadd.f32 0.0, %v132
  %v134 = vpop.f32.mrb[0].mxu0
  %v135 = vpop.f32.mrb[0].mxu0
  %v136 = vadd.f32 0.0, %v135
  %v137 = vpop.f32.mrb[0].mxu0
  %138 = vdwg.mxu0
  %v139 = vadd.f32 %v24, %v133
  %v140 = vadd.f32 %v25, %v136
  %141 = vst [vmem:[#allocation2] sm:$0xff] %v139
  %142 = vst [vmem:[#allocation2 + $0x8] sm:$0xff] %v140
  // Predicated region
  $region22: #{_lambda_.36} parent=0 // pred_check
    %p143 = pneg %p18
  $region23: #{_lambda_.36} parent=0 // pred_check_branch
    %145 = sbr.rel (%p143) target = $region25
  $region24: #{_lambda_.36} parent=0 // pred_region
    %v146 = vld [vmem:[#allocation2] sm:$0xff]
    %v147 = vld [vmem:[#allocation2 + $0x8] sm:$0xff]
    %v148 = vld [vmem:[%s2] sm:$0x1]
    %v150 = vlaneseq
    %v151 = vshrl.u32 %v150, 7
    %v152 = vsub.s32 0, %v151
    %v153 = vrot.slane %v148, %v152
    %v155 = vadd.f32 %v146, %v153
    %v156 = vadd.f32 %v147, %v153
    %v157 = vld [vmem:[%s3] sm:$0xf]
    %v158 = vld [vmem:[%s3 + $0x4] sm:$0xf]
    %v159 = vunpack.c.l.bf16 %v157
    %v160 = vunpack.c.l.bf16 %v158
    %v161 = vadd.f32 %v155, %v159
    %v162 = vadd.f32 %v156, %v160
    %v163 = vpack.c.bf16 %v162, %v161
    %v165 = vunpack.c.l.b16 %v163
    %v166 = vunpack.c.h.b16 %v163
    %v167 = vpack.c.b16 %v165, %v165
    %v168 = vpack.c.b16 %v166, %v166
    %171 = vst [vmem:[%s4] sm:$0xf] %v167
    %172 = vst [vmem:[%s4 + $0x4] sm:$0xf] %v168
  $region25: #{_lambda_.36} parent=0 // pred_fallthru
    _
  // Predicated region
  $region26: #{_lambda_.36} parent=0 // pred_check
    _
  $region27: #{_lambda_.36} parent=0 // pred_check_branch
    %174 = sbr.rel (0) target = $region29
  $region28: #{_lambda_.36} parent=0 // pred_region
    _
  $region29: #{_lambda_.36} parent=0 // pred_fallthru
    _
  // Predicated region
  $region30: #{_lambda_.36} parent=0 // pred_check
    _
  $region31: #{_lambda_.36} parent=0 // pred_check_branch
    %176 = sbr.rel (0) target = $region33
  $region32: #{_lambda_.36} parent=0 // pred_region
    _
  $region33: #{_lambda_.36} parent=0 // pred_fallthru
    _

// kernel: _lambda_.35
$region0: #{_lambda_.35}
  #allocation0 [shape = 'u32[]', space=smem, size = 0x4, offset = 0x4, fixed_abs, tag = 'smem constant byte address 0x4 - core index']
  #allocation1 [shape = 'u32[144,128]{1,0:T(1,128)}', space=vmem, size = 0x12000, scoped, tag = 'internal scratch']
  %s0 = inlined_call_operand.vmem [shape: bf16[2,4,5,16], index: 0, kind: input, shape index: {}]
  %s1 = inlined_call_operand.vmem [shape: bf16[2,4,5,16], index: 1, kind: input, shape index: {}]
  %s2 = inlined_call_operand.vmem [shape: bf16[2,4,5,16], index: 2, kind: input, shape index: {}]
  %s3 = inlined_call_operand.vmem [shape: bf16[2,5,64], index: 3, kind: output, shape index: {}]
  %s4 = sld [smem:[#allocation0]]
  $region45: #{_lambda_.35} parent=0
    _
  %s6 = ssub.s32 1, %s4
  %s7 = scalar_select 0, %s6, %s4
  loop: start=0, step=1, limit=4
  $region2: #{_lambda_.35} parent=0 // loop_pre_header
    _
  $region3: #{_lambda_.35} parent=0 // loop_header
    %s9 = sphi 0, %s13
    %p10 = scmp.ge.s32.totalorder %s9, 4
    %s16 = sphi 0, %s28
    %s17 = sphi 0, %s24
    %s18 = sphi 0, %s16
    %s19 = sphi 0, %s17
    %s20 = sphi 0, %s18
    %s21 = sphi 0, %s19
    %s33 = sphi 0, %s35
    %s36 = sphi 0, %s33
    %s37 = sphi 0, %s36
    %s53 = sphi 0, %s37
    %s61 = sphi 0, %s63
    %s64 = sphi 0, %s61
    %s65 = sphi 0, %s64
    %s81 = sphi 0, %s65
    %s89 = sphi 0, %s91
    %s92 = sphi 0, %s89
    %s93 = sphi 0, %s92
    %s109 = sphi 0, %s93
    %s117 = sphi 0, %s119
    %s120 = sphi 0, %s117
    %s121 = sphi 0, %s120
    %s137 = sphi 0, %s121
  $region4: #{_lambda_.35} parent=0 // loop_header_branch
    %12 = sbr.rel (%p10) target = $region8
  $region5: #{_lambda_.35} parent=0 // loop_body
    %s14 = ssub.s32 %s9, 1
    %s15 = ssub.s32 %s9, 2
    %s22 = sadd.s32 1, %s17
    %p23 = scmp.ge.s32.totalorder %s22, 1
    %s24 = scalar_select %p23, 0, %s22
    %s25 = sadd.s32 1, %s16
    %s26 = scalar_select %p23, %s25, %s16
    %p27 = scmp.ge.s32.totalorder %s26, 2
    %s28 = scalar_select %p27, 0, %s26
    %s29 = ssub.s32 %s16, %s28
    %s30 = ssub.s32 %s17, %s24
    %s31 = sor.u32 %s29, %s30
    %p32 = scmp.eq.s32.totalorder %s31, 0
    %s34 = sadd.s32 %s33, 1
    %s35 = scalar_select %p32, %s33, %s34
    %p38 = pneg %p32
    %p39 = scmp.eq.s32.totalorder %s9, 1
    %p40 = por %p38, %p39
    %p41 = scmp.ne.s32.totalorder %s33, %s36
    %p42 = scmp.eq.s32.totalorder %s9, 0
    %p43 = por %p41, %p42
    %p44 = scmp.ne.s32.totalorder %s33, %s36
    %p45 = scmp.eq.s32.totalorder %s14, 1
    %p46 = por %p44, %p45
    %p47 = scmp.ne.s32.totalorder %s36, %s37
    %p48 = scmp.eq.s32.totalorder %s14, 0
    %p49 = por %p47, %p48
    %p50 = scmp.ne.s32.totalorder %s36, %s37
    %p51 = scmp.eq.s32.totalorder %s15, 1
    %p52 = por %p50, %p51
    %p54 = scmp.ne.s32.totalorder %s37, %s53
    %p55 = scmp.eq.s32.totalorder %s15, 0
    %p56 = por %p54, %p55
    %s57 = ssub.s32 %s16, %s28
    %s58 = ssub.s32 %s17, %s24
    %s59 = sor.u32 %s57, %s58
    %p60 = scmp.eq.s32.totalorder %s59, 0
    %s62 = sadd.s32 %s61, 1
    %s63 = scalar_select %p60, %s61, %s62
    %p66 = pneg %p60
    %p67 = scmp.eq.s32.totalorder %s9, 1
    %p68 = por %p66, %p67
    %p69 = scmp.ne.s32.totalorder %s61, %s64
    %p70 = scmp.eq.s32.totalorder %s9, 0
    %p71 = por %p69, %p70
    %p72 = scmp.ne.s32.totalorder %s61, %s64
    %p73 = scmp.eq.s32.totalorder %s14, 1
    %p74 = por %p72, %p73
    %p75 = scmp.ne.s32.totalorder %s64, %s65
    %p76 = scmp.eq.s32.totalorder %s14, 0
    %p77 = por %p75, %p76
    %p78 = scmp.ne.s32.totalorder %s64, %s65
    %p79 = scmp.eq.s32.totalorder %s15, 1
    %p80 = por %p78, %p79
    %p82 = scmp.ne.s32.totalorder %s65, %s81
    %p83 = scmp.eq.s32.totalorder %s15, 0
    %p84 = por %p82, %p83
    %s85 = ssub.s32 %s16, %s28
    %s86 = ssub.s32 %s17, %s24
    %s87 = sor.u32 %s85, %s86
    %p88 = scmp.eq.s32.totalorder %s87, 0
    %s90 = sadd.s32 %s89, 1
    %s91 = scalar_select %p88, %s89, %s90
    %p94 = pneg %p88
    %p95 = scmp.eq.s32.totalorder %s9, 1
    %p96 = por %p94, %p95
    %p97 = scmp.ne.s32.totalorder %s89, %s92
    %p98 = scmp.eq.s32.totalorder %s9, 0
    %p99 = por %p97, %p98
    %p100 = scmp.ne.s32.totalorder %s89, %s92
    %p101 = scmp.eq.s32.totalorder %s14, 1
    %p102 = por %p100, %p101
    %p103 = scmp.ne.s32.totalorder %s92, %s93
    %p104 = scmp.eq.s32.totalorder %s14, 0
    %p105 = por %p103, %p104
    %p106 = scmp.ne.s32.totalorder %s92, %s93
    %p107 = scmp.eq.s32.totalorder %s15, 1
    %p108 = por %p106, %p107
    %p110 = scmp.ne.s32.totalorder %s93, %s109
    %p111 = scmp.eq.s32.totalorder %s15, 0
    %p112 = por %p110, %p111
    %s113 = ssub.s32 %s16, %s28
    %s114 = ssub.s32 %s17, %s24
    %s115 = sor.u32 %s113, %s114
    %p116 = scmp.eq.s32.totalorder %s115, 0
    %s118 = sadd.s32 %s117, 1
    %s119 = scalar_select %p116, %s117, %s118
    %p122 = pneg %p116
    %p123 = scmp.eq.s32.totalorder %s9, 1
    %p124 = por %p122, %p123
    %p125 = scmp.ne.s32.totalorder %s117, %s120
    %p126 = scmp.eq.s32.totalorder %s9, 0
    %p127 = por %p125, %p126
    %p128 = scmp.ne.s32.totalorder %s117, %s120
    %p129 = scmp.eq.s32.totalorder %s14, 1
    %p130 = por %p128, %p129
    %p131 = scmp.ne.s32.totalorder %s120, %s121
    %p132 = scmp.eq.s32.totalorder %s14, 0
    %p133 = por %p131, %p132
    %p134 = scmp.ne.s32.totalorder %s120, %s121
    %p135 = scmp.eq.s32.totalorder %s15, 1
    %p136 = por %p134, %p135
    %p138 = scmp.ne.s32.totalorder %s121, %s137
    %p139 = scmp.eq.s32.totalorder %s15, 0
    %p140 = por %p138, %p139
    %p141 = scmp.le.s32.totalorder 1, %s9
    %p142 = scmp.lt.s32.totalorder %s9, 3
    %p143 = pnand %p141, %p142
    %p144 = pneg %p143
    // Predicated region
    $region9: #{_lambda_.35} parent=5 // pred_check
      _
    $region10: #{_lambda_.35} parent=5 // pred_check_branch
      %146 = sbr.rel (%p143) target = $region12
    $region11: #{_lambda_.35} parent=5 // pred_region
      %s147 = ssub.s32 %s9, 1
    $region12: #{_lambda_.35} parent=5 // pred_fallthru
      _
    %p148 = scmp.lt.s32.totalorder %s9, 2
    // Predicated region
    $region13: #{_lambda_.35} parent=5 // pred_check
      %p149 = pneg %p148
    $region14: #{_lambda_.35} parent=5 // pred_check_branch
      %151 = sbr.rel (%p149) target = $region16
    $region15: #{_lambda_.35} parent=5 // pred_region
      // Predicated region
      $region17: #{_lambda_.35} parent=15 // pred_check
        %p152 = pneg %p43
      $region18: #{_lambda_.35} parent=15 // pred_check_branch
        %154 = sbr.rel (%p152) target = $region20
      $region19: #{_lambda_.35} parent=15 // pred_region
        %s155 = smul.u32 4, %s17
        %p156 = scmp.lt.s32.totalorder %s16, 1
        %s157 = scalar_select %p156, %s16, 1
        %p158 = scmp.lt.s32.totalorder %s155, 3
        %s159 = scalar_select %p158, %s155, 3
        %s160 = smul.addr %s157, 4
        %s161 = sadd.s32 %s159, %s160
        %s162 = smul.addr %s161, 4
        %s163 = scalar_lea.vmem %s0, %s162
        %s164 = smul.u32 4, %s17
      $region20: #{_lambda_.35} parent=15 // pred_fallthru
        _
      // Predicated region
      $region21: #{_lambda_.35} parent=15 // pred_check
        %p165 = pneg %p71
      $region22: #{_lambda_.35} parent=15 // pred_check_branch
        %167 = sbr.rel (%p165) target = $region24
      $region23: #{_lambda_.35} parent=15 // pred_region
        %s168 = smul.u32 4, %s17
        %p169 = scmp.lt.s32.totalorder %s16, 1
        %s170 = scalar_select %p169, %s16, 1
        %p171 = scmp.lt.s32.totalorder %s168, 3
        %s172 = scalar_select %p171, %s168, 3
        %s173 = smul.addr %s170, 4
        %s174 = sadd.s32 %s172, %s173
        %s175 = smul.addr %s174, 4
        %s176 = scalar_lea.vmem %s1, %s175
        %s177 = smul.u32 4, %s17
      $region24: #{_lambda_.35} parent=15 // pred_fallthru
        _
      // Predicated region
      $region25: #{_lambda_.35} parent=15 // pred_check
        %p178 = pneg %p99
      $region26: #{_lambda_.35} parent=15 // pred_check_branch
        %180 = sbr.rel (%p178) target = $region28
      $region27: #{_lambda_.35} parent=15 // pred_region
        %s181 = smul.u32 4, %s17
        %p182 = scmp.lt.s32.totalorder %s16, 1
        %s183 = scalar_select %p182, %s16, 1
        %p184 = scmp.lt.s32.totalorder %s181, 3
        %s185 = scalar_select %p184, %s181, 3
        %s186 = smul.addr %s183, 4
        %s187 = sadd.s32 %s185, %s186
        %s188 = smul.addr %s187, 4
        %s189 = scalar_lea.vmem %s2, %s188
        %s190 = smul.u32 4, %s17
      $region28: #{_lambda_.35} parent=15 // pred_fallthru
        _
    $region16: #{_lambda_.35} parent=5 // pred_fallthru
      _
    %p191 = scmp.le.s32.totalorder 1, %s9
    %p192 = scmp.lt.s32.totalorder %s9, 3
    %p193 = pnand %p191, %p192
    %p194 = pneg %p193
    // Predicated region
    $region29: #{_lambda_.35} parent=5 // pred_check
      _
    $region30: #{_lambda_.35} parent=5 // pred_check_branch
      %196 = sbr.rel (%p193) target = $region32
    $region31: #{_lambda_.35} parent=5 // pred_region
      %s197 = ssub.s32 %s9, 1
      %s198 = smul.u32 4, %s19
      %p199 = scmp.lt.s32.totalorder %s18, 1
      %s200 = scalar_select %p199, %s18, 1
      %p201 = scmp.lt.s32.totalorder %s198, 3
      %s202 = scalar_select %p201, %s198, 3
      %s203 = smul.addr %s200, 4
      %s204 = sadd.s32 %s202, %s203
      %s205 = smul.addr %s204, 4
      %s206 = scalar_lea.vmem %s0, %s205
      %p207 = pneg %p49
      %p208 = pneg %p46
      %s209 = smul.u32 4, %s19
      %p210 = scmp.lt.s32.totalorder %s18, 1
      %s211 = scalar_select %p210, %s18, 1
      %p212 = scmp.lt.s32.totalorder %s209, 3
      %s213 = scalar_select %p212, %s209, 3
      %s214 = smul.addr %s211, 4
      %s215 = sadd.s32 %s213, %s214
      %s216 = smul.addr %s215, 4
      %s217 = scalar_lea.vmem %s1, %s216
      %p218 = pneg %p77
      %p219 = pneg %p74
      %s220 = smul.u32 4, %s19
      %p221 = scmp.lt.s32.totalorder %s18, 1
      %s222 = scalar_select %p221, %s18, 1
      %p223 = scmp.lt.s32.totalorder %s220, 3
      %s224 = scalar_select %p223, %s220, 3
      %s225 = smul.addr %s222, 4
      %s226 = sadd.s32 %s224, %s225
      %s227 = smul.addr %s226, 4
      %s228 = scalar_lea.vmem %s2, %s227
      %p229 = pneg %p105
      %p230 = pneg %p102
      %p231 = pneg %p133
      %p232 = pneg %p130
      %p233 = scmp.lt.s32.totalorder %s18, 1
      %s234 = scalar_select %p233, %s18, 1
      %p235 = scmp.lt.s32.totalorder %s19, 0
      %s236 = scalar_select %p235, %s19, 0
      %s237 = sadd.s32 %s236, %s234
      %s238 = smul.addr %s237, 4
      %s239 = scalar_lea.vmem %s3, %s238
      %s240 = smul.u32 4, %s19
      %p241 = scmp.lt.s32.totalorder %s18, 1
      %s242 = scalar_select %p241, %s18, 1
      %p243 = scmp.lt.s32.totalorder %s240, 3
      %s244 = scalar_select %p243, %s240, 3
      %s245 = smul.addr %s242, 4
      %s246 = sadd.s32 %s244, %s245
      %s247 = smul.addr %s246, 4
      %s248 = scalar_lea.vmem %s0, %s247
      %s249 = smul.u32 4, %s19
      %s250 = smul.u32 4, %s19
      %p251 = scmp.lt.s32.totalorder %s18, 1
      %s252 = scalar_select %p251, %s18, 1
      %p253 = scmp.lt.s32.totalorder %s250, 3
      %s254 = scalar_select %p253, %s250, 3
      %s255 = smul.addr %s252, 4
      %s256 = sadd.s32 %s254, %s255
      %s257 = smul.addr %s256, 4
      %s258 = scalar_lea.vmem %s1, %s257
      %s259 = smul.u32 4, %s19
      %s260 = smul.u32 4, %s19
      %p261 = scmp.lt.s32.totalorder %s18, 1
      %s262 = scalar_select %p261, %s18, 1
      %p263 = scmp.lt.s32.totalorder %s260, 3
      %s264 = scalar_select %p263, %s260, 3
      %s265 = smul.addr %s262, 4
      %s266 = sadd.s32 %s264, %s265
      %s267 = smul.addr %s266, 4
      %s268 = scalar_lea.vmem %s2, %s267
      %s269 = smul.u32 4, %s19
      %p270 = scmp.lt.s32.totalorder %s18, 1
      %s271 = scalar_select %p270, %s18, 1
      %p272 = scmp.lt.s32.totalorder %s19, 0
      %s273 = scalar_select %p272, %s19, 0
      %s274 = sadd.s32 %s273, %s271
      %s275 = smul.addr %s274, 4
      %s276 = scalar_lea.vmem %s3, %s275
      %v278 = vld [vmem:[%s248] sm:$0x7]
      %v279 = vld [vmem:[%s258] sm:$0x7]
      %v280 = vld [vmem:[%s268] sm:$0x7]
      %vm281 = vcmask 130048
      %v283 = vsel %vm281, %v278, 0
      %v286 = vsel %vm281, %v279, 0
      %288 = vmatprep.subr.bf16.mxu0 0
      %289 = vmatpush1.bf16.xpose.msra.mxu0 %v286
      %290 = vmatprep.subr.bf16.mxu0 0
      %291 = vmatpush1.bf16.xpose.msra.mxu0 0
      %292 = vmatprep.subr.bf16.mxu0 0
      %293 = vmatpush1.bf16.xpose.msra.mxu0 0
      %294 = vmatprep.subr.bf16.mxu0 0
      %295 = vmatpush1.bf16.xpose.msra.mxu0 0
      %296 = vmatprep.subr.bf16.mxu0 0
      %297 = vmatpush1.bf16.xpose.msra.mxu0 0
      %298 = vmatprep.subr.bf16.mxu0 0
      %299 = vmatpush1.bf16.xpose.msra.mxu0 0
      %300 = vmatprep.subr.bf16.mxu0 0
      %301 = vmatpush1.bf16.xpose.msra.mxu0 0
      %302 = vmatprep.subr.bf16.mxu0 0
      %303 = vmatpush1.bf16.xpose.msra.mxu0 0
      %304 = vmatprep.subr.bf16.mxu0 0
      %305 = vmatpush1.bf16.xpose.msra.mxu0 0
      %306 = vmatprep.subr.bf16.mxu0 0
      %307 = vmatpush1.bf16.xpose.msra.mxu0 0
      %308 = vmatprep.subr.bf16.mxu0 0
      %309 = vmatpush1.bf16.xpose.msra.mxu0 0
      %310 = vmatprep.subr.bf16.mxu0 0
      %311 = vmatpush1.bf16.xpose.msra.mxu0 0
      %312 = vmatprep.subr.bf16.mxu0 0
      %313 = vmatpush1.bf16.xpose.msra.mxu0 0
      %314 = vmatprep.subr.bf16.mxu0 0
      %315 = vmatpush1.bf16.xpose.msra.mxu0 0
      %316 = vmatprep.subr.bf16.mxu0 0
      %317 = vmatpush1.bf16.xpose.msra.mxu0 0
      %318 = vmatprep.subr.bf16.mxu0 0
      %319 = vmatpush1.bf16.xpose.msra.mxu0 0
      %320 = vmatprep.mubr.bf16.mxu0 0
      %321 = vmatmul.mubr.bf16.gmra.mrb[0].mxu0 %v283
      %v322 = vpop.f32.mrb[0].mxu0
      %v323 = vadd.f32 0.0, %v322
      %v324 = vpop.f32.mrb[0].mxu0
      %v325 = vpop.f32.mrb[0].mxu0
      %v326 = vpop.f32.mrb[0].mxu0
      %327 = vdwg.mxu0
      %v328 = vmul.f32 %v323, 0.25
      %vm329 = vcmask 36864
      %v330 = vsel %vm329, %v328, -inf
      %331 = vmax.xlane.f32.xlu0 %v330
      %v332 = vpop.xlane.xlu0 %331
      %v333 = vsub.f32 %v328, %v332
      %v334 = vmul.f32 %v333, 1.442695
      %v335 = vpow.pop %v334
      %v336 = vsel %vm329, %v335, 0.0
      %337 = vadd.xlane.f32.xlu0 %v336
      %v338 = vpop.xlane.xlu0 %337
      %v339 = vrcp.pop %v338
      %v340 = vmul.f32 %v335, %v339
      %v341 = vpack.c.bf16 %v340, %v340
      %vm342 = vcmask 39936
      %v344 = vsel %vm342, %v341, 0
      %vm346 = vcmask 1041408
      %vm347 = vcmask 1042432
      %v348 = vsel %vm346, 4294967295, 65535
      %v349 = vsel %vm347, %v348, 0
      %v351 = vand.u32 %v280, %v349
      %353 = vmatprep.subr.bf16.mxu0 0
      %354 = vmatpush1.bf16.msra.mxu0 %v351
      %355 = vmatprep.subr.bf16.mxu0 0
      %356 = vmatpush1.bf16.msra.mxu0 0
      %357 = vmatprep.subr.bf16.mxu0 0
      %358 = vmatpush1.bf16.msra.mxu0 0
      %359 = vmatprep.subr.bf16.mxu0 0
      %360 = vmatpush1.bf16.msra.mxu0 0
      %361 = vmatprep.subr.bf16.mxu0 0
      %362 = vmatpush1.bf16.msra.mxu0 0
      %363 = vmatprep.subr.bf16.mxu0 0
      %364 = vmatpush1.bf16.msra.mxu0 0
      %365 = vmatprep.subr.bf16.mxu0 0
      %366 = vmatpush1.bf16.msra.mxu0 0
      %367 = vmatprep.subr.bf16.mxu0 0
      %368 = vmatpush1.bf16.msra.mxu0 0
      %369 = vmatprep.subr.bf16.mxu0 0
      %370 = vmatpush1.bf16.msra.mxu0 0
      %371 = vmatprep.subr.bf16.mxu0 0
      %372 = vmatpush1.bf16.msra.mxu0 0
      %373 = vmatprep.subr.bf16.mxu0 0
      %374 = vmatpush1.bf16.msra.mxu0 0
      %375 = vmatprep.subr.bf16.mxu0 0
      %376 = vmatpush1.bf16.msra.mxu0 0
      %377 = vmatprep.subr.bf16.mxu0 0
      %378 = vmatpush1.bf16.msra.mxu0 0
      %379 = vmatprep.subr.bf16.mxu0 0
      %380 = vmatpush1.bf16.msra.mxu0 0
      %381 = vmatprep.subr.bf16.mxu0 0
      %382 = vmatpush1.bf16.msra.mxu0 0
      %383 = vmatprep.subr.bf16.mxu0 0
      %384 = vmatpush1.bf16.msra.mxu0 0
      %385 = vmatprep.mubr.bf16.mxu0 0
      %386 = vmatmul.mubr.bf16.gmra.mrb[0].mxu0 %v344
      %v387 = vpop.f32.mrb[0].mxu0
      %v388 = vadd.f32 0.0, %v387
      %v389 = vpop.f32.mrb[0].mxu0
      %v390 = vpop.f32.mrb[0].mxu0
      %v391 = vpop.f32.mrb[0].mxu0
      %392 = vdwg.mxu0
      %v393 = vpack.c.bf16 %v388, %v388
      %s394 = scalar_lea.vmem %s248, 4
      %v395 = vld [vmem:[%s394] sm:$0x7]
      %s396 = scalar_lea.vmem %s258, 4
      %v397 = vld [vmem:[%s396] sm:$0x7]
      %s398 = scalar_lea.vmem %s268, 4
      %v399 = vld [vmem:[%s398] sm:$0x7]
      %v401 = vsel %vm281, %v395, 0
      %v404 = vsel %vm281, %v397, 0
      %406 = vmatprep.subr.bf16.mxu0 0
      %407 = vmatpush1.bf16.xpose.msra.mxu0 %v404
      %408 = vmatprep.subr.bf16.mxu0 0
      %409 = vmatpush1.bf16.xpose.msra.mxu0 0
      %410 = vmatprep.subr.bf16.mxu0 0
      %411 = vmatpush1.bf16.xpose.msra.mxu0 0
      %412 = vmatprep.subr.bf16.mxu0 0
      %413 = vmatpush1.bf16.xpose.msra.mxu0 0
      %414 = vmatprep.subr.bf16.mxu0 0
      %415 = vmatpush1.bf16.xpose.msra.mxu0 0
      %416 = vmatprep.subr.bf16.mxu0 0
      %417 = vmatpush1.bf16.xpose.msra.mxu0 0
      %418 = vmatprep.subr.bf16.mxu0 0
      %419 = vmatpush1.bf16.xpose.msra.mxu0 0
      %420 = vmatprep.subr.bf16.mxu0 0
      %421 = vmatpush1.bf16.xpose.msra.mxu0 0
      %422 = vmatprep.subr.bf16.mxu0 0
      %423 = vmatpush1.bf16.xpose.msra.mxu0 0
      %424 = vmatprep.subr.bf16.mxu0 0
      %425 = vmatpush1.bf16.xpose.msra.mxu0 0
      %426 = vmatprep.subr.bf16.mxu0 0
      %427 = vmatpush1.bf16.xpose.msra.mxu0 0
      %428 = vmatprep.subr.bf16.mxu0 0
      %429 = vmatpush1.bf16.xpose.msra.mxu0 0
      %430 = vmatprep.subr.bf16.mxu0 0
      %431 = vmatpush1.bf16.xpose.msra.mxu0 0
      %432 = vmatprep.subr.bf16.mxu0 0
      %433 = vmatpush1.bf16.xpose.msra.mxu0 0
      %434 = vmatprep.subr.bf16.mxu0 0
      %435 = vmatpush1.bf16.xpose.msra.mxu0 0
      %436 = vmatprep.subr.bf16.mxu0 0
      %437 = vmatpush1.bf16.xpose.msra.mxu0 0
      %438 = vmatprep.mubr.bf16.mxu0 0
      %439 = vmatmul.mubr.bf16.gmra.mrb[0].mxu0 %v401
      %v440 = vpop.f32.mrb[0].mxu0
      %v441 = vadd.f32 0.0, %v440
      %v442 = vpop.f32.mrb[0].mxu0
      %v443 = vpop.f32.mrb[0].mxu0
      %v444 = vpop.f32.mrb[0].mxu0
      %445 = vdwg.mxu0
      %v446 = vmul.f32 %v441, 0.25
      %v447 = vsel %vm329, %v446, -inf
      %448 = vmax.xlane.f32.xlu0 %v447
      %v449 = vpop.xlane.xlu0 %448
      %v450 = vsub.f32 %v446, %v449
      %v451 = vmul.f32 %v450, 1.442695
      %v452 = vpow.pop %v451
      %v453 = vsel %vm329, %v452, 0.0
      %454 = vadd.xlane.f32.xlu0 %v453
      %v455 = vpop.xlane.xlu0 %454
      %v456 = vrcp.pop %v455
      %v457 = vmul.f32 %v452, %v456
      %v458 = vpack.c.bf16 %v457, %v457
      %v460 = vsel %vm342, %v458, 0
      %v463 = vand.u32 %v399, %v349
      %465 = vmatprep.subr.bf16.mxu0 0
      %466 = vmatpush1.bf16.msra.mxu0 %v463
      %467 = vmatprep.subr.bf16.mxu0 0
      %468 = vmatpush1.bf16.msra.mxu0 0
      %469 = vmatprep.subr.bf16.mxu0 0
      %470 = vmatpush1.bf16.msra.mxu0 0
      %471 = vmatprep.subr.bf16.mxu0 0
      %472 = vmatpush1.bf16.msra.mxu0 0
      %473 = vmatprep.subr.bf16.mxu0 0
      %474 = vmatpush1.bf16.msra.mxu0 0
      %475 = vmatprep.subr.bf16.mxu0 0
      %476 = vmatpush1.bf16.msra.mxu0 0
      %477 = vmatprep.subr.bf16.mxu0 0
      %478 = vmatpush1.bf16.msra.mxu0 0
      %479 = vmatprep.subr.bf16.mxu0 0
      %480 = vmatpush1.bf16.msra.mxu0 0
      %481 = vmatprep.subr.bf16.mxu0 0
      %482 = vmatpush1.bf16.msra.mxu0 0
      %483 = vmatprep.subr.bf16.mxu0 0
      %484 = vmatpush1.bf16.msra.mxu0 0
      %485 = vmatprep.subr.bf16.mxu0 0
      %486 = vmatpush1.bf16.msra.mxu0 0
      %487 = vmatprep.subr.bf16.mxu0 0
      %488 = vmatpush1.bf16.msra.mxu0 0
      %489 = vmatprep.subr.bf16.mxu0 0
      %490 = vmatpush1.bf16.msra.mxu0 0
      %491 = vmatprep.subr.bf16.mxu0 0
      %492 = vmatpush1.bf16.msra.mxu0 0
      %493 = vmatprep.subr.bf16.mxu0 0
      %494 = vmatpush1.bf16.msra.mxu0 0
      %495 = vmatprep.subr.bf16.mxu0 0
      %496 = vmatpush1.bf16.msra.mxu0 0
      %497 = vmatprep.mubr.bf16.mxu0 0
      %498 = vmatmul.mubr.bf16.gmra.mrb[0].mxu0 %v460
      %v499 = vpop.f32.mrb[0].mxu0
      %v500 = vadd.f32 0.0, %v499
      %v501 = vpop.f32.mrb[0].mxu0
      %v502 = vpop.f32.mrb[0].mxu0
      %v503 = vpop.f32.mrb[0].mxu0
      %504 = vdwg.mxu0
      %v505 = vpack.c.bf16 %v500, %v500
      %s506 = scalar_lea.vmem %s248, 8
      %v507 = vld [vmem:[%s506] sm:$0x7]
      %s508 = scalar_lea.vmem %s258, 8
      %v509 = vld [vmem:[%s508] sm:$0x7]
      %s510 = scalar_lea.vmem %s268, 8
      %v511 = vld [vmem:[%s510] sm:$0x7]
      %v513 = vsel %vm281, %v507, 0
      %v516 = vsel %vm281, %v509, 0
      %518 = vmatprep.subr.bf16.mxu0 0
      %519 = vmatpush1.bf16.xpose.msra.mxu0 %v516
      %520 = vmatprep.subr.bf16.mxu0 0
      %521 = vmatpush1.bf16.xpose.msra.mxu0 0
      %522 = vmatprep.subr.bf16.mxu0 0
      %523 = vmatpush1.bf16.xpose.msra.mxu0 0
      %524 = vmatprep.subr.bf16.mxu0 0
      %525 = vmatpush1.bf16.xpose.msra.mxu0 0
      %526 = vmatprep.subr.bf16.mxu0 0
      %527 = vmatpush1.bf16.xpose.msra.mxu0 0
      %528 = vmatprep.subr.bf16.mxu0 0
      %529 = vmatpush1.bf16.xpose.msra.mxu0 0
      %530 = vmatprep.subr.bf16.mxu0 0
      %531 = vmatpush1.bf16.xpose.msra.mxu0 0
      %532 = vmatprep.subr.bf16.mxu0 0
      %533 = vmatpush1.bf16.xpose.msra.mxu0 0
      %534 = vmatprep.subr.bf16.mxu0 0
      %535 = vmatpush1.bf16.xpose.msra.mxu0 0
      %536 = vmatprep.subr.bf16.mxu0 0
      %537 = vmatpush1.bf16.xpose.msra.mxu0 0
      %538 = vmatprep.subr.bf16.mxu0 0
      %539 = vmatpush1.bf16.xpose.msra.mxu0 0
      %540 = vmatprep.subr.bf16.mxu0 0
      %541 = vmatpush1.bf16.xpose.msra.mxu0 0
      %542 = vmatprep.subr.bf16.mxu0 0
      %543 = vmatpush1.bf16.xpose.msra.mxu0 0
      %544 = vmatprep.subr.bf16.mxu0 0
      %545 = vmatpush1.bf16.xpose.msra.mxu0 0
      %546 = vmatprep.subr.bf16.mxu0 0
      %547 = vmatpush1.bf16.xpose.msra.mxu0 0
      %548 = vmatprep.subr.bf16.mxu0 0
      %549 = vmatpush1.bf16.xpose.msra.mxu0 0
      %550 = vmatprep.mubr.bf16.mxu0 0
      %551 = vmatmul.mubr.bf16.gmra.mrb[0].mxu0 %v513
      %v552 = vpop.f32.mrb[0].mxu0
      %v553 = vadd.f32 0.0, %v552
      %v554 = vpop.f32.mrb[0].mxu0
      %v555 = vpop.f32.mrb[0].mxu0
      %v556 = vpop.f32.mrb[0].mxu0
      %557 = vdwg.mxu0
      %v558 = vmul.f32 %v553, 0.25
      %v559 = vsel %vm329, %v558, -inf
      %560 = vmax.xlane.f32.xlu0 %v559
      %v561 = vpop.xlane.xlu0 %560
      %v562 = vsub.f32 %v558, %v561
      %v563 = vmul.f32 %v562, 1.442695
      %v564 = vpow.pop %v563
      %v565 = vsel %vm329, %v564, 0.0
      %566 = vadd.xlane.f32.xlu0 %v565
      %v567 = vpop.xlane.xlu0 %566
      %v568 = vrcp.pop %v567
      %v569 = vmul.f32 %v564, %v568
      %v570 = vpack.c.bf16 %v569, %v569
      %v572 = vsel %vm342, %v570, 0
      %v575 = vand.u32 %v511, %v349
      %577 = vmatprep.subr.bf16.mxu0 0
      %578 = vmatpush1.bf16.msra.mxu0 %v575
      %579 = vmatprep.subr.bf16.mxu0 0
      %580 = vmatpush1.bf16.msra.mxu0 0
      %581 = vmatprep.subr.bf16.mxu0 0
      %582 = vmatpush1.bf16.msra.mxu0 0
      %583 = vmatprep.subr.bf16.mxu0 0
      %584 = vmatpush1.bf16.msra.mxu0 0
      %585 = vmatprep.subr.bf16.mxu0 0
      %586 = vmatpush1.bf16.msra.mxu0 0
      %587 = vmatprep.subr.bf16.mxu0 0
      %588 = vmatpush1.bf16.msra.mxu0 0
      %589 = vmatprep.subr.bf16.mxu0 0
      %590 = vmatpush1.bf16.msra.mxu0 0
      %591 = vmatprep.subr.bf16.mxu0 0
      %592 = vmatpush1.bf16.msra.mxu0 0
      %593 = vmatprep.subr.bf16.mxu0 0
      %594 = vmatpush1.bf16.msra.mxu0 0
      %595 = vmatprep.subr.bf16.mxu0 0
      %596 = vmatpush1.bf16.msra.mxu0 0
      %597 = vmatprep.subr.bf16.mxu0 0
      %598 = vmatpush1.bf16.msra.mxu0 0
      %599 = vmatprep.subr.bf16.mxu0 0
      %600 = vmatpush1.bf16.msra.mxu0 0
      %601 = vmatprep.subr.bf16.mxu0 0
      %602 = vmatpush1.bf16.msra.mxu0 0
      %603 = vmatprep.subr.bf16.mxu0 0
      %604 = vmatpush1.bf16.msra.mxu0 0
      %605 = vmatprep.subr.bf16.mxu0 0
      %606 = vmatpush1.bf16.msra.mxu0 0
      %607 = vmatprep.subr.bf16.mxu0 0
      %608 = vmatpush1.bf16.msra.mxu0 0
      %609 = vmatprep.mubr.bf16.mxu0 0
      %610 = vmatmul.mubr.bf16.gmra.mrb[0].mxu0 %v572
      %v611 = vpop.f32.mrb[0].mxu0
      %v612 = vadd.f32 0.0, %v611
      %v613 = vpop.f32.mrb[0].mxu0
      %v614 = vpop.f32.mrb[0].mxu0
      %v615 = vpop.f32.mrb[0].mxu0
      %616 = vdwg.mxu0
      %v617 = vpack.c.bf16 %v612, %v612
      %s618 = scalar_lea.vmem %s248, 12
      %v619 = vld [vmem:[%s618] sm:$0x7]
      %s620 = scalar_lea.vmem %s258, 12
      %v621 = vld [vmem:[%s620] sm:$0x7]
      %s622 = scalar_lea.vmem %s268, 12
      %v623 = vld [vmem:[%s622] sm:$0x7]
      %v625 = vsel %vm281, %v619, 0
      %v628 = vsel %vm281, %v621, 0
      %630 = vmatprep.subr.bf16.mxu0 0
      %631 = vmatpush1.bf16.xpose.msra.mxu0 %v628
      %632 = vmatprep.subr.bf16.mxu0 0
      %633 = vmatpush1.bf16.xpose.msra.mxu0 0
      %634 = vmatprep.subr.bf16.mxu0 0
      %635 = vmatpush1.bf16.xpose.msra.mxu0 0
      %636 = vmatprep.subr.bf16.mxu0 0
      %637 = vmatpush1.bf16.xpose.msra.mxu0 0
      %638 = vmatprep.subr.bf16.mxu0 0
      %639 = vmatpush1.bf16.xpose.msra.mxu0 0
      %640 = vmatprep.subr.bf16.mxu0 0
      %641 = vmatpush1.bf16.xpose.msra.mxu0 0
      %642 = vmatprep.subr.bf16.mxu0 0
      %643 = vmatpush1.bf16.xpose.msra.mxu0 0
      %644 = vmatprep.subr.bf16.mxu0 0
      %645 = vmatpush1.bf16.xpose.msra.mxu0 0
      %646 = vmatprep.subr.bf16.mxu0 0
      %647 = vmatpush1.bf16.xpose.msra.mxu0 0
      %648 = vmatprep.subr.bf16.mxu0 0
      %649 = vmatpush1.bf16.xpose.msra.mxu0 0
      %650 = vmatprep.subr.bf16.mxu0 0
      %651 = vmatpush1.bf16.xpose.msra.mxu0 0
      %652 = vmatprep.subr.bf16.mxu0 0
      %653 = vmatpush1.bf16.xpose.msra.mxu0 0
      %654 = vmatprep.subr.bf16.mxu0 0
      %655 = vmatpush1.bf16.xpose.msra.mxu0 0
      %656 = vmatprep.subr.bf16.mxu0 0
      %657 = vmatpush1.bf16.xpose.msra.mxu0 0
      %658 = vmatprep.subr.bf16.mxu0 0
      %659 = vmatpush1.bf16.xpose.msra.mxu0 0
      %660 = vmatprep.subr.bf16.mxu0 0
      %661 = vmatpush1.bf16.xpose.msra.mxu0 0
      %662 = vmatprep.mubr.bf16.mxu0 0
      %663 = vmatmul.mubr.bf16.gmra.mrb[0].mxu0 %v625
      %v664 = vpop.f32.mrb[0].mxu0
      %v665 = vadd.f32 0.0, %v664
      %v666 = vpop.f32.mrb[0].mxu0
      %v667 = vpop.f32.mrb[0].mxu0
      %v668 = vpop.f32.mrb[0].mxu0
      %669 = vdwg.mxu0
      %v670 = vmul.f32 %v665, 0.25
      %v671 = vsel %vm329, %v670, -inf
      %672 = vmax.xlane.f32.xlu0 %v671
      %v673 = vpop.xlane.xlu0 %672
      %v674 = vsub.f32 %v670, %v673
      %v675 = vmul.f32 %v674, 1.442695
      %v676 = vpow.pop %v675
      %v677 = vsel %vm329, %v676, 0.0
      %678 = vadd.xlane.f32.xlu0 %v677
      %v679 = vpop.xlane.xlu0 %678
      %v680 = vrcp.pop %v679
      %v681 = vmul.f32 %v676, %v680
      %v682 = vpack.c.bf16 %v681, %v681
      %v684 = vsel %vm342, %v682, 0
      %v687 = vand.u32 %v623, %v349
      %689 = vmatprep.subr.bf16.mxu0 0
      %690 = vmatpush1.bf16.msra.mxu0 %v687
      %691 = vmatprep.subr.bf16.mxu0 0
      %692 = vmatpush1.bf16.msra.mxu0 0
      %693 = vmatprep.subr.bf16.mxu0 0
      %694 = vmatpush1.bf16.msra.mxu0 0
      %695 = vmatprep.subr.bf16.mxu0 0
      %696 = vmatpush1.bf16.msra.mxu0 0
      %697 = vmatprep.subr.bf16.mxu0 0
      %698 = vmatpush1.bf16.msra.mxu0 0
      %699 = vmatprep.subr.bf16.mxu0 0
      %700 = vmatpush1.bf16.msra.mxu0 0
      %701 = vmatprep.subr.bf16.mxu0 0
      %702 = vmatpush1.bf16.msra.mxu0 0
      %703 = vmatprep.subr.bf16.mxu0 0
      %704 = vmatpush1.bf16.msra.mxu0 0
      %705 = vmatprep.subr.bf16.mxu0 0
      %706 = vmatpush1.bf16.msra.mxu0 0
      %707 = vmatprep.subr.bf16.mxu0 0
      %708 = vmatpush1.bf16.msra.mxu0 0
      %709 = vmatprep.subr.bf16.mxu0 0
      %710 = vmatpush1.bf16.msra.mxu0 0
      %711 = vmatprep.subr.bf16.mxu0 0
      %712 = vmatpush1.bf16.msra.mxu0 0
      %713 = vmatprep.subr.bf16.mxu0 0
      %714 = vmatpush1.bf16.msra.mxu0 0
      %715 = vmatprep.subr.bf16.mxu0 0
      %716 = vmatpush1.bf16.msra.mxu0 0
      %717 = vmatprep.subr.bf16.mxu0 0
      %718 = vmatpush1.bf16.msra.mxu0 0
      %719 = vmatprep.subr.bf16.mxu0 0
      %720 = vmatpush1.bf16.msra.mxu0 0
      %721 = vmatprep.mubr.bf16.mxu0 0
      %722 = vmatmul.mubr.bf16.gmra.mrb[0].mxu0 %v684
      %v723 = vpop.f32.mrb[0].mxu0
      %v724 = vadd.f32 0.0, %v723
      %v725 = vpop.f32.mrb[0].mxu0
      %v726 = vpop.f32.mrb[0].mxu0
      %v727 = vpop.f32.mrb[0].mxu0
      %728 = vdwg.mxu0
      %v729 = vpack.c.bf16 %v724, %v724
      %731 = vrot.lane.b32.xlu0 %v505, 16
      %v732 = vpop.permute.xlu0 %731
      %734 = vrot.lane.b32.xlu0 %v617, 32
      %v735 = vpop.permute.xlu0 %734
      %737 = vrot.lane.b32.xlu0 %v729, 48
      %v738 = vpop.permute.xlu0 %737
      %v741 = vsel %vm281, %v393, %v732
      %vm742 = vcmask 261120
      %v744 = vsel %vm742, %v741, %v735
      %vm745 = vcmask 392192
      %v747 = vsel %vm745, %v744, %v738
      %vm749 = vcmask 518144
      %vm750 = vsmask.f32 2304
      %vm751 = vmand %vm749, %vm750
      %v752 = vld [vmem:[%s276] sm:$0x7]
      %v753 = vsel %vm751, %v747, %v752
      %754 = vst [vmem:[%s276] sm:$0x7] %v753
      %p755 = scmp.lt.s32.totalorder %s18, 1
      %s756 = scalar_select %p755, %s18, 1
      %p757 = scmp.lt.s32.totalorder %s19, 0
      %s758 = scalar_select %p757, %s19, 0
      %s759 = sadd.s32 %s758, %s756
      %s760 = smul.addr %s759, 4
      %s761 = scalar_lea.vmem %s3, %s760
      // Predicated region
      $region33: #{_lambda_.35} parent=31 // pred_check
        %p762 = pneg %p130
      $region34: #{_lambda_.35} parent=31 // pred_check_branch
        %764 = sbr.rel (%p762) target = $region36
      $region35: #{_lambda_.35} parent=31 // pred_region
        _
      $region36: #{_lambda_.35} parent=31 // pred_fallthru
        _
    $region32: #{_lambda_.35} parent=5 // pred_fallthru
      _
    %p765 = scmp.le.s32.totalorder 2, %s9
    // Predicated region
    $region37: #{_lambda_.35} parent=5 // pred_check
      %p766 = pneg %p765
    $region38: #{_lambda_.35} parent=5 // pred_check_branch
      %768 = sbr.rel (%p766) target = $region40
    $region39: #{_lambda_.35} parent=5 // pred_region
      %s769 = ssub.s32 %s9, 2
      // Predicated region
      $region41: #{_lambda_.35} parent=39 // pred_check
        %p770 = pneg %p136
      $region42: #{_lambda_.35} parent=39 // pred_check_branch
        %772 = sbr.rel (%p770) target = $region44
      $region43: #{_lambda_.35} parent=39 // pred_region
        %p773 = scmp.lt.s32.totalorder %s20, 1
        %s774 = scalar_select %p773, %s20, 1
        %p775 = scmp.lt.s32.totalorder %s21, 0
        %s776 = scalar_select %p775, %s21, 0
        %s777 = sadd.s32 %s776, %s774
        %s778 = smul.addr %s777, 4
        %s779 = scalar_lea.vmem %s3, %s778
      $region44: #{_lambda_.35} parent=39 // pred_fallthru
        _
    $region40: #{_lambda_.35} parent=5 // pred_fallthru
      _
  $region6: #{_lambda_.35} parent=0 // loop_footer
    %s13 = sadd.s32 1, %s9
  $region7: #{_lambda_.35} parent=0 // loop_footer_branch
    %8 = sbr.rel target = $region3
  $region8: #{_lambda_.35} parent=0 // loop_exit
    _

// kernel: _lambda_.37
$region0: #{_lambda_.37}
  #allocation0 [shape = 'u32[]', space=smem, size = 0x4, offset = 0x4, fixed_abs, tag = 'smem constant byte address 0x4 - core index']
  #allocation1 [shape = 'u32[144,128]{1,0:T(1,128)}', space=vmem, size = 0x12000, scoped, tag = 'internal scratch']
  %s0 = inlined_call_operand.vmem [shape: bf16[16,64], index: 0, kind: input, shape index: {}]
  %s1 = inlined_call_operand.vmem [shape: f32[1,64], index: 1, kind: input, shape index: {}]
  %s2 = inlined_call_operand.vmem [shape: f32[1,64], index: 2, kind: input, shape index: {}]
  %s3 = inlined_call_operand.vmem [shape: bf16[64,256], index: 3, kind: input, shape index: {}]
  %s4 = inlined_call_operand.vmem [shape: f32[1,256], index: 4, kind: input, shape index: {}]
  %s5 = inlined_call_operand.vmem [shape: bf16[16,256], index: 5, kind: output, shape index: {}]
  %s6 = sld [smem:[#allocation0]]
  $region30: #{_lambda_.37} parent=0
    _
  %s8 = ssub.s32 1, %s6
  %s9 = scalar_select 0, %s8, %s6
  // Predicated region
  $region2: #{_lambda_.37} parent=0 // pred_check
    _
  $region3: #{_lambda_.37} parent=0 // pred_check_branch
    %11 = sbr.rel (0) target = $region5
  $region4: #{_lambda_.37} parent=0 // pred_region
    _
  $region5: #{_lambda_.37} parent=0 // pred_fallthru
    _
  // Predicated region
  $region6: #{_lambda_.37} parent=0 // pred_check
    _
  $region7: #{_lambda_.37} parent=0 // pred_check_branch
    %13 = sbr.rel (0) target = $region9
  $region8: #{_lambda_.37} parent=0 // pred_region
    _
  $region9: #{_lambda_.37} parent=0 // pred_fallthru
    _
  // Predicated region
  $region10: #{_lambda_.37} parent=0 // pred_check
    _
  $region11: #{_lambda_.37} parent=0 // pred_check_branch
    %15 = sbr.rel (0) target = $region13
  $region12: #{_lambda_.37} parent=0 // pred_region
    _
  $region13: #{_lambda_.37} parent=0 // pred_fallthru
    _
  // Predicated region
  $region14: #{_lambda_.37} parent=0 // pred_check
    _
  $region15: #{_lambda_.37} parent=0 // pred_check_branch
    %17 = sbr.rel (0) target = $region17
  $region16: #{_lambda_.37} parent=0 // pred_region
    _
  $region17: #{_lambda_.37} parent=0 // pred_fallthru
    _
  // Predicated region
  $region18: #{_lambda_.37} parent=0 // pred_check
    _
  $region19: #{_lambda_.37} parent=0 // pred_check_branch
    %19 = sbr.rel (0) target = $region21
  $region20: #{_lambda_.37} parent=0 // pred_region
    _
  $region21: #{_lambda_.37} parent=0 // pred_fallthru
    _
  %v21 = vld [vmem:[%s0] sm:$0xf]
  %v22 = vld [vmem:[%s0 + $0x4] sm:$0xf]
  %v23 = vunpack.c.l.bf16 %v21
  %v24 = vunpack.c.l.bf16 %v22
  %vm25 = vcmask 523264
  %v26 = vsel %vm25, %v23, 0.0
  %27 = vadd.xlane.f32.xlu0 %v26
  %v28 = vpop.xlane.xlu0 %27
  %v29 = vsel %vm25, %v24, 0.0
  %30 = vadd.xlane.f32.xlu0 %v29
  %v31 = vpop.xlane.xlu0 %30
  %v32 = vrcp.pop 64.0
  %v33 = vmul.f32 %v28, %v32
  %v34 = vmul.f32 %v31, %v32
  %v35 = vsub.f32 %v23, %v33
  %v36 = vsub.f32 %v24, %v34
  %v37 = vmul.f32 %v35, %v35
  %v38 = vmul.f32 %v36, %v36
  %v39 = vsel %vm25, %v37, 0.0
  %40 = vadd.xlane.f32.xlu0 %v39
  %v41 = vpop.xlane.xlu0 %40
  %v42 = vsel %vm25, %v38, 0.0
  %43 = vadd.xlane.f32.xlu0 %v42
  %v44 = vpop.xlane.xlu0 %43
  %v45 = vmul.f32 %v41, %v32
  %v46 = vmul.f32 %v44, %v32
  %v47 = vadd.f32 %v45, 1e-05
  %v48 = vadd.f32 %v46, 1e-05
  %v49 = vrsqrt.pop %v47
  %v50 = vrsqrt.pop %v48
  %v51 = vmul.f32 %v35, %v49
  %v52 = vmul.f32 %v36, %v50
  %v53 = vld [vmem:[%s1] sm:$0x1]
  %v55 = vlaneseq
  %v56 = vshrl.u32 %v55, 7
  %v57 = vsub.s32 0, %v56
  %v58 = vrot.slane %v53, %v57
  %v60 = vmul.f32 %v51, %v58
  %v61 = vmul.f32 %v52, %v58
  %v62 = vld [vmem:[%s2] sm:$0x1]
  %v64 = vlaneseq
  %v65 = vshrl.u32 %v64, 7
  %v66 = vsub.s32 0, %v65
  %v67 = vrot.slane %v62, %v66
  %v69 = vadd.f32 %v60, %v67
  %v70 = vadd.f32 %v61, %v67
  %v71 = vpack.c.bf16 %v70, %v69
  %v72 = vld [vmem:[%s3] sm:$0xff]
  %v73 = vld [vmem:[%s3 + $0x8] sm:$0xff]
  %v74 = vld [vmem:[%s3 + $0x10] sm:$0xff]
  %v75 = vld [vmem:[%s3 + $0x18] sm:$0xff]
  %v76 = vld [vmem:[%s3 + $0x20] sm:$0xff]
  %v77 = vld [vmem:[%s3 + $0x28] sm:$0xff]
  %v78 = vld [vmem:[%s3 + $0x30] sm:$0xff]
  %v79 = vld [vmem:[%s3 + $0x38] sm:$0xff]
  %v80 = vld [vmem:[%s4] sm:$0x3]
  %v82 = vlaneseq
  %v83 = vshrl.u32 %v82, 7
  %v84 = vsub.s32 0, %v83
  %v85 = vrot.slane %v80, %v84
  %v86 = vlaneseq
  %v87 = vshrl.u32 %v86, 7
  %v88 = vsub.s32 1, %v87
  %v89 = vrot.slane %v80, %v88
  %v100 = vunpack.c.l.b16 %v72
  %v101 = vunpack.c.h.b16 %v72
  %v102 = vunpack.c.l.b16 %v73
  %v103 = vunpack.c.h.b16 %v73
  %v104 = vunpack.c.l.b16 %v74
  %v105 = vunpack.c.h.b16 %v74
  %v106 = vunpack.c.l.b16 %v75
  %v107 = vunpack.c.h.b16 %v75
  %v108 = vunpack.c.l.b16 %v76
  %v109 = vunpack.c.h.b16 %v76
  %v110 = vunpack.c.l.b16 %v77
  %v111 = vunpack.c.h.b16 %v77
  %v112 = vunpack.c.l.b16 %v78
  %v113 = vunpack.c.h.b16 %v78
  %v114 = vunpack.c.l.b16 %v79
  %v115 = vunpack.c.h.b16 %v79
  %v116 = vpack.c.b16 %v102, %v100
  %v117 = vpack.c.b16 %v103, %v101
  %v118 = vpack.c.b16 %v106, %v104
  %v119 = vpack.c.b16 %v107, %v105
  %v120 = vpack.c.b16 %v110, %v108
  %v121 = vpack.c.b16 %v111, %v109
  %v122 = vpack.c.b16 %v114, %v112
  %v123 = vpack.c.b16 %v115, %v113
  %v133 = vsel %vm25, %v71, 0
  %135 = vmatprep.subr.bf16.mxu0 %v117
  %136 = vmatpush1.bf16.msra.mxu0 %v116
  %137 = vmatprep.subr.bf16.mxu0 %v119
  %138 = vmatpush1.bf16.msra.mxu0 %v118
  %139 = vmatprep.subr.bf16.mxu0 %v121
  %140 = vmatpush1.bf16.msra.mxu0 %v120
  %141 = vmatprep.subr.bf16.mxu0 %v123
  %142 = vmatpush1.bf16.msra.mxu0 %v122
  %143 = vmatprep.subr.bf16.mxu0 0
  %144 = vmatpush1.bf16.msra.mxu0 0
  %145 = vmatprep.subr.bf16.mxu0 0
  %146 = vmatpush1.bf16.msra.mxu0 0
  %147 = vmatprep.subr.bf16.mxu0 0
  %148 = vmatpush1.bf16.msra.mxu0 0
  %149 = vmatprep.subr.bf16.mxu0 0
  %150 = vmatpush1.bf16.msra.mxu0 0
  %151 = vmatprep.subr.bf16.mxu0 0
  %152 = vmatpush1.bf16.msra.mxu0 0
  %153 = vmatprep.subr.bf16.mxu0 0
  %154 = vmatpush1.bf16.msra.mxu0 0
  %155 = vmatprep.subr.bf16.mxu0 0
  %156 = vmatpush1.bf16.msra.mxu0 0
  %157 = vmatprep.subr.bf16.mxu0 0
  %158 = vmatpush1.bf16.msra.mxu0 0
  %159 = vmatprep.subr.bf16.mxu0 0
  %160 = vmatpush1.bf16.msra.mxu0 0
  %161 = vmatprep.subr.bf16.mxu0 0
  %162 = vmatpush1.bf16.msra.mxu0 0
  %163 = vmatprep.subr.bf16.mxu0 0
  %164 = vmatpush1.bf16.msra.mxu0 0
  %165 = vmatprep.subr.bf16.mxu0 0
  %166 = vmatpush1.bf16.msra.mxu0 0
  %167 = vmatprep.mubr.bf16.mxu0 0
  %168 = vmatmul.mubr.bf16.gmra.mrb[0].mxu0 %v133
  %v169 = vpop.f32.mrb[0].mxu0
  %v170 = vadd.f32 %v85, %v169
  %v171 = vpop.f32.mrb[0].mxu0
  %v172 = vadd.f32 %v89, %v171
  %v173 = vpop.f32.mrb[0].mxu0
  %v174 = vadd.f32 %v85, %v173
  %v175 = vpop.f32.mrb[0].mxu0
  %v176 = vadd.f32 %v89, %v175
  %177 = vdwg.mxu0
  %v178 = vmul.f32 %v170, 0.5
  %v179 = vmul.f32 %v172, 0.5
  %v180 = vmul.f32 %v174, 0.5
  %v181 = vmul.f32 %v176, 0.5
  %v182 = vmul.f32 %v170, 0.70710677
  %v183 = vmul.f32 %v172, 0.70710677
  %v184 = vmul.f32 %v174, 0.70710677
  %v185 = vmul.f32 %v176, 0.70710677
  %v186 = vand.u32 2147483647, %v182
  %v187 = vand.u32 2147483647, %v183
  %v188 = vand.u32 2147483647, %v184
  %v189 = vand.u32 2147483647, %v185
  %v190 = vmul.f32 %v186, 0.3275911
  %v191 = vmul.f32 %v187, 0.3275911
  %v192 = vmul.f32 %v188, 0.3275911
  %v193 = vmul.f32 %v189, 0.3275911
  %v194 = vadd.f32 %v190, 1.0
  %v195 = vadd.f32 %v191, 1.0
  %v196 = vadd.f32 %v192, 1.0
  %v197 = vadd.f32 %v193, 1.0
  %v198 = vrcp.pop %v194
  %v199 = vmul.f32 1.0, %v198
  %v200 = vrcp.pop %v195
  %v201 = vmul.f32 1.0, %v200
  %v202 = vrcp.pop %v196
  %v203 = vmul.f32 1.0, %v202
  %v204 = vrcp.pop %v197
  %v205 = vmul.f32 1.0, %v204
  %v206 = vmul.f32 %v199, 1.0614054
  %v207 = vmul.f32 %v201, 1.0614054
  %v208 = vmul.f32 %v203, 1.0614054
  %v209 = vmul.f32 %v205, 1.0614054
  %v210 = vadd.f32 %v206, -1.4531521
  %v211 = vadd.f32 %v207, -1.4531521
  %v212 = vadd.f32 %v208, -1.4531521
  %v213 = vadd.f32 %v209, -1.4531521
  %v214 = vmul.f32 %v210, %v199
  %v215 = vmul.f32 %v211, %v201
  %v216 = vmul.f32 %v212, %v203
  %v217 = vmul.f32 %v213, %v205
  %v218 = vadd.f32 %v214, 1.4214138
  %v219 = vadd.f32 %v215, 1.4214138
  %v220 = vadd.f32 %v216, 1.4214138
  %v221 = vadd.f32 %v217, 1.4214138
  %v222 = vmul.f32 %v218, %v199
  %v223 = vmul.f32 %v219, %v201
  %v224 = vmul.f32 %v220, %v203
  %v225 = vmul.f32 %v221, %v205
  %v226 = vadd.f32 %v222, -0.28449672
  %v227 = vadd.f32 %v223, -0.28449672
  %v228 = vadd.f32 %v224, -0.28449672
  %v229 = vadd.f32 %v225, -0.28449672
  %v230 = vmul.f32 %v226, %v199
  %v231 = vmul.f32 %v227, %v201
  %v232 = vmul.f32 %v228, %v203
  %v233 = vmul.f32 %v229, %v205
  %v234 = vadd.f32 %v230, 0.2548296
  %v235 = vadd.f32 %v231, 0.2548296
  %v236 = vadd.f32 %v232, 0.2548296
  %v237 = vadd.f32 %v233, 0.2548296
  %v238 = vmul.f32 %v234, %v199
  %v239 = vmul.f32 %v235, %v201
  %v240 = vmul.f32 %v236, %v203
  %v241 = vmul.f32 %v237, %v205
  %v242 = vsub.f32 0.0, %v186
  %v243 = vsub.f32 0.0, %v187
  %v244 = vsub.f32 0.0, %v188
  %v245 = vsub.f32 0.0, %v189
  %v246 = vmul.f32 %v242, %v186
  %v247 = vmul.f32 %v243, %v187
  %v248 = vmul.f32 %v244, %v188
  %v249 = vmul.f32 %v245, %v189
  %v250 = vmul.f32 %v246, 1.442695
  %v251 = vpow.pop %v250
  %v252 = vmul.f32 %v247, 1.442695
  %v253 = vpow.pop %v252
  %v254 = vmul.f32 %v248, 1.442695
  %v255 = vpow.pop %v254
  %v256 = vmul.f32 %v249, 1.442695
  %v257 = vpow.pop %v256
  %v258 = vmul.f32 %v238, %v251
  %v259 = vmul.f32 %v239, %v253
  %v260 = vmul.f32 %v240, %v255
  %v261 = vmul.f32 %v241, %v257
  %v262 = vsub.f32 1.0, %v258
  %v263 = vsub.f32 1.0, %v259
  %v264 = vsub.f32 1.0, %v260
  %v265 = vsub.f32 1.0, %v261
  %vm266 = vcmp.lt.f32.partialorder %v182, 0.0
  %vm267 = vcmp.lt.f32.partialorder %v183, 0.0
  %vm268 = vcmp.lt.f32.partialorder %v184, 0.0
  %vm269 = vcmp.lt.f32.partialorder %v185, 0.0
  %v270 = vsub.f32 0.0, %v262
  %v271 = vsub.f32 0.0, %v263
  %v272 = vsub.f32 0.0, %v264
  %v273 = vsub.f32 0.0, %v265
  %v274 = vsel %vm266, %v270, %v262
  %v275 = vsel %vm267, %v271, %v263
  %v276 = vsel %vm268, %v272, %v264
  %v277 = vsel %vm269, %v273, %v265
  %v278 = vadd.f32 %v274, 1.0
  %v279 = vadd.f32 %v275, 1.0
  %v280 = vadd.f32 %v276, 1.0
  %v281 = vadd.f32 %v277, 1.0
  %v282 = vmul.f32 %v178, %v278
  %v283 = vmul.f32 %v179, %v279
  %v284 = vmul.f32 %v180, %v280
  %v285 = vmul.f32 %v181, %v281
  %v286 = vpack.c.bf16 %v284, %v282
  %v287 = vpack.c.bf16 %v285, %v283
  %v290 = vunpack.c.l.b16 %v286
  %v291 = vunpack.c.l.b16 %v287
  %v292 = vunpack.c.h.b16 %v286
  %v293 = vunpack.c.h.b16 %v287
  %v294 = vpack.c.b16 %v291, %v290
  %v295 = vpack.c.b16 %v293, %v292
  %298 = vst [vmem:[%s5] sm:$0xff] %v294
  %299 = vst [vmem:[%s5 + $0x8] sm:$0xff] %v295
  // Predicated region
  $region22: #{_lambda_.37} parent=0 // pred_check
    _
  $region23: #{_lambda_.37} parent=0 // pred_check_branch
    %301 = sbr.rel (0) target = $region25
  $region24: #{_lambda_.37} parent=0 // pred_region
    _
  $region25: #{_lambda_.37} parent=0 // pred_fallthru
    _
  // Predicated region
  $region26: #{_lambda_.37} parent=0 // pred_check
    _
  $region27: #{_lambda_.37} parent=0 // pred_check_branch
    %303 = sbr.rel (0) target = $region29
  $region28: #{_lambda_.37} parent=0 // pred_region
    _
  $region29: #{_lambda_.37} parent=0 // pred_fallthru
    _

// kernel: _lambda_.38
$region0: #{_lambda_.38}
  #allocation0 [shape = 'u32[]', space=smem, size = 0x4, offset = 0x4, fixed_abs, tag = 'smem constant byte address 0x4 - core index']
  #allocation1 [shape = 'u32[144,128]{1,0:T(1,128)}', space=vmem, size = 0x12000, scoped, tag = 'internal scratch']
  #allocation2 [shape = 'f32[16,128]{1,0:T(8,128)}', space=vmem, size = 0x2000, scoped, tag = 'scratch operand']
  %s0 = inlined_call_operand.vmem [shape: bf16[16,256], index: 0, kind: input, shape index: {}]
  %s1 = inlined_call_operand.vmem [shape: bf16[256,128], index: 1, kind: input, shape index: {}]
  %s2 = inlined_call_operand.vmem [shape: f32[1,128], index: 2, kind: input, shape index: {}]
  %s3 = inlined_call_operand.vmem [shape: bf16[16,128], index: 3, kind: input, shape index: {}]
  %s4 = inlined_call_operand.vmem [shape: bf16[16,128], index: 4, kind: output, shape index: {}]
  %s5 = sld [smem:[#allocation0]]
  $region34: #{_lambda_.38} parent=0
    _
  %s7 = ssub.s32 1, %s5
  %s8 = scalar_select 0, %s7, %s5
  // Predicated region
  $region2: #{_lambda_.38} parent=0 // pred_check
    _
  $region3: #{_lambda_.38} parent=0 // pred_check_branch
    %10 = sbr.rel (0) target = $region5
  $region4: #{_lambda_.38} parent=0 // pred_region
    _
  $region5: #{_lambda_.38} parent=0 // pred_fallthru
    _
  // Predicated region
  $region6: #{_lambda_.38} parent=0 // pred_check
    _
  $region7: #{_lambda_.38} parent=0 // pred_check_branch
    %12 = sbr.rel (0) target = $region9
  $region8: #{_lambda_.38} parent=0 // pred_region
    _
  $region9: #{_lambda_.38} parent=0 // pred_fallthru
    _
  // Predicated region
  $region10: #{_lambda_.38} parent=0 // pred_check
    _
  $region11: #{_lambda_.38} parent=0 // pred_check_branch
    %14 = sbr.rel (0) target = $region13
  $region12: #{_lambda_.38} parent=0 // pred_region
    _
  $region13: #{_lambda_.38} parent=0 // pred_fallthru
    _
  // Predicated region
  $region14: #{_lambda_.38} parent=0 // pred_check
    _
  $region15: #{_lambda_.38} parent=0 // pred_check_branch
    %16 = sbr.rel (0) target = $region17
  $region16: #{_lambda_.38} parent=0 // pred_region
    _
  $region17: #{_lambda_.38} parent=0 // pred_fallthru
    _
  %p18 = scmp.eq.s32.totalorder 0, 0
  // Predicated region
  $region18: #{_lambda_.38} parent=0 // pred_check
    %p19 = pneg %p18
  $region19: #{_lambda_.38} parent=0 // pred_check_branch
    %21 = sbr.rel (%p19) target = $region21
  $region20: #{_lambda_.38} parent=0 // pred_region
    %22 = vst [vmem:[#allocation2] sm:$0xff] 0.0
    %23 = vst [vmem:[#allocation2 + $0x8] sm:$0xff] 0.0
  $region21: #{_lambda_.38} parent=0 // pred_fallthru
    _
  %v24 = vld [vmem:[#allocation2] sm:$0xff]
  %v25 = vld [vmem:[#allocation2 + $0x8] sm:$0xff]
  %v26 = vld [vmem:[%s0] sm:$0xff]
  %v27 = vld [vmem:[%s0 + $0x8] sm:$0xff]
  %v28 = vld [vmem:[%s1] sm:$0xf]
  %v29 = vld [vmem:[%s1 + $0x4] sm:$0xf]
  %v30 = vld [vmem:[%s1 + $0x8] sm:$0xf]
  %v31 = vld [vmem:[%s1 + $0xc] sm:$0xf]
  %v32 = vld [vmem:[%s1 + $0x10] sm:$0xf]
  %v33 = vld [vmem:[%s1 + $0x14] sm:$0xf]
  %v34 = vld [vmem:[%s1 + $0x18] sm:$0xf]
  %v35 = vld [vmem:[%s1 + $0x1c] sm:$0xf]
  %v36 = vld [vmem:[%s1 + $0x20] sm:$0xf]
  %v37 = vld [vmem:[%s1 + $0x24] sm:$0xf]
  %v38 = vld [vmem:[%s1 + $0x28] sm:$0xf]
  %v39 = vld [vmem:[%s1 + $0x2c] sm:$0xf]
  %v40 = vld [vmem:[%s1 + $0x30] sm:$0xf]
  %v41 = vld [vmem:[%s1 + $0x34] sm:$0xf]
  %v42 = vld [vmem:[%s1 + $0x38] sm:$0xf]
  %v43 = vld [vmem:[%s1 + $0x3c] sm:$0xf]
  %v44 = vld [vmem:[%s1 + $0x40] sm:$0xf]
  %v45 = vld [vmem:[%s1 + $0x44] sm:$0xf]
  %v46 = vld [vmem:[%s1 + $0x48] sm:$0xf]
  %v47 = vld [vmem:[%s1 + $0x4c] sm:$0xf]
  %v48 = vld [vmem:[%s1 + $0x50] sm:$0xf]
  %v49 = vld [vmem:[%s1 + $0x54] sm:$0xf]
  %v50 = vld [vmem:[%s1 + $0x58] sm:$0xf]
  %v51 = vld [vmem:[%s1 + $0x5c] sm:$0xf]
  %v52 = vld [vmem:[%s1 + $0x60] sm:$0xf]
  %v53 = vld [vmem:[%s1 + $0x64] sm:$0xf]
  %v54 = vld [vmem:[%s1 + $0x68] sm:$0xf]
  %v55 = vld [vmem:[%s1 + $0x6c] sm:$0xf]
  %v56 = vld [vmem:[%s1 + $0x70] sm:$0xf]
  %v57 = vld [vmem:[%s1 + $0x74] sm:$0xf]
  %v58 = vld [vmem:[%s1 + $0x78] sm:$0xf]
  %v59 = vld [vmem:[%s1 + $0x7c] sm:$0xf]
  %v62 = vunpack.c.l.b16 %v26
  %v63 = vunpack.c.h.b16 %v26
  %v64 = vunpack.c.l.b16 %v27
  %v65 = vunpack.c.h.b16 %v27
  %v66 = vpack.c.b16 %v64, %v62
  %v67 = vpack.c.b16 %v65, %v63
  %v102 = vunpack.c.l.b16 %v28
  %v103 = vunpack.c.l.b16 %v29
  %v104 = vunpack.c.l.b16 %v30
  %v105 = vunpack.c.l.b16 %v31
  %v106 = vunpack.c.l.b16 %v32
  %v107 = vunpack.c.l.b16 %v33
  %v108 = vunpack.c.l.b16 %v34
  %v109 = vunpack.c.l.b16 %v35
  %v110 = vunpack.c.l.b16 %v36
  %v111 = vunpack.c.l.b16 %v37
  %v112 = vunpack.c.l.b16 %v38
  %v113 = vunpack.c.l.b16 %v39
  %v114 = vunpack.c.l.b16 %v40
  %v115 = vunpack.c.l.b16 %v41
  %v116 = vunpack.c.l.b16 %v42
  %v117 = vunpack.c.l.b16 %v43
  %v118 = vunpack.c.l.b16 %v44
  %v119 = vunpack.c.l.b16 %v45
  %v120 = vunpack.c.l.b16 %v46
  %v121 = vunpack.c.l.b16 %v47
  %v122 = vunpack.c.l.b16 %v48
  %v123 = vunpack.c.l.b16 %v49
  %v124 = vunpack.c.l.b16 %v50
  %v125 = vunpack.c.l.b16 %v51
  %v126 = vunpack.c.l.b16 %v52
  %v127 = vunpack.c.l.b16 %v53
  %v128 = vunpack.c.l.b16 %v54
  %v129 = vunpack.c.l.b16 %v55
  %v130 = vunpack.c.l.b16 %v56
  %v131 = vunpack.c.l.b16 %v57
  %v132 = vunpack.c.l.b16 %v58
  %v133 = vunpack.c.l.b16 %v59
  %v134 = vpack.c.b16 %v103, %v102
  %v135 = vpack.c.b16 %v105, %v104
  %v136 = vpack.c.b16 %v107, %v106
  %v137 = vpack.c.b16 %v109, %v108
  %v138 = vpack.c.b16 %v111, %v110
  %v139 = vpack.c.b16 %v113, %v112
  %v140 = vpack.c.b16 %v115, %v114
  %v141 = vpack.c.b16 %v117, %v116
  %v142 = vpack.c.b16 %v119, %v118
  %v143 = vpack.c.b16 %v121, %v120
  %v144 = vpack.c.b16 %v123, %v122
  %v145 = vpack.c.b16 %v125, %v124
  %v146 = vpack.c.b16 %v127, %v126
  %v147 = vpack.c.b16 %v129, %v128
  %v148 = vpack.c.b16 %v131, %v130
  %v149 = vpack.c.b16 %v133, %v132
  %166 = vmatprep.subr.bf16.mxu0 0
  %167 = vmatpush1.bf16.msra.mxu0 %v134
  %168 = vmatprep.subr.bf16.mxu0 0
  %169 = vmatpush1.bf16.msra.mxu0 %v135
  %170 = vmatprep.subr.bf16.mxu0 0
  %171 = vmatpush1.bf16.msra.mxu0 %v136
  %172 = vmatprep.subr.bf16.mxu0 0
  %173 = vmatpush1.bf16.msra.mxu0 %v137
  %174 = vmatprep.subr.bf16.mxu0 0
  %175 = vmatpush1.bf16.msra.mxu0 %v138
  %176 = vmatprep.subr.bf16.mxu0 0
  %177 = vmatpush1.bf16.msra.mxu0 %v139
  %178 = vmatprep.subr.bf16.mxu0 0
  %179 = vmatpush1.bf16.msra.mxu0 %v140
  %180 = vmatprep.subr.bf16.mxu0 0
  %181 = vmatpush1.bf16.msra.mxu0 %v141
  %182 = vmatprep.subr.bf16.mxu0 0
  %183 = vmatpush1.bf16.msra.mxu0 %v142
  %184 = vmatprep.subr.bf16.mxu0 0
  %185 = vmatpush1.bf16.msra.mxu0 %v143
  %186 = vmatprep.subr.bf16.mxu0 0
  %187 = vmatpush1.bf16.msra.mxu0 %v144
  %188 = vmatprep.subr.bf16.mxu0 0
  %189 = vmatpush1.bf16.msra.mxu0 %v145
  %190 = vmatprep.subr.bf16.mxu0 0
  %191 = vmatpush1.bf16.msra.mxu0 %v146
  %192 = vmatprep.subr.bf16.mxu0 0
  %193 = vmatpush1.bf16.msra.mxu0 %v147
  %194 = vmatprep.subr.bf16.mxu0 0
  %195 = vmatpush1.bf16.msra.mxu0 %v148
  %196 = vmatprep.subr.bf16.mxu0 0
  %197 = vmatpush1.bf16.msra.mxu0 %v149
  %198 = vmatprep.mubr.bf16.mxu0 %v67
  %199 = vmatmul.mubr.bf16.gmra.mrb[0].mxu0 %v66
  %v200 = vpop.f32.mrb[0].mxu0
  %v201 = vadd.f32 0.0, %v200
  %v202 = vpop.f32.mrb[0].mxu0
  %v203 = vpop.f32.mrb[0].mxu0
  %v204 = vadd.f32 0.0, %v203
  %v205 = vpop.f32.mrb[0].mxu0
  %206 = vdwg.mxu0
  %v207 = vadd.f32 %v24, %v201
  %v208 = vadd.f32 %v25, %v204
  %209 = vst [vmem:[#allocation2] sm:$0xff] %v207
  %210 = vst [vmem:[#allocation2 + $0x8] sm:$0xff] %v208
  // Predicated region
  $region22: #{_lambda_.38} parent=0 // pred_check
    %p211 = pneg %p18
  $region23: #{_lambda_.38} parent=0 // pred_check_branch
    %213 = sbr.rel (%p211) target = $region25
  $region24: #{_lambda_.38} parent=0 // pred_region
    %v214 = vld [vmem:[#allocation2] sm:$0xff]
    %v215 = vld [vmem:[#allocation2 + $0x8] sm:$0xff]
    %v216 = vld [vmem:[%s2] sm:$0x1]
    %v218 = vlaneseq
    %v219 = vshrl.u32 %v218, 7
    %v220 = vsub.s32 0, %v219
    %v221 = vrot.slane %v216, %v220
    %v223 = vadd.f32 %v214, %v221
    %v224 = vadd.f32 %v215, %v221
    %v225 = vld [vmem:[%s3] sm:$0xf]
    %v226 = vld [vmem:[%s3 + $0x4] sm:$0xf]
    %v227 = vunpack.c.l.bf16 %v225
    %v228 = vunpack.c.l.bf16 %v226
    %v229 = vadd.f32 %v223, %v227
    %v230 = vadd.f32 %v224, %v228
    %v231 = vpack.c.bf16 %v230, %v229
    %v233 = vunpack.c.l.b16 %v231
    %v234 = vunpack.c.h.b16 %v231
    %v235 = vpack.c.b16 %v233, %v233
    %v236 = vpack.c.b16 %v234, %v234
    %239 = vst [vmem:[%s4] sm:$0xf] %v235
    %240 = vst [vmem:[%s4 + $0x4] sm:$0xf] %v236
  $region25: #{_lambda_.38} parent=0 // pred_fallthru
    _
  // Predicated region
  $region26: #{_lambda_.38} parent=0 // pred_check
    _
  $region27: #{_lambda_.38} parent=0 // pred_check_branch
    %242 = sbr.rel (0) target = $region29
  $region28: #{_lambda_.38} parent=0 // pred_region
    _
  $region29: #{_lambda_.38} parent=0 // pred_fallthru
    _
  // Predicated region
  $region30: #{_lambda_.38} parent=0 // pred_check
    _
  $region31: #{_lambda_.38} parent=0 // pred_check_branch
    %244 = sbr.rel (0) target = $region33
  $region32: #{_lambda_.38} parent=0 // pred_region
    _
  $region33: #{_lambda_.38} parent=0 // pred_fallthru
    _

// kernel: _lambda_.44
$region0: #{_lambda_.44}
  #allocation0 [shape = 'u32[]', space=smem, size = 0x4, offset = 0x4, fixed_abs, tag = 'smem constant byte address 0x4 - core index']
  #allocation1 [shape = 'u32[144,128]{1,0:T(1,128)}', space=vmem, size = 0x12000, scoped, tag = 'internal scratch']
  %s0 = inlined_call_operand.vmem [shape: bf16[16,64], index: 0, kind: input, shape index: {}]
  %s1 = inlined_call_operand.vmem [shape: f32[1,64], index: 1, kind: input, shape index: {}]
  %s2 = inlined_call_operand.vmem [shape: f32[1,64], index: 2, kind: input, shape index: {}]
  %s3 = inlined_call_operand.vmem [shape: bf16[16,64], index: 3, kind: output, shape index: {}]
  %s4 = sld [smem:[#allocation0]]
  $region22: #{_lambda_.44} parent=0
    _
  %s6 = ssub.s32 1, %s4
  %s7 = scalar_select 0, %s6, %s4
  // Predicated region
  $region2: #{_lambda_.44} parent=0 // pred_check
    _
  $region3: #{_lambda_.44} parent=0 // pred_check_branch
    %9 = sbr.rel (0) target = $region5
  $region4: #{_lambda_.44} parent=0 // pred_region
    _
  $region5: #{_lambda_.44} parent=0 // pred_fallthru
    _
  // Predicated region
  $region6: #{_lambda_.44} parent=0 // pred_check
    _
  $region7: #{_lambda_.44} parent=0 // pred_check_branch
    %11 = sbr.rel (0) target = $region9
  $region8: #{_lambda_.44} parent=0 // pred_region
    _
  $region9: #{_lambda_.44} parent=0 // pred_fallthru
    _
  // Predicated region
  $region10: #{_lambda_.44} parent=0 // pred_check
    _
  $region11: #{_lambda_.44} parent=0 // pred_check_branch
    %13 = sbr.rel (0) target = $region13
  $region12: #{_lambda_.44} parent=0 // pred_region
    _
  $region13: #{_lambda_.44} parent=0 // pred_fallthru
    _
  %v14 = vld [vmem:[%s0] sm:$0xf]
  %v15 = vld [vmem:[%s0 + $0x4] sm:$0xf]
  %v16 = vunpack.c.l.bf16 %v14
  %v17 = vunpack.c.l.bf16 %v15
  %vm18 = vcmask 523264
  %v19 = vsel %vm18, %v16, 0.0
  %20 = vadd.xlane.f32.xlu0 %v19
  %v21 = vpop.xlane.xlu0 %20
  %v22 = vsel %vm18, %v17, 0.0
  %23 = vadd.xlane.f32.xlu0 %v22
  %v24 = vpop.xlane.xlu0 %23
  %v25 = vrcp.pop 64.0
  %v26 = vmul.f32 %v21, %v25
  %v27 = vmul.f32 %v24, %v25
  %v28 = vsub.f32 %v16, %v26
  %v29 = vsub.f32 %v17, %v27
  %v30 = vmul.f32 %v28, %v28
  %v31 = vmul.f32 %v29, %v29
  %v32 = vsel %vm18, %v30, 0.0
  %33 = vadd.xlane.f32.xlu0 %v32
  %v34 = vpop.xlane.xlu0 %33
  %v35 = vsel %vm18, %v31, 0.0
  %36 = vadd.xlane.f32.xlu0 %v35
  %v37 = vpop.xlane.xlu0 %36
  %v38 = vmul.f32 %v34, %v25
  %v39 = vmul.f32 %v37, %v25
  %v40 = vadd.f32 %v38, 1e-05
  %v41 = vadd.f32 %v39, 1e-05
  %v42 = vrsqrt.pop %v40
  %v43 = vrsqrt.pop %v41
  %v44 = vmul.f32 %v28, %v42
  %v45 = vmul.f32 %v29, %v43
  %v46 = vld [vmem:[%s1] sm:$0x1]
  %v48 = vlaneseq
  %v49 = vshrl.u32 %v48, 7
  %v50 = vsub.s32 0, %v49
  %v51 = vrot.slane %v46, %v50
  %v53 = vmul.f32 %v44, %v51
  %v54 = vmul.f32 %v45, %v51
  %v55 = vld [vmem:[%s2] sm:$0x1]
  %v57 = vlaneseq
  %v58 = vshrl.u32 %v57, 7
  %v59 = vsub.s32 0, %v58
  %v60 = vrot.slane %v55, %v59
  %v62 = vadd.f32 %v53, %v60
  %v63 = vadd.f32 %v54, %v60
  %v64 = vpack.c.bf16 %v63, %v62
  %v66 = vunpack.c.l.b16 %v64
  %v67 = vunpack.c.h.b16 %v64
  %v68 = vpack.c.b16 %v66, %v66
  %v69 = vpack.c.b16 %v67, %v67
  %vm72 = vcmask 519168
  %73 = vst.msk [vmem:[%s3] sm:$0xf] %vm72, %v68
  %74 = vst.msk [vmem:[%s3 + $0x4] sm:$0xf] %vm72, %v69
  // Predicated region
  $region14: #{_lambda_.44} parent=0 // pred_check
    _
  $region15: #{_lambda_.44} parent=0 // pred_check_branch
    %76 = sbr.rel (0) target = $region17
  $region16: #{_lambda_.44} parent=0 // pred_region
    _
  $region17: #{_lambda_.44} parent=0 // pred_fallthru
    _
  // Predicated region
  $region18: #{_lambda_.44} parent=0 // pred_check
    _
  $region19: #{_lambda_.44} parent=0 // pred_check_branch
    %78 = sbr.rel (0) target = $region21
  $region20: #{_lambda_.44} parent=0 // pred_region
    _
  $region21: #{_lambda_.44} parent=0 // pred_fallthru
    _

// kernel: _lambda_.49
$region0: #{_lambda_.49}
  #allocation0 [shape = 'u32[]', space=smem, size = 0x4, offset = 0x4, fixed_abs, tag = 'smem constant byte address 0x4 - core index']
  #allocation1 [shape = 'u32[144,128]{1,0:T(1,128)}', space=vmem, size = 0x12000, scoped, tag = 'internal scratch']
  #allocation2 [shape = 'f32[16,128]{1,0:T(8,128)}', space=vmem, size = 0x2000, scoped, tag = 'scratch operand']
  %s0 = inlined_call_operand.vmem [shape: bf16[16,128], index: 0, kind: input, shape index: {}]
  %s1 = inlined_call_operand.vmem [shape: bf16[128,128], index: 1, kind: input, shape index: {}]
  %s2 = inlined_call_operand.vmem [shape: f32[1,128], index: 2, kind: input, shape index: {}]
  %s3 = inlined_call_operand.vmem [shape: bf16[16,128], index: 3, kind: output, shape index: {}]
  %s4 = sld [smem:[#allocation0]]
  $region30: #{_lambda_.49} parent=0
    _
  %s6 = ssub.s32 1, %s4
  %s7 = scalar_select 0, %s6, %s4
  // Predicated region
  $region2: #{_lambda_.49} parent=0 // pred_check
    _
  $region3: #{_lambda_.49} parent=0 // pred_check_branch
    %9 = sbr.rel (0) target = $region5
  $region4: #{_lambda_.49} parent=0 // pred_region
    _
  $region5: #{_lambda_.49} parent=0 // pred_fallthru
    _
  // Predicated region
  $region6: #{_lambda_.49} parent=0 // pred_check
    _
  $region7: #{_lambda_.49} parent=0 // pred_check_branch
    %11 = sbr.rel (0) target = $region9
  $region8: #{_lambda_.49} parent=0 // pred_region
    _
  $region9: #{_lambda_.49} parent=0 // pred_fallthru
    _
  // Predicated region
  $region10: #{_lambda_.49} parent=0 // pred_check
    _
  $region11: #{_lambda_.49} parent=0 // pred_check_branch
    %13 = sbr.rel (0) target = $region13
  $region12: #{_lambda_.49} parent=0 // pred_region
    _
  $region13: #{_lambda_.49} parent=0 // pred_fallthru
    _
  %p15 = scmp.eq.s32.totalorder 0, 0
  // Predicated region
  $region14: #{_lambda_.49} parent=0 // pred_check
    %p16 = pneg %p15
  $region15: #{_lambda_.49} parent=0 // pred_check_branch
    %18 = sbr.rel (%p16) target = $region17
  $region16: #{_lambda_.49} parent=0 // pred_region
    %19 = vst [vmem:[#allocation2] sm:$0xff] 0.0
    %20 = vst [vmem:[#allocation2 + $0x8] sm:$0xff] 0.0
  $region17: #{_lambda_.49} parent=0 // pred_fallthru
    _
  %v21 = vld [vmem:[#allocation2] sm:$0xff]
  %v22 = vld [vmem:[#allocation2 + $0x8] sm:$0xff]
  %v23 = vld [vmem:[%s0] sm:$0xf]
  %v24 = vld [vmem:[%s0 + $0x4] sm:$0xf]
  %v25 = vld [vmem:[%s1] sm:$0xf]
  %v26 = vld [vmem:[%s1 + $0x4] sm:$0xf]
  %v27 = vld [vmem:[%s1 + $0x8] sm:$0xf]
  %v28 = vld [vmem:[%s1 + $0xc] sm:$0xf]
  %v29 = vld [vmem:[%s1 + $0x10] sm:$0xf]
  %v30 = vld [vmem:[%s1 + $0x14] sm:$0xf]
  %v31 = vld [vmem:[%s1 + $0x18] sm:$0xf]
  %v32 = vld [vmem:[%s1 + $0x1c] sm:$0xf]
  %v33 = vld [vmem:[%s1 + $0x20] sm:$0xf]
  %v34 = vld [vmem:[%s1 + $0x24] sm:$0xf]
  %v35 = vld [vmem:[%s1 + $0x28] sm:$0xf]
  %v36 = vld [vmem:[%s1 + $0x2c] sm:$0xf]
  %v37 = vld [vmem:[%s1 + $0x30] sm:$0xf]
  %v38 = vld [vmem:[%s1 + $0x34] sm:$0xf]
  %v39 = vld [vmem:[%s1 + $0x38] sm:$0xf]
  %v40 = vld [vmem:[%s1 + $0x3c] sm:$0xf]
  %v43 = vunpack.c.l.b16 %v23
  %v44 = vunpack.c.l.b16 %v24
  %v45 = vpack.c.b16 %v44, %v43
  %v63 = vunpack.c.l.b16 %v25
  %v64 = vunpack.c.l.b16 %v26
  %v65 = vunpack.c.l.b16 %v27
  %v66 = vunpack.c.l.b16 %v28
  %v67 = vunpack.c.l.b16 %v29
  %v68 = vunpack.c.l.b16 %v30
  %v69 = vunpack.c.l.b16 %v31
  %v70 = vunpack.c.l.b16 %v32
  %v71 = vunpack.c.l.b16 %v33
  %v72 = vunpack.c.l.b16 %v34
  %v73 = vunpack.c.l.b16 %v35
  %v74 = vunpack.c.l.b16 %v36
  %v75 = vunpack.c.l.b16 %v37
  %v76 = vunpack.c.l.b16 %v38
  %v77 = vunpack.c.l.b16 %v39
  %v78 = vunpack.c.l.b16 %v40
  %v79 = vpack.c.b16 %v64, %v63
  %v80 = vpack.c.b16 %v66, %v65
  %v81 = vpack.c.b16 %v68, %v67
  %v82 = vpack.c.b16 %v70, %v69
  %v83 = vpack.c.b16 %v72, %v71
  %v84 = vpack.c.b16 %v74, %v73
  %v85 = vpack.c.b16 %v76, %v75
  %v86 = vpack.c.b16 %v78, %v77
  %95 = vmatprep.subr.bf16.mxu0 0
  %96 = vmatpush1.bf16.msra.mxu0 %v79
  %97 = vmatprep.subr.bf16.mxu0 0
  %98 = vmatpush1.bf16.msra.mxu0 %v80
  %99 = vmatprep.subr.bf16.mxu0 0
  %100 = vmatpush1.bf16.msra.mxu0 %v81
  %101 = vmatprep.subr.bf16.mxu0 0
  %102 = vmatpush1.bf16.msra.mxu0 %v82
  %103 = vmatprep.subr.bf16.mxu0 0
  %104 = vmatpush1.bf16.msra.mxu0 %v83
  %105 = vmatprep.subr.bf16.mxu0 0
  %106 = vmatpush1.bf16.msra.mxu0 %v84
  %107 = vmatprep.subr.bf16.mxu0 0
  %108 = vmatpush1.bf16.msra.mxu0 %v85
  %109 = vmatprep.subr.bf16.mxu0 0
  %110 = vmatpush1.bf16.msra.mxu0 %v86
  %111 = vmatprep.subr.bf16.mxu0 0
  %112 = vmatpush1.bf16.msra.mxu0 0
  %113 = vmatprep.subr.bf16.mxu0 0
  %114 = vmatpush1.bf16.msra.mxu0 0
  %115 = vmatprep.subr.bf16.mxu0 0
  %116 = vmatpush1.bf16.msra.mxu0 0
  %117 = vmatprep.subr.bf16.mxu0 0
  %118 = vmatpush1.bf16.msra.mxu0 0
  %119 = vmatprep.subr.bf16.mxu0 0
  %120 = vmatpush1.bf16.msra.mxu0 0
  %121 = vmatprep.subr.bf16.mxu0 0
  %122 = vmatpush1.bf16.msra.mxu0 0
  %123 = vmatprep.subr.bf16.mxu0 0
  %124 = vmatpush1.bf16.msra.mxu0 0
  %125 = vmatprep.subr.bf16.mxu0 0
  %126 = vmatpush1.bf16.msra.mxu0 0
  %127 = vmatprep.mubr.bf16.mxu0 0
  %128 = vmatmul.mubr.bf16.gmra.mrb[0].mxu0 %v45
  %v129 = vpop.f32.mrb[0].mxu0
  %v130 = vadd.f32 0.0, %v129
  %v131 = vpop.f32.mrb[0].mxu0
  %v132 = vpop.f32.mrb[0].mxu0
  %v133 = vadd.f32 0.0, %v132
  %v134 = vpop.f32.mrb[0].mxu0
  %135 = vdwg.mxu0
  %v136 = vadd.f32 %v21, %v130
  %v137 = vadd.f32 %v22, %v133
  %138 = vst [vmem:[#allocation2] sm:$0xff] %v136
  %139 = vst [vmem:[#allocation2 + $0x8] sm:$0xff] %v137
  // Predicated region
  $region18: #{_lambda_.49} parent=0 // pred_check
    %p140 = pneg %p15
  $region19: #{_lambda_.49} parent=0 // pred_check_branch
    %142 = sbr.rel (%p140) target = $region21
  $region20: #{_lambda_.49} parent=0 // pred_region
    %v143 = vld [vmem:[#allocation2] sm:$0xff]
    %v144 = vld [vmem:[#allocation2 + $0x8] sm:$0xff]
    %v145 = vld [vmem:[%s2] sm:$0x1]
    %v147 = vlaneseq
    %v148 = vshrl.u32 %v147, 7
    %v149 = vsub.s32 0, %v148
    %v150 = vrot.slane %v145, %v149
    %v152 = vadd.f32 %v143, %v150
    %v153 = vadd.f32 %v144, %v150
    %v154 = vpack.c.bf16 %v153, %v152
    %v156 = vunpack.c.l.b16 %v154
    %v157 = vunpack.c.h.b16 %v154
    %v158 = vpack.c.b16 %v156, %v156
    %v159 = vpack.c.b16 %v157, %v157
    %162 = vst [vmem:[%s3] sm:$0xf] %v158
    %163 = vst [vmem:[%s3 + $0x4] sm:$0xf] %v159
  $region21: #{_lambda_.49} parent=0 // pred_fallthru
    _
  // Predicated region
  $region22: #{_lambda_.49} parent=0 // pred_check
    _
  $region23: #{_lambda_.49} parent=0 // pred_check_branch
    %165 = sbr.rel (0) target = $region25
  $region24: #{_lambda_.49} parent=0 // pred_region
    _
  $region25: #{_lambda_.49} parent=0 // pred_fallthru
    _
  // Predicated region
  $region26: #{_lambda_.49} parent=0 // pred_check
    _
  $region27: #{_lambda_.49} parent=0 // pred_check_branch
    %167 = sbr.rel (0) target = $region29
  $region28: #{_lambda_.49} parent=0 // pred_region
    _
  $region29: #{_lambda_.49} parent=0 // pred_fallthru
    _

// kernel: _lambda_.53
$region0: #{_lambda_.53}
  #allocation0 [shape = 'u32[]', space=smem, size = 0x4, offset = 0x4, fixed_abs, tag = 'smem constant byte address 0x4 - core index']
  #allocation1 [shape = 'u32[144,128]{1,0:T(1,128)}', space=vmem, size = 0x12000, scoped, tag = 'internal scratch']
  %s0 = inlined_call_operand.vmem [shape: bf16[64,64], index: 0, kind: input, shape index: {}]
  %s1 = inlined_call_operand.vmem [shape: f32[1,64], index: 1, kind: input, shape index: {}]
  %s2 = inlined_call_operand.vmem [shape: f32[1,64], index: 2, kind: input, shape index: {}]
  %s3 = inlined_call_operand.vmem [shape: bf16[64,256], index: 3, kind: input, shape index: {}]
  %s4 = inlined_call_operand.vmem [shape: f32[1,256], index: 4, kind: input, shape index: {}]
  %s5 = inlined_call_operand.vmem [shape: bf16[64,256], index: 5, kind: output, shape index: {}]
  %s6 = sld [smem:[#allocation0]]
  $region30: #{_lambda_.53} parent=0
    _
  %s8 = ssub.s32 1, %s6
  %s9 = scalar_select 0, %s8, %s6
  // Predicated region
  $region2: #{_lambda_.53} parent=0 // pred_check
    _
  $region3: #{_lambda_.53} parent=0 // pred_check_branch
    %11 = sbr.rel (0) target = $region5
  $region4: #{_lambda_.53} parent=0 // pred_region
    _
  $region5: #{_lambda_.53} parent=0 // pred_fallthru
    _
  // Predicated region
  $region6: #{_lambda_.53} parent=0 // pred_check
    _
  $region7: #{_lambda_.53} parent=0 // pred_check_branch
    %13 = sbr.rel (0) target = $region9
  $region8: #{_lambda_.53} parent=0 // pred_region
    _
  $region9: #{_lambda_.53} parent=0 // pred_fallthru
    _
  // Predicated region
  $region10: #{_lambda_.53} parent=0 // pred_check
    _
  $region11: #{_lambda_.53} parent=0 // pred_check_branch
    %15 = sbr.rel (0) target = $region13
  $region12: #{_lambda_.53} parent=0 // pred_region
    _
  $region13: #{_lambda_.53} parent=0 // pred_fallthru
    _
  // Predicated region
  $region14: #{_lambda_.53} parent=0 // pred_check
    _
  $region15: #{_lambda_.53} parent=0 // pred_check_branch
    %17 = sbr.rel (0) target = $region17
  $region16: #{_lambda_.53} parent=0 // pred_region
    _
  $region17: #{_lambda_.53} parent=0 // pred_fallthru
    _
  // Predicated region
  $region18: #{_lambda_.53} parent=0 // pred_check
    _
  $region19: #{_lambda_.53} parent=0 // pred_check_branch
    %19 = sbr.rel (0) target = $region21
  $region20: #{_lambda_.53} parent=0 // pred_region
    _
  $region21: #{_lambda_.53} parent=0 // pred_fallthru
    _
  %v21 = vld [vmem:[%s0] sm:$0xf]
  %v22 = vld [vmem:[%s0 + $0x4] sm:$0xf]
  %v23 = vld [vmem:[%s0 + $0x8] sm:$0xf]
  %v24 = vld [vmem:[%s0 + $0xc] sm:$0xf]
  %v25 = vld [vmem:[%s0 + $0x10] sm:$0xf]
  %v26 = vld [vmem:[%s0 + $0x14] sm:$0xf]
  %v27 = vld [vmem:[%s0 + $0x18] sm:$0xf]
  %v28 = vld [vmem:[%s0 + $0x1c] sm:$0xf]
  %v29 = vunpack.c.l.bf16 %v21
  %v30 = vunpack.c.l.bf16 %v22
  %v31 = vunpack.c.l.bf16 %v23
  %v32 = vunpack.c.l.bf16 %v24
  %v33 = vunpack.c.l.bf16 %v25
  %v34 = vunpack.c.l.bf16 %v26
  %v35 = vunpack.c.l.bf16 %v27
  %v36 = vunpack.c.l.bf16 %v28
  %vm37 = vcmask 523264
  %v38 = vsel %vm37, %v29, 0.0
  %39 = vadd.xlane.f32.xlu0 %v38
  %v40 = vpop.xlane.xlu0 %39
  %v41 = vsel %vm37, %v30, 0.0
  %42 = vadd.xlane.f32.xlu0 %v41
  %v43 = vpop.xlane.xlu0 %42
  %v44 = vsel %vm37, %v31, 0.0
  %45 = vadd.xlane.f32.xlu0 %v44
  %v46 = vpop.xlane.xlu0 %45
  %v47 = vsel %vm37, %v32, 0.0
  %48 = vadd.xlane.f32.xlu0 %v47
  %v49 = vpop.xlane.xlu0 %48
  %v50 = vsel %vm37, %v33, 0.0
  %51 = vadd.xlane.f32.xlu0 %v50
  %v52 = vpop.xlane.xlu0 %51
  %v53 = vsel %vm37, %v34, 0.0
  %54 = vadd.xlane.f32.xlu0 %v53
  %v55 = vpop.xlane.xlu0 %54
  %v56 = vsel %vm37, %v35, 0.0
  %57 = vadd.xlane.f32.xlu0 %v56
  %v58 = vpop.xlane.xlu0 %57
  %v59 = vsel %vm37, %v36, 0.0
  %60 = vadd.xlane.f32.xlu0 %v59
  %v61 = vpop.xlane.xlu0 %60
  %v62 = vrcp.pop 64.0
  %v63 = vmul.f32 %v40, %v62
  %v64 = vmul.f32 %v43, %v62
  %v65 = vmul.f32 %v46, %v62
  %v66 = vmul.f32 %v49, %v62
  %v67 = vmul.f32 %v52, %v62
  %v68 = vmul.f32 %v55, %v62
  %v69 = vmul.f32 %v58, %v62
  %v70 = vmul.f32 %v61, %v62
  %v71 = vsub.f32 %v29, %v63
  %v72 = vsub.f32 %v30, %v64
  %v73 = vsub.f32 %v31, %v65
  %v74 = vsub.f32 %v32, %v66
  %v75 = vsub.f32 %v33, %v67
  %v76 = vsub.f32 %v34, %v68
  %v77 = vsub.f32 %v35, %v69
  %v78 = vsub.f32 %v36, %v70
  %v79 = vmul.f32 %v71, %v71
  %v80 = vmul.f32 %v72, %v72
  %v81 = vmul.f32 %v73, %v73
  %v82 = vmul.f32 %v74, %v74
  %v83 = vmul.f32 %v75, %v75
  %v84 = vmul.f32 %v76, %v76
  %v85 = vmul.f32 %v77, %v77
  %v86 = vmul.f32 %v78, %v78
  %v87 = vsel %vm37, %v79, 0.0
  %88 = vadd.xlane.f32.xlu0 %v87
  %v89 = vpop.xlane.xlu0 %88
  %v90 = vsel %vm37, %v80, 0.0
  %91 = vadd.xlane.f32.xlu0 %v90
  %v92 = vpop.xlane.xlu0 %91
  %v93 = vsel %vm37, %v81, 0.0
  %94 = vadd.xlane.f32.xlu0 %v93
  %v95 = vpop.xlane.xlu0 %94
  %v96 = vsel %vm37, %v82, 0.0
  %97 = vadd.xlane.f32.xlu0 %v96
  %v98 = vpop.xlane.xlu0 %97
  %v99 = vsel %vm37, %v83, 0.0
  %100 = vadd.xlane.f32.xlu0 %v99
  %v101 = vpop.xlane.xlu0 %100
  %v102 = vsel %vm37, %v84, 0.0
  %103 = vadd.xlane.f32.xlu0 %v102
  %v104 = vpop.xlane.xlu0 %103
  %v105 = vsel %vm37, %v85, 0.0
  %106 = vadd.xlane.f32.xlu0 %v105
  %v107 = vpop.xlane.xlu0 %106
  %v108 = vsel %vm37, %v86, 0.0
  %109 = vadd.xlane.f32.xlu0 %v108
  %v110 = vpop.xlane.xlu0 %109
  %v111 = vmul.f32 %v89, %v62
  %v112 = vmul.f32 %v92, %v62
  %v113 = vmul.f32 %v95, %v62
  %v114 = vmul.f32 %v98, %v62
  %v115 = vmul.f32 %v101, %v62
  %v116 = vmul.f32 %v104, %v62
  %v117 = vmul.f32 %v107, %v62
  %v118 = vmul.f32 %v110, %v62
  %v119 = vadd.f32 %v111, 1e-05
  %v120 = vadd.f32 %v112, 1e-05
  %v121 = vadd.f32 %v113, 1e-05
  %v122 = vadd.f32 %v114, 1e-05
  %v123 = vadd.f32 %v115, 1e-05
  %v124 = vadd.f32 %v116, 1e-05
  %v125 = vadd.f32 %v117, 1e-05
  %v126 = vadd.f32 %v118, 1e-05
  %v127 = vrsqrt.pop %v119
  %v128 = vrsqrt.pop %v120
  %v129 = vrsqrt.pop %v121
  %v130 = vrsqrt.pop %v122
  %v131 = vrsqrt.pop %v123
  %v132 = vrsqrt.pop %v124
  %v133 = vrsqrt.pop %v125
  %v134 = vrsqrt.pop %v126
  %v135 = vmul.f32 %v71, %v127
  %v136 = vmul.f32 %v72, %v128
  %v137 = vmul.f32 %v73, %v129
  %v138 = vmul.f32 %v74, %v130
  %v139 = vmul.f32 %v75, %v131
  %v140 = vmul.f32 %v76, %v132
  %v141 = vmul.f32 %v77, %v133
  %v142 = vmul.f32 %v78, %v134
  %v143 = vld [vmem:[%s1] sm:$0x1]
  %v145 = vlaneseq
  %v146 = vshrl.u32 %v145, 7
  %v147 = vsub.s32 0, %v146
  %v148 = vrot.slane %v143, %v147
  %v150 = vmul.f32 %v135, %v148
  %v151 = vmul.f32 %v136, %v148
  %v152 = vmul.f32 %v137, %v148
  %v153 = vmul.f32 %v138, %v148
  %v154 = vmul.f32 %v139, %v148
  %v155 = vmul.f32 %v140, %v148
  %v156 = vmul.f32 %v141, %v148
  %v157 = vmul.f32 %v142, %v148
  %v158 = vld [vmem:[%s2] sm:$0x1]
  %v160 = vlaneseq
  %v161 = vshrl.u32 %v160, 7
  %v162 = vsub.s32 0, %v161
  %v163 = vrot.slane %v158, %v162
  %v165 = vadd.f32 %v150, %v163
  %v166 = vadd.f32 %v151, %v163
  %v167 = vadd.f32 %v152, %v163
  %v168 = vadd.f32 %v153, %v163
  %v169 = vadd.f32 %v154, %v163
  %v170 = vadd.f32 %v155, %v163
  %v171 = vadd.f32 %v156, %v163
  %v172 = vadd.f32 %v157, %v163
  %v173 = vpack.c.bf16 %v166, %v165
  %v174 = vpack.c.bf16 %v168, %v167
  %v175 = vpack.c.bf16 %v170, %v169
  %v176 = vpack.c.bf16 %v172, %v171
  %v177 = vld [vmem:[%s3] sm:$0xff]
  %v178 = vld [vmem:[%s3 + $0x8] sm:$0xff]
  %v179 = vld [vmem:[%s3 + $0x10] sm:$0xff]
  %v180 = vld [vmem:[%s3 + $0x18] sm:$0xff]
  %v181 = vld [vmem:[%s3 + $0x20] sm:$0xff]
  %v182 = vld [vmem:[%s3 + $0x28] sm:$0xff]
  %v183 = vld [vmem:[%s3 + $0x30] sm:$0xff]
  %v184 = vld [vmem:[%s3 + $0x38] sm:$0xff]
  %v185 = vld [vmem:[%s4] sm:$0x3]
  %v187 = vlaneseq
  %v188 = vshrl.u32 %v187, 7
  %v189 = vsub.s32 0, %v188
  %v190 = vrot.slane %v185, %v189
  %v191 = vlaneseq
  %v192 = vshrl.u32 %v191, 7
  %v193 = vsub.s32 1, %v192
  %v194 = vrot.slane %v185, %v193
  %v205 = vunpack.c.l.b16 %v177
  %v206 = vunpack.c.h.b16 %v177
  %v207 = vunpack.c.l.b16 %v178
  %v208 = vunpack.c.h.b16 %v178
  %v209 = vunpack.c.l.b16 %v179
  %v210 = vunpack.c.h.b16 %v179
  %v211 = vunpack.c.l.b16 %v180
  %v212 = vunpack.c.h.b16 %v180
  %v213 = vunpack.c.l.b16 %v181
  %v214 = vunpack.c.h.b16 %v181
  %v215 = vunpack.c.l.b16 %v182
  %v216 = vunpack.c.h.b16 %v182
  %v217 = vunpack.c.l.b16 %v183
  %v218 = vunpack.c.h.b16 %v183
  %v219 = vunpack.c.l.b16 %v184
  %v220 = vunpack.c.h.b16 %v184
  %v221 = vpack.c.b16 %v207, %v205
  %v222 = vpack.c.b16 %v208, %v206
  %v223 = vpack.c.b16 %v211, %v209
  %v224 = vpack.c.b16 %v212, %v210
  %v225 = vpack.c.b16 %v215, %v213
  %v226 = vpack.c.b16 %v216, %v214
  %v227 = vpack.c.b16 %v219, %v217
  %v228 = vpack.c.b16 %v220, %v218
  %v238 = vsel %vm37, %v173, 0
  %v241 = vsel %vm37, %v174, 0
  %v244 = vsel %vm37, %v175, 0
  %v247 = vsel %vm37, %v176, 0
  %249 = vmatprep.subr.bf16.mxu0 %v222
  %250 = vmatpush1.bf16.msra.mxu0 %v221
  %251 = vmatprep.subr.bf16.mxu0 %v224
  %252 = vmatpush1.bf16.msra.mxu0 %v223
  %253 = vmatprep.subr.bf16.mxu0 %v226
  %254 = vmatpush1.bf16.msra.mxu0 %v225
  %255 = vmatprep.subr.bf16.mxu0 %v228
  %256 = vmatpush1.bf16.msra.mxu0 %v227
  %257 = vmatprep.subr.bf16.mxu0 0
  %258 = vmatpush1.bf16.msra.mxu0 0
  %259 = vmatprep.subr.bf16.mxu0 0
  %260 = vmatpush1.bf16.msra.mxu0 0
  %261 = vmatprep.subr.bf16.mxu0 0
  %262 = vmatpush1.bf16.msra.mxu0 0
  %263 = vmatprep.subr.bf16.mxu0 0
  %264 = vmatpush1.bf16.msra.mxu0 0
  %265 = vmatprep.subr.bf16.mxu0 0
  %266 = vmatpush1.bf16.msra.mxu0 0
  %267 = vmatprep.subr.bf16.mxu0 0
  %268 = vmatpush1.bf16.msra.mxu0 0
  %269 = vmatprep.subr.bf16.mxu0 0
  %270 = vmatpush1.bf16.msra.mxu0 0
  %271 = vmatprep.subr.bf16.mxu0 0
  %272 = vmatpush1.bf16.msra.mxu0 0
  %273 = vmatprep.subr.bf16.mxu0 0
  %274 = vmatpush1.bf16.msra.mxu0 0
  %275 = vmatprep.subr.bf16.mxu0 0
  %276 = vmatpush1.bf16.msra.mxu0 0
  %277 = vmatprep.subr.bf16.mxu0 0
  %278 = vmatpush1.bf16.msra.mxu0 0
  %279 = vmatprep.subr.bf16.mxu0 0
  %280 = vmatpush1.bf16.msra.mxu0 0
  %281 = vmatprep.mubr.bf16.mxu0 0
  %282 = vmatmul.mubr.bf16.gmra.mrb[0].mxu0 %v238
  %v283 = vpop.f32.mrb[0].mxu0
  %v284 = vadd.f32 %v190, %v283
  %v285 = vpop.f32.mrb[0].mxu0
  %v286 = vadd.f32 %v194, %v285
  %v287 = vpop.f32.mrb[0].mxu0
  %v288 = vadd.f32 %v190, %v287
  %v289 = vpop.f32.mrb[0].mxu0
  %v290 = vadd.f32 %v194, %v289
  %291 = vmatprep.mubr.bf16.mxu0 0
  %292 = vmatmul.mubr.bf16.gmra.mrb[0].mxu0 %v241
  %v293 = vpop.f32.mrb[0].mxu0
  %v294 = vadd.f32 %v190, %v293
  %v295 = vpop.f32.mrb[0].mxu0
  %v296 = vadd.f32 %v194, %v295
  %v297 = vpop.f32.mrb[0].mxu0
  %v298 = vadd.f32 %v190, %v297
  %v299 = vpop.f32.mrb[0].mxu0
  %v300 = vadd.f32 %v194, %v299
  %301 = vmatprep.mubr.bf16.mxu0 0
  %302 = vmatmul.mubr.bf16.gmra.mrb[0].mxu0 %v244
  %v303 = vpop.f32.mrb[0].mxu0
  %v304 = vadd.f32 %v190, %v303
  %v305 = vpop.f32.mrb[0].mxu0
  %v306 = vadd.f32 %v194, %v305
  %v307 = vpop.f32.mrb[0].mxu0
  %v308 = vadd.f32 %v190, %v307
  %v309 = vpop.f32.mrb[0].mxu0
  %v310 = vadd.f32 %v194, %v309
  %311 = vmatprep.mubr.bf16.mxu0 0
  %312 = vmatmul.mubr.bf16.gmra.mrb[0].mxu0 %v247
  %v313 = vpop.f32.mrb[0].mxu0
  %v314 = vadd.f32 %v190, %v313
  %v315 = vpop.f32.mrb[0].mxu0
  %v316 = vadd.f32 %v194, %v315
  %v317 = vpop.f32.mrb[0].mxu0
  %v318 = vadd.f32 %v190, %v317
  %v319 = vpop.f32.mrb[0].mxu0
  %v320 = vadd.f32 %v194, %v319
  %321 = vdwg.mxu0
  %v322 = vmul.f32 %v284, 0.5
  %v323 = vmul.f32 %v286, 0.5
  %v324 = vmul.f32 %v288, 0.5
  %v325 = vmul.f32 %v290, 0.5
  %v326 = vmul.f32 %v294, 0.5
  %v327 = vmul.f32 %v296, 0.5
  %v328 = vmul.f32 %v298, 0.5
  %v329 = vmul.f32 %v300, 0.5
  %v330 = vmul.f32 %v304, 0.5
  %v331 = vmul.f32 %v306, 0.5
  %v332 = vmul.f32 %v308, 0.5
  %v333 = vmul.f32 %v310, 0.5
  %v334 = vmul.f32 %v314, 0.5
  %v335 = vmul.f32 %v316, 0.5
  %v336 = vmul.f32 %v318, 0.5
  %v337 = vmul.f32 %v320, 0.5
  %v338 = vmul.f32 %v284, 0.70710677
  %v339 = vmul.f32 %v286, 0.70710677
  %v340 = vmul.f32 %v288, 0.70710677
  %v341 = vmul.f32 %v290, 0.70710677
  %v342 = vmul.f32 %v294, 0.70710677
  %v343 = vmul.f32 %v296, 0.70710677
  %v344 = vmul.f32 %v298, 0.70710677
  %v345 = vmul.f32 %v300, 0.70710677
  %v346 = vmul.f32 %v304, 0.70710677
  %v347 = vmul.f32 %v306, 0.70710677
  %v348 = vmul.f32 %v308, 0.70710677
  %v349 = vmul.f32 %v310, 0.70710677
  %v350 = vmul.f32 %v314, 0.70710677
  %v351 = vmul.f32 %v316, 0.70710677
  %v352 = vmul.f32 %v318, 0.70710677
  %v353 = vmul.f32 %v320, 0.70710677
  %v354 = vand.u32 2147483647, %v338
  %v355 = vand.u32 2147483647, %v339
  %v356 = vand.u32 2147483647, %v340
  %v357 = vand.u32 2147483647, %v341
  %v358 = vand.u32 2147483647, %v342
  %v359 = vand.u32 2147483647, %v343
  %v360 = vand.u32 2147483647, %v344
  %v361 = vand.u32 2147483647, %v345
  %v362 = vand.u32 2147483647, %v346
  %v363 = vand.u32 2147483647, %v347
  %v364 = vand.u32 2147483647, %v348
  %v365 = vand.u32 2147483647, %v349
  %v366 = vand.u32 2147483647, %v350
  %v367 = vand.u32 2147483647, %v351
  %v368 = vand.u32 2147483647, %v352
  %v369 = vand.u32 2147483647, %v353
  %v370 = vmul.f32 %v354, 0.3275911
  %v371 = vmul.f32 %v355, 0.3275911
  %v372 = vmul.f32 %v356, 0.3275911
  %v373 = vmul.f32 %v357, 0.3275911
  %v374 = vmul.f32 %v358, 0.3275911
  %v375 = vmul.f32 %v359, 0.3275911
  %v376 = vmul.f32 %v360, 0.3275911
  %v377 = vmul.f32 %v361, 0.3275911
  %v378 = vmul.f32 %v362, 0.3275911
  %v379 = vmul.f32 %v363, 0.3275911
  %v380 = vmul.f32 %v364, 0.3275911
  %v381 = vmul.f32 %v365, 0.3275911
  %v382 = vmul.f32 %v366, 0.3275911
  %v383 = vmul.f32 %v367, 0.3275911
  %v384 = vmul.f32 %v368, 0.3275911
  %v385 = vmul.f32 %v369, 0.3275911
  %v386 = vadd.f32 %v370, 1.0
  %v387 = vadd.f32 %v371, 1.0
  %v388 = vadd.f32 %v372, 1.0
  %v389 = vadd.f32 %v373, 1.0
  %v390 = vadd.f32 %v374, 1.0
  %v391 = vadd.f32 %v375, 1.0
  %v392 = vadd.f32 %v376, 1.0
  %v393 = vadd.f32 %v377, 1.0
  %v394 = vadd.f32 %v378, 1.0
  %v395 = vadd.f32 %v379, 1.0
  %v396 = vadd.f32 %v380, 1.0
  %v397 = vadd.f32 %v381, 1.0
  %v398 = vadd.f32 %v382, 1.0
  %v399 = vadd.f32 %v383, 1.0
  %v400 = vadd.f32 %v384, 1.0
  %v401 = vadd.f32 %v385, 1.0
  %v402 = vrcp.pop %v386
  %v403 = vmul.f32 1.0, %v402
  %v404 = vrcp.pop %v387
  %v405 = vmul.f32 1.0, %v404
  %v406 = vrcp.pop %v388
  %v407 = vmul.f32 1.0, %v406
  %v408 = vrcp.pop %v389
  %v409 = vmul.f32 1.0, %v408
  %v410 = vrcp.pop %v390
  %v411 = vmul.f32 1.0, %v410
  %v412 = vrcp.pop %v391
  %v413 = vmul.f32 1.0, %v412
  %v414 = vrcp.pop %v392
  %v415 = vmul.f32 1.0, %v414
  %v416 = vrcp.pop %v393
  %v417 = vmul.f32 1.0, %v416
  %v418 = vrcp.pop %v394
  %v419 = vmul.f32 1.0, %v418
  %v420 = vrcp.pop %v395
  %v421 = vmul.f32 1.0, %v420
  %v422 = vrcp.pop %v396
  %v423 = vmul.f32 1.0, %v422
  %v424 = vrcp.pop %v397
  %v425 = vmul.f32 1.0, %v424
  %v426 = vrcp.pop %v398
  %v427 = vmul.f32 1.0, %v426
  %v428 = vrcp.pop %v399
  %v429 = vmul.f32 1.0, %v428
  %v430 = vrcp.pop %v400
  %v431 = vmul.f32 1.0, %v430
  %v432 = vrcp.pop %v401
  %v433 = vmul.f32 1.0, %v432
  %v434 = vmul.f32 %v403, 1.0614054
  %v435 = vmul.f32 %v405, 1.0614054
  %v436 = vmul.f32 %v407, 1.0614054
  %v437 = vmul.f32 %v409, 1.0614054
  %v438 = vmul.f32 %v411, 1.0614054
  %v439 = vmul.f32 %v413, 1.0614054
  %v440 = vmul.f32 %v415, 1.0614054
  %v441 = vmul.f32 %v417, 1.0614054
  %v442 = vmul.f32 %v419, 1.0614054
  %v443 = vmul.f32 %v421, 1.0614054
  %v444 = vmul.f32 %v423, 1.0614054
  %v445 = vmul.f32 %v425, 1.0614054
  %v446 = vmul.f32 %v427, 1.0614054
  %v447 = vmul.f32 %v429, 1.0614054
  %v448 = vmul.f32 %v431, 1.0614054
  %v449 = vmul.f32 %v433, 1.0614054
  %v450 = vadd.f32 %v434, -1.4531521
  %v451 = vadd.f32 %v435, -1.4531521
  %v452 = vadd.f32 %v436, -1.4531521
  %v453 = vadd.f32 %v437, -1.4531521
  %v454 = vadd.f32 %v438, -1.4531521
  %v455 = vadd.f32 %v439, -1.4531521
  %v456 = vadd.f32 %v440, -1.4531521
  %v457 = vadd.f32 %v441, -1.4531521
  %v458 = vadd.f32 %v442, -1.4531521
  %v459 = vadd.f32 %v443, -1.4531521
  %v460 = vadd.f32 %v444, -1.4531521
  %v461 = vadd.f32 %v445, -1.4531521
  %v462 = vadd.f32 %v446, -1.4531521
  %v463 = vadd.f32 %v447, -1.4531521
  %v464 = vadd.f32 %v448, -1.4531521
  %v465 = vadd.f32 %v449, -1.4531521
  %v466 = vmul.f32 %v450, %v403
  %v467 = vmul.f32 %v451, %v405
  %v468 = vmul.f32 %v452, %v407
  %v469 = vmul.f32 %v453, %v409
  %v470 = vmul.f32 %v454, %v411
  %v471 = vmul.f32 %v455, %v413
  %v472 = vmul.f32 %v456, %v415
  %v473 = vmul.f32 %v457, %v417
  %v474 = vmul.f32 %v458, %v419
  %v475 = vmul.f32 %v459, %v421
  %v476 = vmul.f32 %v460, %v423
  %v477 = vmul.f32 %v461, %v425
  %v478 = vmul.f32 %v462, %v427
  %v479 = vmul.f32 %v463, %v429
  %v480 = vmul.f32 %v464, %v431
  %v481 = vmul.f32 %v465, %v433
  %v482 = vadd.f32 %v466, 1.4214138
  %v483 = vadd.f32 %v467, 1.4214138
  %v484 = vadd.f32 %v468, 1.4214138
  %v485 = vadd.f32 %v469, 1.4214138
  %v486 = vadd.f32 %v470, 1.4214138
  %v487 = vadd.f32 %v471, 1.4214138
  %v488 = vadd.f32 %v472, 1.4214138
  %v489 = vadd.f32 %v473, 1.4214138
  %v490 = vadd.f32 %v474, 1.4214138
  %v491 = vadd.f32 %v475, 1.4214138
  %v492 = vadd.f32 %v476, 1.4214138
  %v493 = vadd.f32 %v477, 1.4214138
  %v494 = vadd.f32 %v478, 1.4214138
  %v495 = vadd.f32 %v479, 1.4214138
  %v496 = vadd.f32 %v480, 1.4214138
  %v497 = vadd.f32 %v481, 1.4214138
  %v498 = vmul.f32 %v482, %v403
  %v499 = vmul.f32 %v483, %v405
  %v500 = vmul.f32 %v484, %v407
  %v501 = vmul.f32 %v485, %v409
  %v502 = vmul.f32 %v486, %v411
  %v503 = vmul.f32 %v487, %v413
  %v504 = vmul.f32 %v488, %v415
  %v505 = vmul.f32 %v489, %v417
  %v506 = vmul.f32 %v490, %v419
  %v507 = vmul.f32 %v491, %v421
  %v508 = vmul.f32 %v492, %v423
  %v509 = vmul.f32 %v493, %v425
  %v510 = vmul.f32 %v494, %v427
  %v511 = vmul.f32 %v495, %v429
  %v512 = vmul.f32 %v496, %v431
  %v513 = vmul.f32 %v497, %v433
  %v514 = vadd.f32 %v498, -0.28449672
  %v515 = vadd.f32 %v499, -0.28449672
  %v516 = vadd.f32 %v500, -0.28449672
  %v517 = vadd.f32 %v501, -0.28449672
  %v518 = vadd.f32 %v502, -0.28449672
  %v519 = vadd.f32 %v503, -0.28449672
  %v520 = vadd.f32 %v504, -0.28449672
  %v521 = vadd.f32 %v505, -0.28449672
  %v522 = vadd.f32 %v506, -0.28449672
  %v523 = vadd.f32 %v507, -0.28449672
  %v524 = vadd.f32 %v508, -0.28449672
  %v525 = vadd.f32 %v509, -0.28449672
  %v526 = vadd.f32 %v510, -0.28449672
  %v527 = vadd.f32 %v511, -0.28449672
  %v528 = vadd.f32 %v512, -0.28449672
  %v529 = vadd.f32 %v513, -0.28449672
  %v530 = vmul.f32 %v514, %v403
  %v531 = vmul.f32 %v515, %v405
  %v532 = vmul.f32 %v516, %v407
  %v533 = vmul.f32 %v517, %v409
  %v534 = vmul.f32 %v518, %v411
  %v535 = vmul.f32 %v519, %v413
  %v536 = vmul.f32 %v520, %v415
  %v537 = vmul.f32 %v521, %v417
  %v538 = vmul.f32 %v522, %v419
  %v539 = vmul.f32 %v523, %v421
  %v540 = vmul.f32 %v524, %v423
  %v541 = vmul.f32 %v525, %v425
  %v542 = vmul.f32 %v526, %v427
  %v543 = vmul.f32 %v527, %v429
  %v544 = vmul.f32 %v528, %v431
  %v545 = vmul.f32 %v529, %v433
  %v546 = vadd.f32 %v530, 0.2548296
  %v547 = vadd.f32 %v531, 0.2548296
  %v548 = vadd.f32 %v532, 0.2548296
  %v549 = vadd.f32 %v533, 0.2548296
  %v550 = vadd.f32 %v534, 0.2548296
  %v551 = vadd.f32 %v535, 0.2548296
  %v552 = vadd.f32 %v536, 0.2548296
  %v553 = vadd.f32 %v537, 0.2548296
  %v554 = vadd.f32 %v538, 0.2548296
  %v555 = vadd.f32 %v539, 0.2548296
  %v556 = vadd.f32 %v540, 0.2548296
  %v557 = vadd.f32 %v541, 0.2548296
  %v558 = vadd.f32 %v542, 0.2548296
  %v559 = vadd.f32 %v543, 0.2548296
  %v560 = vadd.f32 %v544, 0.2548296
  %v561 = vadd.f32 %v545, 0.2548296
  %v562 = vmul.f32 %v546, %v403
  %v563 = vmul.f32 %v547, %v405
  %v564 = vmul.f32 %v548, %v407
  %v565 = vmul.f32 %v549, %v409
  %v566 = vmul.f32 %v550, %v411
  %v567 = vmul.f32 %v551, %v413
  %v568 = vmul.f32 %v552, %v415
  %v569 = vmul.f32 %v553, %v417
  %v570 = vmul.f32 %v554, %v419
  %v571 = vmul.f32 %v555, %v421
  %v572 = vmul.f32 %v556, %v423
  %v573 = vmul.f32 %v557, %v425
  %v574 = vmul.f32 %v558, %v427
  %v575 = vmul.f32 %v559, %v429
  %v576 = vmul.f32 %v560, %v431
  %v577 = vmul.f32 %v561, %v433
  %v578 = vsub.f32 0.0, %v354
  %v579 = vsub.f32 0.0, %v355
  %v580 = vsub.f32 0.0, %v356
  %v581 = vsub.f32 0.0, %v357
  %v582 = vsub.f32 0.0, %v358
  %v583 = vsub.f32 0.0, %v359
  %v584 = vsub.f32 0.0, %v360
  %v585 = vsub.f32 0.0, %v361
  %v586 = vsub.f32 0.0, %v362
  %v587 = vsub.f32 0.0, %v363
  %v588 = vsub.f32 0.0, %v364
  %v589 = vsub.f32 0.0, %v365
  %v590 = vsub.f32 0.0, %v366
  %v591 = vsub.f32 0.0, %v367
  %v592 = vsub.f32 0.0, %v368
  %v593 = vsub.f32 0.0, %v369
  %v594 = vmul.f32 %v578, %v354
  %v595 = vmul.f32 %v579, %v355
  %v596 = vmul.f32 %v580, %v356
  %v597 = vmul.f32 %v581, %v357
  %v598 = vmul.f32 %v582, %v358
  %v599 = vmul.f32 %v583, %v359
  %v600 = vmul.f32 %v584, %v360
  %v601 = vmul.f32 %v585, %v361
  %v602 = vmul.f32 %v586, %v362
  %v603 = vmul.f32 %v587, %v363
  %v604 = vmul.f32 %v588, %v364
  %v605 = vmul.f32 %v589, %v365
  %v606 = vmul.f32 %v590, %v366
  %v607 = vmul.f32 %v591, %v367
  %v608 = vmul.f32 %v592, %v368
  %v609 = vmul.f32 %v593, %v369
  %v610 = vmul.f32 %v594, 1.442695
  %v611 = vpow.pop %v610
  %v612 = vmul.f32 %v595, 1.442695
  %v613 = vpow.pop %v612
  %v614 = vmul.f32 %v596, 1.442695
  %v615 = vpow.pop %v614
  %v616 = vmul.f32 %v597, 1.442695
  %v617 = vpow.pop %v616
  %v618 = vmul.f32 %v598, 1.442695
  %v619 = vpow.pop %v618
  %v620 = vmul.f32 %v599, 1.442695
  %v621 = vpow.pop %v620
  %v622 = vmul.f32 %v600, 1.442695
  %v623 = vpow.pop %v622
  %v624 = vmul.f32 %v601, 1.442695
  %v625 = vpow.pop %v624
  %v626 = vmul.f32 %v602, 1.442695
  %v627 = vpow.pop %v626
  %v628 = vmul.f32 %v603, 1.442695
  %v629 = vpow.pop %v628
  %v630 = vmul.f32 %v604, 1.442695
  %v631 = vpow.pop %v630
  %v632 = vmul.f32 %v605, 1.442695
  %v633 = vpow.pop %v632
  %v634 = vmul.f32 %v606, 1.442695
  %v635 = vpow.pop %v634
  %v636 = vmul.f32 %v607, 1.442695
  %v637 = vpow.pop %v636
  %v638 = vmul.f32 %v608, 1.442695
  %v639 = vpow.pop %v638
  %v640 = vmul.f32 %v609, 1.442695
  %v641 = vpow.pop %v640
  %v642 = vmul.f32 %v562, %v611
  %v643 = vmul.f32 %v563, %v613
  %v644 = vmul.f32 %v564, %v615
  %v645 = vmul.f32 %v565, %v617
  %v646 = vmul.f32 %v566, %v619
  %v647 = vmul.f32 %v567, %v621
  %v648 = vmul.f32 %v568, %v623
  %v649 = vmul.f32 %v569, %v625
  %v650 = vmul.f32 %v570, %v627
  %v651 = vmul.f32 %v571, %v629
  %v652 = vmul.f32 %v572, %v631
  %v653 = vmul.f32 %v573, %v633
  %v654 = vmul.f32 %v574, %v635
  %v655 = vmul.f32 %v575, %v637
  %v656 = vmul.f32 %v576, %v639
  %v657 = vmul.f32 %v577, %v641
  %v658 = vsub.f32 1.0, %v642
  %v659 = vsub.f32 1.0, %v643
  %v660 = vsub.f32 1.0, %v644
  %v661 = vsub.f32 1.0, %v645
  %v662 = vsub.f32 1.0, %v646
  %v663 = vsub.f32 1.0, %v647
  %v664 = vsub.f32 1.0, %v648
  %v665 = vsub.f32 1.0, %v649
  %v666 = vsub.f32 1.0, %v650
  %v667 = vsub.f32 1.0, %v651
  %v668 = vsub.f32 1.0, %v652
  %v669 = vsub.f32 1.0, %v653
  %v670 = vsub.f32 1.0, %v654
  %v671 = vsub.f32 1.0, %v655
  %v672 = vsub.f32 1.0, %v656
  %v673 = vsub.f32 1.0, %v657
  %vm674 = vcmp.lt.f32.partialorder %v338, 0.0
  %vm675 = vcmp.lt.f32.partialorder %v339, 0.0
  %vm676 = vcmp.lt.f32.partialorder %v340, 0.0
  %vm677 = vcmp.lt.f32.partialorder %v341, 0.0
  %vm678 = vcmp.lt.f32.partialorder %v342, 0.0
  %vm679 = vcmp.lt.f32.partialorder %v343, 0.0
  %vm680 = vcmp.lt.f32.partialorder %v344, 0.0
  %vm681 = vcmp.lt.f32.partialorder %v345, 0.0
  %vm682 = vcmp.lt.f32.partialorder %v346, 0.0
  %vm683 = vcmp.lt.f32.partialorder %v347, 0.0
  %vm684 = vcmp.lt.f32.partialorder %v348, 0.0
  %vm685 = vcmp.lt.f32.partialorder %v349, 0.0
  %vm686 = vcmp.lt.f32.partialorder %v350, 0.0
  %vm687 = vcmp.lt.f32.partialorder %v351, 0.0
  %vm688 = vcmp.lt.f32.partialorder %v352, 0.0
  %vm689 = vcmp.lt.f32.partialorder %v353, 0.0
  %v690 = vsub.f32 0.0, %v658
  %v691 = vsub.f32 0.0, %v659
  %v692 = vsub.f32 0.0, %v660
  %v693 = vsub.f32 0.0, %v661
  %v694 = vsub.f32 0.0, %v662
  %v695 = vsub.f32 0.0, %v663
  %v696 = vsub.f32 0.0, %v664
  %v697 = vsub.f32 0.0, %v665
  %v698 = vsub.f32 0.0, %v666
  %v699 = vsub.f32 0.0, %v667
  %v700 = vsub.f32 0.0, %v668
  %v701 = vsub.f32 0.0, %v669
  %v702 = vsub.f32 0.0, %v670
  %v703 = vsub.f32 0.0, %v671
  %v704 = vsub.f32 0.0, %v672
  %v705 = vsub.f32 0.0, %v673
  %v706 = vsel %vm674, %v690, %v658
  %v707 = vsel %vm675, %v691, %v659
  %v708 = vsel %vm676, %v692, %v660
  %v709 = vsel %vm677, %v693, %v661
  %v710 = vsel %vm678, %v694, %v662
  %v711 = vsel %vm679, %v695, %v663
  %v712 = vsel %vm680, %v696, %v664
  %v713 = vsel %vm681, %v697, %v665
  %v714 = vsel %vm682, %v698, %v666
  %v715 = vsel %vm683, %v699, %v667
  %v716 = vsel %vm684, %v700, %v668
  %v717 = vsel %vm685, %v701, %v669
  %v718 = vsel %vm686, %v702, %v670
  %v719 = vsel %vm687, %v703, %v671
  %v720 = vsel %vm688, %v704, %v672
  %v721 = vsel %vm689, %v705, %v673
  %v722 = vadd.f32 %v706, 1.0
  %v723 = vadd.f32 %v707, 1.0
  %v724 = vadd.f32 %v708, 1.0
  %v725 = vadd.f32 %v709, 1.0
  %v726 = vadd.f32 %v710, 1.0
  %v727 = vadd.f32 %v711, 1.0
  %v728 = vadd.f32 %v712, 1.0
  %v729 = vadd.f32 %v713, 1.0
  %v730 = vadd.f32 %v714, 1.0
  %v731 = vadd.f32 %v715, 1.0
  %v732 = vadd.f32 %v716, 1.0
  %v733 = vadd.f32 %v717, 1.0
  %v734 = vadd.f32 %v718, 1.0
  %v735 = vadd.f32 %v719, 1.0
  %v736 = vadd.f32 %v720, 1.0
  %v737 = vadd.f32 %v721, 1.0
  %v738 = vmul.f32 %v322, %v722
  %v739 = vmul.f32 %v323, %v723
  %v740 = vmul.f32 %v324, %v724
  %v741 = vmul.f32 %v325, %v725
  %v742 = vmul.f32 %v326, %v726
  %v743 = vmul.f32 %v327, %v727
  %v744 = vmul.f32 %v328, %v728
  %v745 = vmul.f32 %v329, %v729
  %v746 = vmul.f32 %v330, %v730
  %v747 = vmul.f32 %v331, %v731
  %v748 = vmul.f32 %v332, %v732
  %v749 = vmul.f32 %v333, %v733
  %v750 = vmul.f32 %v334, %v734
  %v751 = vmul.f32 %v335, %v735
  %v752 = vmul.f32 %v336, %v736
  %v753 = vmul.f32 %v337, %v737
  %v754 = vpack.c.bf16 %v740, %v738
  %v755 = vpack.c.bf16 %v741, %v739
  %v756 = vpack.c.bf16 %v744, %v742
  %v757 = vpack.c.bf16 %v745, %v743
  %v758 = vpack.c.bf16 %v748, %v746
  %v759 = vpack.c.bf16 %v749, %v747
  %v760 = vpack.c.bf16 %v752, %v750
  %v761 = vpack.c.bf16 %v753, %v751
  %v770 = vunpack.c.l.b16 %v754
  %v771 = vunpack.c.l.b16 %v755
  %v772 = vunpack.c.h.b16 %v754
  %v773 = vunpack.c.h.b16 %v755
  %v774 = vunpack.c.l.b16 %v756
  %v775 = vunpack.c.l.b16 %v757
  %v776 = vunpack.c.h.b16 %v756
  %v777 = vunpack.c.h.b16 %v757
  %v778 = vunpack.c.l.b16 %v758
  %v779 = vunpack.c.l.b16 %v759
  %v780 = vunpack.c.h.b16 %v758
  %v781 = vunpack.c.h.b16 %v759
  %v782 = vunpack.c.l.b16 %v760
  %v783 = vunpack.c.l.b16 %v761
  %v784 = vunpack.c.h.b16 %v760
  %v785 = vunpack.c.h.b16 %v761
  %v786 = vpack.c.b16 %v771, %v770
  %v787 = vpack.c.b16 %v773, %v772
  %v788 = vpack.c.b16 %v775, %v774
  %v789 = vpack.c.b16 %v777, %v776
  %v790 = vpack.c.b16 %v779, %v778
  %v791 = vpack.c.b16 %v781, %v780
  %v792 = vpack.c.b16 %v783, %v782
  %v793 = vpack.c.b16 %v785, %v784
  %802 = vst [vmem:[%s5] sm:$0xff] %v786
  %803 = vst [vmem:[%s5 + $0x8] sm:$0xff] %v787
  %804 = vst [vmem:[%s5 + $0x10] sm:$0xff] %v788
  %805 = vst [vmem:[%s5 + $0x18] sm:$0xff] %v789
  %806 = vst [vmem:[%s5 + $0x20] sm:$0xff] %v790
  %807 = vst [vmem:[%s5 + $0x28] sm:$0xff] %v791
  %808 = vst [vmem:[%s5 + $0x30] sm:$0xff] %v792
  %809 = vst [vmem:[%s5 + $0x38] sm:$0xff] %v793
  // Predicated region
  $region22: #{_lambda_.53} parent=0 // pred_check
    _
  $region23: #{_lambda_.53} parent=0 // pred_check_branch
    %811 = sbr.rel (0) target = $region25
  $region24: #{_lambda_.53} parent=0 // pred_region
    _
  $region25: #{_lambda_.53} parent=0 // pred_fallthru
    _
  // Predicated region
  $region26: #{_lambda_.53} parent=0 // pred_check
    _
  $region27: #{_lambda_.53} parent=0 // pred_check_branch
    %813 = sbr.rel (0) target = $region29
  $region28: #{_lambda_.53} parent=0 // pred_region
    _
  $region29: #{_lambda_.53} parent=0 // pred_fallthru
    _

// kernel: _lambda_.54
$region0: #{_lambda_.54}
  #allocation0 [shape = 'u32[]', space=smem, size = 0x4, offset = 0x4, fixed_abs, tag = 'smem constant byte address 0x4 - core index']
  #allocation1 [shape = 'u32[144,128]{1,0:T(1,128)}', space=vmem, size = 0x12000, scoped, tag = 'internal scratch']
  #allocation2 [shape = 'f32[64,128]{1,0:T(8,128)}', space=vmem, size = 0x8000, scoped, tag = 'scratch operand']
  %s0 = inlined_call_operand.vmem [shape: bf16[64,256], index: 0, kind: input, shape index: {}]
  %s1 = inlined_call_operand.vmem [shape: bf16[256,128], index: 1, kind: input, shape index: {}]
  %s2 = inlined_call_operand.vmem [shape: f32[1,128], index: 2, kind: input, shape index: {}]
  %s3 = inlined_call_operand.vmem [shape: bf16[64,128], index: 3, kind: input, shape index: {}]
  %s4 = inlined_call_operand.vmem [shape: bf16[64,128], index: 4, kind: output, shape index: {}]
  %s5 = sld [smem:[#allocation0]]
  $region34: #{_lambda_.54} parent=0
    _
  %s7 = ssub.s32 1, %s5
  %s8 = scalar_select 0, %s7, %s5
  // Predicated region
  $region2: #{_lambda_.54} parent=0 // pred_check
    _
  $region3: #{_lambda_.54} parent=0 // pred_check_branch
    %10 = sbr.rel (0) target = $region5
  $region4: #{_lambda_.54} parent=0 // pred_region
    _
  $region5: #{_lambda_.54} parent=0 // pred_fallthru
    _
  // Predicated region
  $region6: #{_lambda_.54} parent=0 // pred_check
    _
  $region7: #{_lambda_.54} parent=0 // pred_check_branch
    %12 = sbr.rel (0) target = $region9
  $region8: #{_lambda_.54} parent=0 // pred_region
    _
  $region9: #{_lambda_.54} parent=0 // pred_fallthru
    _
  // Predicated region
  $region10: #{_lambda_.54} parent=0 // pred_check
    _
  $region11: #{_lambda_.54} parent=0 // pred_check_branch
    %14 = sbr.rel (0) target = $region13
  $region12: #{_lambda_.54} parent=0 // pred_region
    _
  $region13: #{_lambda_.54} parent=0 // pred_fallthru
    _
  // Predicated region
  $region14: #{_lambda_.54} parent=0 // pred_check
    _
  $region15: #{_lambda_.54} parent=0 // pred_check_branch
    %16 = sbr.rel (0) target = $region17
  $region16: #{_lambda_.54} parent=0 // pred_region
    _
  $region17: #{_lambda_.54} parent=0 // pred_fallthru
    _
  %p18 = scmp.eq.s32.totalorder 0, 0
  // Predicated region
  $region18: #{_lambda_.54} parent=0 // pred_check
    %p19 = pneg %p18
  $region19: #{_lambda_.54} parent=0 // pred_check_branch
    %21 = sbr.rel (%p19) target = $region21
  $region20: #{_lambda_.54} parent=0 // pred_region
    %22 = vst [vmem:[#allocation2] sm:$0xff] 0.0
    %23 = vst [vmem:[#allocation2 + $0x8] sm:$0xff] 0.0
    %24 = vst [vmem:[#allocation2 + $0x10] sm:$0xff] 0.0
    %25 = vst [vmem:[#allocation2 + $0x18] sm:$0xff] 0.0
    %26 = vst [vmem:[#allocation2 + $0x20] sm:$0xff] 0.0
    %27 = vst [vmem:[#allocation2 + $0x28] sm:$0xff] 0.0
    %28 = vst [vmem:[#allocation2 + $0x30] sm:$0xff] 0.0
    %29 = vst [vmem:[#allocation2 + $0x38] sm:$0xff] 0.0
  $region21: #{_lambda_.54} parent=0 // pred_fallthru
    _
  %v30 = vld [vmem:[#allocation2] sm:$0xff]
  %v31 = vld [vmem:[#allocation2 + $0x8] sm:$0xff]
  %v32 = vld [vmem:[#allocation2 + $0x10] sm:$0xff]
  %v33 = vld [vmem:[#allocation2 + $0x18] sm:$0xff]
  %v34 = vld [vmem:[#allocation2 + $0x20] sm:$0xff]
  %v35 = vld [vmem:[#allocation2 + $0x28] sm:$0xff]
  %v36 = vld [vmem:[#allocation2 + $0x30] sm:$0xff]
  %v37 = vld [vmem:[#allocation2 + $0x38] sm:$0xff]
  %v38 = vld [vmem:[%s0] sm:$0xff]
  %v39 = vld [vmem:[%s0 + $0x8] sm:$0xff]
  %v40 = vld [vmem:[%s0 + $0x10] sm:$0xff]
  %v41 = vld [vmem:[%s0 + $0x18] sm:$0xff]
  %v42 = vld [vmem:[%s0 + $0x20] sm:$0xff]
  %v43 = vld [vmem:[%s0 + $0x28] sm:$0xff]
  %v44 = vld [vmem:[%s0 + $0x30] sm:$0xff]
  %v45 = vld [vmem:[%s0 + $0x38] sm:$0xff]
  %v46 = vld [vmem:[%s1] sm:$0xf]
  %v47 = vld [vmem:[%s1 + $0x4] sm:$0xf]
  %v48 = vld [vmem:[%s1 + $0x8] sm:$0xf]
  %v49 = vld [vmem:[%s1 + $0xc] sm:$0xf]
  %v50 = vld [vmem:[%s1 + $0x10] sm:$0xf]
  %v51 = vld [vmem:[%s1 + $0x14] sm:$0xf]
  %v52 = vld [vmem:[%s1 + $0x18] sm:$0xf]
  %v53 = vld [vmem:[%s1 + $0x1c] sm:$0xf]
  %v54 = vld [vmem:[%s1 + $0x20] sm:$0xf]
  %v55 = vld [vmem:[%s1 + $0x24] sm:$0xf]
  %v56 = vld [vmem:[%s1 + $0x28] sm:$0xf]
  %v57 = vld [vmem:[%s1 + $0x2c] sm:$0xf]
  %v58 = vld [vmem:[%s1 + $0x30] sm:$0xf]
  %v59 = vld [vmem:[%s1 + $0x34] sm:$0xf]
  %v60 = vld [vmem:[%s1 + $0x38] sm:$0xf]
  %v61 = vld [vmem:[%s1 + $0x3c] sm:$0xf]
  %v62 = vld [vmem:[%s1 + $0x40] sm:$0xf]
  %v63 = vld [vmem:[%s1 + $0x44] sm:$0xf]
  %v64 = vld [vmem:[%s1 + $0x48] sm:$0xf]
  %v65 = vld [vmem:[%s1 + $0x4c] sm:$0xf]
  %v66 = vld [vmem:[%s1 + $0x50] sm:$0xf]
  %v67 = vld [vmem:[%s1 + $0x54] sm:$0xf]
  %v68 = vld [vmem:[%s1 + $0x58] sm:$0xf]
  %v69 = vld [vmem:[%s1 + $0x5c] sm:$0xf]
  %v70 = vld [vmem:[%s1 + $0x60] sm:$0xf]
  %v71 = vld [vmem:[%s1 + $0x64] sm:$0xf]
  %v72 = vld [vmem:[%s1 + $0x68] sm:$0xf]
  %v73 = vld [vmem:[%s1 + $0x6c] sm:$0xf]
  %v74 = vld [vmem:[%s1 + $0x70] sm:$0xf]
  %v75 = vld [vmem:[%s1 + $0x74] sm:$0xf]
  %v76 = vld [vmem:[%s1 + $0x78] sm:$0xf]
  %v77 = vld [vmem:[%s1 + $0x7c] sm:$0xf]
  %v86 = vunpack.c.l.b16 %v38
  %v87 = vunpack.c.h.b16 %v38
  %v88 = vunpack.c.l.b16 %v39
  %v89 = vunpack.c.h.b16 %v39
  %v90 = vunpack.c.l.b16 %v40
  %v91 = vunpack.c.h.b16 %v40
  %v92 = vunpack.c.l.b16 %v41
  %v93 = vunpack.c.h.b16 %v41
  %v94 = vunpack.c.l.b16 %v42
  %v95 = vunpack.c.h.b16 %v42
  %v96 = vunpack.c.l.b16 %v43
  %v97 = vunpack.c.h.b16 %v43
  %v98 = vunpack.c.l.b16 %v44
  %v99 = vunpack.c.h.b16 %v44
  %v100 = vunpack.c.l.b16 %v45
  %v101 = vunpack.c.h.b16 %v45
  %v102 = vpack.c.b16 %v88, %v86
  %v103 = vpack.c.b16 %v89, %v87
  %v104 = vpack.c.b16 %v92, %v90
  %v105 = vpack.c.b16 %v93, %v91
  %v106 = vpack.c.b16 %v96, %v94
  %v107 = vpack.c.b16 %v97, %v95
  %v108 = vpack.c.b16 %v100, %v98
  %v109 = vpack.c.b16 %v101, %v99
  %v150 = vunpack.c.l.b16 %v46
  %v151 = vunpack.c.l.b16 %v47
  %v152 = vunpack.c.l.b16 %v48
  %v153 = vunpack.c.l.b16 %v49
  %v154 = vunpack.c.l.b16 %v50
  %v155 = vunpack.c.l.b16 %v51
  %v156 = vunpack.c.l.b16 %v52
  %v157 = vunpack.c.l.b16 %v53
  %v158 = vunpack.c.l.b16 %v54
  %v159 = vunpack.c.l.b16 %v55
  %v160 = vunpack.c.l.b16 %v56
  %v161 = vunpack.c.l.b16 %v57
  %v162 = vunpack.c.l.b16 %v58
  %v163 = vunpack.c.l.b16 %v59
  %v164 = vunpack.c.l.b16 %v60
  %v165 = vunpack.c.l.b16 %v61
  %v166 = vunpack.c.l.b16 %v62
  %v167 = vunpack.c.l.b16 %v63
  %v168 = vunpack.c.l.b16 %v64
  %v169 = vunpack.c.l.b16 %v65
  %v170 = vunpack.c.l.b16 %v66
  %v171 = vunpack.c.l.b16 %v67
  %v172 = vunpack.c.l.b16 %v68
  %v173 = vunpack.c.l.b16 %v69
  %v174 = vunpack.c.l.b16 %v70
  %v175 = vunpack.c.l.b16 %v71
  %v176 = vunpack.c.l.b16 %v72
  %v177 = vunpack.c.l.b16 %v73
  %v178 = vunpack.c.l.b16 %v74
  %v179 = vunpack.c.l.b16 %v75
  %v180 = vunpack.c.l.b16 %v76
  %v181 = vunpack.c.l.b16 %v77
  %v182 = vpack.c.b16 %v151, %v150
  %v183 = vpack.c.b16 %v153, %v152
  %v184 = vpack.c.b16 %v155, %v154
  %v185 = vpack.c.b16 %v157, %v156
  %v186 = vpack.c.b16 %v159, %v158
  %v187 = vpack.c.b16 %v161, %v160
  %v188 = vpack.c.b16 %v163, %v162
  %v189 = vpack.c.b16 %v165, %v164
  %v190 = vpack.c.b16 %v167, %v166
  %v191 = vpack.c.b16 %v169, %v168
  %v192 = vpack.c.b16 %v171, %v170
  %v193 = vpack.c.b16 %v173, %v172
  %v194 = vpack.c.b16 %v175, %v174
  %v195 = vpack.c.b16 %v177, %v176
  %v196 = vpack.c.b16 %v179, %v178
  %v197 = vpack.c.b16 %v181, %v180
  %214 = vmatprep.subr.bf16.mxu0 0
  %215 = vmatpush1.bf16.msra.mxu0 %v182
  %216 = vmatprep.subr.bf16.mxu0 0
  %217 = vmatpush1.bf16.msra.mxu0 %v183
  %218 = vmatprep.subr.bf16.mxu0 0
  %219 = vmatpush1.bf16.msra.mxu0 %v184
  %220 = vmatprep.subr.bf16.mxu0 0
  %221 = vmatpush1.bf16.msra.mxu0 %v185
  %222 = vmatprep.subr.bf16.mxu0 0
  %223 = vmatpush1.bf16.msra.mxu0 %v186
  %224 = vmatprep.subr.bf16.mxu0 0
  %225 = vmatpush1.bf16.msra.mxu0 %v187
  %226 = vmatprep.subr.bf16.mxu0 0
  %227 = vmatpush1.bf16.msra.mxu0 %v188
  %228 = vmatprep.subr.bf16.mxu0 0
  %229 = vmatpush1.bf16.msra.mxu0 %v189
  %230 = vmatprep.subr.bf16.mxu0 0
  %231 = vmatpush1.bf16.msra.mxu0 %v190
  %232 = vmatprep.subr.bf16.mxu0 0
  %233 = vmatpush1.bf16.msra.mxu0 %v191
  %234 = vmatprep.subr.bf16.mxu0 0
  %235 = vmatpush1.bf16.msra.mxu0 %v192
  %236 = vmatprep.subr.bf16.mxu0 0
  %237 = vmatpush1.bf16.msra.mxu0 %v193
  %238 = vmatprep.subr.bf16.mxu0 0
  %239 = vmatpush1.bf16.msra.mxu0 %v194
  %240 = vmatprep.subr.bf16.mxu0 0
  %241 = vmatpush1.bf16.msra.mxu0 %v195
  %242 = vmatprep.subr.bf16.mxu0 0
  %243 = vmatpush1.bf16.msra.mxu0 %v196
  %244 = vmatprep.subr.bf16.mxu0 0
  %245 = vmatpush1.bf16.msra.mxu0 %v197
  %246 = vmatprep.mubr.bf16.mxu0 %v103
  %247 = vmatmul.mubr.bf16.gmra.mrb[0].mxu0 %v102
  %v248 = vpop.f32.mrb[0].mxu0
  %v249 = vadd.f32 0.0, %v248
  %v250 = vpop.f32.mrb[0].mxu0
  %v251 = vpop.f32.mrb[0].mxu0
  %v252 = vadd.f32 0.0, %v251
  %v253 = vpop.f32.mrb[0].mxu0
  %254 = vmatprep.mubr.bf16.mxu0 %v105
  %255 = vmatmul.mubr.bf16.gmra.mrb[0].mxu0 %v104
  %v256 = vpop.f32.mrb[0].mxu0
  %v257 = vadd.f32 0.0, %v256
  %v258 = vpop.f32.mrb[0].mxu0
  %v259 = vpop.f32.mrb[0].mxu0
  %v260 = vadd.f32 0.0, %v259
  %v261 = vpop.f32.mrb[0].mxu0
  %262 = vmatprep.mubr.bf16.mxu0 %v107
  %263 = vmatmul.mubr.bf16.gmra.mrb[0].mxu0 %v106
  %v264 = vpop.f32.mrb[0].mxu0
  %v265 = vadd.f32 0.0, %v264
  %v266 = vpop.f32.mrb[0].mxu0
  %v267 = vpop.f32.mrb[0].mxu0
  %v268 = vadd.f32 0.0, %v267
  %v269 = vpop.f32.mrb[0].mxu0
  %270 = vmatprep.mubr.bf16.mxu0 %v109
  %271 = vmatmul.mubr.bf16.gmra.mrb[0].mxu0 %v108
  %v272 = vpop.f32.mrb[0].mxu0
  %v273 = vadd.f32 0.0, %v272
  %v274 = vpop.f32.mrb[0].mxu0
  %v275 = vpop.f32.mrb[0].mxu0
  %v276 = vadd.f32 0.0, %v275
  %v277 = vpop.f32.mrb[0].mxu0
  %278 = vdwg.mxu0
  %v279 = vadd.f32 %v30, %v249
  %v280 = vadd.f32 %v31, %v252
  %v281 = vadd.f32 %v32, %v257
  %v282 = vadd.f32 %v33, %v260
  %v283 = vadd.f32 %v34, %v265
  %v284 = vadd.f32 %v35, %v268
  %v285 = vadd.f32 %v36, %v273
  %v286 = vadd.f32 %v37, %v276
  %287 = vst [vmem:[#allocation2] sm:$0xff] %v279
  %288 = vst [vmem:[#allocation2 + $0x8] sm:$0xff] %v280
  %289 = vst [vmem:[#allocation2 + $0x10] sm:$0xff] %v281
  %290 = vst [vmem:[#allocation2 + $0x18] sm:$0xff] %v282
  %291 = vst [vmem:[#allocation2 + $0x20] sm:$0xff] %v283
  %292 = vst [vmem:[#allocation2 + $0x28] sm:$0xff] %v284
  %293 = vst [vmem:[#allocation2 + $0x30] sm:$0xff] %v285
  %294 = vst [vmem:[#allocation2 + $0x38] sm:$0xff] %v286
  // Predicated region
  $region22: #{_lambda_.54} parent=0 // pred_check
    %p295 = pneg %p18
  $region23: #{_lambda_.54} parent=0 // pred_check_branch
    %297 = sbr.rel (%p295) target = $region25
  $region24: #{_lambda_.54} parent=0 // pred_region
    %v298 = vld [vmem:[#allocation2] sm:$0xff]
    %v299 = vld [vmem:[#allocation2 + $0x8] sm:$0xff]
    %v300 = vld [vmem:[#allocation2 + $0x10] sm:$0xff]
    %v301 = vld [vmem:[#allocation2 + $0x18] sm:$0xff]
    %v302 = vld [vmem:[#allocation2 + $0x20] sm:$0xff]
    %v303 = vld [vmem:[#allocation2 + $0x28] sm:$0xff]
    %v304 = vld [vmem:[#allocation2 + $0x30] sm:$0xff]
    %v305 = vld [vmem:[#allocation2 + $0x38] sm:$0xff]
    %v306 = vld [vmem:[%s2] sm:$0x1]
    %v308 = vlaneseq
    %v309 = vshrl.u32 %v308, 7
    %v310 = vsub.s32 0, %v309
    %v311 = vrot.slane %v306, %v310
    %v313 = vadd.f32 %v298, %v311
    %v314 = vadd.f32 %v299, %v311
    %v315 = vadd.f32 %v300, %v311
    %v316 = vadd.f32 %v301, %v311
    %v317 = vadd.f32 %v302, %v311
    %v318 = vadd.f32 %v303, %v311
    %v319 = vadd.f32 %v304, %v311
    %v320 = vadd.f32 %v305, %v311
    %v321 = vld [vmem:[%s3] sm:$0xf]
    %v322 = vld [vmem:[%s3 + $0x4] sm:$0xf]
    %v323 = vld [vmem:[%s3 + $0x8] sm:$0xf]
    %v324 = vld [vmem:[%s3 + $0xc] sm:$0xf]
    %v325 = vld [vmem:[%s3 + $0x10] sm:$0xf]
    %v326 = vld [vmem:[%s3 + $0x14] sm:$0xf]
    %v327 = vld [vmem:[%s3 + $0x18] sm:$0xf]
    %v328 = vld [vmem:[%s3 + $0x1c] sm:$0xf]
    %v329 = vunpack.c.l.bf16 %v321
    %v330 = vunpack.c.l.bf16 %v322
    %v331 = vunpack.c.l.bf16 %v323
    %v332 = vunpack.c.l.bf16 %v324
    %v333 = vunpack.c.l.bf16 %v325
    %v334 = vunpack.c.l.bf16 %v326
    %v335 = vunpack.c.l.bf16 %v327
    %v336 = vunpack.c.l.bf16 %v328
    %v337 = vadd.f32 %v313, %v329
    %v338 = vadd.f32 %v314, %v330
    %v339 = vadd.f32 %v315, %v331
    %v340 = vadd.f32 %v316, %v332
    %v341 = vadd.f32 %v317, %v333
    %v342 = vadd.f32 %v318, %v334
    %v343 = vadd.f32 %v319, %v335
    %v344 = vadd.f32 %v320, %v336
    %v345 = vpack.c.bf16 %v338, %v337
    %v346 = vpack.c.bf16 %v340, %v339
    %v347 = vpack.c.bf16 %v342, %v341
    %v348 = vpack.c.bf16 %v344, %v343
    %v353 = vunpack.c.l.b16 %v345
    %v354 = vunpack.c.h.b16 %v345
    %v355 = vunpack.c.l.b16 %v346
    %v356 = vunpack.c.h.b16 %v346
    %v357 = vunpack.c.l.b16 %v347
    %v358 = vunpack.c.h.b16 %v347
    %v359 = vunpack.c.l.b16 %v348
    %v360 = vunpack.c.h.b16 %v348
    %v361 = vpack.c.b16 %v353, %v353
    %v362 = vpack.c.b16 %v354, %v354
    %v363 = vpack.c.b16 %v355, %v355
    %v364 = vpack.c.b16 %v356, %v356
    %v365 = vpack.c.b16 %v357, %v357
    %v366 = vpack.c.b16 %v358, %v358
    %v367 = vpack.c.b16 %v359, %v359
    %v368 = vpack.c.b16 %v360, %v360
    %377 = vst [vmem:[%s4] sm:$0xf] %v361
    %378 = vst [vmem:[%s4 + $0x4] sm:$0xf] %v362
    %379 = vst [vmem:[%s4 + $0x8] sm:$0xf] %v363
    %380 = vst [vmem:[%s4 + $0xc] sm:$0xf] %v364
    %381 = vst [vmem:[%s4 + $0x10] sm:$0xf] %v365
    %382 = vst [vmem:[%s4 + $0x14] sm:$0xf] %v366
    %383 = vst [vmem:[%s4 + $0x18] sm:$0xf] %v367
    %384 = vst [vmem:[%s4 + $0x1c] sm:$0xf] %v368
  $region25: #{_lambda_.54} parent=0 // pred_fallthru
    _
  // Predicated region
  $region26: #{_lambda_.54} parent=0 // pred_check
    _
  $region27: #{_lambda_.54} parent=0 // pred_check_branch
    %386 = sbr.rel (0) target = $region29
  $region28: #{_lambda_.54} parent=0 // pred_region
    _
  $region29: #{_lambda_.54} parent=0 // pred_fallthru
    _
  // Predicated region
  $region30: #{_lambda_.54} parent=0 // pred_check
    _
  $region31: #{_lambda_.54} parent=0 // pred_check_branch
    %388 = sbr.rel (0) target = $region33
  $region32: #{_lambda_.54} parent=0 // pred_region
    _
  $region33: #{_lambda_.54} parent=0 // pred_fallthru
    _

// kernel: _lambda_.51
$region0: #{_lambda_.51}
  #allocation0 [shape = 'u32[]', space=smem, size = 0x4, offset = 0x4, fixed_abs, tag = 'smem constant byte address 0x4 - core index']
  #allocation1 [shape = 'u32[144,128]{1,0:T(1,128)}', space=vmem, size = 0x12000, scoped, tag = 'internal scratch']
  %s0 = inlined_call_operand.vmem [shape: bf16[2,4,32,16], index: 0, kind: input, shape index: {}]
  %s1 = inlined_call_operand.vmem [shape: bf16[2,4,5,16], index: 1, kind: input, shape index: {}]
  %s2 = inlined_call_operand.vmem [shape: bf16[2,4,5,16], index: 2, kind: input, shape index: {}]
  %s3 = inlined_call_operand.vmem [shape: bf16[2,32,64], index: 3, kind: output, shape index: {}]
  %s4 = sld [smem:[#allocation0]]
  $region45: #{_lambda_.51} parent=0
    _
  %s6 = ssub.s32 1, %s4
  %s7 = scalar_select 0, %s6, %s4
  loop: start=0, step=1, limit=4
  $region2: #{_lambda_.51} parent=0 // loop_pre_header
    _
  $region3: #{_lambda_.51} parent=0 // loop_header
    %s9 = sphi 0, %s13
    %p10 = scmp.ge.s32.totalorder %s9, 4
    %s16 = sphi 0, %s28
    %s17 = sphi 0, %s24
    %s18 = sphi 0, %s16
    %s19 = sphi 0, %s17
    %s20 = sphi 0, %s18
    %s21 = sphi 0, %s19
    %s33 = sphi 0, %s35
    %s36 = sphi 0, %s33
    %s37 = sphi 0, %s36
    %s53 = sphi 0, %s37
    %s61 = sphi 0, %s63
    %s64 = sphi 0, %s61
    %s65 = sphi 0, %s64
    %s81 = sphi 0, %s65
    %s89 = sphi 0, %s91
    %s92 = sphi 0, %s89
    %s93 = sphi 0, %s92
    %s109 = sphi 0, %s93
    %s117 = sphi 0, %s119
    %s120 = sphi 0, %s117
    %s121 = sphi 0, %s120
    %s137 = sphi 0, %s121
  $region4: #{_lambda_.51} parent=0 // loop_header_branch
    %12 = sbr.rel (%p10) target = $region8
  $region5: #{_lambda_.51} parent=0 // loop_body
    %s14 = ssub.s32 %s9, 1
    %s15 = ssub.s32 %s9, 2
    %s22 = sadd.s32 1, %s17
    %p23 = scmp.ge.s32.totalorder %s22, 1
    %s24 = scalar_select %p23, 0, %s22
    %s25 = sadd.s32 1, %s16
    %s26 = scalar_select %p23, %s25, %s16
    %p27 = scmp.ge.s32.totalorder %s26, 2
    %s28 = scalar_select %p27, 0, %s26
    %s29 = ssub.s32 %s16, %s28
    %s30 = ssub.s32 %s17, %s24
    %s31 = sor.u32 %s29, %s30
    %p32 = scmp.eq.s32.totalorder %s31, 0
    %s34 = sadd.s32 %s33, 1
    %s35 = scalar_select %p32, %s33, %s34
    %p38 = pneg %p32
    %p39 = scmp.eq.s32.totalorder %s9, 1
    %p40 = por %p38, %p39
    %p41 = scmp.ne.s32.totalorder %s33, %s36
    %p42 = scmp.eq.s32.totalorder %s9, 0
    %p43 = por %p41, %p42
    %p44 = scmp.ne.s32.totalorder %s33, %s36
    %p45 = scmp.eq.s32.totalorder %s14, 1
    %p46 = por %p44, %p45
    %p47 = scmp.ne.s32.totalorder %s36, %s37
    %p48 = scmp.eq.s32.totalorder %s14, 0
    %p49 = por %p47, %p48
    %p50 = scmp.ne.s32.totalorder %s36, %s37
    %p51 = scmp.eq.s32.totalorder %s15, 1
    %p52 = por %p50, %p51
    %p54 = scmp.ne.s32.totalorder %s37, %s53
    %p55 = scmp.eq.s32.totalorder %s15, 0
    %p56 = por %p54, %p55
    %s57 = ssub.s32 %s16, %s28
    %s58 = ssub.s32 %s17, %s24
    %s59 = sor.u32 %s57, %s58
    %p60 = scmp.eq.s32.totalorder %s59, 0
    %s62 = sadd.s32 %s61, 1
    %s63 = scalar_select %p60, %s61, %s62
    %p66 = pneg %p60
    %p67 = scmp.eq.s32.totalorder %s9, 1
    %p68 = por %p66, %p67
    %p69 = scmp.ne.s32.totalorder %s61, %s64
    %p70 = scmp.eq.s32.totalorder %s9, 0
    %p71 = por %p69, %p70
    %p72 = scmp.ne.s32.totalorder %s61, %s64
    %p73 = scmp.eq.s32.totalorder %s14, 1
    %p74 = por %p72, %p73
    %p75 = scmp.ne.s32.totalorder %s64, %s65
    %p76 = scmp.eq.s32.totalorder %s14, 0
    %p77 = por %p75, %p76
    %p78 = scmp.ne.s32.totalorder %s64, %s65
    %p79 = scmp.eq.s32.totalorder %s15, 1
    %p80 = por %p78, %p79
    %p82 = scmp.ne.s32.totalorder %s65, %s81
    %p83 = scmp.eq.s32.totalorder %s15, 0
    %p84 = por %p82, %p83
    %s85 = ssub.s32 %s16, %s28
    %s86 = ssub.s32 %s17, %s24
    %s87 = sor.u32 %s85, %s86
    %p88 = scmp.eq.s32.totalorder %s87, 0
    %s90 = sadd.s32 %s89, 1
    %s91 = scalar_select %p88, %s89, %s90
    %p94 = pneg %p88
    %p95 = scmp.eq.s32.totalorder %s9, 1
    %p96 = por %p94, %p95
    %p97 = scmp.ne.s32.totalorder %s89, %s92
    %p98 = scmp.eq.s32.totalorder %s9, 0
    %p99 = por %p97, %p98
    %p100 = scmp.ne.s32.totalorder %s89, %s92
    %p101 = scmp.eq.s32.totalorder %s14, 1
    %p102 = por %p100, %p101
    %p103 = scmp.ne.s32.totalorder %s92, %s93
    %p104 = scmp.eq.s32.totalorder %s14, 0
    %p105 = por %p103, %p104
    %p106 = scmp.ne.s32.totalorder %s92, %s93
    %p107 = scmp.eq.s32.totalorder %s15, 1
    %p108 = por %p106, %p107
    %p110 = scmp.ne.s32.totalorder %s93, %s109
    %p111 = scmp.eq.s32.totalorder %s15, 0
    %p112 = por %p110, %p111
    %s113 = ssub.s32 %s16, %s28
    %s114 = ssub.s32 %s17, %s24
    %s115 = sor.u32 %s113, %s114
    %p116 = scmp.eq.s32.totalorder %s115, 0
    %s118 = sadd.s32 %s117, 1
    %s119 = scalar_select %p116, %s117, %s118
    %p122 = pneg %p116
    %p123 = scmp.eq.s32.totalorder %s9, 1
    %p124 = por %p122, %p123
    %p125 = scmp.ne.s32.totalorder %s117, %s120
    %p126 = scmp.eq.s32.totalorder %s9, 0
    %p127 = por %p125, %p126
    %p128 = scmp.ne.s32.totalorder %s117, %s120
    %p129 = scmp.eq.s32.totalorder %s14, 1
    %p130 = por %p128, %p129
    %p131 = scmp.ne.s32.totalorder %s120, %s121
    %p132 = scmp.eq.s32.totalorder %s14, 0
    %p133 = por %p131, %p132
    %p134 = scmp.ne.s32.totalorder %s120, %s121
    %p135 = scmp.eq.s32.totalorder %s15, 1
    %p136 = por %p134, %p135
    %p138 = scmp.ne.s32.totalorder %s121, %s137
    %p139 = scmp.eq.s32.totalorder %s15, 0
    %p140 = por %p138, %p139
    %p141 = scmp.le.s32.totalorder 1, %s9
    %p142 = scmp.lt.s32.totalorder %s9, 3
    %p143 = pnand %p141, %p142
    %p144 = pneg %p143
    // Predicated region
    $region9: #{_lambda_.51} parent=5 // pred_check
      _
    $region10: #{_lambda_.51} parent=5 // pred_check_branch
      %146 = sbr.rel (%p143) target = $region12
    $region11: #{_lambda_.51} parent=5 // pred_region
      %s147 = ssub.s32 %s9, 1
    $region12: #{_lambda_.51} parent=5 // pred_fallthru
      _
    %p148 = scmp.lt.s32.totalorder %s9, 2
    // Predicated region
    $region13: #{_lambda_.51} parent=5 // pred_check
      %p149 = pneg %p148
    $region14: #{_lambda_.51} parent=5 // pred_check_branch
      %151 = sbr.rel (%p149) target = $region16
    $region15: #{_lambda_.51} parent=5 // pred_region
      // Predicated region
      $region17: #{_lambda_.51} parent=15 // pred_check
        %p152 = pneg %p43
      $region18: #{_lambda_.51} parent=15 // pred_check_branch
        %154 = sbr.rel (%p152) target = $region20
      $region19: #{_lambda_.51} parent=15 // pred_region
        %s155 = smul.u32 4, %s17
        %p156 = scmp.lt.s32.totalorder %s16, 1
        %s157 = scalar_select %p156, %s16, 1
        %p158 = scmp.lt.s32.totalorder %s155, 3
        %s159 = scalar_select %p158, %s155, 3
        %s160 = smul.addr %s159, 4
        %s161 = smul.addr %s157, 16
        %s162 = sadd.s32 %s160, %s161
        %s163 = smul.addr %s162, 4
        %s164 = scalar_lea.vmem %s0, %s163
        %s165 = smul.u32 4, %s17
      $region20: #{_lambda_.51} parent=15 // pred_fallthru
        _
      // Predicated region
      $region21: #{_lambda_.51} parent=15 // pred_check
        %p166 = pneg %p71
      $region22: #{_lambda_.51} parent=15 // pred_check_branch
        %168 = sbr.rel (%p166) target = $region24
      $region23: #{_lambda_.51} parent=15 // pred_region
        %s169 = smul.u32 4, %s17
        %p170 = scmp.lt.s32.totalorder %s16, 1
        %s171 = scalar_select %p170, %s16, 1
        %p172 = scmp.lt.s32.totalorder %s169, 3
        %s173 = scalar_select %p172, %s169, 3
        %s174 = smul.addr %s171, 4
        %s175 = sadd.s32 %s173, %s174
        %s176 = smul.addr %s175, 4
        %s177 = scalar_lea.vmem %s1, %s176
        %s178 = smul.u32 4, %s17
      $region24: #{_lambda_.51} parent=15 // pred_fallthru
        _
      // Predicated region
      $region25: #{_lambda_.51} parent=15 // pred_check
        %p179 = pneg %p99
      $region26: #{_lambda_.51} parent=15 // pred_check_branch
        %181 = sbr.rel (%p179) target = $region28
      $region27: #{_lambda_.51} parent=15 // pred_region
        %s182 = smul.u32 4, %s17
        %p183 = scmp.lt.s32.totalorder %s16, 1
        %s184 = scalar_select %p183, %s16, 1
        %p185 = scmp.lt.s32.totalorder %s182, 3
        %s186 = scalar_select %p185, %s182, 3
        %s187 = smul.addr %s184, 4
        %s188 = sadd.s32 %s186, %s187
        %s189 = smul.addr %s188, 4
        %s190 = scalar_lea.vmem %s2, %s189
        %s191 = smul.u32 4, %s17
      $region28: #{_lambda_.51} parent=15 // pred_fallthru
        _
    $region16: #{_lambda_.51} parent=5 // pred_fallthru
      _
    %p192 = scmp.le.s32.totalorder 1, %s9
    %p193 = scmp.lt.s32.totalorder %s9, 3
    %p194 = pnand %p192, %p193
    %p195 = pneg %p194
    // Predicated region
    $region29: #{_lambda_.51} parent=5 // pred_check
      _
    $region30: #{_lambda_.51} parent=5 // pred_check_branch
      %197 = sbr.rel (%p194) target = $region32
    $region31: #{_lambda_.51} parent=5 // pred_region
      %s198 = ssub.s32 %s9, 1
      %s199 = smul.u32 4, %s19
      %p200 = scmp.lt.s32.totalorder %s18, 1
      %s201 = scalar_select %p200, %s18, 1
      %p202 = scmp.lt.s32.totalorder %s199, 3
      %s203 = scalar_select %p202, %s199, 3
      %s204 = smul.addr %s203, 4
      %s205 = smul.addr %s201, 16
      %s206 = sadd.s32 %s204, %s205
      %s207 = smul.addr %s206, 4
      %s208 = scalar_lea.vmem %s0, %s207
      %p209 = pneg %p49
      %p210 = pneg %p46
      %s211 = smul.u32 4, %s19
      %p212 = scmp.lt.s32.totalorder %s18, 1
      %s213 = scalar_select %p212, %s18, 1
      %p214 = scmp.lt.s32.totalorder %s211, 3
      %s215 = scalar_select %p214, %s211, 3
      %s216 = smul.addr %s213, 4
      %s217 = sadd.s32 %s215, %s216
      %s218 = smul.addr %s217, 4
      %s219 = scalar_lea.vmem %s1, %s218
      %p220 = pneg %p77
      %p221 = pneg %p74
      %s222 = smul.u32 4, %s19
      %p223 = scmp.lt.s32.totalorder %s18, 1
      %s224 = scalar_select %p223, %s18, 1
      %p225 = scmp.lt.s32.totalorder %s222, 3
      %s226 = scalar_select %p225, %s222, 3
      %s227 = smul.addr %s224, 4
      %s228 = sadd.s32 %s226, %s227
      %s229 = smul.addr %s228, 4
      %s230 = scalar_lea.vmem %s2, %s229
      %p231 = pneg %p105
      %p232 = pneg %p102
      %p233 = pneg %p133
      %p234 = pneg %p130
      %p235 = scmp.lt.s32.totalorder %s18, 1
      %s236 = scalar_select %p235, %s18, 1
      %p237 = scmp.lt.s32.totalorder %s19, 0
      %s238 = scalar_select %p237, %s19, 0
      %s239 = smul.addr %s236, 4
      %s240 = sadd.s32 %s238, %s239
      %s241 = smul.addr %s240, 4
      %s242 = scalar_lea.vmem %s3, %s241
      %s243 = smul.u32 4, %s19
      %p244 = scmp.lt.s32.totalorder %s18, 1
      %s245 = scalar_select %p244, %s18, 1
      %p246 = scmp.lt.s32.totalorder %s243, 3
      %s247 = scalar_select %p246, %s243, 3
      %s248 = smul.addr %s247, 4
      %s249 = smul.addr %s245, 16
      %s250 = sadd.s32 %s248, %s249
      %s251 = smul.addr %s250, 4
      %s252 = scalar_lea.vmem %s0, %s251
      %s253 = smul.u32 4, %s19
      %s254 = smul.u32 4, %s19
      %p255 = scmp.lt.s32.totalorder %s18, 1
      %s256 = scalar_select %p255, %s18, 1
      %p257 = scmp.lt.s32.totalorder %s254, 3
      %s258 = scalar_select %p257, %s254, 3
      %s259 = smul.addr %s256, 4
      %s260 = sadd.s32 %s258, %s259
      %s261 = smul.addr %s260, 4
      %s262 = scalar_lea.vmem %s1, %s261
      %s263 = smul.u32 4, %s19
      %s264 = smul.u32 4, %s19
      %p265 = scmp.lt.s32.totalorder %s18, 1
      %s266 = scalar_select %p265, %s18, 1
      %p267 = scmp.lt.s32.totalorder %s264, 3
      %s268 = scalar_select %p267, %s264, 3
      %s269 = smul.addr %s266, 4
      %s270 = sadd.s32 %s268, %s269
      %s271 = smul.addr %s270, 4
      %s272 = scalar_lea.vmem %s2, %s271
      %s273 = smul.u32 4, %s19
      %p274 = scmp.lt.s32.totalorder %s18, 1
      %s275 = scalar_select %p274, %s18, 1
      %p276 = scmp.lt.s32.totalorder %s19, 0
      %s277 = scalar_select %p276, %s19, 0
      %s278 = smul.addr %s275, 4
      %s279 = sadd.s32 %s277, %s278
      %s280 = smul.addr %s279, 4
      %s281 = scalar_lea.vmem %s3, %s280
      %v283 = vld [vmem:[%s252] sm:$0xf]
      %v284 = vld [vmem:[%s252 + $0x4] sm:$0xf]
      %v285 = vld [vmem:[%s252 + $0x8] sm:$0xf]
      %v286 = vld [vmem:[%s252 + $0xc] sm:$0xf]
      %v287 = vld [vmem:[%s262] sm:$0x7]
      %v288 = vld [vmem:[%s272] sm:$0x7]
      %v293 = vunpack.c.l.b16 %v283
      %v294 = vunpack.c.l.b16 %v284
      %v295 = vunpack.c.l.b16 %v285
      %v296 = vunpack.c.l.b16 %v286
      %v297 = vpack.c.b16 %v294, %v293
      %v298 = vpack.c.b16 %v296, %v295
      %vm299 = vcmask 130048
      %v301 = vsel %vm299, %v297, 0
      %v304 = vsel %vm299, %v298, 0
      %v307 = vsel %vm299, %v287, 0
      %309 = vmatprep.subr.bf16.mxu0 0
      %310 = vmatpush1.bf16.xpose.msra.mxu0 %v307
      %311 = vmatprep.subr.bf16.mxu0 0
      %312 = vmatpush1.bf16.xpose.msra.mxu0 0
      %313 = vmatprep.subr.bf16.mxu0 0
      %314 = vmatpush1.bf16.xpose.msra.mxu0 0
      %315 = vmatprep.subr.bf16.mxu0 0
      %316 = vmatpush1.bf16.xpose.msra.mxu0 0
      %317 = vmatprep.subr.bf16.mxu0 0
      %318 = vmatpush1.bf16.xpose.msra.mxu0 0
      %319 = vmatprep.subr.bf16.mxu0 0
      %320 = vmatpush1.bf16.xpose.msra.mxu0 0
      %321 = vmatprep.subr.bf16.mxu0 0
      %322 = vmatpush1.bf16.xpose.msra.mxu0 0
      %323 = vmatprep.subr.bf16.mxu0 0
      %324 = vmatpush1.bf16.xpose.msra.mxu0 0
      %325 = vmatprep.subr.bf16.mxu0 0
      %326 = vmatpush1.bf16.xpose.msra.mxu0 0
      %327 = vmatprep.subr.bf16.mxu0 0
      %328 = vmatpush1.bf16.xpose.msra.mxu0 0
      %329 = vmatprep.subr.bf16.mxu0 0
      %330 = vmatpush1.bf16.xpose.msra.mxu0 0
      %331 = vmatprep.subr.bf16.mxu0 0
      %332 = vmatpush1.bf16.xpose.msra.mxu0 0
      %333 = vmatprep.subr.bf16.mxu0 0
      %334 = vmatpush1.bf16.xpose.msra.mxu0 0
      %335 = vmatprep.subr.bf16.mxu0 0
      %336 = vmatpush1.bf16.xpose.msra.mxu0 0
      %337 = vmatprep.subr.bf16.mxu0 0
      %338 = vmatpush1.bf16.xpose.msra.mxu0 0
      %339 = vmatprep.subr.bf16.mxu0 0
      %340 = vmatpush1.bf16.xpose.msra.mxu0 0
      %341 = vmatprep.mubr.bf16.mxu0 0
      %342 = vmatmul.mubr.bf16.gmra.mrb[0].mxu0 %v301
      %v343 = vpop.f32.mrb[0].mxu0
      %v344 = vadd.f32 0.0, %v343
      %v345 = vpop.f32.mrb[0].mxu0
      %v346 = vpop.f32.mrb[0].mxu0
      %v347 = vadd.f32 0.0, %v346
      %v348 = vpop.f32.mrb[0].mxu0
      %349 = vmatprep.mubr.bf16.mxu0 0
      %350 = vmatmul.mubr.bf16.gmra.mrb[0].mxu0 %v304
      %v351 = vpop.f32.mrb[0].mxu0
      %v352 = vadd.f32 0.0, %v351
      %v353 = vpop.f32.mrb[0].mxu0
      %v354 = vpop.f32.mrb[0].mxu0
      %v355 = vadd.f32 0.0, %v354
      %v356 = vpop.f32.mrb[0].mxu0
      %357 = vdwg.mxu0
      %v358 = vmul.f32 %v344, 0.25
      %v359 = vmul.f32 %v347, 0.25
      %v360 = vmul.f32 %v352, 0.25
      %v361 = vmul.f32 %v355, 0.25
      %vm362 = vcmask 39936
      %v363 = vsel %vm362, %v358, -inf
      %364 = vmax.xlane.f32.xlu0 %v363
      %v365 = vpop.xlane.xlu0 %364
      %v366 = vsel %vm362, %v359, -inf
      %367 = vmax.xlane.f32.xlu0 %v366
      %v368 = vpop.xlane.xlu0 %367
      %v369 = vsel %vm362, %v360, -inf
      %370 = vmax.xlane.f32.xlu0 %v369
      %v371 = vpop.xlane.xlu0 %370
      %v372 = vsel %vm362, %v361, -inf
      %373 = vmax.xlane.f32.xlu0 %v372
      %v374 = vpop.xlane.xlu0 %373
      %v375 = vsub.f32 %v358, %v365
      %v376 = vsub.f32 %v359, %v368
      %v377 = vsub.f32 %v360, %v371
      %v378 = vsub.f32 %v361, %v374
      %v379 = vmul.f32 %v375, 1.442695
      %v380 = vpow.pop %v379
      %v381 = vmul.f32 %v376, 1.442695
      %v382 = vpow.pop %v381
      %v383 = vmul.f32 %v377, 1.442695
      %v384 = vpow.pop %v383
      %v385 = vmul.f32 %v378, 1.442695
      %v386 = vpow.pop %v385
      %v387 = vsel %vm362, %v380, 0.0
      %388 = vadd.xlane.f32.xlu0 %v387
      %v389 = vpop.xlane.xlu0 %388
      %v390 = vsel %vm362, %v382, 0.0
      %391 = vadd.xlane.f32.xlu0 %v390
      %v392 = vpop.xlane.xlu0 %391
      %v393 = vsel %vm362, %v384, 0.0
      %394 = vadd.xlane.f32.xlu0 %v393
      %v395 = vpop.xlane.xlu0 %394
      %v396 = vsel %vm362, %v386, 0.0
      %397 = vadd.xlane.f32.xlu0 %v396
      %v398 = vpop.xlane.xlu0 %397
      %v399 = vrcp.pop %v389
      %v400 = vrcp.pop %v392
      %v401 = vrcp.pop %v395
      %v402 = vrcp.pop %v398
      %v403 = vmul.f32 %v380, %v399
      %v404 = vmul.f32 %v382, %v400
      %v405 = vmul.f32 %v384, %v401
      %v406 = vmul.f32 %v386, %v402
      %v407 = vpack.c.bf16 %v404, %v403
      %v408 = vpack.c.bf16 %v406, %v405
      %v410 = vsel %vm362, %v407, 0
      %v413 = vsel %vm362, %v408, 0
      %vm415 = vcmask 1041408
      %vm416 = vcmask 1042432
      %v417 = vsel %vm415, 4294967295, 65535
      %v418 = vsel %vm416, %v417, 0
      %v420 = vand.u32 %v288, %v418
      %422 = vmatprep.subr.bf16.mxu0 0
      %423 = vmatpush1.bf16.msra.mxu0 %v420
      %424 = vmatprep.subr.bf16.mxu0 0
      %425 = vmatpush1.bf16.msra.mxu0 0
      %426 = vmatprep.subr.bf16.mxu0 0
      %427 = vmatpush1.bf16.msra.mxu0 0
      %428 = vmatprep.subr.bf16.mxu0 0
      %429 = vmatpush1.bf16.msra.mxu0 0
      %430 = vmatprep.subr.bf16.mxu0 0
      %431 = vmatpush1.bf16.msra.mxu0 0
      %432 = vmatprep.subr.bf16.mxu0 0
      %433 = vmatpush1.bf16.msra.mxu0 0
      %434 = vmatprep.subr.bf16.mxu0 0
      %435 = vmatpush1.bf16.msra.mxu0 0
      %436 = vmatprep.subr.bf16.mxu0 0
      %437 = vmatpush1.bf16.msra.mxu0 0
      %438 = vmatprep.subr.bf16.mxu0 0
      %439 = vmatpush1.bf16.msra.mxu0 0
      %440 = vmatprep.subr.bf16.mxu0 0
      %441 = vmatpush1.bf16.msra.mxu0 0
      %442 = vmatprep.subr.bf16.mxu0 0
      %443 = vmatpush1.bf16.msra.mxu0 0
      %444 = vmatprep.subr.bf16.mxu0 0
      %445 = vmatpush1.bf16.msra.mxu0 0
      %446 = vmatprep.subr.bf16.mxu0 0
      %447 = vmatpush1.bf16.msra.mxu0 0
      %448 = vmatprep.subr.bf16.mxu0 0
      %449 = vmatpush1.bf16.msra.mxu0 0
      %450 = vmatprep.subr.bf16.mxu0 0
      %451 = vmatpush1.bf16.msra.mxu0 0
      %452 = vmatprep.subr.bf16.mxu0 0
      %453 = vmatpush1.bf16.msra.mxu0 0
      %454 = vmatprep.mubr.bf16.mxu0 0
      %455 = vmatmul.mubr.bf16.gmra.mrb[0].mxu0 %v410
      %v456 = vpop.f32.mrb[0].mxu0
      %v457 = vadd.f32 0.0, %v456
      %v458 = vpop.f32.mrb[0].mxu0
      %v459 = vpop.f32.mrb[0].mxu0
      %v460 = vadd.f32 0.0, %v459
      %v461 = vpop.f32.mrb[0].mxu0
      %462 = vmatprep.mubr.bf16.mxu0 0
      %463 = vmatmul.mubr.bf16.gmra.mrb[0].mxu0 %v413
      %v464 = vpop.f32.mrb[0].mxu0
      %v465 = vadd.f32 0.0, %v464
      %v466 = vpop.f32.mrb[0].mxu0
      %v467 = vpop.f32.mrb[0].mxu0
      %v468 = vadd.f32 0.0, %v467
      %v469 = vpop.f32.mrb[0].mxu0
      %470 = vdwg.mxu0
      %v471 = vpack.c.bf16 %v460, %v457
      %v472 = vpack.c.bf16 %v468, %v465
      %s473 = scalar_lea.vmem %s252, 16
      %v474 = vld [vmem:[%s473] sm:$0xf]
      %v475 = vld [vmem:[%s473 + $0x4] sm:$0xf]
      %v476 = vld [vmem:[%s473 + $0x8] sm:$0xf]
      %v477 = vld [vmem:[%s473 + $0xc] sm:$0xf]
      %s478 = scalar_lea.vmem %s262, 4
      %v479 = vld [vmem:[%s478] sm:$0x7]
      %s480 = scalar_lea.vmem %s272, 4
      %v481 = vld [vmem:[%s480] sm:$0x7]
      %v486 = vunpack.c.l.b16 %v474
      %v487 = vunpack.c.l.b16 %v475
      %v488 = vunpack.c.l.b16 %v476
      %v489 = vunpack.c.l.b16 %v477
      %v490 = vpack.c.b16 %v487, %v486
      %v491 = vpack.c.b16 %v489, %v488
      %v493 = vsel %vm299, %v490, 0
      %v496 = vsel %vm299, %v491, 0
      %v499 = vsel %vm299, %v479, 0
      %501 = vmatprep.subr.bf16.mxu0 0
      %502 = vmatpush1.bf16.xpose.msra.mxu0 %v499
      %503 = vmatprep.subr.bf16.mxu0 0
      %504 = vmatpush1.bf16.xpose.msra.mxu0 0
      %505 = vmatprep.subr.bf16.mxu0 0
      %506 = vmatpush1.bf16.xpose.msra.mxu0 0
      %507 = vmatprep.subr.bf16.mxu0 0
      %508 = vmatpush1.bf16.xpose.msra.mxu0 0
      %509 = vmatprep.subr.bf16.mxu0 0
      %510 = vmatpush1.bf16.xpose.msra.mxu0 0
      %511 = vmatprep.subr.bf16.mxu0 0
      %512 = vmatpush1.bf16.xpose.msra.mxu0 0
      %513 = vmatprep.subr.bf16.mxu0 0
      %514 = vmatpush1.bf16.xpose.msra.mxu0 0
      %515 = vmatprep.subr.bf16.mxu0 0
      %516 = vmatpush1.bf16.xpose.msra.mxu0 0
      %517 = vmatprep.subr.bf16.mxu0 0
      %518 = vmatpush1.bf16.xpose.msra.mxu0 0
      %519 = vmatprep.subr.bf16.mxu0 0
      %520 = vmatpush1.bf16.xpose.msra.mxu0 0
      %521 = vmatprep.subr.bf16.mxu0 0
      %522 = vmatpush1.bf16.xpose.msra.mxu0 0
      %523 = vmatprep.subr.bf16.mxu0 0
      %524 = vmatpush1.bf16.xpose.msra.mxu0 0
      %525 = vmatprep.subr.bf16.mxu0 0
      %526 = vmatpush1.bf16.xpose.msra.mxu0 0
      %527 = vmatprep.subr.bf16.mxu0 0
      %528 = vmatpush1.bf16.xpose.msra.mxu0 0
      %529 = vmatprep.subr.bf16.mxu0 0
      %530 = vmatpush1.bf16.xpose.msra.mxu0 0
      %531 = vmatprep.subr.bf16.mxu0 0
      %532 = vmatpush1.bf16.xpose.msra.mxu0 0
      %533 = vmatprep.mubr.bf16.mxu0 0
      %534 = vmatmul.mubr.bf16.gmra.mrb[0].mxu0 %v493
      %v535 = vpop.f32.mrb[0].mxu0
      %v536 = vadd.f32 0.0, %v535
      %v537 = vpop.f32.mrb[0].mxu0
      %v538 = vpop.f32.mrb[0].mxu0
      %v539 = vadd.f32 0.0, %v538
      %v540 = vpop.f32.mrb[0].mxu0
      %541 = vmatprep.mubr.bf16.mxu0 0
      %542 = vmatmul.mubr.bf16.gmra.mrb[0].mxu0 %v496
      %v543 = vpop.f32.mrb[0].mxu0
      %v544 = vadd.f32 0.0, %v543
      %v545 = vpop.f32.mrb[0].mxu0
      %v546 = vpop.f32.mrb[0].mxu0
      %v547 = vadd.f32 0.0, %v546
      %v548 = vpop.f32.mrb[0].mxu0
      %549 = vdwg.mxu0
      %v550 = vmul.f32 %v536, 0.25
      %v551 = vmul.f32 %v539, 0.25
      %v552 = vmul.f32 %v544, 0.25
      %v553 = vmul.f32 %v547, 0.25
      %v554 = vsel %vm362, %v550, -inf
      %555 = vmax.xlane.f32.xlu0 %v554
      %v556 = vpop.xlane.xlu0 %555
      %v557 = vsel %vm362, %v551, -inf
      %558 = vmax.xlane.f32.xlu0 %v557
      %v559 = vpop.xlane.xlu0 %558
      %v560 = vsel %vm362, %v552, -inf
      %561 = vmax.xlane.f32.xlu0 %v560
      %v562 = vpop.xlane.xlu0 %561
      %v563 = vsel %vm362, %v553, -inf
      %564 = vmax.xlane.f32.xlu0 %v563
      %v565 = vpop.xlane.xlu0 %564
      %v566 = vsub.f32 %v550, %v556
      %v567 = vsub.f32 %v551, %v559
      %v568 = vsub.f32 %v552, %v562
      %v569 = vsub.f32 %v553, %v565
      %v570 = vmul.f32 %v566, 1.442695
      %v571 = vpow.pop %v570
      %v572 = vmul.f32 %v567, 1.442695
      %v573 = vpow.pop %v572
      %v574 = vmul.f32 %v568, 1.442695
      %v575 = vpow.pop %v574
      %v576 = vmul.f32 %v569, 1.442695
      %v577 = vpow.pop %v576
      %v578 = vsel %vm362, %v571, 0.0
      %579 = vadd.xlane.f32.xlu0 %v578
      %v580 = vpop.xlane.xlu0 %579
      %v581 = vsel %vm362, %v573, 0.0
      %582 = vadd.xlane.f32.xlu0 %v581
      %v583 = vpop.xlane.xlu0 %582
      %v584 = vsel %vm362, %v575, 0.0
      %585 = vadd.xlane.f32.xlu0 %v584
      %v586 = vpop.xlane.xlu0 %585
      %v587 = vsel %vm362, %v577, 0.0
      %588 = vadd.xlane.f32.xlu0 %v587
      %v589 = vpop.xlane.xlu0 %588
      %v590 = vrcp.pop %v580
      %v591 = vrcp.pop %v583
      %v592 = vrcp.pop %v586
      %v593 = vrcp.pop %v589
      %v594 = vmul.f32 %v571, %v590
      %v595 = vmul.f32 %v573, %v591
      %v596 = vmul.f32 %v575, %v592
      %v597 = vmul.f32 %v577, %v593
      %v598 = vpack.c.bf16 %v595, %v594
      %v599 = vpack.c.bf16 %v597, %v596
      %v601 = vsel %vm362, %v598, 0
      %v604 = vsel %vm362, %v599, 0
      %v607 = vand.u32 %v481, %v418
      %609 = vmatprep.subr.bf16.mxu0 0
      %610 = vmatpush1.bf16.msra.mxu0 %v607
      %611 = vmatprep.subr.bf16.mxu0 0
      %612 = vmatpush1.bf16.msra.mxu0 0
      %613 = vmatprep.subr.bf16.mxu0 0
      %614 = vmatpush1.bf16.msra.mxu0 0
      %615 = vmatprep.subr.bf16.mxu0 0
      %616 = vmatpush1.bf16.msra.mxu0 0
      %617 = vmatprep.subr.bf16.mxu0 0
      %618 = vmatpush1.bf16.msra.mxu0 0
      %619 = vmatprep.subr.bf16.mxu0 0
      %620 = vmatpush1.bf16.msra.mxu0 0
      %621 = vmatprep.subr.bf16.mxu0 0
      %622 = vmatpush1.bf16.msra.mxu0 0
      %623 = vmatprep.subr.bf16.mxu0 0
      %624 = vmatpush1.bf16.msra.mxu0 0
      %625 = vmatprep.subr.bf16.mxu0 0
      %626 = vmatpush1.bf16.msra.mxu0 0
      %627 = vmatprep.subr.bf16.mxu0 0
      %628 = vmatpush1.bf16.msra.mxu0 0
      %629 = vmatprep.subr.bf16.mxu0 0
      %630 = vmatpush1.bf16.msra.mxu0 0
      %631 = vmatprep.subr.bf16.mxu0 0
      %632 = vmatpush1.bf16.msra.mxu0 0
      %633 = vmatprep.subr.bf16.mxu0 0
      %634 = vmatpush1.bf16.msra.mxu0 0
      %635 = vmatprep.subr.bf16.mxu0 0
      %636 = vmatpush1.bf16.msra.mxu0 0
      %637 = vmatprep.subr.bf16.mxu0 0
      %638 = vmatpush1.bf16.msra.mxu0 0
      %639 = vmatprep.subr.bf16.mxu0 0
      %640 = vmatpush1.bf16.msra.mxu0 0
      %641 = vmatprep.mubr.bf16.mxu0 0
      %642 = vmatmul.mubr.bf16.gmra.mrb[0].mxu0 %v601
      %v643 = vpop.f32.mrb[0].mxu0
      %v644 = vadd.f32 0.0, %v643
      %v645 = vpop.f32.mrb[0].mxu0
      %v646 = vpop.f32.mrb[0].mxu0
      %v647 = vadd.f32 0.0, %v646
      %v648 = vpop.f32.mrb[0].mxu0
      %649 = vmatprep.mubr.bf16.mxu0 0
      %650 = vmatmul.mubr.bf16.gmra.mrb[0].mxu0 %v604
      %v651 = vpop.f32.mrb[0].mxu0
      %v652 = vadd.f32 0.0, %v651
      %v653 = vpop.f32.mrb[0].mxu0
      %v654 = vpop.f32.mrb[0].mxu0
      %v655 = vadd.f32 0.0, %v654
      %v656 = vpop.f32.mrb[0].mxu0
      %657 = vdwg.mxu0
      %v658 = vpack.c.bf16 %v647, %v644
      %v659 = vpack.c.bf16 %v655, %v652
      %s660 = scalar_lea.vmem %s252, 32
      %v661 = vld [vmem:[%s660] sm:$0xf]
      %v662 = vld [vmem:[%s660 + $0x4] sm:$0xf]
      %v663 = vld [vmem:[%s660 + $0x8] sm:$0xf]
      %v664 = vld [vmem:[%s660 + $0xc] sm:$0xf]
      %s665 = scalar_lea.vmem %s262, 8
      %v666 = vld [vmem:[%s665] sm:$0x7]
      %s667 = scalar_lea.vmem %s272, 8
      %v668 = vld [vmem:[%s667] sm:$0x7]
      %v673 = vunpack.c.l.b16 %v661
      %v674 = vunpack.c.l.b16 %v662
      %v675 = vunpack.c.l.b16 %v663
      %v676 = vunpack.c.l.b16 %v664
      %v677 = vpack.c.b16 %v674, %v673
      %v678 = vpack.c.b16 %v676, %v675
      %v680 = vsel %vm299, %v677, 0
      %v683 = vsel %vm299, %v678, 0
      %v686 = vsel %vm299, %v666, 0
      %688 = vmatprep.subr.bf16.mxu0 0
      %689 = vmatpush1.bf16.xpose.msra.mxu0 %v686
      %690 = vmatprep.subr.bf16.mxu0 0
      %691 = vmatpush1.bf16.xpose.msra.mxu0 0
      %692 = vmatprep.subr.bf16.mxu0 0
      %693 = vmatpush1.bf16.xpose.msra.mxu0 0
      %694 = vmatprep.subr.bf16.mxu0 0
      %695 = vmatpush1.bf16.xpose.msra.mxu0 0
      %696 = vmatprep.subr.bf16.mxu0 0
      %697 = vmatpush1.bf16.xpose.msra.mxu0 0
      %698 = vmatprep.subr.bf16.mxu0 0
      %699 = vmatpush1.bf16.xpose.msra.mxu0 0
      %700 = vmatprep.subr.bf16.mxu0 0
      %701 = vmatpush1.bf16.xpose.msra.mxu0 0
      %702 = vmatprep.subr.bf16.mxu0 0
      %703 = vmatpush1.bf16.xpose.msra.mxu0 0
      %704 = vmatprep.subr.bf16.mxu0 0
      %705 = vmatpush1.bf16.xpose.msra.mxu0 0
      %706 = vmatprep.subr.bf16.mxu0 0
      %707 = vmatpush1.bf16.xpose.msra.mxu0 0
      %708 = vmatprep.subr.bf16.mxu0 0
      %709 = vmatpush1.bf16.xpose.msra.mxu0 0
      %710 = vmatprep.subr.bf16.mxu0 0
      %711 = vmatpush1.bf16.xpose.msra.mxu0 0
      %712 = vmatprep.subr.bf16.mxu0 0
      %713 = vmatpush1.bf16.xpose.msra.mxu0 0
      %714 = vmatprep.subr.bf16.mxu0 0
      %715 = vmatpush1.bf16.xpose.msra.mxu0 0
      %716 = vmatprep.subr.bf16.mxu0 0
      %717 = vmatpush1.bf16.xpose.msra.mxu0 0
      %718 = vmatprep.subr.bf16.mxu0 0
      %719 = vmatpush1.bf16.xpose.msra.mxu0 0
      %720 = vmatprep.mubr.bf16.mxu0 0
      %721 = vmatmul.mubr.bf16.gmra.mrb[0].mxu0 %v680
      %v722 = vpop.f32.mrb[0].mxu0
      %v723 = vadd.f32 0.0, %v722
      %v724 = vpop.f32.mrb[0].mxu0
      %v725 = vpop.f32.mrb[0].mxu0
      %v726 = vadd.f32 0.0, %v725
      %v727 = vpop.f32.mrb[0].mxu0
      %728 = vmatprep.mubr.bf16.mxu0 0
      %729 = vmatmul.mubr.bf16.gmra.mrb[0].mxu0 %v683
      %v730 = vpop.f32.mrb[0].mxu0
      %v731 = vadd.f32 0.0, %v730
      %v732 = vpop.f32.mrb[0].mxu0
      %v733 = vpop.f32.mrb[0].mxu0
      %v734 = vadd.f32 0.0, %v733
      %v735 = vpop.f32.mrb[0].mxu0
      %736 = vdwg.mxu0
      %v737 = vmul.f32 %v723, 0.25
      %v738 = vmul.f32 %v726, 0.25
      %v739 = vmul.f32 %v731, 0.25
      %v740 = vmul.f32 %v734, 0.25
      %v741 = vsel %vm362, %v737, -inf
      %742 = vmax.xlane.f32.xlu0 %v741
      %v743 = vpop.xlane.xlu0 %742
      %v744 = vsel %vm362, %v738, -inf
      %745 = vmax.xlane.f32.xlu0 %v744
      %v746 = vpop.xlane.xlu0 %745
      %v747 = vsel %vm362, %v739, -inf
      %748 = vmax.xlane.f32.xlu0 %v747
      %v749 = vpop.xlane.xlu0 %748
      %v750 = vsel %vm362, %v740, -inf
      %751 = vmax.xlane.f32.xlu0 %v750
      %v752 = vpop.xlane.xlu0 %751
      %v753 = vsub.f32 %v737, %v743
      %v754 = vsub.f32 %v738, %v746
      %v755 = vsub.f32 %v739, %v749
      %v756 = vsub.f32 %v740, %v752
      %v757 = vmul.f32 %v753, 1.442695
      %v758 = vpow.pop %v757
      %v759 = vmul.f32 %v754, 1.442695
      %v760 = vpow.pop %v759
      %v761 = vmul.f32 %v755, 1.442695
      %v762 = vpow.pop %v761
      %v763 = vmul.f32 %v756, 1.442695
      %v764 = vpow.pop %v763
      %v765 = vsel %vm362, %v758, 0.0
      %766 = vadd.xlane.f32.xlu0 %v765
      %v767 = vpop.xlane.xlu0 %766
      %v768 = vsel %vm362, %v760, 0.0
      %769 = vadd.xlane.f32.xlu0 %v768
      %v770 = vpop.xlane.xlu0 %769
      %v771 = vsel %vm362, %v762, 0.0
      %772 = vadd.xlane.f32.xlu0 %v771
      %v773 = vpop.xlane.xlu0 %772
      %v774 = vsel %vm362, %v764, 0.0
      %775 = vadd.xlane.f32.xlu0 %v774
      %v776 = vpop.xlane.xlu0 %775
      %v777 = vrcp.pop %v767
      %v778 = vrcp.pop %v770
      %v779 = vrcp.pop %v773
      %v780 = vrcp.pop %v776
      %v781 = vmul.f32 %v758, %v777
      %v782 = vmul.f32 %v760, %v778
      %v783 = vmul.f32 %v762, %v779
      %v784 = vmul.f32 %v764, %v780
      %v785 = vpack.c.bf16 %v782, %v781
      %v786 = vpack.c.bf16 %v784, %v783
      %v788 = vsel %vm362, %v785, 0
      %v791 = vsel %vm362, %v786, 0
      %v794 = vand.u32 %v668, %v418
      %796 = vmatprep.subr.bf16.mxu0 0
      %797 = vmatpush1.bf16.msra.mxu0 %v794
      %798 = vmatprep.subr.bf16.mxu0 0
      %799 = vmatpush1.bf16.msra.mxu0 0
      %800 = vmatprep.subr.bf16.mxu0 0
      %801 = vmatpush1.bf16.msra.mxu0 0
      %802 = vmatprep.subr.bf16.mxu0 0
      %803 = vmatpush1.bf16.msra.mxu0 0
      %804 = vmatprep.subr.bf16.mxu0 0
      %805 = vmatpush1.bf16.msra.mxu0 0
      %806 = vmatprep.subr.bf16.mxu0 0
      %807 = vmatpush1.bf16.msra.mxu0 0
      %808 = vmatprep.subr.bf16.mxu0 0
      %809 = vmatpush1.bf16.msra.mxu0 0
      %810 = vmatprep.subr.bf16.mxu0 0
      %811 = vmatpush1.bf16.msra.mxu0 0
      %812 = vmatprep.subr.bf16.mxu0 0
      %813 = vmatpush1.bf16.msra.mxu0 0
      %814 = vmatprep.subr.bf16.mxu0 0
      %815 = vmatpush1.bf16.msra.mxu0 0
      %816 = vmatprep.subr.bf16.mxu0 0
      %817 = vmatpush1.bf16.msra.mxu0 0
      %818 = vmatprep.subr.bf16.mxu0 0
      %819 = vmatpush1.bf16.msra.mxu0 0
      %820 = vmatprep.subr.bf16.mxu0 0
      %821 = vmatpush1.bf16.msra.mxu0 0
      %822 = vmatprep.subr.bf16.mxu0 0
      %823 = vmatpush1.bf16.msra.mxu0 0
      %824 = vmatprep.subr.bf16.mxu0 0
      %825 = vmatpush1.bf16.msra.mxu0 0
      %826 = vmatprep.subr.bf16.mxu0 0
      %827 = vmatpush1.bf16.msra.mxu0 0
      %828 = vmatprep.mubr.bf16.mxu0 0
      %829 = vmatmul.mubr.bf16.gmra.mrb[0].mxu0 %v788
      %v830 = vpop.f32.mrb[0].mxu0
      %v831 = vadd.f32 0.0, %v830
      %v832 = vpop.f32.mrb[0].mxu0
      %v833 = vpop.f32.mrb[0].mxu0
      %v834 = vadd.f32 0.0, %v833
      %v835 = vpop.f32.mrb[0].mxu0
      %836 = vmatprep.mubr.bf16.mxu0 0
      %837 = vmatmul.mubr.bf16.gmra.mrb[0].mxu0 %v791
      %v838 = vpop.f32.mrb[0].mxu0
      %v839 = vadd.f32 0.0, %v838
      %v840 = vpop.f32.mrb[0].mxu0
      %v841 = vpop.f32.mrb[0].mxu0
      %v842 = vadd.f32 0.0, %v841
      %v843 = vpop.f32.mrb[0].mxu0
      %844 = vdwg.mxu0
      %v845 = vpack.c.bf16 %v834, %v831
      %v846 = vpack.c.bf16 %v842, %v839
      %s847 = scalar_lea.vmem %s252, 48
      %v848 = vld [vmem:[%s847] sm:$0xf]
      %v849 = vld [vmem:[%s847 + $0x4] sm:$0xf]
      %v850 = vld [vmem:[%s847 + $0x8] sm:$0xf]
      %v851 = vld [vmem:[%s847 + $0xc] sm:$0xf]
      %s852 = scalar_lea.vmem %s262, 12
      %v853 = vld [vmem:[%s852] sm:$0x7]
      %s854 = scalar_lea.vmem %s272, 12
      %v855 = vld [vmem:[%s854] sm:$0x7]
      %v860 = vunpack.c.l.b16 %v848
      %v861 = vunpack.c.l.b16 %v849
      %v862 = vunpack.c.l.b16 %v850
      %v863 = vunpack.c.l.b16 %v851
      %v864 = vpack.c.b16 %v861, %v860
      %v865 = vpack.c.b16 %v863, %v862
      %v867 = vsel %vm299, %v864, 0
      %v870 = vsel %vm299, %v865, 0
      %v873 = vsel %vm299, %v853, 0
      %875 = vmatprep.subr.bf16.mxu0 0
      %876 = vmatpush1.bf16.xpose.msra.mxu0 %v873
      %877 = vmatprep.subr.bf16.mxu0 0
      %878 = vmatpush1.bf16.xpose.msra.mxu0 0
      %879 = vmatprep.subr.bf16.mxu0 0
      %880 = vmatpush1.bf16.xpose.msra.mxu0 0
      %881 = vmatprep.subr.bf16.mxu0 0
      %882 = vmatpush1.bf16.xpose.msra.mxu0 0
      %883 = vmatprep.subr.bf16.mxu0 0
      %884 = vmatpush1.bf16.xpose.msra.mxu0 0
      %885 = vmatprep.subr.bf16.mxu0 0
      %886 = vmatpush1.bf16.xpose.msra.mxu0 0
      %887 = vmatprep.subr.bf16.mxu0 0
      %888 = vmatpush1.bf16.xpose.msra.mxu0 0
      %889 = vmatprep.subr.bf16.mxu0 0
      %890 = vmatpush1.bf16.xpose.msra.mxu0 0
      %891 = vmatprep.subr.bf16.mxu0 0
      %892 = vmatpush1.bf16.xpose.msra.mxu0 0
      %893 = vmatprep.subr.bf16.mxu0 0
      %894 = vmatpush1.bf16.xpose.msra.mxu0 0
      %895 = vmatprep.subr.bf16.mxu0 0
      %896 = vmatpush1.bf16.xpose.msra.mxu0 0
      %897 = vmatprep.subr.bf16.mxu0 0
      %898 = vmatpush1.bf16.xpose.msra.mxu0 0
      %899 = vmatprep.subr.bf16.mxu0 0
      %900 = vmatpush1.bf16.xpose.msra.mxu0 0
      %901 = vmatprep.subr.bf16.mxu0 0
      %902 = vmatpush1.bf16.xpose.msra.mxu0 0
      %903 = vmatprep.subr.bf16.mxu0 0
      %904 = vmatpush1.bf16.xpose.msra.mxu0 0
      %905 = vmatprep.subr.bf16.mxu0 0
      %906 = vmatpush1.bf16.xpose.msra.mxu0 0
      %907 = vmatprep.mubr.bf16.mxu0 0
      %908 = vmatmul.mubr.bf16.gmra.mrb[0].mxu0 %v867
      %v909 = vpop.f32.mrb[0].mxu0
      %v910 = vadd.f32 0.0, %v909
      %v911 = vpop.f32.mrb[0].mxu0
      %v912 = vpop.f32.mrb[0].mxu0
      %v913 = vadd.f32 0.0, %v912
      %v914 = vpop.f32.mrb[0].mxu0
      %915 = vmatprep.mubr.bf16.mxu0 0
      %916 = vmatmul.mubr.bf16.gmra.mrb[0].mxu0 %v870
      %v917 = vpop.f32.mrb[0].mxu0
      %v918 = vadd.f32 0.0, %v917
      %v919 = vpop.f32.mrb[0].mxu0
      %v920 = vpop.f32.mrb[0].mxu0
      %v921 = vadd.f32 0.0, %v920
      %v922 = vpop.f32.mrb[0].mxu0
      %923 = vdwg.mxu0
      %v924 = vmul.f32 %v910, 0.25
      %v925 = vmul.f32 %v913, 0.25
      %v926 = vmul.f32 %v918, 0.25
      %v927 = vmul.f32 %v921, 0.25
      %v928 = vsel %vm362, %v924, -inf
      %929 = vmax.xlane.f32.xlu0 %v928
      %v930 = vpop.xlane.xlu0 %929
      %v931 = vsel %vm362, %v925, -inf
      %932 = vmax.xlane.f32.xlu0 %v931
      %v933 = vpop.xlane.xlu0 %932
      %v934 = vsel %vm362, %v926, -inf
      %935 = vmax.xlane.f32.xlu0 %v934
      %v936 = vpop.xlane.xlu0 %935
      %v937 = vsel %vm362, %v927, -inf
      %938 = vmax.xlane.f32.xlu0 %v937
      %v939 = vpop.xlane.xlu0 %938
      %v940 = vsub.f32 %v924, %v930
      %v941 = vsub.f32 %v925, %v933
      %v942 = vsub.f32 %v926, %v936
      %v943 = vsub.f32 %v927, %v939
      %v944 = vmul.f32 %v940, 1.442695
      %v945 = vpow.pop %v944
      %v946 = vmul.f32 %v941, 1.442695
      %v947 = vpow.pop %v946
      %v948 = vmul.f32 %v942, 1.442695
      %v949 = vpow.pop %v948
      %v950 = vmul.f32 %v943, 1.442695
      %v951 = vpow.pop %v950
      %v952 = vsel %vm362, %v945, 0.0
      %953 = vadd.xlane.f32.xlu0 %v952
      %v954 = vpop.xlane.xlu0 %953
      %v955 = vsel %vm362, %v947, 0.0
      %956 = vadd.xlane.f32.xlu0 %v955
      %v957 = vpop.xlane.xlu0 %956
      %v958 = vsel %vm362, %v949, 0.0
      %959 = vadd.xlane.f32.xlu0 %v958
      %v960 = vpop.xlane.xlu0 %959
      %v961 = vsel %vm362, %v951, 0.0
      %962 = vadd.xlane.f32.xlu0 %v961
      %v963 = vpop.xlane.xlu0 %962
      %v964 = vrcp.pop %v954
      %v965 = vrcp.pop %v957
      %v966 = vrcp.pop %v960
      %v967 = vrcp.pop %v963
      %v968 = vmul.f32 %v945, %v964
      %v969 = vmul.f32 %v947, %v965
      %v970 = vmul.f32 %v949, %v966
      %v971 = vmul.f32 %v951, %v967
      %v972 = vpack.c.bf16 %v969, %v968
      %v973 = vpack.c.bf16 %v971, %v970
      %v975 = vsel %vm362, %v972, 0
      %v978 = vsel %vm362, %v973, 0
      %v981 = vand.u32 %v855, %v418
      %983 = vmatprep.subr.bf16.mxu0 0
      %984 = vmatpush1.bf16.msra.mxu0 %v981
      %985 = vmatprep.subr.bf16.mxu0 0
      %986 = vmatpush1.bf16.msra.mxu0 0
      %987 = vmatprep.subr.bf16.mxu0 0
      %988 = vmatpush1.bf16.msra.mxu0 0
      %989 = vmatprep.subr.bf16.mxu0 0
      %990 = vmatpush1.bf16.msra.mxu0 0
      %991 = vmatprep.subr.bf16.mxu0 0
      %992 = vmatpush1.bf16.msra.mxu0 0
      %993 = vmatprep.subr.bf16.mxu0 0
      %994 = vmatpush1.bf16.msra.mxu0 0
      %995 = vmatprep.subr.bf16.mxu0 0
      %996 = vmatpush1.bf16.msra.mxu0 0
      %997 = vmatprep.subr.bf16.mxu0 0
      %998 = vmatpush1.bf16.msra.mxu0 0
      %999 = vmatprep.subr.bf16.mxu0 0
      %1000 = vmatpush1.bf16.msra.mxu0 0
      %1001 = vmatprep.subr.bf16.mxu0 0
      %1002 = vmatpush1.bf16.msra.mxu0 0
      %1003 = vmatprep.subr.bf16.mxu0 0
      %1004 = vmatpush1.bf16.msra.mxu0 0
      %1005 = vmatprep.subr.bf16.mxu0 0
      %1006 = vmatpush1.bf16.msra.mxu0 0
      %1007 = vmatprep.subr.bf16.mxu0 0
      %1008 = vmatpush1.bf16.msra.mxu0 0
      %1009 = vmatprep.subr.bf16.mxu0 0
      %1010 = vmatpush1.bf16.msra.mxu0 0
      %1011 = vmatprep.subr.bf16.mxu0 0
      %1012 = vmatpush1.bf16.msra.mxu0 0
      %1013 = vmatprep.subr.bf16.mxu0 0
      %1014 = vmatpush1.bf16.msra.mxu0 0
      %1015 = vmatprep.mubr.bf16.mxu0 0
      %1016 = vmatmul.mubr.bf16.gmra.mrb[0].mxu0 %v975
      %v1017 = vpop.f32.mrb[0].mxu0
      %v1018 = vadd.f32 0.0, %v1017
      %v1019 = vpop.f32.mrb[0].mxu0
      %v1020 = vpop.f32.mrb[0].mxu0
      %v1021 = vadd.f32 0.0, %v1020
      %v1022 = vpop.f32.mrb[0].mxu0
      %1023 = vmatprep.mubr.bf16.mxu0 0
      %1024 = vmatmul.mubr.bf16.gmra.mrb[0].mxu0 %v978
      %v1025 = vpop.f32.mrb[0].mxu0
      %v1026 = vadd.f32 0.0, %v1025
      %v1027 = vpop.f32.mrb[0].mxu0
      %v1028 = vpop.f32.mrb[0].mxu0
      %v1029 = vadd.f32 0.0, %v1028
      %v1030 = vpop.f32.mrb[0].mxu0
      %1031 = vdwg.mxu0
      %v1032 = vpack.c.bf16 %v1021, %v1018
      %v1033 = vpack.c.bf16 %v1029, %v1026
      %1036 = vrot.lane.b32.xlu0 %v658, 16
      %v1037 = vpop.permute.xlu0 %1036
      %1038 = vrot.lane.b32.xlu0 %v659, 16
      %v1039 = vpop.permute.xlu0 %1038
      %1042 = vrot.lane.b32.xlu0 %v845, 32
      %v1043 = vpop.permute.xlu0 %1042
      %1044 = vrot.lane.b32.xlu0 %v846, 32
      %v1045 = vpop.permute.xlu0 %1044
      %1048 = vrot.lane.b32.xlu0 %v1032, 48
      %v1049 = vpop.permute.xlu0 %1048
      %1050 = vrot.lane.b32.xlu0 %v1033, 48
      %v1051 = vpop.permute.xlu0 %1050
      %v1054 = vsel %vm299, %v471, %v1037
      %v1057 = vsel %vm299, %v472, %v1039
      %vm1058 = vcmask 261120
      %v1060 = vsel %vm1058, %v1054, %v1043
      %v1062 = vsel %vm1058, %v1057, %v1045
      %vm1063 = vcmask 392192
      %v1065 = vsel %vm1063, %v1060, %v1049
      %v1067 = vsel %vm1063, %v1062, %v1051
      %v1070 = vunpack.c.l.b16 %v1065
      %v1071 = vunpack.c.h.b16 %v1065
      %v1072 = vunpack.c.l.b16 %v1067
      %v1073 = vunpack.c.h.b16 %v1067
      %v1074 = vpack.c.b16 %v1070, %v1070
      %v1075 = vpack.c.b16 %v1071, %v1071
      %v1076 = vpack.c.b16 %v1072, %v1072
      %v1077 = vpack.c.b16 %v1073, %v1073
      %vm1082 = vcmask 519168
      %1083 = vst.msk [vmem:[%s281] sm:$0xf] %vm1082, %v1074
      %1084 = vst.msk [vmem:[%s281 + $0x4] sm:$0xf] %vm1082, %v1075
      %1085 = vst.msk [vmem:[%s281 + $0x8] sm:$0xf] %vm1082, %v1076
      %1086 = vst.msk [vmem:[%s281 + $0xc] sm:$0xf] %vm1082, %v1077
      %p1087 = scmp.lt.s32.totalorder %s18, 1
      %s1088 = scalar_select %p1087, %s18, 1
      %p1089 = scmp.lt.s32.totalorder %s19, 0
      %s1090 = scalar_select %p1089, %s19, 0
      %s1091 = smul.addr %s1088, 4
      %s1092 = sadd.s32 %s1090, %s1091
      %s1093 = smul.addr %s1092, 4
      %s1094 = scalar_lea.vmem %s3, %s1093
      // Predicated region
      $region33: #{_lambda_.51} parent=31 // pred_check
        %p1095 = pneg %p130
      $region34: #{_lambda_.51} parent=31 // pred_check_branch
        %1097 = sbr.rel (%p1095) target = $region36
      $region35: #{_lambda_.51} parent=31 // pred_region
        _
      $region36: #{_lambda_.51} parent=31 // pred_fallthru
        _
    $region32: #{_lambda_.51} parent=5 // pred_fallthru
      _
    %p1098 = scmp.le.s32.totalorder 2, %s9
    // Predicated region
    $region37: #{_lambda_.51} parent=5 // pred_check
      %p1099 = pneg %p1098
    $region38: #{_lambda_.51} parent=5 // pred_check_branch
      %1101 = sbr.rel (%p1099) target = $region40
    $region39: #{_lambda_.51} parent=5 // pred_region
      %s1102 = ssub.s32 %s9, 2
      // Predicated region
      $region41: #{_lambda_.51} parent=39 // pred_check
        %p1103 = pneg %p136
      $region42: #{_lambda_.51} parent=39 // pred_check_branch
        %1105 = sbr.rel (%p1103) target = $region44
      $region43: #{_lambda_.51} parent=39 // pred_region
        %p1106 = scmp.lt.s32.totalorder %s20, 1
        %s1107 = scalar_select %p1106, %s20, 1
        %p1108 = scmp.lt.s32.totalorder %s21, 0
        %s1109 = scalar_select %p1108, %s21, 0
        %s1110 = smul.addr %s1107, 4
        %s1111 = sadd.s32 %s1109, %s1110
        %s1112 = smul.addr %s1111, 4
        %s1113 = scalar_lea.vmem %s3, %s1112
      $region44: #{_lambda_.51} parent=39 // pred_fallthru
        _
    $region40: #{_lambda_.51} parent=5 // pred_fallthru
      _
  $region6: #{_lambda_.51} parent=0 // loop_footer
    %s13 = sadd.s32 1, %s9
  $region7: #{_lambda_.51} parent=0 // loop_footer_branch
    %8 = sbr.rel target = $region3
  $region8: #{_lambda_.51} parent=0 // loop_exit
    _

// kernel: _lambda_.65
$region0: #{_lambda_.65}
  #allocation0 [shape = 'u32[]', space=smem, size = 0x4, offset = 0x4, fixed_abs, tag = 'smem constant byte address 0x4 - core index']
  #allocation1 [shape = 'u32[144,128]{1,0:T(1,128)}', space=vmem, size = 0x12000, scoped, tag = 'internal scratch']
  #allocation2 [shape = 'f32[64,128]{1,0:T(8,128)}', space=vmem, size = 0x8000, scoped, tag = 'scratch operand']
  %s0 = inlined_call_operand.vmem [shape: bf16[64,128], index: 0, kind: input, shape index: {}]
  %s1 = inlined_call_operand.vmem [shape: bf16[128,128], index: 1, kind: input, shape index: {}]
  %s2 = inlined_call_operand.vmem [shape: f32[1,128], index: 2, kind: input, shape index: {}]
  %s3 = inlined_call_operand.hbm [shape: f32[64,128], index: 3, kind: output, shape index: {}]
  %s4 = sld [smem:[#allocation0]]
  $region30: #{_lambda_.65} parent=0
    _
  %s6 = ssub.s32 1, %s4
  %s7 = scalar_select 0, %s6, %s4
  $region1: #{_lambda_.65} parent=0
    #allocation3 [shape = 'u8[32768]{0}', space=vmem, size = 0x8000, scoped, tag = 'output window, operand 0, single buffered']
    #allocation4 [shape = 's32[1]{0}', space=sflag, size = 0x4, scoped, tag = 'scoped memory for _lambda_.65']
    %8 = vsyncpa [#allocation4], 0
    // Predicated region
    $region2: #{_lambda_.65} parent=1 // pred_check
      _
    $region3: #{_lambda_.65} parent=1 // pred_check_branch
      %10 = sbr.rel (0) target = $region5
    $region4: #{_lambda_.65} parent=1 // pred_region
      _
    $region5: #{_lambda_.65} parent=1 // pred_fallthru
      _
    // Predicated region
    $region6: #{_lambda_.65} parent=1 // pred_check
      _
    $region7: #{_lambda_.65} parent=1 // pred_check_branch
      %12 = sbr.rel (0) target = $region9
    $region8: #{_lambda_.65} parent=1 // pred_region
      _
    $region9: #{_lambda_.65} parent=1 // pred_fallthru
      _
    // Predicated region
    $region10: #{_lambda_.65} parent=1 // pred_check
      _
    $region11: #{_lambda_.65} parent=1 // pred_check_branch
      %14 = sbr.rel (0) target = $region13
    $region12: #{_lambda_.65} parent=1 // pred_region
      _
    $region13: #{_lambda_.65} parent=1 // pred_fallthru
      _
    %p16 = scmp.eq.s32.totalorder 0, 0
    // Predicated region
    $region14: #{_lambda_.65} parent=1 // pred_check
      %p17 = pneg %p16
    $region15: #{_lambda_.65} parent=1 // pred_check_branch
      %19 = sbr.rel (%p17) target = $region17
    $region16: #{_lambda_.65} parent=1 // pred_region
      %20 = vst [vmem:[#allocation2] sm:$0xff] 0.0
      %21 = vst [vmem:[#allocation2 + $0x8] sm:$0xff] 0.0
      %22 = vst [vmem:[#allocation2 + $0x10] sm:$0xff] 0.0
      %23 = vst [vmem:[#allocation2 + $0x18] sm:$0xff] 0.0
      %24 = vst [vmem:[#allocation2 + $0x20] sm:$0xff] 0.0
      %25 = vst [vmem:[#allocation2 + $0x28] sm:$0xff] 0.0
      %26 = vst [vmem:[#allocation2 + $0x30] sm:$0xff] 0.0
      %27 = vst [vmem:[#allocation2 + $0x38] sm:$0xff] 0.0
    $region17: #{_lambda_.65} parent=1 // pred_fallthru
      _
    %v28 = vld [vmem:[#allocation2] sm:$0xff]
    %v29 = vld [vmem:[#allocation2 + $0x8] sm:$0xff]
    %v30 = vld [vmem:[#allocation2 + $0x10] sm:$0xff]
    %v31 = vld [vmem:[#allocation2 + $0x18] sm:$0xff]
    %v32 = vld [vmem:[#allocation2 + $0x20] sm:$0xff]
    %v33 = vld [vmem:[#allocation2 + $0x28] sm:$0xff]
    %v34 = vld [vmem:[#allocation2 + $0x30] sm:$0xff]
    %v35 = vld [vmem:[#allocation2 + $0x38] sm:$0xff]
    %v36 = vld [vmem:[%s0] sm:$0xf]
    %v37 = vld [vmem:[%s0 + $0x4] sm:$0xf]
    %v38 = vld [vmem:[%s0 + $0x8] sm:$0xf]
    %v39 = vld [vmem:[%s0 + $0xc] sm:$0xf]
    %v40 = vld [vmem:[%s0 + $0x10] sm:$0xf]
    %v41 = vld [vmem:[%s0 + $0x14] sm:$0xf]
    %v42 = vld [vmem:[%s0 + $0x18] sm:$0xf]
    %v43 = vld [vmem:[%s0 + $0x1c] sm:$0xf]
    %v44 = vld [vmem:[%s1] sm:$0xf]
    %v45 = vld [vmem:[%s1 + $0x4] sm:$0xf]
    %v46 = vld [vmem:[%s1 + $0x8] sm:$0xf]
    %v47 = vld [vmem:[%s1 + $0xc] sm:$0xf]
    %v48 = vld [vmem:[%s1 + $0x10] sm:$0xf]
    %v49 = vld [vmem:[%s1 + $0x14] sm:$0xf]
    %v50 = vld [vmem:[%s1 + $0x18] sm:$0xf]
    %v51 = vld [vmem:[%s1 + $0x1c] sm:$0xf]
    %v52 = vld [vmem:[%s1 + $0x20] sm:$0xf]
    %v53 = vld [vmem:[%s1 + $0x24] sm:$0xf]
    %v54 = vld [vmem:[%s1 + $0x28] sm:$0xf]
    %v55 = vld [vmem:[%s1 + $0x2c] sm:$0xf]
    %v56 = vld [vmem:[%s1 + $0x30] sm:$0xf]
    %v57 = vld [vmem:[%s1 + $0x34] sm:$0xf]
    %v58 = vld [vmem:[%s1 + $0x38] sm:$0xf]
    %v59 = vld [vmem:[%s1 + $0x3c] sm:$0xf]
    %v68 = vunpack.c.l.b16 %v36
    %v69 = vunpack.c.l.b16 %v37
    %v70 = vunpack.c.l.b16 %v38
    %v71 = vunpack.c.l.b16 %v39
    %v72 = vunpack.c.l.b16 %v40
    %v73 = vunpack.c.l.b16 %v41
    %v74 = vunpack.c.l.b16 %v42
    %v75 = vunpack.c.l.b16 %v43
    %v76 = vpack.c.b16 %v69, %v68
    %v77 = vpack.c.b16 %v71, %v70
    %v78 = vpack.c.b16 %v73, %v72
    %v79 = vpack.c.b16 %v75, %v74
    %v100 = vunpack.c.l.b16 %v44
    %v101 = vunpack.c.l.b16 %v45
    %v102 = vunpack.c.l.b16 %v46
    %v103 = vunpack.c.l.b16 %v47
    %v104 = vunpack.c.l.b16 %v48
    %v105 = vunpack.c.l.b16 %v49
    %v106 = vunpack.c.l.b16 %v50
    %v107 = vunpack.c.l.b16 %v51
    %v108 = vunpack.c.l.b16 %v52
    %v109 = vunpack.c.l.b16 %v53
    %v110 = vunpack.c.l.b16 %v54
    %v111 = vunpack.c.l.b16 %v55
    %v112 = vunpack.c.l.b16 %v56
    %v113 = vunpack.c.l.b16 %v57
    %v114 = vunpack.c.l.b16 %v58
    %v115 = vunpack.c.l.b16 %v59
    %v116 = vpack.c.b16 %v101, %v100
    %v117 = vpack.c.b16 %v103, %v102
    %v118 = vpack.c.b16 %v105, %v104
    %v119 = vpack.c.b16 %v107, %v106
    %v120 = vpack.c.b16 %v109, %v108
    %v121 = vpack.c.b16 %v111, %v110
    %v122 = vpack.c.b16 %v113, %v112
    %v123 = vpack.c.b16 %v115, %v114
    %132 = vmatprep.subr.bf16.mxu0 0
    %133 = vmatpush1.bf16.msra.mxu0 %v116
    %134 = vmatprep.subr.bf16.mxu0 0
    %135 = vmatpush1.bf16.msra.mxu0 %v117
    %136 = vmatprep.subr.bf16.mxu0 0
    %137 = vmatpush1.bf16.msra.mxu0 %v118
    %138 = vmatprep.subr.bf16.mxu0 0
    %139 = vmatpush1.bf16.msra.mxu0 %v119
    %140 = vmatprep.subr.bf16.mxu0 0
    %141 = vmatpush1.bf16.msra.mxu0 %v120
    %142 = vmatprep.subr.bf16.mxu0 0
    %143 = vmatpush1.bf16.msra.mxu0 %v121
    %144 = vmatprep.subr.bf16.mxu0 0
    %145 = vmatpush1.bf16.msra.mxu0 %v122
    %146 = vmatprep.subr.bf16.mxu0 0
    %147 = vmatpush1.bf16.msra.mxu0 %v123
    %148 = vmatprep.subr.bf16.mxu0 0
    %149 = vmatpush1.bf16.msra.mxu0 0
    %150 = vmatprep.subr.bf16.mxu0 0
    %151 = vmatpush1.bf16.msra.mxu0 0
    %152 = vmatprep.subr.bf16.mxu0 0
    %153 = vmatpush1.bf16.msra.mxu0 0
    %154 = vmatprep.subr.bf16.mxu0 0
    %155 = vmatpush1.bf16.msra.mxu0 0
    %156 = vmatprep.subr.bf16.mxu0 0
    %157 = vmatpush1.bf16.msra.mxu0 0
    %158 = vmatprep.subr.bf16.mxu0 0
    %159 = vmatpush1.bf16.msra.mxu0 0
    %160 = vmatprep.subr.bf16.mxu0 0
    %161 = vmatpush1.bf16.msra.mxu0 0
    %162 = vmatprep.subr.bf16.mxu0 0
    %163 = vmatpush1.bf16.msra.mxu0 0
    %164 = vmatprep.mubr.bf16.mxu0 0
    %165 = vmatmul.mubr.bf16.gmra.mrb[0].mxu0 %v76
    %v166 = vpop.f32.mrb[0].mxu0
    %v167 = vadd.f32 0.0, %v166
    %v168 = vpop.f32.mrb[0].mxu0
    %v169 = vpop.f32.mrb[0].mxu0
    %v170 = vadd.f32 0.0, %v169
    %v171 = vpop.f32.mrb[0].mxu0
    %172 = vmatprep.mubr.bf16.mxu0 0
    %173 = vmatmul.mubr.bf16.gmra.mrb[0].mxu0 %v77
    %v174 = vpop.f32.mrb[0].mxu0
    %v175 = vadd.f32 0.0, %v174
    %v176 = vpop.f32.mrb[0].mxu0
    %v177 = vpop.f32.mrb[0].mxu0
    %v178 = vadd.f32 0.0, %v177
    %v179 = vpop.f32.mrb[0].mxu0
    %180 = vmatprep.mubr.bf16.mxu0 0
    %181 = vmatmul.mubr.bf16.gmra.mrb[0].mxu0 %v78
    %v182 = vpop.f32.mrb[0].mxu0
    %v183 = vadd.f32 0.0, %v182
    %v184 = vpop.f32.mrb[0].mxu0
    %v185 = vpop.f32.mrb[0].mxu0
    %v186 = vadd.f32 0.0, %v185
    %v187 = vpop.f32.mrb[0].mxu0
    %188 = vmatprep.mubr.bf16.mxu0 0
    %189 = vmatmul.mubr.bf16.gmra.mrb[0].mxu0 %v79
    %v190 = vpop.f32.mrb[0].mxu0
    %v191 = vadd.f32 0.0, %v190
    %v192 = vpop.f32.mrb[0].mxu0
    %v193 = vpop.f32.mrb[0].mxu0
    %v194 = vadd.f32 0.0, %v193
    %v195 = vpop.f32.mrb[0].mxu0
    %196 = vdwg.mxu0
    %v197 = vadd.f32 %v28, %v167
    %v198 = vadd.f32 %v29, %v170
    %v199 = vadd.f32 %v30, %v175
    %v200 = vadd.f32 %v31, %v178
    %v201 = vadd.f32 %v32, %v183
    %v202 = vadd.f32 %v33, %v186
    %v203 = vadd.f32 %v34, %v191
    %v204 = vadd.f32 %v35, %v194
    %205 = vst [vmem:[#allocation2] sm:$0xff] %v197
    %206 = vst [vmem:[#allocation2 + $0x8] sm:$0xff] %v198
    %207 = vst [vmem:[#allocation2 + $0x10] sm:$0xff] %v199
    %208 = vst [vmem:[#allocation2 + $0x18] sm:$0xff] %v200
    %209 = vst [vmem:[#allocation2 + $0x20] sm:$0xff] %v201
    %210 = vst [vmem:[#allocation2 + $0x28] sm:$0xff] %v202
    %211 = vst [vmem:[#allocation2 + $0x30] sm:$0xff] %v203
    %212 = vst [vmem:[#allocation2 + $0x38] sm:$0xff] %v204
    // Predicated region
    $region18: #{_lambda_.65} parent=1 // pred_check
      %p213 = pneg %p16
    $region19: #{_lambda_.65} parent=1 // pred_check_branch
      %215 = sbr.rel (%p213) target = $region21
    $region20: #{_lambda_.65} parent=1 // pred_region
      %v216 = vld [vmem:[#allocation2] sm:$0xff]
      %v217 = vld [vmem:[#allocation2 + $0x8] sm:$0xff]
      %v218 = vld [vmem:[#allocation2 + $0x10] sm:$0xff]
      %v219 = vld [vmem:[#allocation2 + $0x18] sm:$0xff]
      %v220 = vld [vmem:[#allocation2 + $0x20] sm:$0xff]
      %v221 = vld [vmem:[#allocation2 + $0x28] sm:$0xff]
      %v222 = vld [vmem:[#allocation2 + $0x30] sm:$0xff]
      %v223 = vld [vmem:[#allocation2 + $0x38] sm:$0xff]
      %v224 = vld [vmem:[%s2] sm:$0x1]
      %v226 = vlaneseq
      %v227 = vshrl.u32 %v226, 7
      %v228 = vsub.s32 0, %v227
      %v229 = vrot.slane %v224, %v228
      %v231 = vadd.f32 %v216, %v229
      %v232 = vadd.f32 %v217, %v229
      %v233 = vadd.f32 %v218, %v229
      %v234 = vadd.f32 %v219, %v229
      %v235 = vadd.f32 %v220, %v229
      %v236 = vadd.f32 %v221, %v229
      %v237 = vadd.f32 %v222, %v229
      %v238 = vadd.f32 %v223, %v229
      %239 = vst [vmem:[#allocation3] sm:$0xff] %v231
      %240 = vst [vmem:[#allocation3 + $0x8] sm:$0xff] %v232
      %241 = vst [vmem:[#allocation3 + $0x10] sm:$0xff] %v233
      %242 = vst [vmem:[#allocation3 + $0x18] sm:$0xff] %v234
      %243 = vst [vmem:[#allocation3 + $0x20] sm:$0xff] %v235
      %244 = vst [vmem:[#allocation3 + $0x28] sm:$0xff] %v236
      %245 = vst [vmem:[#allocation3 + $0x30] sm:$0xff] %v237
      %246 = vst [vmem:[#allocation3 + $0x38] sm:$0xff] %v238
    $region21: #{_lambda_.65} parent=1 // pred_fallthru
      _
    // Predicated region
    $region22: #{_lambda_.65} parent=1 // pred_check
      _
    $region23: #{_lambda_.65} parent=1 // pred_check_branch
      %248 = sbr.rel (0) target = $region25
    $region24: #{_lambda_.65} parent=1 // pred_region
      %s250 = ssub.s32 1024, 1024
      %251 = vsyncadd [#allocation4], %s250
      %s252 = sshll.u32 [#allocation3], 4
      %s253 = int_to_ptr.vmem [resolvable:$true] %s252
      %258 = dma.vmem_to_hbm [thread:$0]  %s253, 1024, %s3, [#allocation4], 128, 128, 8
    $region25: #{_lambda_.65} parent=1 // pred_fallthru
      _
    // Predicated region
    $region26: #{_lambda_.65} parent=1 // pred_check
      _
    $region27: #{_lambda_.65} parent=1 // pred_check_branch
      %260 = sbr.rel (0) target = $region29
    $region28: #{_lambda_.65} parent=1 // pred_region
      %261 = dma.done [#allocation4], 1024
    $region29: #{_lambda_.65} parent=1 // pred_fallthru
      _
    %262 = vsyncpa [#allocation4], 1

</llo_original>
